<compile_context>
chip_gen: v7x
topology: tpu7x:2x2x1
jax: 0.10.0
libtpu: 0.0.40
codegen_flags: <defaults>
</compile_context>

<pallas_src>
import numpy as np
import jax
import jax.numpy as jnp
from jax.experimental import pallas as pl
from jax.experimental.pallas import tpu as pltpu


def _leaky_relu(v, slope=0.1):
    return jnp.where(v >= 0, v, slope * v)


def _fold_bn(gamma, beta, mean, var, eps=1e-5):
    scale = gamma / jnp.sqrt(var + eps)
    return scale, beta - mean * scale


def resb3d_kernel(xpad_ref, xres_ref, w1_ref, b1_ref, w2_ref, b2_ref,
                  caw1_ref, cab1_ref, caw2_ref, cab2_ref,
                  out_ref, pad_scr):
    NB, Dp2, Hp2, WC = xpad_ref.shape
    D, H = Dp2 - 2, Hp2 - 2
    C = cab2_ref.shape[-1]
    C16 = cab1_ref.shape[-1]
    W = WC // C
    M = NB * D * H

    def conv_banded(src_ref, w_ref):
        # src_ref: (NB, D+2, H+2, W*C) bf16 (d/h halos only; the W halo is
        # folded into the banded weights).  w_ref: (3, 3, W*C, W*C) bf16.
        acc = None
        for kd in range(3):
            for kh in range(3):
                slab = src_ref[:, kd:kd + D, kh:kh + H, :].reshape(M, WC)
                part = jnp.dot(slab, w_ref[kd, kh],
                               preferred_element_type=jnp.float32)
                acc = part if acc is None else acc + part
        return acc                                            # (M, W*C) f32

    # conv1 (BN1 scale folded into the banded bf16 weights) + bias + LeakyReLU.
    y = _leaky_relu(conv_banded(xpad_ref, w1_ref) + b1_ref[...])

    # Re-pad the intermediate for conv2: one full-lane memset of the scratch
    # plus one full-lane interior store (no masked W-face stores in this
    # layout).  Re-zeroed every grid step: safe under megacore sharding.
    pad_scr[...] = jnp.zeros(pad_scr.shape, jnp.bfloat16)
    pad_scr[:, pl.ds(1, D), pl.ds(1, H), :] = (
        y.reshape(NB, D, H, WC).astype(jnp.bfloat16))

    # conv2 (BN2 scale folded); BN2 bias deferred to the pooled path / finale.
    buf = conv_banded(pad_scr, w2_ref)                        # (M, W*C) f32

    # CALayer.  AdaptiveAvgPool3d((9,1,1)) == mean over (H, W) since D == 9.
    # Sum over H is a per-group sublane reduction (no relayout), then the
    # per-w channel groups are summed with static lane slices.
    hsum = buf.reshape(NB * D, H, WC).sum(axis=1)             # (NB*D, W*C)
    psum = hsum[:, 0:C]
    for w in range(1, W):
        psum = psum + hsum[:, w * C:(w + 1) * C]
    pooled = psum * (1.0 / (H * W)) + b2_ref[:, 0:C]          # (NB*D, C)

    # 1x1x1 convs of the CA path on the VPU/XLU (broadcast-mul + lane reduce):
    # C16 = C // 16 channels, so a couple of lane reductions beat MXU
    # weight-push + result drain on the serial critical path.
    w1t = caw1_ref[...]                                       # (C16, C)
    cols = [jnp.sum(pooled * w1t[j:j + 1, :], axis=-1, keepdims=True)
            for j in range(C16)]
    hid = _leaky_relu(jnp.concatenate(cols, axis=-1) + cab1_ref[...])

    w2c = caw2_ref[...]                                       # (C16, C)
    gacc = hid[:, 0:1] * w2c[0:1, :]
    for j in range(1, C16):
        gacc = gacc + hid[:, j:j + 1] * w2c[j:j + 1, :]
    gate = jax.nn.sigmoid(gacc + cab2_ref[...])               # (NB*D, C)

    # Lane-dense finale: pre-tiled bias, attention scaling, residual add and
    # the store all run on full 256-lane rows.
    g_w = jnp.tile(gate, (1, W))                              # (NB*D, W*C)
    g_full = jnp.broadcast_to(g_w[:, None, :], (NB * D, H, WC)).reshape(M, WC)
    out_ref[...] = (buf + b2_ref[...]) * g_full + xres_ref[...]


def _banded_conv_weights(w_dhwio, scale, W):
    """(3,3,3,Cin,Cout) conv weights (BN scale folded on Cout) -> block-banded
    (3, 3, W*Cin, W*Cout) bf16 matrices: a 3x3x3 'same' conv over rows that are
    lane-dense in (w, c) becomes 9 full-width MXU matmuls with no im2col."""
    wf = w_dhwio * scale
    _, _, _, Cin, Cout = wf.shape
    zero = jnp.zeros((3, 3, Cin, Cout), wf.dtype)
    rows = []
    for wi in range(W):
        cols = [wf[:, :, wi - wo + 1] if 0 <= wi - wo + 1 <= 2 else zero
                for wo in range(W)]
        rows.append(jnp.concatenate(cols, axis=-1))           # (3,3,Cin,W*Cout)
    return jnp.concatenate(rows, axis=-2).astype(jnp.bfloat16)


def _tensorcores_per_chip():
    try:
        kind = jax.devices()[0].device_kind.lower()
    except Exception:
        return 1
    return 2 if ("v7" in kind or "7x" in kind) else 1


@jax.jit
def resb3d_forward(x_ndhwc, p):
    N, D, H, W, C = x_ndhwc.shape
    C16 = p["ca_w1"].shape[1]
    WC = W * C

    s1, t1 = _fold_bn(*p["bn1"])
    s2, t2 = _fold_bn(*p["bn2"])
    cs1, ct1 = _fold_bn(*p["ca_bn1"])
    cs2, ct2 = _fold_bn(*p["ca_bn2"])

    w1b = _banded_conv_weights(p["w1"], s1, W)                # (3,3,WC,WC) bf16
    w2b = _banded_conv_weights(p["w2"], s2, W)
    b1t = jnp.tile(t1.reshape(1, C), (1, W))                  # (1, WC) pre-tiled
    b2t = jnp.tile(t2.reshape(1, C), (1, W))

    caw1t = (p["ca_w1"] * cs1).T                              # (C16, C)
    cab1f = (cs1 * p["ca_b1"] + ct1).reshape(1, C16)
    caw2f = p["ca_w2"] * cs2                                  # (C16, C)
    cab2f = (cs2 * p["ca_b2"] + ct2).reshape(1, C)

    # Lane-dense padded input: pad only D and H (W halo lives in the banded
    # weights) and fold (W, C) into a single 256-lane last dim.
    x_pad = jnp.pad(x_ndhwc.astype(jnp.bfloat16),
                    ((0, 0), (1, 1), (1, 1), (0, 0), (0, 0)))
    x_pad = x_pad.reshape(N, D + 2, H + 2, WC)
    x_res = x_ndhwc.reshape(N * D * H, WC)                    # f32 residual

    # v7x (2 TensorCores): one batch element per core.  v5e/v6e (1 TC): fold
    # the whole batch into the matmul M dimension and run a single grid step.
    g = _tensorcores_per_chip()
    g = g if (g > 1 and N % g == 0) else 1
    NB = N // g

    bc2 = lambda shape: pl.BlockSpec(shape, lambda i: (0, 0))
    bc4 = lambda shape: pl.BlockSpec(shape, lambda i: (0, 0, 0, 0))
    in_specs = [
        pl.BlockSpec((NB, D + 2, H + 2, WC), lambda i: (i, 0, 0, 0)),  # x_pad
        pl.BlockSpec((NB * D * H, WC), lambda i: (i, 0)),              # x_res
        bc4((3, 3, WC, WC)), bc2((1, WC)),                             # conv1
        bc4((3, 3, WC, WC)), bc2((1, WC)),                             # conv2
        bc2((C16, C)), bc2((1, C16)),                                  # CA conv1
        bc2((C16, C)), bc2((1, C)),                                    # CA conv2
    ]
    out_spec = pl.BlockSpec((NB * D * H, WC), lambda i: (i, 0))

    out = pl.pallas_call(
        resb3d_kernel,
        out_shape=jax.ShapeDtypeStruct((N * D * H, WC), jnp.float32),
        grid_spec=pltpu.PrefetchScalarGridSpec(
            num_scalar_prefetch=0,
            grid=(g,),
            in_specs=in_specs,
            out_specs=out_spec,
            scratch_shapes=[pltpu.VMEM((NB, D + 2, H + 2, WC), jnp.bfloat16)]),
        compiler_params=pltpu.CompilerParams(
            dimension_semantics=("parallel",)),
    )(x_pad, x_res, w1b, b1t, w2b, b2t, caw1t, cab1f, caw2f, cab2f)
    return out.reshape(N, D, H, W, C)


def _conv(v, w):
    return jax.lax.conv_general_dilated(
        v, w, window_strides=(1, 1, 1), padding="SAME",
        dimension_numbers=("NDHWC", "DHWIO", "NDHWC"),
        preferred_element_type=jnp.float32)


def resb3d_reference_bf16(x, p):
    """Pure-JAX reference with the kernel's mixed precision (bf16 conv operands,
    f32 accumulation, f32 elementwise)."""
    s1, t1 = _fold_bn(*p["bn1"])
    s2, t2 = _fold_bn(*p["bn2"])
    cs1, ct1 = _fold_bn(*p["ca_bn1"])
    cs2, ct2 = _fold_bn(*p["ca_bn2"])
    w1 = (p["w1"] * s1).astype(jnp.bfloat16)
    w2 = (p["w2"] * s2).astype(jnp.bfloat16)

    y = _conv(x.astype(jnp.bfloat16), w1) + t1
    y = jnp.where(y >= 0, y, 0.1 * y)
    buf = _conv(y.astype(jnp.bfloat16), w2) + t2

    pooled = jnp.mean(buf, axis=(2, 3))                       # (N, D, C)
    h = pooled @ (p["ca_w1"] * cs1) + (cs1 * p["ca_b1"] + ct1)
    h = jnp.where(h >= 0, h, 0.1 * h)
    g = jax.nn.sigmoid(h @ (p["ca_w2"] * cs2) + (cs2 * p["ca_b2"] + ct2))
    return buf * g[:, :, None, None, :] + x


def resb3d_reference_f32(x, p):
    """Pure-f32, un-folded reference matching the original PyTorch module."""
    def bn(v, gamma, beta, mean, var, eps=1e-5):
        return (v - mean) / jnp.sqrt(var + eps) * gamma + beta

    y = bn(_conv(x, p["w1"]), *p["bn1"])
    y = jnp.where(y >= 0, y, 0.1 * y)
    buf = bn(_conv(y, p["w2"]), *p["bn2"])

    pooled = jnp.mean(buf, axis=(2, 3))
    h = bn(pooled @ p["ca_w1"] + p["ca_b1"], *p["ca_bn1"])
    h = jnp.where(h >= 0, h, 0.1 * h)
    g = jax.nn.sigmoid(bn(h @ p["ca_w2"] + p["ca_b2"], *p["ca_bn2"]))
    return buf * g[:, :, None, None, :] + x


def make_params(key, C):
    C16 = max(C // 16, 1)
    ks = jax.random.split(key, 10)

    def bn_params(k, ch):
        k1, k2, k3, k4 = jax.random.split(k, 4)
        gamma = 1.0 + 0.1 * jax.random.normal(k1, (ch,), jnp.float32)
        beta = 0.1 * jax.random.normal(k2, (ch,), jnp.float32)
        mean = 0.1 * jax.random.normal(k3, (ch,), jnp.float32)
        var = 0.5 + 0.5 * jnp.abs(jax.random.normal(k4, (ch,), jnp.float32))
        return gamma, beta, mean, var

    return {
        # Conv3d(C, C, 3, 1, 1, bias=False): PyTorch OIDHW -> DHWIO
        "w1": 0.1 * jax.random.normal(ks[0], (3, 3, 3, C, C), jnp.float32),
        "bn1": bn_params(ks[1], C),
        "w2": 0.1 * jax.random.normal(ks[2], (3, 3, 3, C, C), jnp.float32),
        "bn2": bn_params(ks[3], C),
        # Conv3d 1x1x1 (with bias): weight (Cout, Cin, 1,1,1) -> (Cin, Cout)
        "ca_w1": 0.1 * jax.random.normal(ks[4], (C, C16), jnp.float32),
        "ca_b1": 0.1 * jax.random.normal(ks[5], (C16,), jnp.float32),
        "ca_bn1": bn_params(ks[6], C16),
        "ca_w2": 0.1 * jax.random.normal(ks[7], (C16, C), jnp.float32),
        "ca_b2": 0.1 * jax.random.normal(ks[8], (C,), jnp.float32),
        "ca_bn2": bn_params(ks[9], C),
    }


if __name__ == "__main__":
    # small shapes: batch=2, channels=32 (so channel//16 = 2), views D=9, H=W=8
    N, C, D, H, W = 2, 32, 9, 8, 8
    key = jax.random.PRNGKey(0)
    kx, kp = jax.random.split(key)

    x_ncdhw = jax.random.normal(kx, (N, C, D, H, W), jnp.float32)  # PyTorch layout
    x = jnp.transpose(x_ncdhw, (0, 2, 3, 4, 1))                    # -> NDHWC
    params = make_params(kp, C)

    out = jax.block_until_ready(resb3d_forward(x, params))
    out_np = np.asarray(out)

    # (1) Tight check vs a reference using the same bf16/f32 mixed precision.
    ref_mp = np.asarray(resb3d_reference_bf16(x, params))
    np.testing.assert_allclose(out_np, ref_mp, rtol=2e-2, atol=2e-2)

    # (2) Sanity check vs the full-f32, un-folded module: bf16-level agreement.
    ref32 = np.asarray(resb3d_reference_f32(x, params))
    rel_l2 = np.linalg.norm(out_np - ref32) / np.linalg.norm(ref32)
    assert rel_l2 < 3e-2, f"relative L2 error vs f32 reference too large: {rel_l2}"

    print("KERNEL_OK")
</pallas_src>

<mosaic_0001>
module attributes {stable_mosaic.version = 11 : i64} {
  func.func @resb3d_kernel(%arg0: i32, %arg1: memref<2x11x10x256xbf16, #tpu.memory_space<vmem>>, %arg2: memref<144x256xf32, #tpu.memory_space<vmem>>, %arg3: memref<3x3x256x256xbf16, #tpu.memory_space<vmem>>, %arg4: memref<1x256xf32, #tpu.memory_space<vmem>>, %arg5: memref<3x3x256x256xbf16, #tpu.memory_space<vmem>>, %arg6: memref<1x256xf32, #tpu.memory_space<vmem>>, %arg7: memref<2x32xf32, #tpu.memory_space<vmem>>, %arg8: memref<1x2xf32, #tpu.memory_space<vmem>>, %arg9: memref<2x32xf32, #tpu.memory_space<vmem>>, %arg10: memref<1x32xf32, #tpu.memory_space<vmem>>, %arg11: memref<144x256xf32, #tpu.memory_space<vmem>>, %arg12: memref<2x11x10x256xbf16, #tpu.memory_space<vmem>>) attributes {dimension_semantics = [#tpu.dimension_semantics<parallel>], iteration_bounds = array<i64: 1>, scalar_prefetch = 0 : i64, scratch_operands = 1 : i64, tpu.core_type = #tpu.core_type<tc>, window_params = [{transform_indices = @transform_0, window_bounds = array<i64: 2, 11, 10, 256>}, {transform_indices = @transform_1, window_bounds = array<i64: 144, 256>}, {pipeline_mode = #tpu.pipeline_mode<synchronous>, transform_indices = @transform_2, window_bounds = array<i64: 3, 3, 256, 256>}, {pipeline_mode = #tpu.pipeline_mode<synchronous>, transform_indices = @transform_3, window_bounds = array<i64: 1, 256>}, {pipeline_mode = #tpu.pipeline_mode<synchronous>, transform_indices = @transform_4, window_bounds = array<i64: 3, 3, 256, 256>}, {pipeline_mode = #tpu.pipeline_mode<synchronous>, transform_indices = @transform_5, window_bounds = array<i64: 1, 256>}, {pipeline_mode = #tpu.pipeline_mode<synchronous>, transform_indices = @transform_6, window_bounds = array<i64: 2, 32>}, {pipeline_mode = #tpu.pipeline_mode<synchronous>, transform_indices = @transform_7, window_bounds = array<i64: 1, 2>}, {pipeline_mode = #tpu.pipeline_mode<synchronous>, transform_indices = @transform_8, window_bounds = array<i64: 2, 32>}, {pipeline_mode = #tpu.pipeline_mode<synchronous>, transform_indices = @transform_9, window_bounds = array<i64: 1, 32>}, {transform_indices = @transform_10, window_bounds = array<i64: 144, 256>}]} {
    %c0 = arith.constant 0 : index
    %c0_0 = arith.constant 0 : index
    %c0_1 = arith.constant 0 : index
    %c0_2 = arith.constant 0 : index
    %0 = vector.load %arg1[%c0, %c0_0, %c0_1, %c0_2] : memref<2x11x10x256xbf16, #tpu.memory_space<vmem>>, vector<2x9x8x256xbf16>
    %1 = vector.shape_cast %0 : vector<2x9x8x256xbf16> to vector<144x256xbf16>
    %c0_3 = arith.constant 0 : index
    %c0_4 = arith.constant 0 : index
    %c0_5 = arith.constant 0 : index
    %c0_6 = arith.constant 0 : index
    %2 = vector.load %arg3[%c0_3, %c0_4, %c0_5, %c0_6] : memref<3x3x256x256xbf16, #tpu.memory_space<vmem>>, vector<1x1x256x256xbf16>
    %3 = vector.shape_cast %2 : vector<1x1x256x256xbf16> to vector<256x256xbf16>
    %cst = arith.constant dense<0.000000e+00> : vector<144x256xf32>
    %4 = tpu.matmul %1, %3, %cst {dimension_numbers = #tpu.dot_dimension_numbers<[1], [0], [0], [1], [0, 0, 1, 1], [], []>} : vector<144x256xbf16>, vector<256x256xbf16>, vector<144x256xf32> -> vector<144x256xf32>
    %c0_7 = arith.constant 0 : index
    %c0_8 = arith.constant 0 : index
    %c1 = arith.constant 1 : index
    %c0_9 = arith.constant 0 : index
    %5 = vector.load %arg1[%c0_7, %c0_8, %c1, %c0_9] : memref<2x11x10x256xbf16, #tpu.memory_space<vmem>>, vector<2x9x8x256xbf16>
    %6 = vector.shape_cast %5 : vector<2x9x8x256xbf16> to vector<144x256xbf16>
    %c0_10 = arith.constant 0 : index
    %c1_11 = arith.constant 1 : index
    %c0_12 = arith.constant 0 : index
    %c0_13 = arith.constant 0 : index
    %7 = vector.load %arg3[%c0_10, %c1_11, %c0_12, %c0_13] : memref<3x3x256x256xbf16, #tpu.memory_space<vmem>>, vector<1x1x256x256xbf16>
    %8 = vector.shape_cast %7 : vector<1x1x256x256xbf16> to vector<256x256xbf16>
    %cst_14 = arith.constant dense<0.000000e+00> : vector<144x256xf32>
    %9 = tpu.matmul %6, %8, %cst_14 {dimension_numbers = #tpu.dot_dimension_numbers<[1], [0], [0], [1], [0, 0, 1, 1], [], []>} : vector<144x256xbf16>, vector<256x256xbf16>, vector<144x256xf32> -> vector<144x256xf32>
    %10 = arith.addf %4, %9 : vector<144x256xf32>
    %c0_15 = arith.constant 0 : index
    %c0_16 = arith.constant 0 : index
    %c2 = arith.constant 2 : index
    %c0_17 = arith.constant 0 : index
    %11 = vector.load %arg1[%c0_15, %c0_16, %c2, %c0_17] : memref<2x11x10x256xbf16, #tpu.memory_space<vmem>>, vector<2x9x8x256xbf16>
    %12 = vector.shape_cast %11 : vector<2x9x8x256xbf16> to vector<144x256xbf16>
    %c0_18 = arith.constant 0 : index
    %c2_19 = arith.constant 2 : index
    %c0_20 = arith.constant 0 : index
    %c0_21 = arith.constant 0 : index
    %13 = vector.load %arg3[%c0_18, %c2_19, %c0_20, %c0_21] : memref<3x3x256x256xbf16, #tpu.memory_space<vmem>>, vector<1x1x256x256xbf16>
    %14 = vector.shape_cast %13 : vector<1x1x256x256xbf16> to vector<256x256xbf16>
    %cst_22 = arith.constant dense<0.000000e+00> : vector<144x256xf32>
    %15 = tpu.matmul %12, %14, %cst_22 {dimension_numbers = #tpu.dot_dimension_numbers<[1], [0], [0], [1], [0, 0, 1, 1], [], []>} : vector<144x256xbf16>, vector<256x256xbf16>, vector<144x256xf32> -> vector<144x256xf32>
    %16 = arith.addf %10, %15 : vector<144x256xf32>
    %c0_23 = arith.constant 0 : index
    %c1_24 = arith.constant 1 : index
    %c0_25 = arith.constant 0 : index
    %c0_26 = arith.constant 0 : index
    %17 = vector.load %arg1[%c0_23, %c1_24, %c0_25, %c0_26] : memref<2x11x10x256xbf16, #tpu.memory_space<vmem>>, vector<2x9x8x256xbf16>
    %18 = vector.shape_cast %17 : vector<2x9x8x256xbf16> to vector<144x256xbf16>
    %c1_27 = arith.constant 1 : index
    %c0_28 = arith.constant 0 : index
    %c0_29 = arith.constant 0 : index
    %c0_30 = arith.constant 0 : index
    %19 = vector.load %arg3[%c1_27, %c0_28, %c0_29, %c0_30] : memref<3x3x256x256xbf16, #tpu.memory_space<vmem>>, vector<1x1x256x256xbf16>
    %20 = vector.shape_cast %19 : vector<1x1x256x256xbf16> to vector<256x256xbf16>
    %cst_31 = arith.constant dense<0.000000e+00> : vector<144x256xf32>
    %21 = tpu.matmul %18, %20, %cst_31 {dimension_numbers = #tpu.dot_dimension_numbers<[1], [0], [0], [1], [0, 0, 1, 1], [], []>} : vector<144x256xbf16>, vector<256x256xbf16>, vector<144x256xf32> -> vector<144x256xf32>
    %22 = arith.addf %16, %21 : vector<144x256xf32>
    %c0_32 = arith.constant 0 : index
    %c1_33 = arith.constant 1 : index
    %c1_34 = arith.constant 1 : index
    %c0_35 = arith.constant 0 : index
    %23 = vector.load %arg1[%c0_32, %c1_33, %c1_34, %c0_35] : memref<2x11x10x256xbf16, #tpu.memory_space<vmem>>, vector<2x9x8x256xbf16>
    %24 = vector.shape_cast %23 : vector<2x9x8x256xbf16> to vector<144x256xbf16>
    %c1_36 = arith.constant 1 : index
    %c1_37 = arith.constant 1 : index
    %c0_38 = arith.constant 0 : index
    %c0_39 = arith.constant 0 : index
    %25 = vector.load %arg3[%c1_36, %c1_37, %c0_38, %c0_39] : memref<3x3x256x256xbf16, #tpu.memory_space<vmem>>, vector<1x1x256x256xbf16>
    %26 = vector.shape_cast %25 : vector<1x1x256x256xbf16> to vector<256x256xbf16>
    %cst_40 = arith.constant dense<0.000000e+00> : vector<144x256xf32>
    %27 = tpu.matmul %24, %26, %cst_40 {dimension_numbers = #tpu.dot_dimension_numbers<[1], [0], [0], [1], [0, 0, 1, 1], [], []>} : vector<144x256xbf16>, vector<256x256xbf16>, vector<144x256xf32> -> vector<144x256xf32>
    %28 = arith.addf %22, %27 : vector<144x256xf32>
    %c0_41 = arith.constant 0 : index
    %c1_42 = arith.constant 1 : index
    %c2_43 = arith.constant 2 : index
    %c0_44 = arith.constant 0 : index
    %29 = vector.load %arg1[%c0_41, %c1_42, %c2_43, %c0_44] : memref<2x11x10x256xbf16, #tpu.memory_space<vmem>>, vector<2x9x8x256xbf16>
    %30 = vector.shape_cast %29 : vector<2x9x8x256xbf16> to vector<144x256xbf16>
    %c1_45 = arith.constant 1 : index
    %c2_46 = arith.constant 2 : index
    %c0_47 = arith.constant 0 : index
    %c0_48 = arith.constant 0 : index
    %31 = vector.load %arg3[%c1_45, %c2_46, %c0_47, %c0_48] : memref<3x3x256x256xbf16, #tpu.memory_space<vmem>>, vector<1x1x256x256xbf16>
    %32 = vector.shape_cast %31 : vector<1x1x256x256xbf16> to vector<256x256xbf16>
    %cst_49 = arith.constant dense<0.000000e+00> : vector<144x256xf32>
    %33 = tpu.matmul %30, %32, %cst_49 {dimension_numbers = #tpu.dot_dimension_numbers<[1], [0], [0], [1], [0, 0, 1, 1], [], []>} : vector<144x256xbf16>, vector<256x256xbf16>, vector<144x256xf32> -> vector<144x256xf32>
    %34 = arith.addf %28, %33 : vector<144x256xf32>
    %c0_50 = arith.constant 0 : index
    %c2_51 = arith.constant 2 : index
    %c0_52 = arith.constant 0 : index
    %c0_53 = arith.constant 0 : index
    %35 = vector.load %arg1[%c0_50, %c2_51, %c0_52, %c0_53] : memref<2x11x10x256xbf16, #tpu.memory_space<vmem>>, vector<2x9x8x256xbf16>
    %36 = vector.shape_cast %35 : vector<2x9x8x256xbf16> to vector<144x256xbf16>
    %c2_54 = arith.constant 2 : index
    %c0_55 = arith.constant 0 : index
    %c0_56 = arith.constant 0 : index
    %c0_57 = arith.constant 0 : index
    %37 = vector.load %arg3[%c2_54, %c0_55, %c0_56, %c0_57] : memref<3x3x256x256xbf16, #tpu.memory_space<vmem>>, vector<1x1x256x256xbf16>
    %38 = vector.shape_cast %37 : vector<1x1x256x256xbf16> to vector<256x256xbf16>
    %cst_58 = arith.constant dense<0.000000e+00> : vector<144x256xf32>
    %39 = tpu.matmul %36, %38, %cst_58 {dimension_numbers = #tpu.dot_dimension_numbers<[1], [0], [0], [1], [0, 0, 1, 1], [], []>} : vector<144x256xbf16>, vector<256x256xbf16>, vector<144x256xf32> -> vector<144x256xf32>
    %40 = arith.addf %34, %39 : vector<144x256xf32>
    %c0_59 = arith.constant 0 : index
    %c2_60 = arith.constant 2 : index
    %c1_61 = arith.constant 1 : index
    %c0_62 = arith.constant 0 : index
    %41 = vector.load %arg1[%c0_59, %c2_60, %c1_61, %c0_62] : memref<2x11x10x256xbf16, #tpu.memory_space<vmem>>, vector<2x9x8x256xbf16>
    %42 = vector.shape_cast %41 : vector<2x9x8x256xbf16> to vector<144x256xbf16>
    %c2_63 = arith.constant 2 : index
    %c1_64 = arith.constant 1 : index
    %c0_65 = arith.constant 0 : index
    %c0_66 = arith.constant 0 : index
    %43 = vector.load %arg3[%c2_63, %c1_64, %c0_65, %c0_66] : memref<3x3x256x256xbf16, #tpu.memory_space<vmem>>, vector<1x1x256x256xbf16>
    %44 = vector.shape_cast %43 : vector<1x1x256x256xbf16> to vector<256x256xbf16>
    %cst_67 = arith.constant dense<0.000000e+00> : vector<144x256xf32>
    %45 = tpu.matmul %42, %44, %cst_67 {dimension_numbers = #tpu.dot_dimension_numbers<[1], [0], [0], [1], [0, 0, 1, 1], [], []>} : vector<144x256xbf16>, vector<256x256xbf16>, vector<144x256xf32> -> vector<144x256xf32>
    %46 = arith.addf %40, %45 : vector<144x256xf32>
    %c0_68 = arith.constant 0 : index
    %c2_69 = arith.constant 2 : index
    %c2_70 = arith.constant 2 : index
    %c0_71 = arith.constant 0 : index
    %47 = vector.load %arg1[%c0_68, %c2_69, %c2_70, %c0_71] : memref<2x11x10x256xbf16, #tpu.memory_space<vmem>>, vector<2x9x8x256xbf16>
    %48 = vector.shape_cast %47 : vector<2x9x8x256xbf16> to vector<144x256xbf16>
    %c2_72 = arith.constant 2 : index
    %c2_73 = arith.constant 2 : index
    %c0_74 = arith.constant 0 : index
    %c0_75 = arith.constant 0 : index
    %49 = vector.load %arg3[%c2_72, %c2_73, %c0_74, %c0_75] : memref<3x3x256x256xbf16, #tpu.memory_space<vmem>>, vector<1x1x256x256xbf16>
    %50 = vector.shape_cast %49 : vector<1x1x256x256xbf16> to vector<256x256xbf16>
    %cst_76 = arith.constant dense<0.000000e+00> : vector<144x256xf32>
    %51 = tpu.matmul %48, %50, %cst_76 {dimension_numbers = #tpu.dot_dimension_numbers<[1], [0], [0], [1], [0, 0, 1, 1], [], []>} : vector<144x256xbf16>, vector<256x256xbf16>, vector<144x256xf32> -> vector<144x256xf32>
    %52 = arith.addf %46, %51 : vector<144x256xf32>
    %c0_77 = arith.constant 0 : index
    %c0_78 = arith.constant 0 : index
    %53 = vector.load %arg4[%c0_77, %c0_78] : memref<1x256xf32, #tpu.memory_space<vmem>>, vector<1x256xf32>
    %54 = vector.broadcast %53 : vector<1x256xf32> to vector<144x256xf32>
    %55 = arith.addf %52, %54 : vector<144x256xf32>
    %cst_79 = arith.constant 0.000000e+00 : f32
    %56 = vector.broadcast %cst_79 : f32 to vector<144x256xf32>
    %57 = arith.cmpf oge, %55, %56 : vector<144x256xf32>
    %cst_80 = arith.constant 1.000000e-01 : f32
    %58 = vector.broadcast %cst_80 : f32 to vector<144x256xf32>
    %59 = arith.mulf %58, %55 : vector<144x256xf32>
    %60 = arith.select %57, %55, %59 : vector<144x256xi1>, vector<144x256xf32>
    %cst_81 = arith.constant 0.000000e+00 : bf16
    %61 = vector.broadcast %cst_81 : bf16 to vector<2x11x10x256xbf16>
    %c0_82 = arith.constant 0 : index
    %c0_83 = arith.constant 0 : index
    %c0_84 = arith.constant 0 : index
    %c0_85 = arith.constant 0 : index
    %62 = vector.load %arg12[%c0_82, %c0_83, %c0_84, %c0_85] : memref<2x11x10x256xbf16, #tpu.memory_space<vmem>>, vector<2x11x10x256xbf16>
    tpu.vector_store %arg12[%c0_82, %c0_83, %c0_84, %c0_85], %61 {strides = array<i32>} : memref<2x11x10x256xbf16, #tpu.memory_space<vmem>>, vector<2x11x10x256xbf16>,
    %63 = vector.shape_cast %60 : vector<144x256xf32> to vector<2x9x8x256xf32>
    %64 = arith.truncf %63 : vector<2x9x8x256xf32> to vector<2x9x8x256xbf16>
    %c0_86 = arith.constant 0 : index
    %c1_87 = arith.constant 1 : index
    %c1_88 = arith.constant 1 : index
    %c0_89 = arith.constant 0 : index
    %65 = vector.load %arg12[%c0_86, %c1_87, %c1_88, %c0_89] : memref<2x11x10x256xbf16, #tpu.memory_space<vmem>>, vector<2x9x8x256xbf16>
    tpu.vector_store %arg12[%c0_86, %c1_87, %c1_88, %c0_89], %64 {strides = array<i32>} : memref<2x11x10x256xbf16, #tpu.memory_space<vmem>>, vector<2x9x8x256xbf16>,
    %c0_90 = arith.constant 0 : index
    %c0_91 = arith.constant 0 : index
    %c0_92 = arith.constant 0 : index
    %c0_93 = arith.constant 0 : index
    %66 = vector.load %arg12[%c0_90, %c0_91, %c0_92, %c0_93] : memref<2x11x10x256xbf16, #tpu.memory_space<vmem>>, vector<2x9x8x256xbf16>
    %67 = vector.shape_cast %66 : vector<2x9x8x256xbf16> to vector<144x256xbf16>
    %c0_94 = arith.constant 0 : index
    %c0_95 = arith.constant 0 : index
    %c0_96 = arith.constant 0 : index
    %c0_97 = arith.constant 0 : index
    %68 = vector.load %arg5[%c0_94, %c0_95, %c0_96, %c0_97] : memref<3x3x256x256xbf16, #tpu.memory_space<vmem>>, vector<1x1x256x256xbf16>
    %69 = vector.shape_cast %68 : vector<1x1x256x256xbf16> to vector<256x256xbf16>
    %cst_98 = arith.constant dense<0.000000e+00> : vector<144x256xf32>
    %70 = tpu.matmul %67, %69, %cst_98 {dimension_numbers = #tpu.dot_dimension_numbers<[1], [0], [0], [1], [0, 0, 1, 1], [], []>} : vector<144x256xbf16>, vector<256x256xbf16>, vector<144x256xf32> -> vector<144x256xf32>
    %c0_99 = arith.constant 0 : index
    %c0_100 = arith.constant 0 : index
    %c1_101 = arith.constant 1 : index
    %c0_102 = arith.constant 0 : index
    %71 = vector.load %arg12[%c0_99, %c0_100, %c1_101, %c0_102] : memref<2x11x10x256xbf16, #tpu.memory_space<vmem>>, vector<2x9x8x256xbf16>
    %72 = vector.shape_cast %71 : vector<2x9x8x256xbf16> to vector<144x256xbf16>
    %c0_103 = arith.constant 0 : index
    %c1_104 = arith.constant 1 : index
    %c0_105 = arith.constant 0 : index
    %c0_106 = arith.constant 0 : index
    %73 = vector.load %arg5[%c0_103, %c1_104, %c0_105, %c0_106] : memref<3x3x256x256xbf16, #tpu.memory_space<vmem>>, vector<1x1x256x256xbf16>
    %74 = vector.shape_cast %73 : vector<1x1x256x256xbf16> to vector<256x256xbf16>
    %cst_107 = arith.constant dense<0.000000e+00> : vector<144x256xf32>
    %75 = tpu.matmul %72, %74, %cst_107 {dimension_numbers = #tpu.dot_dimension_numbers<[1], [0], [0], [1], [0, 0, 1, 1], [], []>} : vector<144x256xbf16>, vector<256x256xbf16>, vector<144x256xf32> -> vector<144x256xf32>
    %76 = arith.addf %70, %75 : vector<144x256xf32>
    %c0_108 = arith.constant 0 : index
    %c0_109 = arith.constant 0 : index
    %c2_110 = arith.constant 2 : index
    %c0_111 = arith.constant 0 : index
    %77 = vector.load %arg12[%c0_108, %c0_109, %c2_110, %c0_111] : memref<2x11x10x256xbf16, #tpu.memory_space<vmem>>, vector<2x9x8x256xbf16>
    %78 = vector.shape_cast %77 : vector<2x9x8x256xbf16> to vector<144x256xbf16>
    %c0_112 = arith.constant 0 : index
    %c2_113 = arith.constant 2 : index
    %c0_114 = arith.constant 0 : index
    %c0_115 = arith.constant 0 : index
    %79 = vector.load %arg5[%c0_112, %c2_113, %c0_114, %c0_115] : memref<3x3x256x256xbf16, #tpu.memory_space<vmem>>, vector<1x1x256x256xbf16>
    %80 = vector.shape_cast %79 : vector<1x1x256x256xbf16> to vector<256x256xbf16>
    %cst_116 = arith.constant dense<0.000000e+00> : vector<144x256xf32>
    %81 = tpu.matmul %78, %80, %cst_116 {dimension_numbers = #tpu.dot_dimension_numbers<[1], [0], [0], [1], [0, 0, 1, 1], [], []>} : vector<144x256xbf16>, vector<256x256xbf16>, vector<144x256xf32> -> vector<144x256xf32>
    %82 = arith.addf %76, %81 : vector<144x256xf32>
    %c0_117 = arith.constant 0 : index
    %c1_118 = arith.constant 1 : index
    %c0_119 = arith.constant 0 : index
    %c0_120 = arith.constant 0 : index
    %83 = vector.load %arg12[%c0_117, %c1_118, %c0_119, %c0_120] : memref<2x11x10x256xbf16, #tpu.memory_space<vmem>>, vector<2x9x8x256xbf16>
    %84 = vector.shape_cast %83 : vector<2x9x8x256xbf16> to vector<144x256xbf16>
    %c1_121 = arith.constant 1 : index
    %c0_122 = arith.constant 0 : index
    %c0_123 = arith.constant 0 : index
    %c0_124 = arith.constant 0 : index
    %85 = vector.load %arg5[%c1_121, %c0_122, %c0_123, %c0_124] : memref<3x3x256x256xbf16, #tpu.memory_space<vmem>>, vector<1x1x256x256xbf16>
    %86 = vector.shape_cast %85 : vector<1x1x256x256xbf16> to vector<256x256xbf16>
    %cst_125 = arith.constant dense<0.000000e+00> : vector<144x256xf32>
    %87 = tpu.matmul %84, %86, %cst_125 {dimension_numbers = #tpu.dot_dimension_numbers<[1], [0], [0], [1], [0, 0, 1, 1], [], []>} : vector<144x256xbf16>, vector<256x256xbf16>, vector<144x256xf32> -> vector<144x256xf32>
    %88 = arith.addf %82, %87 : vector<144x256xf32>
    %c0_126 = arith.constant 0 : index
    %c1_127 = arith.constant 1 : index
    %c1_128 = arith.constant 1 : index
    %c0_129 = arith.constant 0 : index
    %89 = vector.load %arg12[%c0_126, %c1_127, %c1_128, %c0_129] : memref<2x11x10x256xbf16, #tpu.memory_space<vmem>>, vector<2x9x8x256xbf16>
    %90 = vector.shape_cast %89 : vector<2x9x8x256xbf16> to vector<144x256xbf16>
    %c1_130 = arith.constant 1 : index
    %c1_131 = arith.constant 1 : index
    %c0_132 = arith.constant 0 : index
    %c0_133 = arith.constant 0 : index
    %91 = vector.load %arg5[%c1_130, %c1_131, %c0_132, %c0_133] : memref<3x3x256x256xbf16, #tpu.memory_space<vmem>>, vector<1x1x256x256xbf16>
    %92 = vector.shape_cast %91 : vector<1x1x256x256xbf16> to vector<256x256xbf16>
    %cst_134 = arith.constant dense<0.000000e+00> : vector<144x256xf32>
    %93 = tpu.matmul %90, %92, %cst_134 {dimension_numbers = #tpu.dot_dimension_numbers<[1], [0], [0], [1], [0, 0, 1, 1], [], []>} : vector<144x256xbf16>, vector<256x256xbf16>, vector<144x256xf32> -> vector<144x256xf32>
    %94 = arith.addf %88, %93 : vector<144x256xf32>
    %c0_135 = arith.constant 0 : index
    %c1_136 = arith.constant 1 : index
    %c2_137 = arith.constant 2 : index
    %c0_138 = arith.constant 0 : index
    %95 = vector.load %arg12[%c0_135, %c1_136, %c2_137, %c0_138] : memref<2x11x10x256xbf16, #tpu.memory_space<vmem>>, vector<2x9x8x256xbf16>
    %96 = vector.shape_cast %95 : vector<2x9x8x256xbf16> to vector<144x256xbf16>
    %c1_139 = arith.constant 1 : index
    %c2_140 = arith.constant 2 : index
    %c0_141 = arith.constant 0 : index
    %c0_142 = arith.constant 0 : index
    %97 = vector.load %arg5[%c1_139, %c2_140, %c0_141, %c0_142] : memref<3x3x256x256xbf16, #tpu.memory_space<vmem>>, vector<1x1x256x256xbf16>
    %98 = vector.shape_cast %97 : vector<1x1x256x256xbf16> to vector<256x256xbf16>
    %cst_143 = arith.constant dense<0.000000e+00> : vector<144x256xf32>
    %99 = tpu.matmul %96, %98, %cst_143 {dimension_numbers = #tpu.dot_dimension_numbers<[1], [0], [0], [1], [0, 0, 1, 1], [], []>} : vector<144x256xbf16>, vector<256x256xbf16>, vector<144x256xf32> -> vector<144x256xf32>
    %100 = arith.addf %94, %99 : vector<144x256xf32>
    %c0_144 = arith.constant 0 : index
    %c2_145 = arith.constant 2 : index
    %c0_146 = arith.constant 0 : index
    %c0_147 = arith.constant 0 : index
    %101 = vector.load %arg12[%c0_144, %c2_145, %c0_146, %c0_147] : memref<2x11x10x256xbf16, #tpu.memory_space<vmem>>, vector<2x9x8x256xbf16>
    %102 = vector.shape_cast %101 : vector<2x9x8x256xbf16> to vector<144x256xbf16>
    %c2_148 = arith.constant 2 : index
    %c0_149 = arith.constant 0 : index
    %c0_150 = arith.constant 0 : index
    %c0_151 = arith.constant 0 : index
    %103 = vector.load %arg5[%c2_148, %c0_149, %c0_150, %c0_151] : memref<3x3x256x256xbf16, #tpu.memory_space<vmem>>, vector<1x1x256x256xbf16>
    %104 = vector.shape_cast %103 : vector<1x1x256x256xbf16> to vector<256x256xbf16>
    %cst_152 = arith.constant dense<0.000000e+00> : vector<144x256xf32>
    %105 = tpu.matmul %102, %104, %cst_152 {dimension_numbers = #tpu.dot_dimension_numbers<[1], [0], [0], [1], [0, 0, 1, 1], [], []>} : vector<144x256xbf16>, vector<256x256xbf16>, vector<144x256xf32> -> vector<144x256xf32>
    %106 = arith.addf %100, %105 : vector<144x256xf32>
    %c0_153 = arith.constant 0 : index
    %c2_154 = arith.constant 2 : index
    %c1_155 = arith.constant 1 : index
    %c0_156 = arith.constant 0 : index
    %107 = vector.load %arg12[%c0_153, %c2_154, %c1_155, %c0_156] : memref<2x11x10x256xbf16, #tpu.memory_space<vmem>>, vector<2x9x8x256xbf16>
    %108 = vector.shape_cast %107 : vector<2x9x8x256xbf16> to vector<144x256xbf16>
    %c2_157 = arith.constant 2 : index
    %c1_158 = arith.constant 1 : index
    %c0_159 = arith.constant 0 : index
    %c0_160 = arith.constant 0 : index
    %109 = vector.load %arg5[%c2_157, %c1_158, %c0_159, %c0_160] : memref<3x3x256x256xbf16, #tpu.memory_space<vmem>>, vector<1x1x256x256xbf16>
    %110 = vector.shape_cast %109 : vector<1x1x256x256xbf16> to vector<256x256xbf16>
    %cst_161 = arith.constant dense<0.000000e+00> : vector<144x256xf32>
    %111 = tpu.matmul %108, %110, %cst_161 {dimension_numbers = #tpu.dot_dimension_numbers<[1], [0], [0], [1], [0, 0, 1, 1], [], []>} : vector<144x256xbf16>, vector<256x256xbf16>, vector<144x256xf32> -> vector<144x256xf32>
    %112 = arith.addf %106, %111 : vector<144x256xf32>
    %c0_162 = arith.constant 0 : index
    %c2_163 = arith.constant 2 : index
    %c2_164 = arith.constant 2 : index
    %c0_165 = arith.constant 0 : index
    %113 = vector.load %arg12[%c0_162, %c2_163, %c2_164, %c0_165] : memref<2x11x10x256xbf16, #tpu.memory_space<vmem>>, vector<2x9x8x256xbf16>
    %114 = vector.shape_cast %113 : vector<2x9x8x256xbf16> to vector<144x256xbf16>
    %c2_166 = arith.constant 2 : index
    %c2_167 = arith.constant 2 : index
    %c0_168 = arith.constant 0 : index
    %c0_169 = arith.constant 0 : index
    %115 = vector.load %arg5[%c2_166, %c2_167, %c0_168, %c0_169] : memref<3x3x256x256xbf16, #tpu.memory_space<vmem>>, vector<1x1x256x256xbf16>
    %116 = vector.shape_cast %115 : vector<1x1x256x256xbf16> to vector<256x256xbf16>
    %cst_170 = arith.constant dense<0.000000e+00> : vector<144x256xf32>
    %117 = tpu.matmul %114, %116, %cst_170 {dimension_numbers = #tpu.dot_dimension_numbers<[1], [0], [0], [1], [0, 0, 1, 1], [], []>} : vector<144x256xbf16>, vector<256x256xbf16>, vector<144x256xf32> -> vector<144x256xf32>
    %118 = arith.addf %112, %117 : vector<144x256xf32>
    %119 = vector.shape_cast %118 : vector<144x256xf32> to vector<18x8x256xf32>
    %cst_171 = arith.constant dense<0.000000e+00> : vector<18x256xf32>
    %120 = vector.multi_reduction <add>, %119, %cst_171 [1] : vector<18x8x256xf32> to vector<18x256xf32>
    %121 = vector.extract_strided_slice %120 {offsets = [0, 0], sizes = [18, 32], strides = [1, 1]} : vector<18x256xf32> to vector<18x32xf32>
    %122 = vector.extract_strided_slice %120 {offsets = [0, 32], sizes = [18, 32], strides = [1, 1]} : vector<18x256xf32> to vector<18x32xf32>
    %123 = arith.addf %121, %122 : vector<18x32xf32>
    %124 = vector.extract_strided_slice %120 {offsets = [0, 64], sizes = [18, 32], strides = [1, 1]} : vector<18x256xf32> to vector<18x32xf32>
    %125 = arith.addf %123, %124 : vector<18x32xf32>
    %126 = vector.extract_strided_slice %120 {offsets = [0, 96], sizes = [18, 32], strides = [1, 1]} : vector<18x256xf32> to vector<18x32xf32>
    %127 = arith.addf %125, %126 : vector<18x32xf32>
    %128 = vector.extract_strided_slice %120 {offsets = [0, 128], sizes = [18, 32], strides = [1, 1]} : vector<18x256xf32> to vector<18x32xf32>
    %129 = arith.addf %127, %128 : vector<18x32xf32>
    %130 = vector.extract_strided_slice %120 {offsets = [0, 160], sizes = [18, 32], strides = [1, 1]} : vector<18x256xf32> to vector<18x32xf32>
    %131 = arith.addf %129, %130 : vector<18x32xf32>
    %132 = vector.extract_strided_slice %120 {offsets = [0, 192], sizes = [18, 32], strides = [1, 1]} : vector<18x256xf32> to vector<18x32xf32>
    %133 = arith.addf %131, %132 : vector<18x32xf32>
    %134 = vector.extract_strided_slice %120 {offsets = [0, 224], sizes = [18, 32], strides = [1, 1]} : vector<18x256xf32> to vector<18x32xf32>
    %135 = arith.addf %133, %134 : vector<18x32xf32>
    %cst_172 = arith.constant 1.562500e-02 : f32
    %136 = vector.broadcast %cst_172 : f32 to vector<18x32xf32>
    %137 = arith.mulf %135, %136 : vector<18x32xf32>
    %c0_173 = arith.constant 0 : index
    %c0_174 = arith.constant 0 : index
    %138 = vector.load %arg6[%c0_173, %c0_174] : memref<1x256xf32, #tpu.memory_space<vmem>>, vector<1x32xf32>
    %139 = vector.broadcast %138 : vector<1x32xf32> to vector<18x32xf32>
    %140 = arith.addf %137, %139 : vector<18x32xf32>
    %c0_175 = arith.constant 0 : index
    %c0_176 = arith.constant 0 : index
    %141 = vector.load %arg7[%c0_175, %c0_176] : memref<2x32xf32, #tpu.memory_space<vmem>>, vector<2x32xf32>
    %142 = vector.extract_strided_slice %141 {offsets = [0, 0], sizes = [1, 32], strides = [1, 1]} : vector<2x32xf32> to vector<1x32xf32>
    %143 = vector.broadcast %142 : vector<1x32xf32> to vector<18x32xf32>
    %144 = arith.mulf %140, %143 : vector<18x32xf32>
    %cst_177 = arith.constant dense<0.000000e+00> : vector<18xf32>
    %145 = vector.multi_reduction <add>, %144, %cst_177 [1] : vector<18x32xf32> to vector<18xf32>
    %146 = vector.shape_cast %145 : vector<18xf32> to vector<18x1xf32>
    %147 = vector.extract_strided_slice %141 {offsets = [1, 0], sizes = [1, 32], strides = [1, 1]} : vector<2x32xf32> to vector<1x32xf32>
    %148 = vector.broadcast %147 : vector<1x32xf32> to vector<18x32xf32>
    %149 = arith.mulf %140, %148 : vector<18x32xf32>
    %cst_178 = arith.constant dense<0.000000e+00> : vector<18xf32>
    %150 = vector.multi_reduction <add>, %149, %cst_178 [1] : vector<18x32xf32> to vector<18xf32>
    %151 = vector.shape_cast %150 : vector<18xf32> to vector<18x1xf32>
    %152 = tpu.concatenate %146, %151 in 1 : vector<18x1xf32>, vector<18x1xf32> -> vector<18x2xf32>
    %c0_179 = arith.constant 0 : index
    %c0_180 = arith.constant 0 : index
    %153 = vector.load %arg8[%c0_179, %c0_180] : memref<1x2xf32, #tpu.memory_space<vmem>>, vector<1x2xf32>
    %154 = vector.broadcast %153 : vector<1x2xf32> to vector<18x2xf32>
    %155 = arith.addf %152, %154 : vector<18x2xf32>
    %cst_181 = arith.constant 0.000000e+00 : f32
    %156 = vector.broadcast %cst_181 : f32 to vector<18x2xf32>
    %157 = arith.cmpf oge, %155, %156 : vector<18x2xf32>
    %cst_182 = arith.constant 1.000000e-01 : f32
    %158 = vector.broadcast %cst_182 : f32 to vector<18x2xf32>
    %159 = arith.mulf %158, %155 : vector<18x2xf32>
    %160 = arith.select %157, %155, %159 : vector<18x2xi1>, vector<18x2xf32>
    %c0_183 = arith.constant 0 : index
    %c0_184 = arith.constant 0 : index
    %161 = vector.load %arg9[%c0_183, %c0_184] : memref<2x32xf32, #tpu.memory_space<vmem>>, vector<2x32xf32>
    %162 = vector.extract_strided_slice %160 {offsets = [0, 0], sizes = [18, 1], strides = [1, 1]} : vector<18x2xf32> to vector<18x1xf32>
    %163 = vector.extract_strided_slice %161 {offsets = [0, 0], sizes = [1, 32], strides = [1, 1]} : vector<2x32xf32> to vector<1x32xf32>
    %164 = vector.broadcast %162 : vector<18x1xf32> to vector<18x32xf32>
    %165 = vector.broadcast %163 : vector<1x32xf32> to vector<18x32xf32>
    %166 = arith.mulf %164, %165 : vector<18x32xf32>
    %167 = vector.extract_strided_slice %160 {offsets = [0, 1], sizes = [18, 1], strides = [1, 1]} : vector<18x2xf32> to vector<18x1xf32>
    %168 = vector.extract_strided_slice %161 {offsets = [1, 0], sizes = [1, 32], strides = [1, 1]} : vector<2x32xf32> to vector<1x32xf32>
    %169 = vector.broadcast %167 : vector<18x1xf32> to vector<18x32xf32>
    %170 = vector.broadcast %168 : vector<1x32xf32> to vector<18x32xf32>
    %171 = arith.mulf %169, %170 : vector<18x32xf32>
    %172 = arith.addf %166, %171 : vector<18x32xf32>
    %c0_185 = arith.constant 0 : index
    %c0_186 = arith.constant 0 : index
    %173 = vector.load %arg10[%c0_185, %c0_186] : memref<1x32xf32, #tpu.memory_space<vmem>>, vector<1x32xf32>
    %174 = vector.broadcast %173 : vector<1x32xf32> to vector<18x32xf32>
    %175 = arith.addf %172, %174 : vector<18x32xf32>
    %176 = arith.negf %175 : vector<18x32xf32>
    %177 = math.exp %176 : vector<18x32xf32>
    %cst_187 = arith.constant 1.000000e+00 : f32
    %178 = vector.broadcast %cst_187 : f32 to vector<18x32xf32>
    %179 = arith.addf %178, %177 : vector<18x32xf32>
    %180 = arith.divf %178, %179 : vector<18x32xf32>
    %181 = tpu.concatenate %180, %180, %180, %180, %180, %180, %180, %180 in 1 : vector<18x32xf32>, vector<18x32xf32>, vector<18x32xf32>, vector<18x32xf32>, vector<18x32xf32>, vector<18x32xf32>, vector<18x32xf32>, vector<18x32xf32> -> vector<18x256xf32>
    %182 = vector.shape_cast %181 : vector<18x256xf32> to vector<18x1x256xf32>
    %183 = vector.shape_cast %182 : vector<18x1x256xf32> to vector<18x1x256xf32>
    %184 = vector.broadcast %183 : vector<18x1x256xf32> to vector<18x8x256xf32>
    %185 = vector.shape_cast %184 : vector<18x8x256xf32> to vector<144x256xf32>
    %c0_188 = arith.constant 0 : index
    %c0_189 = arith.constant 0 : index
    %186 = vector.load %arg6[%c0_188, %c0_189] : memref<1x256xf32, #tpu.memory_space<vmem>>, vector<1x256xf32>
    %187 = vector.broadcast %186 : vector<1x256xf32> to vector<144x256xf32>
    %188 = arith.addf %118, %187 : vector<144x256xf32>
    %189 = arith.mulf %188, %185 : vector<144x256xf32>
    %c0_190 = arith.constant 0 : index
    %c0_191 = arith.constant 0 : index
    %190 = vector.load %arg2[%c0_190, %c0_191] : memref<144x256xf32, #tpu.memory_space<vmem>>, vector<144x256xf32>
    %191 = arith.addf %189, %190 : vector<144x256xf32>
    %c0_192 = arith.constant 0 : index
    %c0_193 = arith.constant 0 : index
    %192 = vector.load %arg11[%c0_192, %c0_193] : memref<144x256xf32, #tpu.memory_space<vmem>>, vector<144x256xf32>
    tpu.vector_store %arg11[%c0_192, %c0_193], %191 {strides = array<i32>} : memref<144x256xf32, #tpu.memory_space<vmem>>, vector<144x256xf32>,
    return
  }
  func.func @transform_0(%arg0: i32) -> (i32, i32, i32, i32) {
    %c0_i32 = arith.constant 0 : i32
    %c0_i32_0 = arith.constant 0 : i32
    %c0_i32_1 = arith.constant 0 : i32
    %c0_i32_2 = arith.constant 0 : i32
    return %arg0, %c0_i32, %c0_i32_0, %c0_i32_1 : i32, i32, i32, i32
  }
  func.func @transform_1(%arg0: i32) -> (i32, i32) {
    %c0_i32 = arith.constant 0 : i32
    %c0_i32_0 = arith.constant 0 : i32
    return %arg0, %c0_i32 : i32, i32
  }
  func.func @transform_2(%arg0: i32) -> (i32, i32, i32, i32) {
    %c0_i32 = arith.constant 0 : i32
    %c0_i32_0 = arith.constant 0 : i32
    %c0_i32_1 = arith.constant 0 : i32
    %c0_i32_2 = arith.constant 0 : i32
    %c0_i32_3 = arith.constant 0 : i32
    return %c0_i32, %c0_i32_0, %c0_i32_1, %c0_i32_2 : i32, i32, i32, i32
  }
  func.func @transform_3(%arg0: i32) -> (i32, i32) {
    %c0_i32 = arith.constant 0 : i32
    %c0_i32_0 = arith.constant 0 : i32
    %c0_i32_1 = arith.constant 0 : i32
    return %c0_i32, %c0_i32_0 : i32, i32
  }
  func.func @transform_4(%arg0: i32) -> (i32, i32, i32, i32) {
    %c0_i32 = arith.constant 0 : i32
    %c0_i32_0 = arith.constant 0 : i32
    %c0_i32_1 = arith.constant 0 : i32
    %c0_i32_2 = arith.constant 0 : i32
    %c0_i32_3 = arith.constant 0 : i32
    return %c0_i32, %c0_i32_0, %c0_i32_1, %c0_i32_2 : i32, i32, i32, i32
  }
  func.func @transform_5(%arg0: i32) -> (i32, i32) {
    %c0_i32 = arith.constant 0 : i32
    %c0_i32_0 = arith.constant 0 : i32
    %c0_i32_1 = arith.constant 0 : i32
    return %c0_i32, %c0_i32_0 : i32, i32
  }
  func.func @transform_6(%arg0: i32) -> (i32, i32) {
    %c0_i32 = arith.constant 0 : i32
    %c0_i32_0 = arith.constant 0 : i32
    %c0_i32_1 = arith.constant 0 : i32
    return %c0_i32, %c0_i32_0 : i32, i32
  }
  func.func @transform_7(%arg0: i32) -> (i32, i32) {
    %c0_i32 = arith.constant 0 : i32
    %c0_i32_0 = arith.constant 0 : i32
    %c0_i32_1 = arith.constant 0 : i32
    return %c0_i32, %c0_i32_0 : i32, i32
  }
  func.func @transform_8(%arg0: i32) -> (i32, i32) {
    %c0_i32 = arith.constant 0 : i32
    %c0_i32_0 = arith.constant 0 : i32
    %c0_i32_1 = arith.constant 0 : i32
    return %c0_i32, %c0_i32_0 : i32, i32
  }
  func.func @transform_9(%arg0: i32) -> (i32, i32) {
    %c0_i32 = arith.constant 0 : i32
    %c0_i32_0 = arith.constant 0 : i32
    %c0_i32_1 = arith.constant 0 : i32
    return %c0_i32, %c0_i32_0 : i32, i32
  }
  func.func @transform_10(%arg0: i32) -> (i32, i32) {
    %c0_i32 = arith.constant 0 : i32
    %c0_i32_0 = arith.constant 0 : i32
    return %arg0, %c0_i32 : i32, i32
  }
}

</mosaic_0001>

<llo_original>
// kernel: resb3d_forward.1
$region0: #{resb3d_forward.1}
  #allocation0 [shape = 'u32[]', space=smem, size = 0x4, offset = 0x4, fixed_abs, tag = 'smem constant byte address 0x4 - core index']
  #allocation1 [shape = 'u32[144,128]{1,0:T(1,128)}', space=vmem, size = 0x12000, scoped, tag = 'internal scratch']
  #allocation2 [shape = 'bf16[2,11,10,256]{3,2,1,0:T(8,128)(2,1)}', space=vmem, size = 0x2c000, scoped, tag = 'scratch operand']
  %s0 = inlined_call_operand.vmem [shape: bf16[2,11,10,256], index: 0, kind: input, shape index: {}]
  %s1 = inlined_call_operand.vmem [shape: f32[144,256], index: 1, kind: input, shape index: {}]
  %s2 = inlined_call_operand.vmem [shape: bf16[3,3,256,256], index: 2, kind: input, shape index: {}]
  %s3 = inlined_call_operand.vmem [shape: f32[1,256], index: 3, kind: input, shape index: {}]
  %s4 = inlined_call_operand.vmem [shape: bf16[3,3,256,256], index: 4, kind: input, shape index: {}]
  %s5 = inlined_call_operand.vmem [shape: f32[1,256], index: 5, kind: input, shape index: {}]
  %s6 = inlined_call_operand.vmem [shape: f32[2,32], index: 6, kind: input, shape index: {}]
  %s7 = inlined_call_operand.vmem [shape: f32[1,2], index: 7, kind: input, shape index: {}]
  %s8 = inlined_call_operand.vmem [shape: f32[2,32], index: 8, kind: input, shape index: {}]
  %s9 = inlined_call_operand.vmem [shape: f32[1,32], index: 9, kind: input, shape index: {}]
  %s10 = inlined_call_operand.vmem [shape: f32[144,256], index: 10, kind: output, shape index: {}]
  %s11 = sld [smem:[#allocation0]]
  $region50: #{resb3d_forward.1} parent=0
    _
  %s13 = ssub.s32 1, %s11
  %s14 = scalar_select 0, %s13, %s11
  // Predicated region
  $region2: #{resb3d_forward.1} parent=0 // pred_check
    _
  $region3: #{resb3d_forward.1} parent=0 // pred_check_branch
    %16 = sbr.rel (0) target = $region5
  $region4: #{resb3d_forward.1} parent=0 // pred_region
    _
  $region5: #{resb3d_forward.1} parent=0 // pred_fallthru
    _
  // Predicated region
  $region6: #{resb3d_forward.1} parent=0 // pred_check
    _
  $region7: #{resb3d_forward.1} parent=0 // pred_check_branch
    %18 = sbr.rel (0) target = $region9
  $region8: #{resb3d_forward.1} parent=0 // pred_region
    _
  $region9: #{resb3d_forward.1} parent=0 // pred_fallthru
    _
  // Predicated region
  $region10: #{resb3d_forward.1} parent=0 // pred_check
    _
  $region11: #{resb3d_forward.1} parent=0 // pred_check_branch
    %20 = sbr.rel (0) target = $region13
  $region12: #{resb3d_forward.1} parent=0 // pred_region
    _
  $region13: #{resb3d_forward.1} parent=0 // pred_fallthru
    _
  // Predicated region
  $region14: #{resb3d_forward.1} parent=0 // pred_check
    _
  $region15: #{resb3d_forward.1} parent=0 // pred_check_branch
    %22 = sbr.rel (0) target = $region17
  $region16: #{resb3d_forward.1} parent=0 // pred_region
    _
  $region17: #{resb3d_forward.1} parent=0 // pred_fallthru
    _
  // Predicated region
  $region18: #{resb3d_forward.1} parent=0 // pred_check
    _
  $region19: #{resb3d_forward.1} parent=0 // pred_check_branch
    %24 = sbr.rel (0) target = $region21
  $region20: #{resb3d_forward.1} parent=0 // pred_region
    _
  $region21: #{resb3d_forward.1} parent=0 // pred_fallthru
    _
  // Predicated region
  $region22: #{resb3d_forward.1} parent=0 // pred_check
    _
  $region23: #{resb3d_forward.1} parent=0 // pred_check_branch
    %26 = sbr.rel (0) target = $region25
  $region24: #{resb3d_forward.1} parent=0 // pred_region
    _
  $region25: #{resb3d_forward.1} parent=0 // pred_fallthru
    _
  // Predicated region
  $region26: #{resb3d_forward.1} parent=0 // pred_check
    _
  $region27: #{resb3d_forward.1} parent=0 // pred_check_branch
    %28 = sbr.rel (0) target = $region29
  $region28: #{resb3d_forward.1} parent=0 // pred_region
    _
  $region29: #{resb3d_forward.1} parent=0 // pred_fallthru
    _
  // Predicated region
  $region30: #{resb3d_forward.1} parent=0 // pred_check
    _
  $region31: #{resb3d_forward.1} parent=0 // pred_check_branch
    %30 = sbr.rel (0) target = $region33
  $region32: #{resb3d_forward.1} parent=0 // pred_region
    _
  $region33: #{resb3d_forward.1} parent=0 // pred_fallthru
    _
  // Predicated region
  $region34: #{resb3d_forward.1} parent=0 // pred_check
    _
  $region35: #{resb3d_forward.1} parent=0 // pred_check_branch
    %32 = sbr.rel (0) target = $region37
  $region36: #{resb3d_forward.1} parent=0 // pred_region
    _
  $region37: #{resb3d_forward.1} parent=0 // pred_fallthru
    _
  // Predicated region
  $region38: #{resb3d_forward.1} parent=0 // pred_check
    _
  $region39: #{resb3d_forward.1} parent=0 // pred_check_branch
    %34 = sbr.rel (0) target = $region41
  $region40: #{resb3d_forward.1} parent=0 // pred_region
    _
  $region41: #{resb3d_forward.1} parent=0 // pred_fallthru
    _
  %v36 = vld [vmem:[%s0] sm:$0xff]
  %v37 = vld [vmem:[%s0 + $0x10] sm:$0xff]
  %v38 = vld [vmem:[%s0 + $0x20] sm:$0xff]
  %v39 = vld [vmem:[%s0 + $0x30] sm:$0xff]
  %v40 = vld [vmem:[%s0 + $0x40] sm:$0xff]
  %v41 = vld [vmem:[%s0 + $0x50] sm:$0xff]
  %v42 = vld [vmem:[%s0 + $0x60] sm:$0xff]
  %v43 = vld [vmem:[%s0 + $0x70] sm:$0xff]
  %v44 = vld [vmem:[%s0 + $0x80] sm:$0xff]
  %v45 = vld [vmem:[%s0 + $0xb0] sm:$0xff]
  %v46 = vld [vmem:[%s0 + $0xc0] sm:$0xff]
  %v47 = vld [vmem:[%s0 + $0xd0] sm:$0xff]
  %v48 = vld [vmem:[%s0 + $0xe0] sm:$0xff]
  %v49 = vld [vmem:[%s0 + $0xf0] sm:$0xff]
  %v50 = vld [vmem:[%s0 + $0x100] sm:$0xff]
  %v51 = vld [vmem:[%s0 + $0x110] sm:$0xff]
  %v52 = vld [vmem:[%s0 + $0x120] sm:$0xff]
  %v53 = vld [vmem:[%s0 + $0x130] sm:$0xff]
  %v54 = vld [vmem:[%s2] sm:$0xff]
  %v55 = vld [vmem:[%s2 + $0x8] sm:$0xff]
  %v56 = vld [vmem:[%s2 + $0x10] sm:$0xff]
  %v57 = vld [vmem:[%s2 + $0x18] sm:$0xff]
  %v58 = vld [vmem:[%s2 + $0x20] sm:$0xff]
  %v59 = vld [vmem:[%s2 + $0x28] sm:$0xff]
  %v60 = vld [vmem:[%s2 + $0x30] sm:$0xff]
  %v61 = vld [vmem:[%s2 + $0x38] sm:$0xff]
  %v62 = vld [vmem:[%s2 + $0x40] sm:$0xff]
  %v63 = vld [vmem:[%s2 + $0x48] sm:$0xff]
  %v64 = vld [vmem:[%s2 + $0x50] sm:$0xff]
  %v65 = vld [vmem:[%s2 + $0x58] sm:$0xff]
  %v66 = vld [vmem:[%s2 + $0x60] sm:$0xff]
  %v67 = vld [vmem:[%s2 + $0x68] sm:$0xff]
  %v68 = vld [vmem:[%s2 + $0x70] sm:$0xff]
  %v69 = vld [vmem:[%s2 + $0x78] sm:$0xff]
  %v70 = vld [vmem:[%s2 + $0x80] sm:$0xff]
  %v71 = vld [vmem:[%s2 + $0x88] sm:$0xff]
  %v72 = vld [vmem:[%s2 + $0x90] sm:$0xff]
  %v73 = vld [vmem:[%s2 + $0x98] sm:$0xff]
  %v74 = vld [vmem:[%s2 + $0xa0] sm:$0xff]
  %v75 = vld [vmem:[%s2 + $0xa8] sm:$0xff]
  %v76 = vld [vmem:[%s2 + $0xb0] sm:$0xff]
  %v77 = vld [vmem:[%s2 + $0xb8] sm:$0xff]
  %v78 = vld [vmem:[%s2 + $0xc0] sm:$0xff]
  %v79 = vld [vmem:[%s2 + $0xc8] sm:$0xff]
  %v80 = vld [vmem:[%s2 + $0xd0] sm:$0xff]
  %v81 = vld [vmem:[%s2 + $0xd8] sm:$0xff]
  %v82 = vld [vmem:[%s2 + $0xe0] sm:$0xff]
  %v83 = vld [vmem:[%s2 + $0xe8] sm:$0xff]
  %v84 = vld [vmem:[%s2 + $0xf0] sm:$0xff]
  %v85 = vld [vmem:[%s2 + $0xf8] sm:$0xff]
  %v86 = vld [vmem:[%s0 + $0x8] sm:$0x11]
  %v87 = vld [vmem:[%s0 + $0x18] sm:$0x11]
  %v88 = vld [vmem:[%s0 + $0x28] sm:$0x11]
  %v89 = vld [vmem:[%s0 + $0x38] sm:$0x11]
  %v90 = vld [vmem:[%s0 + $0x48] sm:$0x11]
  %v91 = vld [vmem:[%s0 + $0x58] sm:$0x11]
  %v92 = vld [vmem:[%s0 + $0x68] sm:$0x11]
  %v93 = vld [vmem:[%s0 + $0x78] sm:$0x11]
  %v94 = vld [vmem:[%s0 + $0x88] sm:$0x11]
  %v95 = vld [vmem:[%s0 + $0xb8] sm:$0x11]
  %v96 = vld [vmem:[%s0 + $0xc8] sm:$0x11]
  %v97 = vld [vmem:[%s0 + $0xd8] sm:$0x11]
  %v98 = vld [vmem:[%s0 + $0xe8] sm:$0x11]
  %v99 = vld [vmem:[%s0 + $0xf8] sm:$0x11]
  %v100 = vld [vmem:[%s0 + $0x108] sm:$0x11]
  %v101 = vld [vmem:[%s0 + $0x118] sm:$0x11]
  %v102 = vld [vmem:[%s0 + $0x128] sm:$0x11]
  %v103 = vld [vmem:[%s0 + $0x138] sm:$0x11]
  %vm104 = vsmask.f32 3328
  %vm105 = vsmask.f32 7440
  %vm106 = vmor %vm104, %vm105
  %v108 = vshrl.u32 %v36, 16
  %v110 = vrot.slane %v108, 4
  %v111 = vshll.u32 %v36, 16
  %v113 = vrot.slane %v111, 5
  %v114 = vor.u32 %v110, %v113
  %v115 = vrot.slane %v114, 4
  %v117 = vshll.u32 %v86, 16
  %v119 = vrot.slane %v117, 5
  %v120 = vsel %vm106, %v115, %v119
  %v122 = vshrl.u32 %v37, 16
  %v124 = vrot.slane %v122, 4
  %v125 = vshll.u32 %v37, 16
  %v127 = vrot.slane %v125, 5
  %v128 = vor.u32 %v124, %v127
  %v129 = vrot.slane %v128, 4
  %v131 = vshll.u32 %v87, 16
  %v133 = vrot.slane %v131, 5
  %v134 = vsel %vm106, %v129, %v133
  %v136 = vshrl.u32 %v38, 16
  %v138 = vrot.slane %v136, 4
  %v139 = vshll.u32 %v38, 16
  %v141 = vrot.slane %v139, 5
  %v142 = vor.u32 %v138, %v141
  %v143 = vrot.slane %v142, 4
  %v145 = vshll.u32 %v88, 16
  %v147 = vrot.slane %v145, 5
  %v148 = vsel %vm106, %v143, %v147
  %v150 = vshrl.u32 %v39, 16
  %v152 = vrot.slane %v150, 4
  %v153 = vshll.u32 %v39, 16
  %v155 = vrot.slane %v153, 5
  %v156 = vor.u32 %v152, %v155
  %v157 = vrot.slane %v156, 4
  %v159 = vshll.u32 %v89, 16
  %v161 = vrot.slane %v159, 5
  %v162 = vsel %vm106, %v157, %v161
  %v164 = vshrl.u32 %v40, 16
  %v166 = vrot.slane %v164, 4
  %v167 = vshll.u32 %v40, 16
  %v169 = vrot.slane %v167, 5
  %v170 = vor.u32 %v166, %v169
  %v171 = vrot.slane %v170, 4
  %v173 = vshll.u32 %v90, 16
  %v175 = vrot.slane %v173, 5
  %v176 = vsel %vm106, %v171, %v175
  %v178 = vshrl.u32 %v41, 16
  %v180 = vrot.slane %v178, 4
  %v181 = vshll.u32 %v41, 16
  %v183 = vrot.slane %v181, 5
  %v184 = vor.u32 %v180, %v183
  %v185 = vrot.slane %v184, 4
  %v187 = vshll.u32 %v91, 16
  %v189 = vrot.slane %v187, 5
  %v190 = vsel %vm106, %v185, %v189
  %v192 = vshrl.u32 %v42, 16
  %v194 = vrot.slane %v192, 4
  %v195 = vshll.u32 %v42, 16
  %v197 = vrot.slane %v195, 5
  %v198 = vor.u32 %v194, %v197
  %v199 = vrot.slane %v198, 4
  %v201 = vshll.u32 %v92, 16
  %v203 = vrot.slane %v201, 5
  %v204 = vsel %vm106, %v199, %v203
  %v206 = vshrl.u32 %v43, 16
  %v208 = vrot.slane %v206, 4
  %v209 = vshll.u32 %v43, 16
  %v211 = vrot.slane %v209, 5
  %v212 = vor.u32 %v208, %v211
  %v213 = vrot.slane %v212, 4
  %v215 = vshll.u32 %v93, 16
  %v217 = vrot.slane %v215, 5
  %v218 = vsel %vm106, %v213, %v217
  %v220 = vshrl.u32 %v44, 16
  %v222 = vrot.slane %v220, 4
  %v223 = vshll.u32 %v44, 16
  %v225 = vrot.slane %v223, 5
  %v226 = vor.u32 %v222, %v225
  %v227 = vrot.slane %v226, 4
  %v229 = vshll.u32 %v94, 16
  %v231 = vrot.slane %v229, 5
  %v232 = vsel %vm106, %v227, %v231
  %v234 = vshrl.u32 %v45, 16
  %v236 = vrot.slane %v234, 4
  %v237 = vshll.u32 %v45, 16
  %v239 = vrot.slane %v237, 5
  %v240 = vor.u32 %v236, %v239
  %v241 = vrot.slane %v240, 4
  %v243 = vshll.u32 %v95, 16
  %v245 = vrot.slane %v243, 5
  %v246 = vsel %vm106, %v241, %v245
  %v248 = vshrl.u32 %v46, 16
  %v250 = vrot.slane %v248, 4
  %v251 = vshll.u32 %v46, 16
  %v253 = vrot.slane %v251, 5
  %v254 = vor.u32 %v250, %v253
  %v255 = vrot.slane %v254, 4
  %v257 = vshll.u32 %v96, 16
  %v259 = vrot.slane %v257, 5
  %v260 = vsel %vm106, %v255, %v259
  %v262 = vshrl.u32 %v47, 16
  %v264 = vrot.slane %v262, 4
  %v265 = vshll.u32 %v47, 16
  %v267 = vrot.slane %v265, 5
  %v268 = vor.u32 %v264, %v267
  %v269 = vrot.slane %v268, 4
  %v271 = vshll.u32 %v97, 16
  %v273 = vrot.slane %v271, 5
  %v274 = vsel %vm106, %v269, %v273
  %v276 = vshrl.u32 %v48, 16
  %v278 = vrot.slane %v276, 4
  %v279 = vshll.u32 %v48, 16
  %v281 = vrot.slane %v279, 5
  %v282 = vor.u32 %v278, %v281
  %v283 = vrot.slane %v282, 4
  %v285 = vshll.u32 %v98, 16
  %v287 = vrot.slane %v285, 5
  %v288 = vsel %vm106, %v283, %v287
  %v290 = vshrl.u32 %v49, 16
  %v292 = vrot.slane %v290, 4
  %v293 = vshll.u32 %v49, 16
  %v295 = vrot.slane %v293, 5
  %v296 = vor.u32 %v292, %v295
  %v297 = vrot.slane %v296, 4
  %v299 = vshll.u32 %v99, 16
  %v301 = vrot.slane %v299, 5
  %v302 = vsel %vm106, %v297, %v301
  %v304 = vshrl.u32 %v50, 16
  %v306 = vrot.slane %v304, 4
  %v307 = vshll.u32 %v50, 16
  %v309 = vrot.slane %v307, 5
  %v310 = vor.u32 %v306, %v309
  %v311 = vrot.slane %v310, 4
  %v313 = vshll.u32 %v100, 16
  %v315 = vrot.slane %v313, 5
  %v316 = vsel %vm106, %v311, %v315
  %v318 = vshrl.u32 %v51, 16
  %v320 = vrot.slane %v318, 4
  %v321 = vshll.u32 %v51, 16
  %v323 = vrot.slane %v321, 5
  %v324 = vor.u32 %v320, %v323
  %v325 = vrot.slane %v324, 4
  %v327 = vshll.u32 %v101, 16
  %v329 = vrot.slane %v327, 5
  %v330 = vsel %vm106, %v325, %v329
  %v332 = vshrl.u32 %v52, 16
  %v334 = vrot.slane %v332, 4
  %v335 = vshll.u32 %v52, 16
  %v337 = vrot.slane %v335, 5
  %v338 = vor.u32 %v334, %v337
  %v339 = vrot.slane %v338, 4
  %v341 = vshll.u32 %v102, 16
  %v343 = vrot.slane %v341, 5
  %v344 = vsel %vm106, %v339, %v343
  %v346 = vshrl.u32 %v53, 16
  %v348 = vrot.slane %v346, 4
  %v349 = vshll.u32 %v53, 16
  %v351 = vrot.slane %v349, 5
  %v352 = vor.u32 %v348, %v351
  %v353 = vrot.slane %v352, 4
  %v355 = vshll.u32 %v103, 16
  %v357 = vrot.slane %v355, 5
  %v358 = vsel %vm106, %v353, %v357
  %s359 = scalar_lea.vmem %s2, 256
  %v360 = vld [vmem:[%s359] sm:$0xff]
  %v361 = vld [vmem:[%s359 + $0x8] sm:$0xff]
  %v362 = vld [vmem:[%s359 + $0x10] sm:$0xff]
  %v363 = vld [vmem:[%s359 + $0x18] sm:$0xff]
  %v364 = vld [vmem:[%s359 + $0x20] sm:$0xff]
  %v365 = vld [vmem:[%s359 + $0x28] sm:$0xff]
  %v366 = vld [vmem:[%s359 + $0x30] sm:$0xff]
  %v367 = vld [vmem:[%s359 + $0x38] sm:$0xff]
  %v368 = vld [vmem:[%s359 + $0x40] sm:$0xff]
  %v369 = vld [vmem:[%s359 + $0x48] sm:$0xff]
  %v370 = vld [vmem:[%s359 + $0x50] sm:$0xff]
  %v371 = vld [vmem:[%s359 + $0x58] sm:$0xff]
  %v372 = vld [vmem:[%s359 + $0x60] sm:$0xff]
  %v373 = vld [vmem:[%s359 + $0x68] sm:$0xff]
  %v374 = vld [vmem:[%s359 + $0x70] sm:$0xff]
  %v375 = vld [vmem:[%s359 + $0x78] sm:$0xff]
  %v376 = vld [vmem:[%s359 + $0x80] sm:$0xff]
  %v377 = vld [vmem:[%s359 + $0x88] sm:$0xff]
  %v378 = vld [vmem:[%s359 + $0x90] sm:$0xff]
  %v379 = vld [vmem:[%s359 + $0x98] sm:$0xff]
  %v380 = vld [vmem:[%s359 + $0xa0] sm:$0xff]
  %v381 = vld [vmem:[%s359 + $0xa8] sm:$0xff]
  %v382 = vld [vmem:[%s359 + $0xb0] sm:$0xff]
  %v383 = vld [vmem:[%s359 + $0xb8] sm:$0xff]
  %v384 = vld [vmem:[%s359 + $0xc0] sm:$0xff]
  %v385 = vld [vmem:[%s359 + $0xc8] sm:$0xff]
  %v386 = vld [vmem:[%s359 + $0xd0] sm:$0xff]
  %v387 = vld [vmem:[%s359 + $0xd8] sm:$0xff]
  %v388 = vld [vmem:[%s359 + $0xe0] sm:$0xff]
  %v389 = vld [vmem:[%s359 + $0xe8] sm:$0xff]
  %v390 = vld [vmem:[%s359 + $0xf0] sm:$0xff]
  %v391 = vld [vmem:[%s359 + $0xf8] sm:$0xff]
  %v392 = vunpack.c.l.b16 %v120
  %v393 = vunpack.c.h.b16 %v120
  %v394 = vunpack.c.l.b16 %v134
  %v395 = vunpack.c.h.b16 %v134
  %v396 = vunpack.c.l.b16 %v148
  %v397 = vunpack.c.h.b16 %v148
  %v398 = vunpack.c.l.b16 %v162
  %v399 = vunpack.c.h.b16 %v162
  %v400 = vunpack.c.l.b16 %v176
  %v401 = vunpack.c.h.b16 %v176
  %v402 = vunpack.c.l.b16 %v190
  %v403 = vunpack.c.h.b16 %v190
  %v404 = vunpack.c.l.b16 %v204
  %v405 = vunpack.c.h.b16 %v204
  %v406 = vunpack.c.l.b16 %v218
  %v407 = vunpack.c.h.b16 %v218
  %v408 = vunpack.c.l.b16 %v232
  %v409 = vunpack.c.h.b16 %v232
  %v410 = vunpack.c.l.b16 %v246
  %v411 = vunpack.c.h.b16 %v246
  %v412 = vunpack.c.l.b16 %v260
  %v413 = vunpack.c.h.b16 %v260
  %v414 = vunpack.c.l.b16 %v274
  %v415 = vunpack.c.h.b16 %v274
  %v416 = vunpack.c.l.b16 %v288
  %v417 = vunpack.c.h.b16 %v288
  %v418 = vunpack.c.l.b16 %v302
  %v419 = vunpack.c.h.b16 %v302
  %v420 = vunpack.c.l.b16 %v316
  %v421 = vunpack.c.h.b16 %v316
  %v422 = vunpack.c.l.b16 %v330
  %v423 = vunpack.c.h.b16 %v330
  %v424 = vunpack.c.l.b16 %v344
  %v425 = vunpack.c.h.b16 %v344
  %v426 = vunpack.c.l.b16 %v358
  %v427 = vunpack.c.h.b16 %v358
  %v428 = vpack.c.b16 %v394, %v392
  %v429 = vpack.c.b16 %v395, %v393
  %v430 = vpack.c.b16 %v398, %v396
  %v431 = vpack.c.b16 %v399, %v397
  %v432 = vpack.c.b16 %v402, %v400
  %v433 = vpack.c.b16 %v403, %v401
  %v434 = vpack.c.b16 %v406, %v404
  %v435 = vpack.c.b16 %v407, %v405
  %v436 = vpack.c.b16 %v410, %v408
  %v437 = vpack.c.b16 %v411, %v409
  %v438 = vpack.c.b16 %v414, %v412
  %v439 = vpack.c.b16 %v415, %v413
  %v440 = vpack.c.b16 %v418, %v416
  %v441 = vpack.c.b16 %v419, %v417
  %v442 = vpack.c.b16 %v422, %v420
  %v443 = vpack.c.b16 %v423, %v421
  %v444 = vpack.c.b16 %v426, %v424
  %v445 = vpack.c.b16 %v427, %v425
  %v496 = vunpack.c.l.b16 %v360
  %v497 = vunpack.c.h.b16 %v360
  %v498 = vunpack.c.l.b16 %v361
  %v499 = vunpack.c.h.b16 %v361
  %v500 = vunpack.c.l.b16 %v362
  %v501 = vunpack.c.h.b16 %v362
  %v502 = vunpack.c.l.b16 %v363
  %v503 = vunpack.c.h.b16 %v363
  %v504 = vunpack.c.l.b16 %v364
  %v505 = vunpack.c.h.b16 %v364
  %v506 = vunpack.c.l.b16 %v365
  %v507 = vunpack.c.h.b16 %v365
  %v508 = vunpack.c.l.b16 %v366
  %v509 = vunpack.c.h.b16 %v366
  %v510 = vunpack.c.l.b16 %v367
  %v511 = vunpack.c.h.b16 %v367
  %v512 = vunpack.c.l.b16 %v368
  %v513 = vunpack.c.h.b16 %v368
  %v514 = vunpack.c.l.b16 %v369
  %v515 = vunpack.c.h.b16 %v369
  %v516 = vunpack.c.l.b16 %v370
  %v517 = vunpack.c.h.b16 %v370
  %v518 = vunpack.c.l.b16 %v371
  %v519 = vunpack.c.h.b16 %v371
  %v520 = vunpack.c.l.b16 %v372
  %v521 = vunpack.c.h.b16 %v372
  %v522 = vunpack.c.l.b16 %v373
  %v523 = vunpack.c.h.b16 %v373
  %v524 = vunpack.c.l.b16 %v374
  %v525 = vunpack.c.h.b16 %v374
  %v526 = vunpack.c.l.b16 %v375
  %v527 = vunpack.c.h.b16 %v375
  %v528 = vunpack.c.l.b16 %v376
  %v529 = vunpack.c.h.b16 %v376
  %v530 = vunpack.c.l.b16 %v377
  %v531 = vunpack.c.h.b16 %v377
  %v532 = vunpack.c.l.b16 %v378
  %v533 = vunpack.c.h.b16 %v378
  %v534 = vunpack.c.l.b16 %v379
  %v535 = vunpack.c.h.b16 %v379
  %v536 = vunpack.c.l.b16 %v380
  %v537 = vunpack.c.h.b16 %v380
  %v538 = vunpack.c.l.b16 %v381
  %v539 = vunpack.c.h.b16 %v381
  %v540 = vunpack.c.l.b16 %v382
  %v541 = vunpack.c.h.b16 %v382
  %v542 = vunpack.c.l.b16 %v383
  %v543 = vunpack.c.h.b16 %v383
  %v544 = vunpack.c.l.b16 %v384
  %v545 = vunpack.c.h.b16 %v384
  %v546 = vunpack.c.l.b16 %v385
  %v547 = vunpack.c.h.b16 %v385
  %v548 = vunpack.c.l.b16 %v386
  %v549 = vunpack.c.h.b16 %v386
  %v550 = vunpack.c.l.b16 %v387
  %v551 = vunpack.c.h.b16 %v387
  %v552 = vunpack.c.l.b16 %v388
  %v553 = vunpack.c.h.b16 %v388
  %v554 = vunpack.c.l.b16 %v389
  %v555 = vunpack.c.h.b16 %v389
  %v556 = vunpack.c.l.b16 %v390
  %v557 = vunpack.c.h.b16 %v390
  %v558 = vunpack.c.l.b16 %v391
  %v559 = vunpack.c.h.b16 %v391
  %v560 = vpack.c.b16 %v498, %v496
  %v561 = vpack.c.b16 %v499, %v497
  %v562 = vpack.c.b16 %v502, %v500
  %v563 = vpack.c.b16 %v503, %v501
  %v564 = vpack.c.b16 %v506, %v504
  %v565 = vpack.c.b16 %v507, %v505
  %v566 = vpack.c.b16 %v510, %v508
  %v567 = vpack.c.b16 %v511, %v509
  %v568 = vpack.c.b16 %v514, %v512
  %v569 = vpack.c.b16 %v515, %v513
  %v570 = vpack.c.b16 %v518, %v516
  %v571 = vpack.c.b16 %v519, %v517
  %v572 = vpack.c.b16 %v522, %v520
  %v573 = vpack.c.b16 %v523, %v521
  %v574 = vpack.c.b16 %v526, %v524
  %v575 = vpack.c.b16 %v527, %v525
  %v576 = vpack.c.b16 %v530, %v528
  %v577 = vpack.c.b16 %v531, %v529
  %v578 = vpack.c.b16 %v534, %v532
  %v579 = vpack.c.b16 %v535, %v533
  %v580 = vpack.c.b16 %v538, %v536
  %v581 = vpack.c.b16 %v539, %v537
  %v582 = vpack.c.b16 %v542, %v540
  %v583 = vpack.c.b16 %v543, %v541
  %v584 = vpack.c.b16 %v546, %v544
  %v585 = vpack.c.b16 %v547, %v545
  %v586 = vpack.c.b16 %v550, %v548
  %v587 = vpack.c.b16 %v551, %v549
  %v588 = vpack.c.b16 %v554, %v552
  %v589 = vpack.c.b16 %v555, %v553
  %v590 = vpack.c.b16 %v558, %v556
  %v591 = vpack.c.b16 %v559, %v557
  %624 = vmatprep.subr.bf16.mxu0 %v561
  %625 = vmatpush1.bf16.msra.mxu0 %v560
  %626 = vmatprep.subr.bf16.mxu0 %v563
  %627 = vmatpush1.bf16.msra.mxu0 %v562
  %628 = vmatprep.subr.bf16.mxu0 %v565
  %629 = vmatpush1.bf16.msra.mxu0 %v564
  %630 = vmatprep.subr.bf16.mxu0 %v567
  %631 = vmatpush1.bf16.msra.mxu0 %v566
  %632 = vmatprep.subr.bf16.mxu0 %v569
  %633 = vmatpush1.bf16.msra.mxu0 %v568
  %634 = vmatprep.subr.bf16.mxu0 %v571
  %635 = vmatpush1.bf16.msra.mxu0 %v570
  %636 = vmatprep.subr.bf16.mxu0 %v573
  %637 = vmatpush1.bf16.msra.mxu0 %v572
  %638 = vmatprep.subr.bf16.mxu0 %v575
  %639 = vmatpush1.bf16.msra.mxu0 %v574
  %640 = vmatprep.subr.bf16.mxu0 %v577
  %641 = vmatpush1.bf16.msra.mxu0 %v576
  %642 = vmatprep.subr.bf16.mxu0 %v579
  %643 = vmatpush1.bf16.msra.mxu0 %v578
  %644 = vmatprep.subr.bf16.mxu0 %v581
  %645 = vmatpush1.bf16.msra.mxu0 %v580
  %646 = vmatprep.subr.bf16.mxu0 %v583
  %647 = vmatpush1.bf16.msra.mxu0 %v582
  %648 = vmatprep.subr.bf16.mxu0 %v585
  %649 = vmatpush1.bf16.msra.mxu0 %v584
  %650 = vmatprep.subr.bf16.mxu0 %v587
  %651 = vmatpush1.bf16.msra.mxu0 %v586
  %652 = vmatprep.subr.bf16.mxu0 %v589
  %653 = vmatpush1.bf16.msra.mxu0 %v588
  %654 = vmatprep.subr.bf16.mxu0 %v591
  %655 = vmatpush1.bf16.msra.mxu0 %v590
  %656 = vmatprep.mubr.bf16.mxu0 %v429
  %657 = vmatmul.mubr.bf16.gmra.mrb[0].mxu0 %v428
  %v658 = vpop.f32.mrb[0].mxu0
  %v659 = vadd.f32 0.0, %v658
  %v660 = vpop.f32.mrb[0].mxu0
  %v661 = vadd.f32 0.0, %v660
  %v662 = vpop.f32.mrb[0].mxu0
  %v663 = vadd.f32 0.0, %v662
  %v664 = vpop.f32.mrb[0].mxu0
  %v665 = vadd.f32 0.0, %v664
  %666 = vmatprep.mubr.bf16.mxu0 %v431
  %667 = vmatmul.mubr.bf16.gmra.mrb[0].mxu0 %v430
  %v668 = vpop.f32.mrb[0].mxu0
  %v669 = vadd.f32 0.0, %v668
  %v670 = vpop.f32.mrb[0].mxu0
  %v671 = vadd.f32 0.0, %v670
  %v672 = vpop.f32.mrb[0].mxu0
  %v673 = vadd.f32 0.0, %v672
  %v674 = vpop.f32.mrb[0].mxu0
  %v675 = vadd.f32 0.0, %v674
  %676 = vmatprep.mubr.bf16.mxu0 %v433
  %677 = vmatmul.mubr.bf16.gmra.mrb[0].mxu0 %v432
  %v678 = vpop.f32.mrb[0].mxu0
  %v679 = vadd.f32 0.0, %v678
  %v680 = vpop.f32.mrb[0].mxu0
  %v681 = vadd.f32 0.0, %v680
  %v682 = vpop.f32.mrb[0].mxu0
  %v683 = vadd.f32 0.0, %v682
  %v684 = vpop.f32.mrb[0].mxu0
  %v685 = vadd.f32 0.0, %v684
  %686 = vmatprep.mubr.bf16.mxu0 %v435
  %687 = vmatmul.mubr.bf16.gmra.mrb[0].mxu0 %v434
  %v688 = vpop.f32.mrb[0].mxu0
  %v689 = vadd.f32 0.0, %v688
  %v690 = vpop.f32.mrb[0].mxu0
  %v691 = vadd.f32 0.0, %v690
  %v692 = vpop.f32.mrb[0].mxu0
  %v693 = vadd.f32 0.0, %v692
  %v694 = vpop.f32.mrb[0].mxu0
  %v695 = vadd.f32 0.0, %v694
  %696 = vmatprep.mubr.bf16.mxu0 %v437
  %697 = vmatmul.mubr.bf16.gmra.mrb[0].mxu0 %v436
  %v698 = vpop.f32.mrb[0].mxu0
  %v699 = vadd.f32 0.0, %v698
  %v700 = vpop.f32.mrb[0].mxu0
  %v701 = vadd.f32 0.0, %v700
  %v702 = vpop.f32.mrb[0].mxu0
  %v703 = vadd.f32 0.0, %v702
  %v704 = vpop.f32.mrb[0].mxu0
  %v705 = vadd.f32 0.0, %v704
  %706 = vmatprep.mubr.bf16.mxu0 %v439
  %707 = vmatmul.mubr.bf16.gmra.mrb[0].mxu0 %v438
  %v708 = vpop.f32.mrb[0].mxu0
  %v709 = vadd.f32 0.0, %v708
  %v710 = vpop.f32.mrb[0].mxu0
  %v711 = vadd.f32 0.0, %v710
  %v712 = vpop.f32.mrb[0].mxu0
  %v713 = vadd.f32 0.0, %v712
  %v714 = vpop.f32.mrb[0].mxu0
  %v715 = vadd.f32 0.0, %v714
  %716 = vmatprep.mubr.bf16.mxu0 %v441
  %717 = vmatmul.mubr.bf16.gmra.mrb[0].mxu0 %v440
  %v718 = vpop.f32.mrb[0].mxu0
  %v719 = vadd.f32 0.0, %v718
  %v720 = vpop.f32.mrb[0].mxu0
  %v721 = vadd.f32 0.0, %v720
  %v722 = vpop.f32.mrb[0].mxu0
  %v723 = vadd.f32 0.0, %v722
  %v724 = vpop.f32.mrb[0].mxu0
  %v725 = vadd.f32 0.0, %v724
  %726 = vmatprep.mubr.bf16.mxu0 %v443
  %727 = vmatmul.mubr.bf16.gmra.mrb[0].mxu0 %v442
  %v728 = vpop.f32.mrb[0].mxu0
  %v729 = vadd.f32 0.0, %v728
  %v730 = vpop.f32.mrb[0].mxu0
  %v731 = vadd.f32 0.0, %v730
  %v732 = vpop.f32.mrb[0].mxu0
  %v733 = vadd.f32 0.0, %v732
  %v734 = vpop.f32.mrb[0].mxu0
  %v735 = vadd.f32 0.0, %v734
  %736 = vmatprep.mubr.bf16.mxu0 %v445
  %737 = vmatmul.mubr.bf16.gmra.mrb[0].mxu0 %v444
  %v738 = vpop.f32.mrb[0].mxu0
  %v739 = vadd.f32 0.0, %v738
  %v740 = vpop.f32.mrb[0].mxu0
  %v741 = vadd.f32 0.0, %v740
  %v742 = vpop.f32.mrb[0].mxu0
  %v743 = vadd.f32 0.0, %v742
  %v744 = vpop.f32.mrb[0].mxu0
  %v745 = vadd.f32 0.0, %v744
  %746 = vdwg.mxu0
  %v765 = vunpack.c.l.b16 %v36
  %v766 = vunpack.c.h.b16 %v36
  %v767 = vunpack.c.l.b16 %v37
  %v768 = vunpack.c.h.b16 %v37
  %v769 = vunpack.c.l.b16 %v38
  %v770 = vunpack.c.h.b16 %v38
  %v771 = vunpack.c.l.b16 %v39
  %v772 = vunpack.c.h.b16 %v39
  %v773 = vunpack.c.l.b16 %v40
  %v774 = vunpack.c.h.b16 %v40
  %v775 = vunpack.c.l.b16 %v41
  %v776 = vunpack.c.h.b16 %v41
  %v777 = vunpack.c.l.b16 %v42
  %v778 = vunpack.c.h.b16 %v42
  %v779 = vunpack.c.l.b16 %v43
  %v780 = vunpack.c.h.b16 %v43
  %v781 = vunpack.c.l.b16 %v44
  %v782 = vunpack.c.h.b16 %v44
  %v783 = vunpack.c.l.b16 %v45
  %v784 = vunpack.c.h.b16 %v45
  %v785 = vunpack.c.l.b16 %v46
  %v786 = vunpack.c.h.b16 %v46
  %v787 = vunpack.c.l.b16 %v47
  %v788 = vunpack.c.h.b16 %v47
  %v789 = vunpack.c.l.b16 %v48
  %v790 = vunpack.c.h.b16 %v48
  %v791 = vunpack.c.l.b16 %v49
  %v792 = vunpack.c.h.b16 %v49
  %v793 = vunpack.c.l.b16 %v50
  %v794 = vunpack.c.h.b16 %v50
  %v795 = vunpack.c.l.b16 %v51
  %v796 = vunpack.c.h.b16 %v51
  %v797 = vunpack.c.l.b16 %v52
  %v798 = vunpack.c.h.b16 %v52
  %v799 = vunpack.c.l.b16 %v53
  %v800 = vunpack.c.h.b16 %v53
  %v801 = vpack.c.b16 %v767, %v765
  %v802 = vpack.c.b16 %v768, %v766
  %v803 = vpack.c.b16 %v771, %v769
  %v804 = vpack.c.b16 %v772, %v770
  %v805 = vpack.c.b16 %v775, %v773
  %v806 = vpack.c.b16 %v776, %v774
  %v807 = vpack.c.b16 %v779, %v777
  %v808 = vpack.c.b16 %v780, %v778
  %v809 = vpack.c.b16 %v783, %v781
  %v810 = vpack.c.b16 %v784, %v782
  %v811 = vpack.c.b16 %v787, %v785
  %v812 = vpack.c.b16 %v788, %v786
  %v813 = vpack.c.b16 %v791, %v789
  %v814 = vpack.c.b16 %v792, %v790
  %v815 = vpack.c.b16 %v795, %v793
  %v816 = vpack.c.b16 %v796, %v794
  %v817 = vpack.c.b16 %v799, %v797
  %v818 = vpack.c.b16 %v800, %v798
  %v869 = vunpack.c.l.b16 %v54
  %v870 = vunpack.c.h.b16 %v54
  %v871 = vunpack.c.l.b16 %v55
  %v872 = vunpack.c.h.b16 %v55
  %v873 = vunpack.c.l.b16 %v56
  %v874 = vunpack.c.h.b16 %v56
  %v875 = vunpack.c.l.b16 %v57
  %v876 = vunpack.c.h.b16 %v57
  %v877 = vunpack.c.l.b16 %v58
  %v878 = vunpack.c.h.b16 %v58
  %v879 = vunpack.c.l.b16 %v59
  %v880 = vunpack.c.h.b16 %v59
  %v881 = vunpack.c.l.b16 %v60
  %v882 = vunpack.c.h.b16 %v60
  %v883 = vunpack.c.l.b16 %v61
  %v884 = vunpack.c.h.b16 %v61
  %v885 = vunpack.c.l.b16 %v62
  %v886 = vunpack.c.h.b16 %v62
  %v887 = vunpack.c.l.b16 %v63
  %v888 = vunpack.c.h.b16 %v63
  %v889 = vunpack.c.l.b16 %v64
  %v890 = vunpack.c.h.b16 %v64
  %v891 = vunpack.c.l.b16 %v65
  %v892 = vunpack.c.h.b16 %v65
  %v893 = vunpack.c.l.b16 %v66
  %v894 = vunpack.c.h.b16 %v66
  %v895 = vunpack.c.l.b16 %v67
  %v896 = vunpack.c.h.b16 %v67
  %v897 = vunpack.c.l.b16 %v68
  %v898 = vunpack.c.h.b16 %v68
  %v899 = vunpack.c.l.b16 %v69
  %v900 = vunpack.c.h.b16 %v69
  %v901 = vunpack.c.l.b16 %v70
  %v902 = vunpack.c.h.b16 %v70
  %v903 = vunpack.c.l.b16 %v71
  %v904 = vunpack.c.h.b16 %v71
  %v905 = vunpack.c.l.b16 %v72
  %v906 = vunpack.c.h.b16 %v72
  %v907 = vunpack.c.l.b16 %v73
  %v908 = vunpack.c.h.b16 %v73
  %v909 = vunpack.c.l.b16 %v74
  %v910 = vunpack.c.h.b16 %v74
  %v911 = vunpack.c.l.b16 %v75
  %v912 = vunpack.c.h.b16 %v75
  %v913 = vunpack.c.l.b16 %v76
  %v914 = vunpack.c.h.b16 %v76
  %v915 = vunpack.c.l.b16 %v77
  %v916 = vunpack.c.h.b16 %v77
  %v917 = vunpack.c.l.b16 %v78
  %v918 = vunpack.c.h.b16 %v78
  %v919 = vunpack.c.l.b16 %v79
  %v920 = vunpack.c.h.b16 %v79
  %v921 = vunpack.c.l.b16 %v80
  %v922 = vunpack.c.h.b16 %v80
  %v923 = vunpack.c.l.b16 %v81
  %v924 = vunpack.c.h.b16 %v81
  %v925 = vunpack.c.l.b16 %v82
  %v926 = vunpack.c.h.b16 %v82
  %v927 = vunpack.c.l.b16 %v83
  %v928 = vunpack.c.h.b16 %v83
  %v929 = vunpack.c.l.b16 %v84
  %v930 = vunpack.c.h.b16 %v84
  %v931 = vunpack.c.l.b16 %v85
  %v932 = vunpack.c.h.b16 %v85
  %v933 = vpack.c.b16 %v871, %v869
  %v934 = vpack.c.b16 %v872, %v870
  %v935 = vpack.c.b16 %v875, %v873
  %v936 = vpack.c.b16 %v876, %v874
  %v937 = vpack.c.b16 %v879, %v877
  %v938 = vpack.c.b16 %v880, %v878
  %v939 = vpack.c.b16 %v883, %v881
  %v940 = vpack.c.b16 %v884, %v882
  %v941 = vpack.c.b16 %v887, %v885
  %v942 = vpack.c.b16 %v888, %v886
  %v943 = vpack.c.b16 %v891, %v889
  %v944 = vpack.c.b16 %v892, %v890
  %v945 = vpack.c.b16 %v895, %v893
  %v946 = vpack.c.b16 %v896, %v894
  %v947 = vpack.c.b16 %v899, %v897
  %v948 = vpack.c.b16 %v900, %v898
  %v949 = vpack.c.b16 %v903, %v901
  %v950 = vpack.c.b16 %v904, %v902
  %v951 = vpack.c.b16 %v907, %v905
  %v952 = vpack.c.b16 %v908, %v906
  %v953 = vpack.c.b16 %v911, %v909
  %v954 = vpack.c.b16 %v912, %v910
  %v955 = vpack.c.b16 %v915, %v913
  %v956 = vpack.c.b16 %v916, %v914
  %v957 = vpack.c.b16 %v919, %v917
  %v958 = vpack.c.b16 %v920, %v918
  %v959 = vpack.c.b16 %v923, %v921
  %v960 = vpack.c.b16 %v924, %v922
  %v961 = vpack.c.b16 %v927, %v925
  %v962 = vpack.c.b16 %v928, %v926
  %v963 = vpack.c.b16 %v931, %v929
  %v964 = vpack.c.b16 %v932, %v930
  %997 = vmatprep.subr.bf16.mxu0 %v934
  %998 = vmatpush1.bf16.msra.mxu0 %v933
  %999 = vmatprep.subr.bf16.mxu0 %v936
  %1000 = vmatpush1.bf16.msra.mxu0 %v935
  %1001 = vmatprep.subr.bf16.mxu0 %v938
  %1002 = vmatpush1.bf16.msra.mxu0 %v937
  %1003 = vmatprep.subr.bf16.mxu0 %v940
  %1004 = vmatpush1.bf16.msra.mxu0 %v939
  %1005 = vmatprep.subr.bf16.mxu0 %v942
  %1006 = vmatpush1.bf16.msra.mxu0 %v941
  %1007 = vmatprep.subr.bf16.mxu0 %v944
  %1008 = vmatpush1.bf16.msra.mxu0 %v943
  %1009 = vmatprep.subr.bf16.mxu0 %v946
  %1010 = vmatpush1.bf16.msra.mxu0 %v945
  %1011 = vmatprep.subr.bf16.mxu0 %v948
  %1012 = vmatpush1.bf16.msra.mxu0 %v947
  %1013 = vmatprep.subr.bf16.mxu0 %v950
  %1014 = vmatpush1.bf16.msra.mxu0 %v949
  %1015 = vmatprep.subr.bf16.mxu0 %v952
  %1016 = vmatpush1.bf16.msra.mxu0 %v951
  %1017 = vmatprep.subr.bf16.mxu0 %v954
  %1018 = vmatpush1.bf16.msra.mxu0 %v953
  %1019 = vmatprep.subr.bf16.mxu0 %v956
  %1020 = vmatpush1.bf16.msra.mxu0 %v955
  %1021 = vmatprep.subr.bf16.mxu0 %v958
  %1022 = vmatpush1.bf16.msra.mxu0 %v957
  %1023 = vmatprep.subr.bf16.mxu0 %v960
  %1024 = vmatpush1.bf16.msra.mxu0 %v959
  %1025 = vmatprep.subr.bf16.mxu0 %v962
  %1026 = vmatpush1.bf16.msra.mxu0 %v961
  %1027 = vmatprep.subr.bf16.mxu0 %v964
  %1028 = vmatpush1.bf16.msra.mxu0 %v963
  %1029 = vmatprep.mubr.bf16.mxu0 %v802
  %1030 = vmatmul.mubr.bf16.gmra.mrb[0].mxu0 %v801
  %v1031 = vpop.f32.mrb[0].mxu0
  %v1032 = vadd.f32 %v659, %v1031
  %v1033 = vpop.f32.mrb[0].mxu0
  %v1034 = vadd.f32 %v661, %v1033
  %v1035 = vpop.f32.mrb[0].mxu0
  %v1036 = vadd.f32 %v663, %v1035
  %v1037 = vpop.f32.mrb[0].mxu0
  %v1038 = vadd.f32 %v665, %v1037
  %1039 = vmatprep.mubr.bf16.mxu0 %v804
  %1040 = vmatmul.mubr.bf16.gmra.mrb[0].mxu0 %v803
  %v1041 = vpop.f32.mrb[0].mxu0
  %v1042 = vadd.f32 %v669, %v1041
  %v1043 = vpop.f32.mrb[0].mxu0
  %v1044 = vadd.f32 %v671, %v1043
  %v1045 = vpop.f32.mrb[0].mxu0
  %v1046 = vadd.f32 %v673, %v1045
  %v1047 = vpop.f32.mrb[0].mxu0
  %v1048 = vadd.f32 %v675, %v1047
  %1049 = vmatprep.mubr.bf16.mxu0 %v806
  %1050 = vmatmul.mubr.bf16.gmra.mrb[0].mxu0 %v805
  %v1051 = vpop.f32.mrb[0].mxu0
  %v1052 = vadd.f32 %v679, %v1051
  %v1053 = vpop.f32.mrb[0].mxu0
  %v1054 = vadd.f32 %v681, %v1053
  %v1055 = vpop.f32.mrb[0].mxu0
  %v1056 = vadd.f32 %v683, %v1055
  %v1057 = vpop.f32.mrb[0].mxu0
  %v1058 = vadd.f32 %v685, %v1057
  %1059 = vmatprep.mubr.bf16.mxu0 %v808
  %1060 = vmatmul.mubr.bf16.gmra.mrb[0].mxu0 %v807
  %v1061 = vpop.f32.mrb[0].mxu0
  %v1062 = vadd.f32 %v689, %v1061
  %v1063 = vpop.f32.mrb[0].mxu0
  %v1064 = vadd.f32 %v691, %v1063
  %v1065 = vpop.f32.mrb[0].mxu0
  %v1066 = vadd.f32 %v693, %v1065
  %v1067 = vpop.f32.mrb[0].mxu0
  %v1068 = vadd.f32 %v695, %v1067
  %1069 = vmatprep.mubr.bf16.mxu0 %v810
  %1070 = vmatmul.mubr.bf16.gmra.mrb[0].mxu0 %v809
  %v1071 = vpop.f32.mrb[0].mxu0
  %v1072 = vadd.f32 %v699, %v1071
  %v1073 = vpop.f32.mrb[0].mxu0
  %v1074 = vadd.f32 %v701, %v1073
  %v1075 = vpop.f32.mrb[0].mxu0
  %v1076 = vadd.f32 %v703, %v1075
  %v1077 = vpop.f32.mrb[0].mxu0
  %v1078 = vadd.f32 %v705, %v1077
  %1079 = vmatprep.mubr.bf16.mxu0 %v812
  %1080 = vmatmul.mubr.bf16.gmra.mrb[0].mxu0 %v811
  %v1081 = vpop.f32.mrb[0].mxu0
  %v1082 = vadd.f32 %v709, %v1081
  %v1083 = vpop.f32.mrb[0].mxu0
  %v1084 = vadd.f32 %v711, %v1083
  %v1085 = vpop.f32.mrb[0].mxu0
  %v1086 = vadd.f32 %v713, %v1085
  %v1087 = vpop.f32.mrb[0].mxu0
  %v1088 = vadd.f32 %v715, %v1087
  %1089 = vmatprep.mubr.bf16.mxu0 %v814
  %1090 = vmatmul.mubr.bf16.gmra.mrb[0].mxu0 %v813
  %v1091 = vpop.f32.mrb[0].mxu0
  %v1092 = vadd.f32 %v719, %v1091
  %v1093 = vpop.f32.mrb[0].mxu0
  %v1094 = vadd.f32 %v721, %v1093
  %v1095 = vpop.f32.mrb[0].mxu0
  %v1096 = vadd.f32 %v723, %v1095
  %v1097 = vpop.f32.mrb[0].mxu0
  %v1098 = vadd.f32 %v725, %v1097
  %1099 = vmatprep.mubr.bf16.mxu0 %v816
  %1100 = vmatmul.mubr.bf16.gmra.mrb[0].mxu0 %v815
  %v1101 = vpop.f32.mrb[0].mxu0
  %v1102 = vadd.f32 %v729, %v1101
  %v1103 = vpop.f32.mrb[0].mxu0
  %v1104 = vadd.f32 %v731, %v1103
  %v1105 = vpop.f32.mrb[0].mxu0
  %v1106 = vadd.f32 %v733, %v1105
  %v1107 = vpop.f32.mrb[0].mxu0
  %v1108 = vadd.f32 %v735, %v1107
  %1109 = vmatprep.mubr.bf16.mxu0 %v818
  %1110 = vmatmul.mubr.bf16.gmra.mrb[0].mxu0 %v817
  %v1111 = vpop.f32.mrb[0].mxu0
  %v1112 = vadd.f32 %v739, %v1111
  %v1113 = vpop.f32.mrb[0].mxu0
  %v1114 = vadd.f32 %v741, %v1113
  %v1115 = vpop.f32.mrb[0].mxu0
  %v1116 = vadd.f32 %v743, %v1115
  %v1117 = vpop.f32.mrb[0].mxu0
  %v1118 = vadd.f32 %v745, %v1117
  %1119 = vdwg.mxu0
  %v1120 = vld [vmem:[%s0] sm:$0xee]
  %v1121 = vld [vmem:[%s0 + $0x10] sm:$0xee]
  %v1122 = vld [vmem:[%s0 + $0x20] sm:$0xee]
  %v1123 = vld [vmem:[%s0 + $0x30] sm:$0xee]
  %v1124 = vld [vmem:[%s0 + $0x40] sm:$0xee]
  %v1125 = vld [vmem:[%s0 + $0x50] sm:$0xee]
  %v1126 = vld [vmem:[%s0 + $0x60] sm:$0xee]
  %v1127 = vld [vmem:[%s0 + $0x70] sm:$0xee]
  %v1128 = vld [vmem:[%s0 + $0x80] sm:$0xee]
  %v1129 = vld [vmem:[%s0 + $0xb0] sm:$0xee]
  %v1130 = vld [vmem:[%s0 + $0xc0] sm:$0xee]
  %v1131 = vld [vmem:[%s0 + $0xd0] sm:$0xee]
  %v1132 = vld [vmem:[%s0 + $0xe0] sm:$0xee]
  %v1133 = vld [vmem:[%s0 + $0xf0] sm:$0xee]
  %v1134 = vld [vmem:[%s0 + $0x100] sm:$0xee]
  %v1135 = vld [vmem:[%s0 + $0x110] sm:$0xee]
  %v1136 = vld [vmem:[%s0 + $0x120] sm:$0xee]
  %v1137 = vld [vmem:[%s0 + $0x130] sm:$0xee]
  %vm1174 = vcmask 1042432
  %vm1175 = vcmask 1046532
  %vm1176 = vmor %vm1174, %vm1175
  %v1177 = vrot.slane %v1120, 5
  %v1178 = vrot.slane %v1177, 4
  %v1179 = vrot.slane %v86, 5
  %v1180 = vsel %vm1176, %v1178, %v1179
  %v1181 = vrot.slane %v1121, 5
  %v1182 = vrot.slane %v1181, 4
  %v1183 = vrot.slane %v87, 5
  %v1184 = vsel %vm1176, %v1182, %v1183
  %v1185 = vrot.slane %v1122, 5
  %v1186 = vrot.slane %v1185, 4
  %v1187 = vrot.slane %v88, 5
  %v1188 = vsel %vm1176, %v1186, %v1187
  %v1189 = vrot.slane %v1123, 5
  %v1190 = vrot.slane %v1189, 4
  %v1191 = vrot.slane %v89, 5
  %v1192 = vsel %vm1176, %v1190, %v1191
  %v1193 = vrot.slane %v1124, 5
  %v1194 = vrot.slane %v1193, 4
  %v1195 = vrot.slane %v90, 5
  %v1196 = vsel %vm1176, %v1194, %v1195
  %v1197 = vrot.slane %v1125, 5
  %v1198 = vrot.slane %v1197, 4
  %v1199 = vrot.slane %v91, 5
  %v1200 = vsel %vm1176, %v1198, %v1199
  %v1201 = vrot.slane %v1126, 5
  %v1202 = vrot.slane %v1201, 4
  %v1203 = vrot.slane %v92, 5
  %v1204 = vsel %vm1176, %v1202, %v1203
  %v1205 = vrot.slane %v1127, 5
  %v1206 = vrot.slane %v1205, 4
  %v1207 = vrot.slane %v93, 5
  %v1208 = vsel %vm1176, %v1206, %v1207
  %v1209 = vrot.slane %v1128, 5
  %v1210 = vrot.slane %v1209, 4
  %v1211 = vrot.slane %v94, 5
  %v1212 = vsel %vm1176, %v1210, %v1211
  %v1213 = vrot.slane %v1129, 5
  %v1214 = vrot.slane %v1213, 4
  %v1215 = vrot.slane %v95, 5
  %v1216 = vsel %vm1176, %v1214, %v1215
  %v1217 = vrot.slane %v1130, 5
  %v1218 = vrot.slane %v1217, 4
  %v1219 = vrot.slane %v96, 5
  %v1220 = vsel %vm1176, %v1218, %v1219
  %v1221 = vrot.slane %v1131, 5
  %v1222 = vrot.slane %v1221, 4
  %v1223 = vrot.slane %v97, 5
  %v1224 = vsel %vm1176, %v1222, %v1223
  %v1225 = vrot.slane %v1132, 5
  %v1226 = vrot.slane %v1225, 4
  %v1227 = vrot.slane %v98, 5
  %v1228 = vsel %vm1176, %v1226, %v1227
  %v1229 = vrot.slane %v1133, 5
  %v1230 = vrot.slane %v1229, 4
  %v1231 = vrot.slane %v99, 5
  %v1232 = vsel %vm1176, %v1230, %v1231
  %v1233 = vrot.slane %v1134, 5
  %v1234 = vrot.slane %v1233, 4
  %v1235 = vrot.slane %v100, 5
  %v1236 = vsel %vm1176, %v1234, %v1235
  %v1237 = vrot.slane %v1135, 5
  %v1238 = vrot.slane %v1237, 4
  %v1239 = vrot.slane %v101, 5
  %v1240 = vsel %vm1176, %v1238, %v1239
  %v1241 = vrot.slane %v1136, 5
  %v1242 = vrot.slane %v1241, 4
  %v1243 = vrot.slane %v102, 5
  %v1244 = vsel %vm1176, %v1242, %v1243
  %v1245 = vrot.slane %v1137, 5
  %v1246 = vrot.slane %v1245, 4
  %v1247 = vrot.slane %v103, 5
  %v1248 = vsel %vm1176, %v1246, %v1247
  %s1249 = scalar_lea.vmem %s2, 512
  %v1250 = vld [vmem:[%s1249] sm:$0xff]
  %v1251 = vld [vmem:[%s1249 + $0x8] sm:$0xff]
  %v1252 = vld [vmem:[%s1249 + $0x10] sm:$0xff]
  %v1253 = vld [vmem:[%s1249 + $0x18] sm:$0xff]
  %v1254 = vld [vmem:[%s1249 + $0x20] sm:$0xff]
  %v1255 = vld [vmem:[%s1249 + $0x28] sm:$0xff]
  %v1256 = vld [vmem:[%s1249 + $0x30] sm:$0xff]
  %v1257 = vld [vmem:[%s1249 + $0x38] sm:$0xff]
  %v1258 = vld [vmem:[%s1249 + $0x40] sm:$0xff]
  %v1259 = vld [vmem:[%s1249 + $0x48] sm:$0xff]
  %v1260 = vld [vmem:[%s1249 + $0x50] sm:$0xff]
  %v1261 = vld [vmem:[%s1249 + $0x58] sm:$0xff]
  %v1262 = vld [vmem:[%s1249 + $0x60] sm:$0xff]
  %v1263 = vld [vmem:[%s1249 + $0x68] sm:$0xff]
  %v1264 = vld [vmem:[%s1249 + $0x70] sm:$0xff]
  %v1265 = vld [vmem:[%s1249 + $0x78] sm:$0xff]
  %v1266 = vld [vmem:[%s1249 + $0x80] sm:$0xff]
  %v1267 = vld [vmem:[%s1249 + $0x88] sm:$0xff]
  %v1268 = vld [vmem:[%s1249 + $0x90] sm:$0xff]
  %v1269 = vld [vmem:[%s1249 + $0x98] sm:$0xff]
  %v1270 = vld [vmem:[%s1249 + $0xa0] sm:$0xff]
  %v1271 = vld [vmem:[%s1249 + $0xa8] sm:$0xff]
  %v1272 = vld [vmem:[%s1249 + $0xb0] sm:$0xff]
  %v1273 = vld [vmem:[%s1249 + $0xb8] sm:$0xff]
  %v1274 = vld [vmem:[%s1249 + $0xc0] sm:$0xff]
  %v1275 = vld [vmem:[%s1249 + $0xc8] sm:$0xff]
  %v1276 = vld [vmem:[%s1249 + $0xd0] sm:$0xff]
  %v1277 = vld [vmem:[%s1249 + $0xd8] sm:$0xff]
  %v1278 = vld [vmem:[%s1249 + $0xe0] sm:$0xff]
  %v1279 = vld [vmem:[%s1249 + $0xe8] sm:$0xff]
  %v1280 = vld [vmem:[%s1249 + $0xf0] sm:$0xff]
  %v1281 = vld [vmem:[%s1249 + $0xf8] sm:$0xff]
  %v1282 = vunpack.c.l.b16 %v1180
  %v1283 = vunpack.c.h.b16 %v1180
  %v1284 = vunpack.c.l.b16 %v1184
  %v1285 = vunpack.c.h.b16 %v1184
  %v1286 = vunpack.c.l.b16 %v1188
  %v1287 = vunpack.c.h.b16 %v1188
  %v1288 = vunpack.c.l.b16 %v1192
  %v1289 = vunpack.c.h.b16 %v1192
  %v1290 = vunpack.c.l.b16 %v1196
  %v1291 = vunpack.c.h.b16 %v1196
  %v1292 = vunpack.c.l.b16 %v1200
  %v1293 = vunpack.c.h.b16 %v1200
  %v1294 = vunpack.c.l.b16 %v1204
  %v1295 = vunpack.c.h.b16 %v1204
  %v1296 = vunpack.c.l.b16 %v1208
  %v1297 = vunpack.c.h.b16 %v1208
  %v1298 = vunpack.c.l.b16 %v1212
  %v1299 = vunpack.c.h.b16 %v1212
  %v1300 = vunpack.c.l.b16 %v1216
  %v1301 = vunpack.c.h.b16 %v1216
  %v1302 = vunpack.c.l.b16 %v1220
  %v1303 = vunpack.c.h.b16 %v1220
  %v1304 = vunpack.c.l.b16 %v1224
  %v1305 = vunpack.c.h.b16 %v1224
  %v1306 = vunpack.c.l.b16 %v1228
  %v1307 = vunpack.c.h.b16 %v1228
  %v1308 = vunpack.c.l.b16 %v1232
  %v1309 = vunpack.c.h.b16 %v1232
  %v1310 = vunpack.c.l.b16 %v1236
  %v1311 = vunpack.c.h.b16 %v1236
  %v1312 = vunpack.c.l.b16 %v1240
  %v1313 = vunpack.c.h.b16 %v1240
  %v1314 = vunpack.c.l.b16 %v1244
  %v1315 = vunpack.c.h.b16 %v1244
  %v1316 = vunpack.c.l.b16 %v1248
  %v1317 = vunpack.c.h.b16 %v1248
  %v1318 = vpack.c.b16 %v1284, %v1282
  %v1319 = vpack.c.b16 %v1285, %v1283
  %v1320 = vpack.c.b16 %v1288, %v1286
  %v1321 = vpack.c.b16 %v1289, %v1287
  %v1322 = vpack.c.b16 %v1292, %v1290
  %v1323 = vpack.c.b16 %v1293, %v1291
  %v1324 = vpack.c.b16 %v1296, %v1294
  %v1325 = vpack.c.b16 %v1297, %v1295
  %v1326 = vpack.c.b16 %v1300, %v1298
  %v1327 = vpack.c.b16 %v1301, %v1299
  %v1328 = vpack.c.b16 %v1304, %v1302
  %v1329 = vpack.c.b16 %v1305, %v1303
  %v1330 = vpack.c.b16 %v1308, %v1306
  %v1331 = vpack.c.b16 %v1309, %v1307
  %v1332 = vpack.c.b16 %v1312, %v1310
  %v1333 = vpack.c.b16 %v1313, %v1311
  %v1334 = vpack.c.b16 %v1316, %v1314
  %v1335 = vpack.c.b16 %v1317, %v1315
  %v1386 = vunpack.c.l.b16 %v1250
  %v1387 = vunpack.c.h.b16 %v1250
  %v1388 = vunpack.c.l.b16 %v1251
  %v1389 = vunpack.c.h.b16 %v1251
  %v1390 = vunpack.c.l.b16 %v1252
  %v1391 = vunpack.c.h.b16 %v1252
  %v1392 = vunpack.c.l.b16 %v1253
  %v1393 = vunpack.c.h.b16 %v1253
  %v1394 = vunpack.c.l.b16 %v1254
  %v1395 = vunpack.c.h.b16 %v1254
  %v1396 = vunpack.c.l.b16 %v1255
  %v1397 = vunpack.c.h.b16 %v1255
  %v1398 = vunpack.c.l.b16 %v1256
  %v1399 = vunpack.c.h.b16 %v1256
  %v1400 = vunpack.c.l.b16 %v1257
  %v1401 = vunpack.c.h.b16 %v1257
  %v1402 = vunpack.c.l.b16 %v1258
  %v1403 = vunpack.c.h.b16 %v1258
  %v1404 = vunpack.c.l.b16 %v1259
  %v1405 = vunpack.c.h.b16 %v1259
  %v1406 = vunpack.c.l.b16 %v1260
  %v1407 = vunpack.c.h.b16 %v1260
  %v1408 = vunpack.c.l.b16 %v1261
  %v1409 = vunpack.c.h.b16 %v1261
  %v1410 = vunpack.c.l.b16 %v1262
  %v1411 = vunpack.c.h.b16 %v1262
  %v1412 = vunpack.c.l.b16 %v1263
  %v1413 = vunpack.c.h.b16 %v1263
  %v1414 = vunpack.c.l.b16 %v1264
  %v1415 = vunpack.c.h.b16 %v1264
  %v1416 = vunpack.c.l.b16 %v1265
  %v1417 = vunpack.c.h.b16 %v1265
  %v1418 = vunpack.c.l.b16 %v1266
  %v1419 = vunpack.c.h.b16 %v1266
  %v1420 = vunpack.c.l.b16 %v1267
  %v1421 = vunpack.c.h.b16 %v1267
  %v1422 = vunpack.c.l.b16 %v1268
  %v1423 = vunpack.c.h.b16 %v1268
  %v1424 = vunpack.c.l.b16 %v1269
  %v1425 = vunpack.c.h.b16 %v1269
  %v1426 = vunpack.c.l.b16 %v1270
  %v1427 = vunpack.c.h.b16 %v1270
  %v1428 = vunpack.c.l.b16 %v1271
  %v1429 = vunpack.c.h.b16 %v1271
  %v1430 = vunpack.c.l.b16 %v1272
  %v1431 = vunpack.c.h.b16 %v1272
  %v1432 = vunpack.c.l.b16 %v1273
  %v1433 = vunpack.c.h.b16 %v1273
  %v1434 = vunpack.c.l.b16 %v1274
  %v1435 = vunpack.c.h.b16 %v1274
  %v1436 = vunpack.c.l.b16 %v1275
  %v1437 = vunpack.c.h.b16 %v1275
  %v1438 = vunpack.c.l.b16 %v1276
  %v1439 = vunpack.c.h.b16 %v1276
  %v1440 = vunpack.c.l.b16 %v1277
  %v1441 = vunpack.c.h.b16 %v1277
  %v1442 = vunpack.c.l.b16 %v1278
  %v1443 = vunpack.c.h.b16 %v1278
  %v1444 = vunpack.c.l.b16 %v1279
  %v1445 = vunpack.c.h.b16 %v1279
  %v1446 = vunpack.c.l.b16 %v1280
  %v1447 = vunpack.c.h.b16 %v1280
  %v1448 = vunpack.c.l.b16 %v1281
  %v1449 = vunpack.c.h.b16 %v1281
  %v1450 = vpack.c.b16 %v1388, %v1386
  %v1451 = vpack.c.b16 %v1389, %v1387
  %v1452 = vpack.c.b16 %v1392, %v1390
  %v1453 = vpack.c.b16 %v1393, %v1391
  %v1454 = vpack.c.b16 %v1396, %v1394
  %v1455 = vpack.c.b16 %v1397, %v1395
  %v1456 = vpack.c.b16 %v1400, %v1398
  %v1457 = vpack.c.b16 %v1401, %v1399
  %v1458 = vpack.c.b16 %v1404, %v1402
  %v1459 = vpack.c.b16 %v1405, %v1403
  %v1460 = vpack.c.b16 %v1408, %v1406
  %v1461 = vpack.c.b16 %v1409, %v1407
  %v1462 = vpack.c.b16 %v1412, %v1410
  %v1463 = vpack.c.b16 %v1413, %v1411
  %v1464 = vpack.c.b16 %v1416, %v1414
  %v1465 = vpack.c.b16 %v1417, %v1415
  %v1466 = vpack.c.b16 %v1420, %v1418
  %v1467 = vpack.c.b16 %v1421, %v1419
  %v1468 = vpack.c.b16 %v1424, %v1422
  %v1469 = vpack.c.b16 %v1425, %v1423
  %v1470 = vpack.c.b16 %v1428, %v1426
  %v1471 = vpack.c.b16 %v1429, %v1427
  %v1472 = vpack.c.b16 %v1432, %v1430
  %v1473 = vpack.c.b16 %v1433, %v1431
  %v1474 = vpack.c.b16 %v1436, %v1434
  %v1475 = vpack.c.b16 %v1437, %v1435
  %v1476 = vpack.c.b16 %v1440, %v1438
  %v1477 = vpack.c.b16 %v1441, %v1439
  %v1478 = vpack.c.b16 %v1444, %v1442
  %v1479 = vpack.c.b16 %v1445, %v1443
  %v1480 = vpack.c.b16 %v1448, %v1446
  %v1481 = vpack.c.b16 %v1449, %v1447
  %1514 = vmatprep.subr.bf16.mxu0 %v1451
  %1515 = vmatpush1.bf16.msra.mxu0 %v1450
  %1516 = vmatprep.subr.bf16.mxu0 %v1453
  %1517 = vmatpush1.bf16.msra.mxu0 %v1452
  %1518 = vmatprep.subr.bf16.mxu0 %v1455
  %1519 = vmatpush1.bf16.msra.mxu0 %v1454
  %1520 = vmatprep.subr.bf16.mxu0 %v1457
  %1521 = vmatpush1.bf16.msra.mxu0 %v1456
  %1522 = vmatprep.subr.bf16.mxu0 %v1459
  %1523 = vmatpush1.bf16.msra.mxu0 %v1458
  %1524 = vmatprep.subr.bf16.mxu0 %v1461
  %1525 = vmatpush1.bf16.msra.mxu0 %v1460
  %1526 = vmatprep.subr.bf16.mxu0 %v1463
  %1527 = vmatpush1.bf16.msra.mxu0 %v1462
  %1528 = vmatprep.subr.bf16.mxu0 %v1465
  %1529 = vmatpush1.bf16.msra.mxu0 %v1464
  %1530 = vmatprep.subr.bf16.mxu0 %v1467
  %1531 = vmatpush1.bf16.msra.mxu0 %v1466
  %1532 = vmatprep.subr.bf16.mxu0 %v1469
  %1533 = vmatpush1.bf16.msra.mxu0 %v1468
  %1534 = vmatprep.subr.bf16.mxu0 %v1471
  %1535 = vmatpush1.bf16.msra.mxu0 %v1470
  %1536 = vmatprep.subr.bf16.mxu0 %v1473
  %1537 = vmatpush1.bf16.msra.mxu0 %v1472
  %1538 = vmatprep.subr.bf16.mxu0 %v1475
  %1539 = vmatpush1.bf16.msra.mxu0 %v1474
  %1540 = vmatprep.subr.bf16.mxu0 %v1477
  %1541 = vmatpush1.bf16.msra.mxu0 %v1476
  %1542 = vmatprep.subr.bf16.mxu0 %v1479
  %1543 = vmatpush1.bf16.msra.mxu0 %v1478
  %1544 = vmatprep.subr.bf16.mxu0 %v1481
  %1545 = vmatpush1.bf16.msra.mxu0 %v1480
  %1546 = vmatprep.mubr.bf16.mxu0 %v1319
  %1547 = vmatmul.mubr.bf16.gmra.mrb[0].mxu0 %v1318
  %v1548 = vpop.f32.mrb[0].mxu0
  %v1549 = vadd.f32 0.0, %v1548
  %v1550 = vpop.f32.mrb[0].mxu0
  %v1551 = vadd.f32 0.0, %v1550
  %v1552 = vpop.f32.mrb[0].mxu0
  %v1553 = vadd.f32 0.0, %v1552
  %v1554 = vpop.f32.mrb[0].mxu0
  %v1555 = vadd.f32 0.0, %v1554
  %1556 = vmatprep.mubr.bf16.mxu0 %v1321
  %1557 = vmatmul.mubr.bf16.gmra.mrb[0].mxu0 %v1320
  %v1558 = vpop.f32.mrb[0].mxu0
  %v1559 = vadd.f32 0.0, %v1558
  %v1560 = vpop.f32.mrb[0].mxu0
  %v1561 = vadd.f32 0.0, %v1560
  %v1562 = vpop.f32.mrb[0].mxu0
  %v1563 = vadd.f32 0.0, %v1562
  %v1564 = vpop.f32.mrb[0].mxu0
  %v1565 = vadd.f32 0.0, %v1564
  %1566 = vmatprep.mubr.bf16.mxu0 %v1323
  %1567 = vmatmul.mubr.bf16.gmra.mrb[0].mxu0 %v1322
  %v1568 = vpop.f32.mrb[0].mxu0
  %v1569 = vadd.f32 0.0, %v1568
  %v1570 = vpop.f32.mrb[0].mxu0
  %v1571 = vadd.f32 0.0, %v1570
  %v1572 = vpop.f32.mrb[0].mxu0
  %v1573 = vadd.f32 0.0, %v1572
  %v1574 = vpop.f32.mrb[0].mxu0
  %v1575 = vadd.f32 0.0, %v1574
  %1576 = vmatprep.mubr.bf16.mxu0 %v1325
  %1577 = vmatmul.mubr.bf16.gmra.mrb[0].mxu0 %v1324
  %v1578 = vpop.f32.mrb[0].mxu0
  %v1579 = vadd.f32 0.0, %v1578
  %v1580 = vpop.f32.mrb[0].mxu0
  %v1581 = vadd.f32 0.0, %v1580
  %v1582 = vpop.f32.mrb[0].mxu0
  %v1583 = vadd.f32 0.0, %v1582
  %v1584 = vpop.f32.mrb[0].mxu0
  %v1585 = vadd.f32 0.0, %v1584
  %1586 = vmatprep.mubr.bf16.mxu0 %v1327
  %1587 = vmatmul.mubr.bf16.gmra.mrb[0].mxu0 %v1326
  %v1588 = vpop.f32.mrb[0].mxu0
  %v1589 = vadd.f32 0.0, %v1588
  %v1590 = vpop.f32.mrb[0].mxu0
  %v1591 = vadd.f32 0.0, %v1590
  %v1592 = vpop.f32.mrb[0].mxu0
  %v1593 = vadd.f32 0.0, %v1592
  %v1594 = vpop.f32.mrb[0].mxu0
  %v1595 = vadd.f32 0.0, %v1594
  %1596 = vmatprep.mubr.bf16.mxu0 %v1329
  %1597 = vmatmul.mubr.bf16.gmra.mrb[0].mxu0 %v1328
  %v1598 = vpop.f32.mrb[0].mxu0
  %v1599 = vadd.f32 0.0, %v1598
  %v1600 = vpop.f32.mrb[0].mxu0
  %v1601 = vadd.f32 0.0, %v1600
  %v1602 = vpop.f32.mrb[0].mxu0
  %v1603 = vadd.f32 0.0, %v1602
  %v1604 = vpop.f32.mrb[0].mxu0
  %v1605 = vadd.f32 0.0, %v1604
  %1606 = vmatprep.mubr.bf16.mxu0 %v1331
  %1607 = vmatmul.mubr.bf16.gmra.mrb[0].mxu0 %v1330
  %v1608 = vpop.f32.mrb[0].mxu0
  %v1609 = vadd.f32 0.0, %v1608
  %v1610 = vpop.f32.mrb[0].mxu0
  %v1611 = vadd.f32 0.0, %v1610
  %v1612 = vpop.f32.mrb[0].mxu0
  %v1613 = vadd.f32 0.0, %v1612
  %v1614 = vpop.f32.mrb[0].mxu0
  %v1615 = vadd.f32 0.0, %v1614
  %1616 = vmatprep.mubr.bf16.mxu0 %v1333
  %1617 = vmatmul.mubr.bf16.gmra.mrb[0].mxu0 %v1332
  %v1618 = vpop.f32.mrb[0].mxu0
  %v1619 = vadd.f32 0.0, %v1618
  %v1620 = vpop.f32.mrb[0].mxu0
  %v1621 = vadd.f32 0.0, %v1620
  %v1622 = vpop.f32.mrb[0].mxu0
  %v1623 = vadd.f32 0.0, %v1622
  %v1624 = vpop.f32.mrb[0].mxu0
  %v1625 = vadd.f32 0.0, %v1624
  %1626 = vmatprep.mubr.bf16.mxu0 %v1335
  %1627 = vmatmul.mubr.bf16.gmra.mrb[0].mxu0 %v1334
  %v1628 = vpop.f32.mrb[0].mxu0
  %v1629 = vadd.f32 0.0, %v1628
  %v1630 = vpop.f32.mrb[0].mxu0
  %v1631 = vadd.f32 0.0, %v1630
  %v1632 = vpop.f32.mrb[0].mxu0
  %v1633 = vadd.f32 0.0, %v1632
  %v1634 = vpop.f32.mrb[0].mxu0
  %v1635 = vadd.f32 0.0, %v1634
  %1636 = vdwg.mxu0
  %v1637 = vadd.f32 %v1032, %v1549
  %v1638 = vadd.f32 %v1034, %v1551
  %v1639 = vadd.f32 %v1036, %v1553
  %v1640 = vadd.f32 %v1038, %v1555
  %v1641 = vadd.f32 %v1042, %v1559
  %v1642 = vadd.f32 %v1044, %v1561
  %v1643 = vadd.f32 %v1046, %v1563
  %v1644 = vadd.f32 %v1048, %v1565
  %v1645 = vadd.f32 %v1052, %v1569
  %v1646 = vadd.f32 %v1054, %v1571
  %v1647 = vadd.f32 %v1056, %v1573
  %v1648 = vadd.f32 %v1058, %v1575
  %v1649 = vadd.f32 %v1062, %v1579
  %v1650 = vadd.f32 %v1064, %v1581
  %v1651 = vadd.f32 %v1066, %v1583
  %v1652 = vadd.f32 %v1068, %v1585
  %v1653 = vadd.f32 %v1072, %v1589
  %v1654 = vadd.f32 %v1074, %v1591
  %v1655 = vadd.f32 %v1076, %v1593
  %v1656 = vadd.f32 %v1078, %v1595
  %v1657 = vadd.f32 %v1082, %v1599
  %v1658 = vadd.f32 %v1084, %v1601
  %v1659 = vadd.f32 %v1086, %v1603
  %v1660 = vadd.f32 %v1088, %v1605
  %v1661 = vadd.f32 %v1092, %v1609
  %v1662 = vadd.f32 %v1094, %v1611
  %v1663 = vadd.f32 %v1096, %v1613
  %v1664 = vadd.f32 %v1098, %v1615
  %v1665 = vadd.f32 %v1102, %v1619
  %v1666 = vadd.f32 %v1104, %v1621
  %v1667 = vadd.f32 %v1106, %v1623
  %v1668 = vadd.f32 %v1108, %v1625
  %v1669 = vadd.f32 %v1112, %v1629
  %v1670 = vadd.f32 %v1114, %v1631
  %v1671 = vadd.f32 %v1116, %v1633
  %v1672 = vadd.f32 %v1118, %v1635
  %s1673 = scalar_lea.vmem %s0, 16
  %v1674 = vld [vmem:[%s1673] sm:$0xff]
  %v1675 = vld [vmem:[%s1673 + $0x10] sm:$0xff]
  %v1676 = vld [vmem:[%s1673 + $0x20] sm:$0xff]
  %v1677 = vld [vmem:[%s1673 + $0x30] sm:$0xff]
  %v1678 = vld [vmem:[%s1673 + $0x40] sm:$0xff]
  %v1679 = vld [vmem:[%s1673 + $0x50] sm:$0xff]
  %v1680 = vld [vmem:[%s1673 + $0x60] sm:$0xff]
  %v1681 = vld [vmem:[%s1673 + $0x70] sm:$0xff]
  %v1682 = vld [vmem:[%s1673 + $0x80] sm:$0xff]
  %v1683 = vld [vmem:[%s1673 + $0xb0] sm:$0xff]
  %v1684 = vld [vmem:[%s1673 + $0xc0] sm:$0xff]
  %v1685 = vld [vmem:[%s1673 + $0xd0] sm:$0xff]
  %v1686 = vld [vmem:[%s1673 + $0xe0] sm:$0xff]
  %v1687 = vld [vmem:[%s1673 + $0xf0] sm:$0xff]
  %v1688 = vld [vmem:[%s1673 + $0x100] sm:$0xff]
  %v1689 = vld [vmem:[%s1673 + $0x110] sm:$0xff]
  %v1690 = vld [vmem:[%s1673 + $0x120] sm:$0xff]
  %v1691 = vld [vmem:[%s1673 + $0x130] sm:$0xff]
  %s1692 = scalar_lea.vmem %s2, 768
  %v1693 = vld [vmem:[%s1692] sm:$0xff]
  %v1694 = vld [vmem:[%s1692 + $0x8] sm:$0xff]
  %v1695 = vld [vmem:[%s1692 + $0x10] sm:$0xff]
  %v1696 = vld [vmem:[%s1692 + $0x18] sm:$0xff]
  %v1697 = vld [vmem:[%s1692 + $0x20] sm:$0xff]
  %v1698 = vld [vmem:[%s1692 + $0x28] sm:$0xff]
  %v1699 = vld [vmem:[%s1692 + $0x30] sm:$0xff]
  %v1700 = vld [vmem:[%s1692 + $0x38] sm:$0xff]
  %v1701 = vld [vmem:[%s1692 + $0x40] sm:$0xff]
  %v1702 = vld [vmem:[%s1692 + $0x48] sm:$0xff]
  %v1703 = vld [vmem:[%s1692 + $0x50] sm:$0xff]
  %v1704 = vld [vmem:[%s1692 + $0x58] sm:$0xff]
  %v1705 = vld [vmem:[%s1692 + $0x60] sm:$0xff]
  %v1706 = vld [vmem:[%s1692 + $0x68] sm:$0xff]
  %v1707 = vld [vmem:[%s1692 + $0x70] sm:$0xff]
  %v1708 = vld [vmem:[%s1692 + $0x78] sm:$0xff]
  %v1709 = vld [vmem:[%s1692 + $0x80] sm:$0xff]
  %v1710 = vld [vmem:[%s1692 + $0x88] sm:$0xff]
  %v1711 = vld [vmem:[%s1692 + $0x90] sm:$0xff]
  %v1712 = vld [vmem:[%s1692 + $0x98] sm:$0xff]
  %v1713 = vld [vmem:[%s1692 + $0xa0] sm:$0xff]
  %v1714 = vld [vmem:[%s1692 + $0xa8] sm:$0xff]
  %v1715 = vld [vmem:[%s1692 + $0xb0] sm:$0xff]
  %v1716 = vld [vmem:[%s1692 + $0xb8] sm:$0xff]
  %v1717 = vld [vmem:[%s1692 + $0xc0] sm:$0xff]
  %v1718 = vld [vmem:[%s1692 + $0xc8] sm:$0xff]
  %v1719 = vld [vmem:[%s1692 + $0xd0] sm:$0xff]
  %v1720 = vld [vmem:[%s1692 + $0xd8] sm:$0xff]
  %v1721 = vld [vmem:[%s1692 + $0xe0] sm:$0xff]
  %v1722 = vld [vmem:[%s1692 + $0xe8] sm:$0xff]
  %v1723 = vld [vmem:[%s1692 + $0xf0] sm:$0xff]
  %v1724 = vld [vmem:[%s1692 + $0xf8] sm:$0xff]
  %v1743 = vunpack.c.l.b16 %v1674
  %v1744 = vunpack.c.h.b16 %v1674
  %v1745 = vunpack.c.l.b16 %v1675
  %v1746 = vunpack.c.h.b16 %v1675
  %v1747 = vunpack.c.l.b16 %v1676
  %v1748 = vunpack.c.h.b16 %v1676
  %v1749 = vunpack.c.l.b16 %v1677
  %v1750 = vunpack.c.h.b16 %v1677
  %v1751 = vunpack.c.l.b16 %v1678
  %v1752 = vunpack.c.h.b16 %v1678
  %v1753 = vunpack.c.l.b16 %v1679
  %v1754 = vunpack.c.h.b16 %v1679
  %v1755 = vunpack.c.l.b16 %v1680
  %v1756 = vunpack.c.h.b16 %v1680
  %v1757 = vunpack.c.l.b16 %v1681
  %v1758 = vunpack.c.h.b16 %v1681
  %v1759 = vunpack.c.l.b16 %v1682
  %v1760 = vunpack.c.h.b16 %v1682
  %v1761 = vunpack.c.l.b16 %v1683
  %v1762 = vunpack.c.h.b16 %v1683
  %v1763 = vunpack.c.l.b16 %v1684
  %v1764 = vunpack.c.h.b16 %v1684
  %v1765 = vunpack.c.l.b16 %v1685
  %v1766 = vunpack.c.h.b16 %v1685
  %v1767 = vunpack.c.l.b16 %v1686
  %v1768 = vunpack.c.h.b16 %v1686
  %v1769 = vunpack.c.l.b16 %v1687
  %v1770 = vunpack.c.h.b16 %v1687
  %v1771 = vunpack.c.l.b16 %v1688
  %v1772 = vunpack.c.h.b16 %v1688
  %v1773 = vunpack.c.l.b16 %v1689
  %v1774 = vunpack.c.h.b16 %v1689
  %v1775 = vunpack.c.l.b16 %v1690
  %v1776 = vunpack.c.h.b16 %v1690
  %v1777 = vunpack.c.l.b16 %v1691
  %v1778 = vunpack.c.h.b16 %v1691
  %v1779 = vpack.c.b16 %v1745, %v1743
  %v1780 = vpack.c.b16 %v1746, %v1744
  %v1781 = vpack.c.b16 %v1749, %v1747
  %v1782 = vpack.c.b16 %v1750, %v1748
  %v1783 = vpack.c.b16 %v1753, %v1751
  %v1784 = vpack.c.b16 %v1754, %v1752
  %v1785 = vpack.c.b16 %v1757, %v1755
  %v1786 = vpack.c.b16 %v1758, %v1756
  %v1787 = vpack.c.b16 %v1761, %v1759
  %v1788 = vpack.c.b16 %v1762, %v1760
  %v1789 = vpack.c.b16 %v1765, %v1763
  %v1790 = vpack.c.b16 %v1766, %v1764
  %v1791 = vpack.c.b16 %v1769, %v1767
  %v1792 = vpack.c.b16 %v1770, %v1768
  %v1793 = vpack.c.b16 %v1773, %v1771
  %v1794 = vpack.c.b16 %v1774, %v1772
  %v1795 = vpack.c.b16 %v1777, %v1775
  %v1796 = vpack.c.b16 %v1778, %v1776
  %v1847 = vunpack.c.l.b16 %v1693
  %v1848 = vunpack.c.h.b16 %v1693
  %v1849 = vunpack.c.l.b16 %v1694
  %v1850 = vunpack.c.h.b16 %v1694
  %v1851 = vunpack.c.l.b16 %v1695
  %v1852 = vunpack.c.h.b16 %v1695
  %v1853 = vunpack.c.l.b16 %v1696
  %v1854 = vunpack.c.h.b16 %v1696
  %v1855 = vunpack.c.l.b16 %v1697
  %v1856 = vunpack.c.h.b16 %v1697
  %v1857 = vunpack.c.l.b16 %v1698
  %v1858 = vunpack.c.h.b16 %v1698
  %v1859 = vunpack.c.l.b16 %v1699
  %v1860 = vunpack.c.h.b16 %v1699
  %v1861 = vunpack.c.l.b16 %v1700
  %v1862 = vunpack.c.h.b16 %v1700
  %v1863 = vunpack.c.l.b16 %v1701
  %v1864 = vunpack.c.h.b16 %v1701
  %v1865 = vunpack.c.l.b16 %v1702
  %v1866 = vunpack.c.h.b16 %v1702
  %v1867 = vunpack.c.l.b16 %v1703
  %v1868 = vunpack.c.h.b16 %v1703
  %v1869 = vunpack.c.l.b16 %v1704
  %v1870 = vunpack.c.h.b16 %v1704
  %v1871 = vunpack.c.l.b16 %v1705
  %v1872 = vunpack.c.h.b16 %v1705
  %v1873 = vunpack.c.l.b16 %v1706
  %v1874 = vunpack.c.h.b16 %v1706
  %v1875 = vunpack.c.l.b16 %v1707
  %v1876 = vunpack.c.h.b16 %v1707
  %v1877 = vunpack.c.l.b16 %v1708
  %v1878 = vunpack.c.h.b16 %v1708
  %v1879 = vunpack.c.l.b16 %v1709
  %v1880 = vunpack.c.h.b16 %v1709
  %v1881 = vunpack.c.l.b16 %v1710
  %v1882 = vunpack.c.h.b16 %v1710
  %v1883 = vunpack.c.l.b16 %v1711
  %v1884 = vunpack.c.h.b16 %v1711
  %v1885 = vunpack.c.l.b16 %v1712
  %v1886 = vunpack.c.h.b16 %v1712
  %v1887 = vunpack.c.l.b16 %v1713
  %v1888 = vunpack.c.h.b16 %v1713
  %v1889 = vunpack.c.l.b16 %v1714
  %v1890 = vunpack.c.h.b16 %v1714
  %v1891 = vunpack.c.l.b16 %v1715
  %v1892 = vunpack.c.h.b16 %v1715
  %v1893 = vunpack.c.l.b16 %v1716
  %v1894 = vunpack.c.h.b16 %v1716
  %v1895 = vunpack.c.l.b16 %v1717
  %v1896 = vunpack.c.h.b16 %v1717
  %v1897 = vunpack.c.l.b16 %v1718
  %v1898 = vunpack.c.h.b16 %v1718
  %v1899 = vunpack.c.l.b16 %v1719
  %v1900 = vunpack.c.h.b16 %v1719
  %v1901 = vunpack.c.l.b16 %v1720
  %v1902 = vunpack.c.h.b16 %v1720
  %v1903 = vunpack.c.l.b16 %v1721
  %v1904 = vunpack.c.h.b16 %v1721
  %v1905 = vunpack.c.l.b16 %v1722
  %v1906 = vunpack.c.h.b16 %v1722
  %v1907 = vunpack.c.l.b16 %v1723
  %v1908 = vunpack.c.h.b16 %v1723
  %v1909 = vunpack.c.l.b16 %v1724
  %v1910 = vunpack.c.h.b16 %v1724
  %v1911 = vpack.c.b16 %v1849, %v1847
  %v1912 = vpack.c.b16 %v1850, %v1848
  %v1913 = vpack.c.b16 %v1853, %v1851
  %v1914 = vpack.c.b16 %v1854, %v1852
  %v1915 = vpack.c.b16 %v1857, %v1855
  %v1916 = vpack.c.b16 %v1858, %v1856
  %v1917 = vpack.c.b16 %v1861, %v1859
  %v1918 = vpack.c.b16 %v1862, %v1860
  %v1919 = vpack.c.b16 %v1865, %v1863
  %v1920 = vpack.c.b16 %v1866, %v1864
  %v1921 = vpack.c.b16 %v1869, %v1867
  %v1922 = vpack.c.b16 %v1870, %v1868
  %v1923 = vpack.c.b16 %v1873, %v1871
  %v1924 = vpack.c.b16 %v1874, %v1872
  %v1925 = vpack.c.b16 %v1877, %v1875
  %v1926 = vpack.c.b16 %v1878, %v1876
  %v1927 = vpack.c.b16 %v1881, %v1879
  %v1928 = vpack.c.b16 %v1882, %v1880
  %v1929 = vpack.c.b16 %v1885, %v1883
  %v1930 = vpack.c.b16 %v1886, %v1884
  %v1931 = vpack.c.b16 %v1889, %v1887
  %v1932 = vpack.c.b16 %v1890, %v1888
  %v1933 = vpack.c.b16 %v1893, %v1891
  %v1934 = vpack.c.b16 %v1894, %v1892
  %v1935 = vpack.c.b16 %v1897, %v1895
  %v1936 = vpack.c.b16 %v1898, %v1896
  %v1937 = vpack.c.b16 %v1901, %v1899
  %v1938 = vpack.c.b16 %v1902, %v1900
  %v1939 = vpack.c.b16 %v1905, %v1903
  %v1940 = vpack.c.b16 %v1906, %v1904
  %v1941 = vpack.c.b16 %v1909, %v1907
  %v1942 = vpack.c.b16 %v1910, %v1908
  %1975 = vmatprep.subr.bf16.mxu0 %v1912
  %1976 = vmatpush1.bf16.msra.mxu0 %v1911
  %1977 = vmatprep.subr.bf16.mxu0 %v1914
  %1978 = vmatpush1.bf16.msra.mxu0 %v1913
  %1979 = vmatprep.subr.bf16.mxu0 %v1916
  %1980 = vmatpush1.bf16.msra.mxu0 %v1915
  %1981 = vmatprep.subr.bf16.mxu0 %v1918
  %1982 = vmatpush1.bf16.msra.mxu0 %v1917
  %1983 = vmatprep.subr.bf16.mxu0 %v1920
  %1984 = vmatpush1.bf16.msra.mxu0 %v1919
  %1985 = vmatprep.subr.bf16.mxu0 %v1922
  %1986 = vmatpush1.bf16.msra.mxu0 %v1921
  %1987 = vmatprep.subr.bf16.mxu0 %v1924
  %1988 = vmatpush1.bf16.msra.mxu0 %v1923
  %1989 = vmatprep.subr.bf16.mxu0 %v1926
  %1990 = vmatpush1.bf16.msra.mxu0 %v1925
  %1991 = vmatprep.subr.bf16.mxu0 %v1928
  %1992 = vmatpush1.bf16.msra.mxu0 %v1927
  %1993 = vmatprep.subr.bf16.mxu0 %v1930
  %1994 = vmatpush1.bf16.msra.mxu0 %v1929
  %1995 = vmatprep.subr.bf16.mxu0 %v1932
  %1996 = vmatpush1.bf16.msra.mxu0 %v1931
  %1997 = vmatprep.subr.bf16.mxu0 %v1934
  %1998 = vmatpush1.bf16.msra.mxu0 %v1933
  %1999 = vmatprep.subr.bf16.mxu0 %v1936
  %2000 = vmatpush1.bf16.msra.mxu0 %v1935
  %2001 = vmatprep.subr.bf16.mxu0 %v1938
  %2002 = vmatpush1.bf16.msra.mxu0 %v1937
  %2003 = vmatprep.subr.bf16.mxu0 %v1940
  %2004 = vmatpush1.bf16.msra.mxu0 %v1939
  %2005 = vmatprep.subr.bf16.mxu0 %v1942
  %2006 = vmatpush1.bf16.msra.mxu0 %v1941
  %2007 = vmatprep.mubr.bf16.mxu0 %v1780
  %2008 = vmatmul.mubr.bf16.gmra.mrb[0].mxu0 %v1779
  %v2009 = vpop.f32.mrb[0].mxu0
  %v2010 = vadd.f32 0.0, %v2009
  %v2011 = vpop.f32.mrb[0].mxu0
  %v2012 = vadd.f32 0.0, %v2011
  %v2013 = vpop.f32.mrb[0].mxu0
  %v2014 = vadd.f32 0.0, %v2013
  %v2015 = vpop.f32.mrb[0].mxu0
  %v2016 = vadd.f32 0.0, %v2015
  %2017 = vmatprep.mubr.bf16.mxu0 %v1782
  %2018 = vmatmul.mubr.bf16.gmra.mrb[0].mxu0 %v1781
  %v2019 = vpop.f32.mrb[0].mxu0
  %v2020 = vadd.f32 0.0, %v2019
  %v2021 = vpop.f32.mrb[0].mxu0
  %v2022 = vadd.f32 0.0, %v2021
  %v2023 = vpop.f32.mrb[0].mxu0
  %v2024 = vadd.f32 0.0, %v2023
  %v2025 = vpop.f32.mrb[0].mxu0
  %v2026 = vadd.f32 0.0, %v2025
  %2027 = vmatprep.mubr.bf16.mxu0 %v1784
  %2028 = vmatmul.mubr.bf16.gmra.mrb[0].mxu0 %v1783
  %v2029 = vpop.f32.mrb[0].mxu0
  %v2030 = vadd.f32 0.0, %v2029
  %v2031 = vpop.f32.mrb[0].mxu0
  %v2032 = vadd.f32 0.0, %v2031
  %v2033 = vpop.f32.mrb[0].mxu0
  %v2034 = vadd.f32 0.0, %v2033
  %v2035 = vpop.f32.mrb[0].mxu0
  %v2036 = vadd.f32 0.0, %v2035
  %2037 = vmatprep.mubr.bf16.mxu0 %v1786
  %2038 = vmatmul.mubr.bf16.gmra.mrb[0].mxu0 %v1785
  %v2039 = vpop.f32.mrb[0].mxu0
  %v2040 = vadd.f32 0.0, %v2039
  %v2041 = vpop.f32.mrb[0].mxu0
  %v2042 = vadd.f32 0.0, %v2041
  %v2043 = vpop.f32.mrb[0].mxu0
  %v2044 = vadd.f32 0.0, %v2043
  %v2045 = vpop.f32.mrb[0].mxu0
  %v2046 = vadd.f32 0.0, %v2045
  %2047 = vmatprep.mubr.bf16.mxu0 %v1788
  %2048 = vmatmul.mubr.bf16.gmra.mrb[0].mxu0 %v1787
  %v2049 = vpop.f32.mrb[0].mxu0
  %v2050 = vadd.f32 0.0, %v2049
  %v2051 = vpop.f32.mrb[0].mxu0
  %v2052 = vadd.f32 0.0, %v2051
  %v2053 = vpop.f32.mrb[0].mxu0
  %v2054 = vadd.f32 0.0, %v2053
  %v2055 = vpop.f32.mrb[0].mxu0
  %v2056 = vadd.f32 0.0, %v2055
  %2057 = vmatprep.mubr.bf16.mxu0 %v1790
  %2058 = vmatmul.mubr.bf16.gmra.mrb[0].mxu0 %v1789
  %v2059 = vpop.f32.mrb[0].mxu0
  %v2060 = vadd.f32 0.0, %v2059
  %v2061 = vpop.f32.mrb[0].mxu0
  %v2062 = vadd.f32 0.0, %v2061
  %v2063 = vpop.f32.mrb[0].mxu0
  %v2064 = vadd.f32 0.0, %v2063
  %v2065 = vpop.f32.mrb[0].mxu0
  %v2066 = vadd.f32 0.0, %v2065
  %2067 = vmatprep.mubr.bf16.mxu0 %v1792
  %2068 = vmatmul.mubr.bf16.gmra.mrb[0].mxu0 %v1791
  %v2069 = vpop.f32.mrb[0].mxu0
  %v2070 = vadd.f32 0.0, %v2069
  %v2071 = vpop.f32.mrb[0].mxu0
  %v2072 = vadd.f32 0.0, %v2071
  %v2073 = vpop.f32.mrb[0].mxu0
  %v2074 = vadd.f32 0.0, %v2073
  %v2075 = vpop.f32.mrb[0].mxu0
  %v2076 = vadd.f32 0.0, %v2075
  %2077 = vmatprep.mubr.bf16.mxu0 %v1794
  %2078 = vmatmul.mubr.bf16.gmra.mrb[0].mxu0 %v1793
  %v2079 = vpop.f32.mrb[0].mxu0
  %v2080 = vadd.f32 0.0, %v2079
  %v2081 = vpop.f32.mrb[0].mxu0
  %v2082 = vadd.f32 0.0, %v2081
  %v2083 = vpop.f32.mrb[0].mxu0
  %v2084 = vadd.f32 0.0, %v2083
  %v2085 = vpop.f32.mrb[0].mxu0
  %v2086 = vadd.f32 0.0, %v2085
  %2087 = vmatprep.mubr.bf16.mxu0 %v1796
  %2088 = vmatmul.mubr.bf16.gmra.mrb[0].mxu0 %v1795
  %v2089 = vpop.f32.mrb[0].mxu0
  %v2090 = vadd.f32 0.0, %v2089
  %v2091 = vpop.f32.mrb[0].mxu0
  %v2092 = vadd.f32 0.0, %v2091
  %v2093 = vpop.f32.mrb[0].mxu0
  %v2094 = vadd.f32 0.0, %v2093
  %v2095 = vpop.f32.mrb[0].mxu0
  %v2096 = vadd.f32 0.0, %v2095
  %2097 = vdwg.mxu0
  %v2098 = vadd.f32 %v1637, %v2010
  %v2099 = vadd.f32 %v1638, %v2012
  %v2100 = vadd.f32 %v1639, %v2014
  %v2101 = vadd.f32 %v1640, %v2016
  %v2102 = vadd.f32 %v1641, %v2020
  %v2103 = vadd.f32 %v1642, %v2022
  %v2104 = vadd.f32 %v1643, %v2024
  %v2105 = vadd.f32 %v1644, %v2026
  %v2106 = vadd.f32 %v1645, %v2030
  %v2107 = vadd.f32 %v1646, %v2032
  %v2108 = vadd.f32 %v1647, %v2034
  %v2109 = vadd.f32 %v1648, %v2036
  %v2110 = vadd.f32 %v1649, %v2040
  %v2111 = vadd.f32 %v1650, %v2042
  %v2112 = vadd.f32 %v1651, %v2044
  %v2113 = vadd.f32 %v1652, %v2046
  %v2114 = vadd.f32 %v1653, %v2050
  %v2115 = vadd.f32 %v1654, %v2052
  %v2116 = vadd.f32 %v1655, %v2054
  %v2117 = vadd.f32 %v1656, %v2056
  %v2118 = vadd.f32 %v1657, %v2060
  %v2119 = vadd.f32 %v1658, %v2062
  %v2120 = vadd.f32 %v1659, %v2064
  %v2121 = vadd.f32 %v1660, %v2066
  %v2122 = vadd.f32 %v1661, %v2070
  %v2123 = vadd.f32 %v1662, %v2072
  %v2124 = vadd.f32 %v1663, %v2074
  %v2125 = vadd.f32 %v1664, %v2076
  %v2126 = vadd.f32 %v1665, %v2080
  %v2127 = vadd.f32 %v1666, %v2082
  %v2128 = vadd.f32 %v1667, %v2084
  %v2129 = vadd.f32 %v1668, %v2086
  %v2130 = vadd.f32 %v1669, %v2090
  %v2131 = vadd.f32 %v1670, %v2092
  %v2132 = vadd.f32 %v1671, %v2094
  %v2133 = vadd.f32 %v1672, %v2096
  %v2134 = vld [vmem:[%s1673] sm:$0xff]
  %v2135 = vld [vmem:[%s1673 + $0x8] sm:$0x11]
  %v2136 = vld [vmem:[%s1673 + $0x10] sm:$0xff]
  %v2137 = vld [vmem:[%s1673 + $0x18] sm:$0x11]
  %v2138 = vld [vmem:[%s1673 + $0x20] sm:$0xff]
  %v2139 = vld [vmem:[%s1673 + $0x28] sm:$0x11]
  %v2140 = vld [vmem:[%s1673 + $0x30] sm:$0xff]
  %v2141 = vld [vmem:[%s1673 + $0x38] sm:$0x11]
  %v2142 = vld [vmem:[%s1673 + $0x40] sm:$0xff]
  %v2143 = vld [vmem:[%s1673 + $0x48] sm:$0x11]
  %v2144 = vld [vmem:[%s1673 + $0x50] sm:$0xff]
  %v2145 = vld [vmem:[%s1673 + $0x58] sm:$0x11]
  %v2146 = vld [vmem:[%s1673 + $0x60] sm:$0xff]
  %v2147 = vld [vmem:[%s1673 + $0x68] sm:$0x11]
  %v2148 = vld [vmem:[%s1673 + $0x70] sm:$0xff]
  %v2149 = vld [vmem:[%s1673 + $0x78] sm:$0x11]
  %v2150 = vld [vmem:[%s1673 + $0x80] sm:$0xff]
  %v2151 = vld [vmem:[%s1673 + $0x88] sm:$0x11]
  %v2152 = vld [vmem:[%s1673 + $0xb0] sm:$0xff]
  %v2153 = vld [vmem:[%s1673 + $0xb8] sm:$0x11]
  %v2154 = vld [vmem:[%s1673 + $0xc0] sm:$0xff]
  %v2155 = vld [vmem:[%s1673 + $0xc8] sm:$0x11]
  %v2156 = vld [vmem:[%s1673 + $0xd0] sm:$0xff]
  %v2157 = vld [vmem:[%s1673 + $0xd8] sm:$0x11]
  %v2158 = vld [vmem:[%s1673 + $0xe0] sm:$0xff]
  %v2159 = vld [vmem:[%s1673 + $0xe8] sm:$0x11]
  %v2160 = vld [vmem:[%s1673 + $0xf0] sm:$0xff]
  %v2161 = vld [vmem:[%s1673 + $0xf8] sm:$0x11]
  %v2162 = vld [vmem:[%s1673 + $0x100] sm:$0xff]
  %v2163 = vld [vmem:[%s1673 + $0x108] sm:$0x11]
  %v2164 = vld [vmem:[%s1673 + $0x110] sm:$0xff]
  %v2165 = vld [vmem:[%s1673 + $0x118] sm:$0x11]
  %v2166 = vld [vmem:[%s1673 + $0x120] sm:$0xff]
  %v2167 = vld [vmem:[%s1673 + $0x128] sm:$0x11]
  %v2168 = vld [vmem:[%s1673 + $0x130] sm:$0xff]
  %v2169 = vld [vmem:[%s1673 + $0x138] sm:$0x11]
  %v2171 = vshrl.u32 %v2134, 16
  %v2173 = vrot.slane %v2171, 4
  %v2174 = vshll.u32 %v2134, 16
  %v2176 = vrot.slane %v2174, 5
  %v2177 = vor.u32 %v2173, %v2176
  %v2178 = vrot.slane %v2177, 4
  %v2180 = vshll.u32 %v2135, 16
  %v2182 = vrot.slane %v2180, 5
  %v2183 = vsel %vm106, %v2178, %v2182
  %v2185 = vshrl.u32 %v2136, 16
  %v2187 = vrot.slane %v2185, 4
  %v2188 = vshll.u32 %v2136, 16
  %v2190 = vrot.slane %v2188, 5
  %v2191 = vor.u32 %v2187, %v2190
  %v2192 = vrot.slane %v2191, 4
  %v2194 = vshll.u32 %v2137, 16
  %v2196 = vrot.slane %v2194, 5
  %v2197 = vsel %vm106, %v2192, %v2196
  %v2199 = vshrl.u32 %v2138, 16
  %v2201 = vrot.slane %v2199, 4
  %v2202 = vshll.u32 %v2138, 16
  %v2204 = vrot.slane %v2202, 5
  %v2205 = vor.u32 %v2201, %v2204
  %v2206 = vrot.slane %v2205, 4
  %v2208 = vshll.u32 %v2139, 16
  %v2210 = vrot.slane %v2208, 5
  %v2211 = vsel %vm106, %v2206, %v2210
  %v2213 = vshrl.u32 %v2140, 16
  %v2215 = vrot.slane %v2213, 4
  %v2216 = vshll.u32 %v2140, 16
  %v2218 = vrot.slane %v2216, 5
  %v2219 = vor.u32 %v2215, %v2218
  %v2220 = vrot.slane %v2219, 4
  %v2222 = vshll.u32 %v2141, 16
  %v2224 = vrot.slane %v2222, 5
  %v2225 = vsel %vm106, %v2220, %v2224
  %v2227 = vshrl.u32 %v2142, 16
  %v2229 = vrot.slane %v2227, 4
  %v2230 = vshll.u32 %v2142, 16
  %v2232 = vrot.slane %v2230, 5
  %v2233 = vor.u32 %v2229, %v2232
  %v2234 = vrot.slane %v2233, 4
  %v2236 = vshll.u32 %v2143, 16
  %v2238 = vrot.slane %v2236, 5
  %v2239 = vsel %vm106, %v2234, %v2238
  %v2241 = vshrl.u32 %v2144, 16
  %v2243 = vrot.slane %v2241, 4
  %v2244 = vshll.u32 %v2144, 16
  %v2246 = vrot.slane %v2244, 5
  %v2247 = vor.u32 %v2243, %v2246
  %v2248 = vrot.slane %v2247, 4
  %v2250 = vshll.u32 %v2145, 16
  %v2252 = vrot.slane %v2250, 5
  %v2253 = vsel %vm106, %v2248, %v2252
  %v2255 = vshrl.u32 %v2146, 16
  %v2257 = vrot.slane %v2255, 4
  %v2258 = vshll.u32 %v2146, 16
  %v2260 = vrot.slane %v2258, 5
  %v2261 = vor.u32 %v2257, %v2260
  %v2262 = vrot.slane %v2261, 4
  %v2264 = vshll.u32 %v2147, 16
  %v2266 = vrot.slane %v2264, 5
  %v2267 = vsel %vm106, %v2262, %v2266
  %v2269 = vshrl.u32 %v2148, 16
  %v2271 = vrot.slane %v2269, 4
  %v2272 = vshll.u32 %v2148, 16
  %v2274 = vrot.slane %v2272, 5
  %v2275 = vor.u32 %v2271, %v2274
  %v2276 = vrot.slane %v2275, 4
  %v2278 = vshll.u32 %v2149, 16
  %v2280 = vrot.slane %v2278, 5
  %v2281 = vsel %vm106, %v2276, %v2280
  %v2283 = vshrl.u32 %v2150, 16
  %v2285 = vrot.slane %v2283, 4
  %v2286 = vshll.u32 %v2150, 16
  %v2288 = vrot.slane %v2286, 5
  %v2289 = vor.u32 %v2285, %v2288
  %v2290 = vrot.slane %v2289, 4
  %v2292 = vshll.u32 %v2151, 16
  %v2294 = vrot.slane %v2292, 5
  %v2295 = vsel %vm106, %v2290, %v2294
  %v2297 = vshrl.u32 %v2152, 16
  %v2299 = vrot.slane %v2297, 4
  %v2300 = vshll.u32 %v2152, 16
  %v2302 = vrot.slane %v2300, 5
  %v2303 = vor.u32 %v2299, %v2302
  %v2304 = vrot.slane %v2303, 4
  %v2306 = vshll.u32 %v2153, 16
  %v2308 = vrot.slane %v2306, 5
  %v2309 = vsel %vm106, %v2304, %v2308
  %v2311 = vshrl.u32 %v2154, 16
  %v2313 = vrot.slane %v2311, 4
  %v2314 = vshll.u32 %v2154, 16
  %v2316 = vrot.slane %v2314, 5
  %v2317 = vor.u32 %v2313, %v2316
  %v2318 = vrot.slane %v2317, 4
  %v2320 = vshll.u32 %v2155, 16
  %v2322 = vrot.slane %v2320, 5
  %v2323 = vsel %vm106, %v2318, %v2322
  %v2325 = vshrl.u32 %v2156, 16
  %v2327 = vrot.slane %v2325, 4
  %v2328 = vshll.u32 %v2156, 16
  %v2330 = vrot.slane %v2328, 5
  %v2331 = vor.u32 %v2327, %v2330
  %v2332 = vrot.slane %v2331, 4
  %v2334 = vshll.u32 %v2157, 16
  %v2336 = vrot.slane %v2334, 5
  %v2337 = vsel %vm106, %v2332, %v2336
  %v2339 = vshrl.u32 %v2158, 16
  %v2341 = vrot.slane %v2339, 4
  %v2342 = vshll.u32 %v2158, 16
  %v2344 = vrot.slane %v2342, 5
  %v2345 = vor.u32 %v2341, %v2344
  %v2346 = vrot.slane %v2345, 4
  %v2348 = vshll.u32 %v2159, 16
  %v2350 = vrot.slane %v2348, 5
  %v2351 = vsel %vm106, %v2346, %v2350
  %v2353 = vshrl.u32 %v2160, 16
  %v2355 = vrot.slane %v2353, 4
  %v2356 = vshll.u32 %v2160, 16
  %v2358 = vrot.slane %v2356, 5
  %v2359 = vor.u32 %v2355, %v2358
  %v2360 = vrot.slane %v2359, 4
  %v2362 = vshll.u32 %v2161, 16
  %v2364 = vrot.slane %v2362, 5
  %v2365 = vsel %vm106, %v2360, %v2364
  %v2367 = vshrl.u32 %v2162, 16
  %v2369 = vrot.slane %v2367, 4
  %v2370 = vshll.u32 %v2162, 16
  %v2372 = vrot.slane %v2370, 5
  %v2373 = vor.u32 %v2369, %v2372
  %v2374 = vrot.slane %v2373, 4
  %v2376 = vshll.u32 %v2163, 16
  %v2378 = vrot.slane %v2376, 5
  %v2379 = vsel %vm106, %v2374, %v2378
  %v2381 = vshrl.u32 %v2164, 16
  %v2383 = vrot.slane %v2381, 4
  %v2384 = vshll.u32 %v2164, 16
  %v2386 = vrot.slane %v2384, 5
  %v2387 = vor.u32 %v2383, %v2386
  %v2388 = vrot.slane %v2387, 4
  %v2390 = vshll.u32 %v2165, 16
  %v2392 = vrot.slane %v2390, 5
  %v2393 = vsel %vm106, %v2388, %v2392
  %v2395 = vshrl.u32 %v2166, 16
  %v2397 = vrot.slane %v2395, 4
  %v2398 = vshll.u32 %v2166, 16
  %v2400 = vrot.slane %v2398, 5
  %v2401 = vor.u32 %v2397, %v2400
  %v2402 = vrot.slane %v2401, 4
  %v2404 = vshll.u32 %v2167, 16
  %v2406 = vrot.slane %v2404, 5
  %v2407 = vsel %vm106, %v2402, %v2406
  %v2409 = vshrl.u32 %v2168, 16
  %v2411 = vrot.slane %v2409, 4
  %v2412 = vshll.u32 %v2168, 16
  %v2414 = vrot.slane %v2412, 5
  %v2415 = vor.u32 %v2411, %v2414
  %v2416 = vrot.slane %v2415, 4
  %v2418 = vshll.u32 %v2169, 16
  %v2420 = vrot.slane %v2418, 5
  %v2421 = vsel %vm106, %v2416, %v2420
  %s2422 = scalar_lea.vmem %s2, 1024
  %v2423 = vld [vmem:[%s2422] sm:$0xff]
  %v2424 = vld [vmem:[%s2422 + $0x8] sm:$0xff]
  %v2425 = vld [vmem:[%s2422 + $0x10] sm:$0xff]
  %v2426 = vld [vmem:[%s2422 + $0x18] sm:$0xff]
  %v2427 = vld [vmem:[%s2422 + $0x20] sm:$0xff]
  %v2428 = vld [vmem:[%s2422 + $0x28] sm:$0xff]
  %v2429 = vld [vmem:[%s2422 + $0x30] sm:$0xff]
  %v2430 = vld [vmem:[%s2422 + $0x38] sm:$0xff]
  %v2431 = vld [vmem:[%s2422 + $0x40] sm:$0xff]
  %v2432 = vld [vmem:[%s2422 + $0x48] sm:$0xff]
  %v2433 = vld [vmem:[%s2422 + $0x50] sm:$0xff]
  %v2434 = vld [vmem:[%s2422 + $0x58] sm:$0xff]
  %v2435 = vld [vmem:[%s2422 + $0x60] sm:$0xff]
  %v2436 = vld [vmem:[%s2422 + $0x68] sm:$0xff]
  %v2437 = vld [vmem:[%s2422 + $0x70] sm:$0xff]
  %v2438 = vld [vmem:[%s2422 + $0x78] sm:$0xff]
  %v2439 = vld [vmem:[%s2422 + $0x80] sm:$0xff]
  %v2440 = vld [vmem:[%s2422 + $0x88] sm:$0xff]
  %v2441 = vld [vmem:[%s2422 + $0x90] sm:$0xff]
  %v2442 = vld [vmem:[%s2422 + $0x98] sm:$0xff]
  %v2443 = vld [vmem:[%s2422 + $0xa0] sm:$0xff]
  %v2444 = vld [vmem:[%s2422 + $0xa8] sm:$0xff]
  %v2445 = vld [vmem:[%s2422 + $0xb0] sm:$0xff]
  %v2446 = vld [vmem:[%s2422 + $0xb8] sm:$0xff]
  %v2447 = vld [vmem:[%s2422 + $0xc0] sm:$0xff]
  %v2448 = vld [vmem:[%s2422 + $0xc8] sm:$0xff]
  %v2449 = vld [vmem:[%s2422 + $0xd0] sm:$0xff]
  %v2450 = vld [vmem:[%s2422 + $0xd8] sm:$0xff]
  %v2451 = vld [vmem:[%s2422 + $0xe0] sm:$0xff]
  %v2452 = vld [vmem:[%s2422 + $0xe8] sm:$0xff]
  %v2453 = vld [vmem:[%s2422 + $0xf0] sm:$0xff]
  %v2454 = vld [vmem:[%s2422 + $0xf8] sm:$0xff]
  %v2455 = vunpack.c.l.b16 %v2183
  %v2456 = vunpack.c.h.b16 %v2183
  %v2457 = vunpack.c.l.b16 %v2197
  %v2458 = vunpack.c.h.b16 %v2197
  %v2459 = vunpack.c.l.b16 %v2211
  %v2460 = vunpack.c.h.b16 %v2211
  %v2461 = vunpack.c.l.b16 %v2225
  %v2462 = vunpack.c.h.b16 %v2225
  %v2463 = vunpack.c.l.b16 %v2239
  %v2464 = vunpack.c.h.b16 %v2239
  %v2465 = vunpack.c.l.b16 %v2253
  %v2466 = vunpack.c.h.b16 %v2253
  %v2467 = vunpack.c.l.b16 %v2267
  %v2468 = vunpack.c.h.b16 %v2267
  %v2469 = vunpack.c.l.b16 %v2281
  %v2470 = vunpack.c.h.b16 %v2281
  %v2471 = vunpack.c.l.b16 %v2295
  %v2472 = vunpack.c.h.b16 %v2295
  %v2473 = vunpack.c.l.b16 %v2309
  %v2474 = vunpack.c.h.b16 %v2309
  %v2475 = vunpack.c.l.b16 %v2323
  %v2476 = vunpack.c.h.b16 %v2323
  %v2477 = vunpack.c.l.b16 %v2337
  %v2478 = vunpack.c.h.b16 %v2337
  %v2479 = vunpack.c.l.b16 %v2351
  %v2480 = vunpack.c.h.b16 %v2351
  %v2481 = vunpack.c.l.b16 %v2365
  %v2482 = vunpack.c.h.b16 %v2365
  %v2483 = vunpack.c.l.b16 %v2379
  %v2484 = vunpack.c.h.b16 %v2379
  %v2485 = vunpack.c.l.b16 %v2393
  %v2486 = vunpack.c.h.b16 %v2393
  %v2487 = vunpack.c.l.b16 %v2407
  %v2488 = vunpack.c.h.b16 %v2407
  %v2489 = vunpack.c.l.b16 %v2421
  %v2490 = vunpack.c.h.b16 %v2421
  %v2491 = vpack.c.b16 %v2457, %v2455
  %v2492 = vpack.c.b16 %v2458, %v2456
  %v2493 = vpack.c.b16 %v2461, %v2459
  %v2494 = vpack.c.b16 %v2462, %v2460
  %v2495 = vpack.c.b16 %v2465, %v2463
  %v2496 = vpack.c.b16 %v2466, %v2464
  %v2497 = vpack.c.b16 %v2469, %v2467
  %v2498 = vpack.c.b16 %v2470, %v2468
  %v2499 = vpack.c.b16 %v2473, %v2471
  %v2500 = vpack.c.b16 %v2474, %v2472
  %v2501 = vpack.c.b16 %v2477, %v2475
  %v2502 = vpack.c.b16 %v2478, %v2476
  %v2503 = vpack.c.b16 %v2481, %v2479
  %v2504 = vpack.c.b16 %v2482, %v2480
  %v2505 = vpack.c.b16 %v2485, %v2483
  %v2506 = vpack.c.b16 %v2486, %v2484
  %v2507 = vpack.c.b16 %v2489, %v2487
  %v2508 = vpack.c.b16 %v2490, %v2488
  %v2559 = vunpack.c.l.b16 %v2423
  %v2560 = vunpack.c.h.b16 %v2423
  %v2561 = vunpack.c.l.b16 %v2424
  %v2562 = vunpack.c.h.b16 %v2424
  %v2563 = vunpack.c.l.b16 %v2425
  %v2564 = vunpack.c.h.b16 %v2425
  %v2565 = vunpack.c.l.b16 %v2426
  %v2566 = vunpack.c.h.b16 %v2426
  %v2567 = vunpack.c.l.b16 %v2427
  %v2568 = vunpack.c.h.b16 %v2427
  %v2569 = vunpack.c.l.b16 %v2428
  %v2570 = vunpack.c.h.b16 %v2428
  %v2571 = vunpack.c.l.b16 %v2429
  %v2572 = vunpack.c.h.b16 %v2429
  %v2573 = vunpack.c.l.b16 %v2430
  %v2574 = vunpack.c.h.b16 %v2430
  %v2575 = vunpack.c.l.b16 %v2431
  %v2576 = vunpack.c.h.b16 %v2431
  %v2577 = vunpack.c.l.b16 %v2432
  %v2578 = vunpack.c.h.b16 %v2432
  %v2579 = vunpack.c.l.b16 %v2433
  %v2580 = vunpack.c.h.b16 %v2433
  %v2581 = vunpack.c.l.b16 %v2434
  %v2582 = vunpack.c.h.b16 %v2434
  %v2583 = vunpack.c.l.b16 %v2435
  %v2584 = vunpack.c.h.b16 %v2435
  %v2585 = vunpack.c.l.b16 %v2436
  %v2586 = vunpack.c.h.b16 %v2436
  %v2587 = vunpack.c.l.b16 %v2437
  %v2588 = vunpack.c.h.b16 %v2437
  %v2589 = vunpack.c.l.b16 %v2438
  %v2590 = vunpack.c.h.b16 %v2438
  %v2591 = vunpack.c.l.b16 %v2439
  %v2592 = vunpack.c.h.b16 %v2439
  %v2593 = vunpack.c.l.b16 %v2440
  %v2594 = vunpack.c.h.b16 %v2440
  %v2595 = vunpack.c.l.b16 %v2441
  %v2596 = vunpack.c.h.b16 %v2441
  %v2597 = vunpack.c.l.b16 %v2442
  %v2598 = vunpack.c.h.b16 %v2442
  %v2599 = vunpack.c.l.b16 %v2443
  %v2600 = vunpack.c.h.b16 %v2443
  %v2601 = vunpack.c.l.b16 %v2444
  %v2602 = vunpack.c.h.b16 %v2444
  %v2603 = vunpack.c.l.b16 %v2445
  %v2604 = vunpack.c.h.b16 %v2445
  %v2605 = vunpack.c.l.b16 %v2446
  %v2606 = vunpack.c.h.b16 %v2446
  %v2607 = vunpack.c.l.b16 %v2447
  %v2608 = vunpack.c.h.b16 %v2447
  %v2609 = vunpack.c.l.b16 %v2448
  %v2610 = vunpack.c.h.b16 %v2448
  %v2611 = vunpack.c.l.b16 %v2449
  %v2612 = vunpack.c.h.b16 %v2449
  %v2613 = vunpack.c.l.b16 %v2450
  %v2614 = vunpack.c.h.b16 %v2450
  %v2615 = vunpack.c.l.b16 %v2451
  %v2616 = vunpack.c.h.b16 %v2451
  %v2617 = vunpack.c.l.b16 %v2452
  %v2618 = vunpack.c.h.b16 %v2452
  %v2619 = vunpack.c.l.b16 %v2453
  %v2620 = vunpack.c.h.b16 %v2453
  %v2621 = vunpack.c.l.b16 %v2454
  %v2622 = vunpack.c.h.b16 %v2454
  %v2623 = vpack.c.b16 %v2561, %v2559
  %v2624 = vpack.c.b16 %v2562, %v2560
  %v2625 = vpack.c.b16 %v2565, %v2563
  %v2626 = vpack.c.b16 %v2566, %v2564
  %v2627 = vpack.c.b16 %v2569, %v2567
  %v2628 = vpack.c.b16 %v2570, %v2568
  %v2629 = vpack.c.b16 %v2573, %v2571
  %v2630 = vpack.c.b16 %v2574, %v2572
  %v2631 = vpack.c.b16 %v2577, %v2575
  %v2632 = vpack.c.b16 %v2578, %v2576
  %v2633 = vpack.c.b16 %v2581, %v2579
  %v2634 = vpack.c.b16 %v2582, %v2580
  %v2635 = vpack.c.b16 %v2585, %v2583
  %v2636 = vpack.c.b16 %v2586, %v2584
  %v2637 = vpack.c.b16 %v2589, %v2587
  %v2638 = vpack.c.b16 %v2590, %v2588
  %v2639 = vpack.c.b16 %v2593, %v2591
  %v2640 = vpack.c.b16 %v2594, %v2592
  %v2641 = vpack.c.b16 %v2597, %v2595
  %v2642 = vpack.c.b16 %v2598, %v2596
  %v2643 = vpack.c.b16 %v2601, %v2599
  %v2644 = vpack.c.b16 %v2602, %v2600
  %v2645 = vpack.c.b16 %v2605, %v2603
  %v2646 = vpack.c.b16 %v2606, %v2604
  %v2647 = vpack.c.b16 %v2609, %v2607
  %v2648 = vpack.c.b16 %v2610, %v2608
  %v2649 = vpack.c.b16 %v2613, %v2611
  %v2650 = vpack.c.b16 %v2614, %v2612
  %v2651 = vpack.c.b16 %v2617, %v2615
  %v2652 = vpack.c.b16 %v2618, %v2616
  %v2653 = vpack.c.b16 %v2621, %v2619
  %v2654 = vpack.c.b16 %v2622, %v2620
  %2687 = vmatprep.subr.bf16.mxu0 %v2624
  %2688 = vmatpush1.bf16.msra.mxu0 %v2623
  %2689 = vmatprep.subr.bf16.mxu0 %v2626
  %2690 = vmatpush1.bf16.msra.mxu0 %v2625
  %2691 = vmatprep.subr.bf16.mxu0 %v2628
  %2692 = vmatpush1.bf16.msra.mxu0 %v2627
  %2693 = vmatprep.subr.bf16.mxu0 %v2630
  %2694 = vmatpush1.bf16.msra.mxu0 %v2629
  %2695 = vmatprep.subr.bf16.mxu0 %v2632
  %2696 = vmatpush1.bf16.msra.mxu0 %v2631
  %2697 = vmatprep.subr.bf16.mxu0 %v2634
  %2698 = vmatpush1.bf16.msra.mxu0 %v2633
  %2699 = vmatprep.subr.bf16.mxu0 %v2636
  %2700 = vmatpush1.bf16.msra.mxu0 %v2635
  %2701 = vmatprep.subr.bf16.mxu0 %v2638
  %2702 = vmatpush1.bf16.msra.mxu0 %v2637
  %2703 = vmatprep.subr.bf16.mxu0 %v2640
  %2704 = vmatpush1.bf16.msra.mxu0 %v2639
  %2705 = vmatprep.subr.bf16.mxu0 %v2642
  %2706 = vmatpush1.bf16.msra.mxu0 %v2641
  %2707 = vmatprep.subr.bf16.mxu0 %v2644
  %2708 = vmatpush1.bf16.msra.mxu0 %v2643
  %2709 = vmatprep.subr.bf16.mxu0 %v2646
  %2710 = vmatpush1.bf16.msra.mxu0 %v2645
  %2711 = vmatprep.subr.bf16.mxu0 %v2648
  %2712 = vmatpush1.bf16.msra.mxu0 %v2647
  %2713 = vmatprep.subr.bf16.mxu0 %v2650
  %2714 = vmatpush1.bf16.msra.mxu0 %v2649
  %2715 = vmatprep.subr.bf16.mxu0 %v2652
  %2716 = vmatpush1.bf16.msra.mxu0 %v2651
  %2717 = vmatprep.subr.bf16.mxu0 %v2654
  %2718 = vmatpush1.bf16.msra.mxu0 %v2653
  %2719 = vmatprep.mubr.bf16.mxu0 %v2492
  %2720 = vmatmul.mubr.bf16.gmra.mrb[0].mxu0 %v2491
  %v2721 = vpop.f32.mrb[0].mxu0
  %v2722 = vadd.f32 0.0, %v2721
  %v2723 = vpop.f32.mrb[0].mxu0
  %v2724 = vadd.f32 0.0, %v2723
  %v2725 = vpop.f32.mrb[0].mxu0
  %v2726 = vadd.f32 0.0, %v2725
  %v2727 = vpop.f32.mrb[0].mxu0
  %v2728 = vadd.f32 0.0, %v2727
  %2729 = vmatprep.mubr.bf16.mxu0 %v2494
  %2730 = vmatmul.mubr.bf16.gmra.mrb[0].mxu0 %v2493
  %v2731 = vpop.f32.mrb[0].mxu0
  %v2732 = vadd.f32 0.0, %v2731
  %v2733 = vpop.f32.mrb[0].mxu0
  %v2734 = vadd.f32 0.0, %v2733
  %v2735 = vpop.f32.mrb[0].mxu0
  %v2736 = vadd.f32 0.0, %v2735
  %v2737 = vpop.f32.mrb[0].mxu0
  %v2738 = vadd.f32 0.0, %v2737
  %2739 = vmatprep.mubr.bf16.mxu0 %v2496
  %2740 = vmatmul.mubr.bf16.gmra.mrb[0].mxu0 %v2495
  %v2741 = vpop.f32.mrb[0].mxu0
  %v2742 = vadd.f32 0.0, %v2741
  %v2743 = vpop.f32.mrb[0].mxu0
  %v2744 = vadd.f32 0.0, %v2743
  %v2745 = vpop.f32.mrb[0].mxu0
  %v2746 = vadd.f32 0.0, %v2745
  %v2747 = vpop.f32.mrb[0].mxu0
  %v2748 = vadd.f32 0.0, %v2747
  %2749 = vmatprep.mubr.bf16.mxu0 %v2498
  %2750 = vmatmul.mubr.bf16.gmra.mrb[0].mxu0 %v2497
  %v2751 = vpop.f32.mrb[0].mxu0
  %v2752 = vadd.f32 0.0, %v2751
  %v2753 = vpop.f32.mrb[0].mxu0
  %v2754 = vadd.f32 0.0, %v2753
  %v2755 = vpop.f32.mrb[0].mxu0
  %v2756 = vadd.f32 0.0, %v2755
  %v2757 = vpop.f32.mrb[0].mxu0
  %v2758 = vadd.f32 0.0, %v2757
  %2759 = vmatprep.mubr.bf16.mxu0 %v2500
  %2760 = vmatmul.mubr.bf16.gmra.mrb[0].mxu0 %v2499
  %v2761 = vpop.f32.mrb[0].mxu0
  %v2762 = vadd.f32 0.0, %v2761
  %v2763 = vpop.f32.mrb[0].mxu0
  %v2764 = vadd.f32 0.0, %v2763
  %v2765 = vpop.f32.mrb[0].mxu0
  %v2766 = vadd.f32 0.0, %v2765
  %v2767 = vpop.f32.mrb[0].mxu0
  %v2768 = vadd.f32 0.0, %v2767
  %2769 = vmatprep.mubr.bf16.mxu0 %v2502
  %2770 = vmatmul.mubr.bf16.gmra.mrb[0].mxu0 %v2501
  %v2771 = vpop.f32.mrb[0].mxu0
  %v2772 = vadd.f32 0.0, %v2771
  %v2773 = vpop.f32.mrb[0].mxu0
  %v2774 = vadd.f32 0.0, %v2773
  %v2775 = vpop.f32.mrb[0].mxu0
  %v2776 = vadd.f32 0.0, %v2775
  %v2777 = vpop.f32.mrb[0].mxu0
  %v2778 = vadd.f32 0.0, %v2777
  %2779 = vmatprep.mubr.bf16.mxu0 %v2504
  %2780 = vmatmul.mubr.bf16.gmra.mrb[0].mxu0 %v2503
  %v2781 = vpop.f32.mrb[0].mxu0
  %v2782 = vadd.f32 0.0, %v2781
  %v2783 = vpop.f32.mrb[0].mxu0
  %v2784 = vadd.f32 0.0, %v2783
  %v2785 = vpop.f32.mrb[0].mxu0
  %v2786 = vadd.f32 0.0, %v2785
  %v2787 = vpop.f32.mrb[0].mxu0
  %v2788 = vadd.f32 0.0, %v2787
  %2789 = vmatprep.mubr.bf16.mxu0 %v2506
  %2790 = vmatmul.mubr.bf16.gmra.mrb[0].mxu0 %v2505
  %v2791 = vpop.f32.mrb[0].mxu0
  %v2792 = vadd.f32 0.0, %v2791
  %v2793 = vpop.f32.mrb[0].mxu0
  %v2794 = vadd.f32 0.0, %v2793
  %v2795 = vpop.f32.mrb[0].mxu0
  %v2796 = vadd.f32 0.0, %v2795
  %v2797 = vpop.f32.mrb[0].mxu0
  %v2798 = vadd.f32 0.0, %v2797
  %2799 = vmatprep.mubr.bf16.mxu0 %v2508
  %2800 = vmatmul.mubr.bf16.gmra.mrb[0].mxu0 %v2507
  %v2801 = vpop.f32.mrb[0].mxu0
  %v2802 = vadd.f32 0.0, %v2801
  %v2803 = vpop.f32.mrb[0].mxu0
  %v2804 = vadd.f32 0.0, %v2803
  %v2805 = vpop.f32.mrb[0].mxu0
  %v2806 = vadd.f32 0.0, %v2805
  %v2807 = vpop.f32.mrb[0].mxu0
  %v2808 = vadd.f32 0.0, %v2807
  %2809 = vdwg.mxu0
  %v2810 = vadd.f32 %v2098, %v2722
  %v2811 = vadd.f32 %v2099, %v2724
  %v2812 = vadd.f32 %v2100, %v2726
  %v2813 = vadd.f32 %v2101, %v2728
  %v2814 = vadd.f32 %v2102, %v2732
  %v2815 = vadd.f32 %v2103, %v2734
  %v2816 = vadd.f32 %v2104, %v2736
  %v2817 = vadd.f32 %v2105, %v2738
  %v2818 = vadd.f32 %v2106, %v2742
  %v2819 = vadd.f32 %v2107, %v2744
  %v2820 = vadd.f32 %v2108, %v2746
  %v2821 = vadd.f32 %v2109, %v2748
  %v2822 = vadd.f32 %v2110, %v2752
  %v2823 = vadd.f32 %v2111, %v2754
  %v2824 = vadd.f32 %v2112, %v2756
  %v2825 = vadd.f32 %v2113, %v2758
  %v2826 = vadd.f32 %v2114, %v2762
  %v2827 = vadd.f32 %v2115, %v2764
  %v2828 = vadd.f32 %v2116, %v2766
  %v2829 = vadd.f32 %v2117, %v2768
  %v2830 = vadd.f32 %v2118, %v2772
  %v2831 = vadd.f32 %v2119, %v2774
  %v2832 = vadd.f32 %v2120, %v2776
  %v2833 = vadd.f32 %v2121, %v2778
  %v2834 = vadd.f32 %v2122, %v2782
  %v2835 = vadd.f32 %v2123, %v2784
  %v2836 = vadd.f32 %v2124, %v2786
  %v2837 = vadd.f32 %v2125, %v2788
  %v2838 = vadd.f32 %v2126, %v2792
  %v2839 = vadd.f32 %v2127, %v2794
  %v2840 = vadd.f32 %v2128, %v2796
  %v2841 = vadd.f32 %v2129, %v2798
  %v2842 = vadd.f32 %v2130, %v2802
  %v2843 = vadd.f32 %v2131, %v2804
  %v2844 = vadd.f32 %v2132, %v2806
  %v2845 = vadd.f32 %v2133, %v2808
  %v2846 = vld [vmem:[%s1673] sm:$0xee]
  %v2847 = vld [vmem:[%s1673 + $0x10] sm:$0xee]
  %v2848 = vld [vmem:[%s1673 + $0x20] sm:$0xee]
  %v2849 = vld [vmem:[%s1673 + $0x30] sm:$0xee]
  %v2850 = vld [vmem:[%s1673 + $0x40] sm:$0xee]
  %v2851 = vld [vmem:[%s1673 + $0x50] sm:$0xee]
  %v2852 = vld [vmem:[%s1673 + $0x60] sm:$0xee]
  %v2853 = vld [vmem:[%s1673 + $0x70] sm:$0xee]
  %v2854 = vld [vmem:[%s1673 + $0x80] sm:$0xee]
  %v2855 = vld [vmem:[%s1673 + $0xb0] sm:$0xee]
  %v2856 = vld [vmem:[%s1673 + $0xc0] sm:$0xee]
  %v2857 = vld [vmem:[%s1673 + $0xd0] sm:$0xee]
  %v2858 = vld [vmem:[%s1673 + $0xe0] sm:$0xee]
  %v2859 = vld [vmem:[%s1673 + $0xf0] sm:$0xee]
  %v2860 = vld [vmem:[%s1673 + $0x100] sm:$0xee]
  %v2861 = vld [vmem:[%s1673 + $0x110] sm:$0xee]
  %v2862 = vld [vmem:[%s1673 + $0x120] sm:$0xee]
  %v2863 = vld [vmem:[%s1673 + $0x130] sm:$0xee]
  %v2900 = vrot.slane %v2846, 5
  %v2901 = vrot.slane %v2900, 4
  %v2902 = vrot.slane %v2135, 5
  %v2903 = vsel %vm1176, %v2901, %v2902
  %v2904 = vrot.slane %v2847, 5
  %v2905 = vrot.slane %v2904, 4
  %v2906 = vrot.slane %v2137, 5
  %v2907 = vsel %vm1176, %v2905, %v2906
  %v2908 = vrot.slane %v2848, 5
  %v2909 = vrot.slane %v2908, 4
  %v2910 = vrot.slane %v2139, 5
  %v2911 = vsel %vm1176, %v2909, %v2910
  %v2912 = vrot.slane %v2849, 5
  %v2913 = vrot.slane %v2912, 4
  %v2914 = vrot.slane %v2141, 5
  %v2915 = vsel %vm1176, %v2913, %v2914
  %v2916 = vrot.slane %v2850, 5
  %v2917 = vrot.slane %v2916, 4
  %v2918 = vrot.slane %v2143, 5
  %v2919 = vsel %vm1176, %v2917, %v2918
  %v2920 = vrot.slane %v2851, 5
  %v2921 = vrot.slane %v2920, 4
  %v2922 = vrot.slane %v2145, 5
  %v2923 = vsel %vm1176, %v2921, %v2922
  %v2924 = vrot.slane %v2852, 5
  %v2925 = vrot.slane %v2924, 4
  %v2926 = vrot.slane %v2147, 5
  %v2927 = vsel %vm1176, %v2925, %v2926
  %v2928 = vrot.slane %v2853, 5
  %v2929 = vrot.slane %v2928, 4
  %v2930 = vrot.slane %v2149, 5
  %v2931 = vsel %vm1176, %v2929, %v2930
  %v2932 = vrot.slane %v2854, 5
  %v2933 = vrot.slane %v2932, 4
  %v2934 = vrot.slane %v2151, 5
  %v2935 = vsel %vm1176, %v2933, %v2934
  %v2936 = vrot.slane %v2855, 5
  %v2937 = vrot.slane %v2936, 4
  %v2938 = vrot.slane %v2153, 5
  %v2939 = vsel %vm1176, %v2937, %v2938
  %v2940 = vrot.slane %v2856, 5
  %v2941 = vrot.slane %v2940, 4
  %v2942 = vrot.slane %v2155, 5
  %v2943 = vsel %vm1176, %v2941, %v2942
  %v2944 = vrot.slane %v2857, 5
  %v2945 = vrot.slane %v2944, 4
  %v2946 = vrot.slane %v2157, 5
  %v2947 = vsel %vm1176, %v2945, %v2946
  %v2948 = vrot.slane %v2858, 5
  %v2949 = vrot.slane %v2948, 4
  %v2950 = vrot.slane %v2159, 5
  %v2951 = vsel %vm1176, %v2949, %v2950
  %v2952 = vrot.slane %v2859, 5
  %v2953 = vrot.slane %v2952, 4
  %v2954 = vrot.slane %v2161, 5
  %v2955 = vsel %vm1176, %v2953, %v2954
  %v2956 = vrot.slane %v2860, 5
  %v2957 = vrot.slane %v2956, 4
  %v2958 = vrot.slane %v2163, 5
  %v2959 = vsel %vm1176, %v2957, %v2958
  %v2960 = vrot.slane %v2861, 5
  %v2961 = vrot.slane %v2960, 4
  %v2962 = vrot.slane %v2165, 5
  %v2963 = vsel %vm1176, %v2961, %v2962
  %v2964 = vrot.slane %v2862, 5
  %v2965 = vrot.slane %v2964, 4
  %v2966 = vrot.slane %v2167, 5
  %v2967 = vsel %vm1176, %v2965, %v2966
  %v2968 = vrot.slane %v2863, 5
  %v2969 = vrot.slane %v2968, 4
  %v2970 = vrot.slane %v2169, 5
  %v2971 = vsel %vm1176, %v2969, %v2970
  %s2972 = scalar_lea.vmem %s2, 1280
  %v2973 = vld [vmem:[%s2972] sm:$0xff]
  %v2974 = vld [vmem:[%s2972 + $0x8] sm:$0xff]
  %v2975 = vld [vmem:[%s2972 + $0x10] sm:$0xff]
  %v2976 = vld [vmem:[%s2972 + $0x18] sm:$0xff]
  %v2977 = vld [vmem:[%s2972 + $0x20] sm:$0xff]
  %v2978 = vld [vmem:[%s2972 + $0x28] sm:$0xff]
  %v2979 = vld [vmem:[%s2972 + $0x30] sm:$0xff]
  %v2980 = vld [vmem:[%s2972 + $0x38] sm:$0xff]
  %v2981 = vld [vmem:[%s2972 + $0x40] sm:$0xff]
  %v2982 = vld [vmem:[%s2972 + $0x48] sm:$0xff]
  %v2983 = vld [vmem:[%s2972 + $0x50] sm:$0xff]
  %v2984 = vld [vmem:[%s2972 + $0x58] sm:$0xff]
  %v2985 = vld [vmem:[%s2972 + $0x60] sm:$0xff]
  %v2986 = vld [vmem:[%s2972 + $0x68] sm:$0xff]
  %v2987 = vld [vmem:[%s2972 + $0x70] sm:$0xff]
  %v2988 = vld [vmem:[%s2972 + $0x78] sm:$0xff]
  %v2989 = vld [vmem:[%s2972 + $0x80] sm:$0xff]
  %v2990 = vld [vmem:[%s2972 + $0x88] sm:$0xff]
  %v2991 = vld [vmem:[%s2972 + $0x90] sm:$0xff]
  %v2992 = vld [vmem:[%s2972 + $0x98] sm:$0xff]
  %v2993 = vld [vmem:[%s2972 + $0xa0] sm:$0xff]
  %v2994 = vld [vmem:[%s2972 + $0xa8] sm:$0xff]
  %v2995 = vld [vmem:[%s2972 + $0xb0] sm:$0xff]
  %v2996 = vld [vmem:[%s2972 + $0xb8] sm:$0xff]
  %v2997 = vld [vmem:[%s2972 + $0xc0] sm:$0xff]
  %v2998 = vld [vmem:[%s2972 + $0xc8] sm:$0xff]
  %v2999 = vld [vmem:[%s2972 + $0xd0] sm:$0xff]
  %v3000 = vld [vmem:[%s2972 + $0xd8] sm:$0xff]
  %v3001 = vld [vmem:[%s2972 + $0xe0] sm:$0xff]
  %v3002 = vld [vmem:[%s2972 + $0xe8] sm:$0xff]
  %v3003 = vld [vmem:[%s2972 + $0xf0] sm:$0xff]
  %v3004 = vld [vmem:[%s2972 + $0xf8] sm:$0xff]
  %v3005 = vunpack.c.l.b16 %v2903
  %v3006 = vunpack.c.h.b16 %v2903
  %v3007 = vunpack.c.l.b16 %v2907
  %v3008 = vunpack.c.h.b16 %v2907
  %v3009 = vunpack.c.l.b16 %v2911
  %v3010 = vunpack.c.h.b16 %v2911
  %v3011 = vunpack.c.l.b16 %v2915
  %v3012 = vunpack.c.h.b16 %v2915
  %v3013 = vunpack.c.l.b16 %v2919
  %v3014 = vunpack.c.h.b16 %v2919
  %v3015 = vunpack.c.l.b16 %v2923
  %v3016 = vunpack.c.h.b16 %v2923
  %v3017 = vunpack.c.l.b16 %v2927
  %v3018 = vunpack.c.h.b16 %v2927
  %v3019 = vunpack.c.l.b16 %v2931
  %v3020 = vunpack.c.h.b16 %v2931
  %v3021 = vunpack.c.l.b16 %v2935
  %v3022 = vunpack.c.h.b16 %v2935
  %v3023 = vunpack.c.l.b16 %v2939
  %v3024 = vunpack.c.h.b16 %v2939
  %v3025 = vunpack.c.l.b16 %v2943
  %v3026 = vunpack.c.h.b16 %v2943
  %v3027 = vunpack.c.l.b16 %v2947
  %v3028 = vunpack.c.h.b16 %v2947
  %v3029 = vunpack.c.l.b16 %v2951
  %v3030 = vunpack.c.h.b16 %v2951
  %v3031 = vunpack.c.l.b16 %v2955
  %v3032 = vunpack.c.h.b16 %v2955
  %v3033 = vunpack.c.l.b16 %v2959
  %v3034 = vunpack.c.h.b16 %v2959
  %v3035 = vunpack.c.l.b16 %v2963
  %v3036 = vunpack.c.h.b16 %v2963
  %v3037 = vunpack.c.l.b16 %v2967
  %v3038 = vunpack.c.h.b16 %v2967
  %v3039 = vunpack.c.l.b16 %v2971
  %v3040 = vunpack.c.h.b16 %v2971
  %v3041 = vpack.c.b16 %v3007, %v3005
  %v3042 = vpack.c.b16 %v3008, %v3006
  %v3043 = vpack.c.b16 %v3011, %v3009
  %v3044 = vpack.c.b16 %v3012, %v3010
  %v3045 = vpack.c.b16 %v3015, %v3013
  %v3046 = vpack.c.b16 %v3016, %v3014
  %v3047 = vpack.c.b16 %v3019, %v3017
  %v3048 = vpack.c.b16 %v3020, %v3018
  %v3049 = vpack.c.b16 %v3023, %v3021
  %v3050 = vpack.c.b16 %v3024, %v3022
  %v3051 = vpack.c.b16 %v3027, %v3025
  %v3052 = vpack.c.b16 %v3028, %v3026
  %v3053 = vpack.c.b16 %v3031, %v3029
  %v3054 = vpack.c.b16 %v3032, %v3030
  %v3055 = vpack.c.b16 %v3035, %v3033
  %v3056 = vpack.c.b16 %v3036, %v3034
  %v3057 = vpack.c.b16 %v3039, %v3037
  %v3058 = vpack.c.b16 %v3040, %v3038
  %v3109 = vunpack.c.l.b16 %v2973
  %v3110 = vunpack.c.h.b16 %v2973
  %v3111 = vunpack.c.l.b16 %v2974
  %v3112 = vunpack.c.h.b16 %v2974
  %v3113 = vunpack.c.l.b16 %v2975
  %v3114 = vunpack.c.h.b16 %v2975
  %v3115 = vunpack.c.l.b16 %v2976
  %v3116 = vunpack.c.h.b16 %v2976
  %v3117 = vunpack.c.l.b16 %v2977
  %v3118 = vunpack.c.h.b16 %v2977
  %v3119 = vunpack.c.l.b16 %v2978
  %v3120 = vunpack.c.h.b16 %v2978
  %v3121 = vunpack.c.l.b16 %v2979
  %v3122 = vunpack.c.h.b16 %v2979
  %v3123 = vunpack.c.l.b16 %v2980
  %v3124 = vunpack.c.h.b16 %v2980
  %v3125 = vunpack.c.l.b16 %v2981
  %v3126 = vunpack.c.h.b16 %v2981
  %v3127 = vunpack.c.l.b16 %v2982
  %v3128 = vunpack.c.h.b16 %v2982
  %v3129 = vunpack.c.l.b16 %v2983
  %v3130 = vunpack.c.h.b16 %v2983
  %v3131 = vunpack.c.l.b16 %v2984
  %v3132 = vunpack.c.h.b16 %v2984
  %v3133 = vunpack.c.l.b16 %v2985
  %v3134 = vunpack.c.h.b16 %v2985
  %v3135 = vunpack.c.l.b16 %v2986
  %v3136 = vunpack.c.h.b16 %v2986
  %v3137 = vunpack.c.l.b16 %v2987
  %v3138 = vunpack.c.h.b16 %v2987
  %v3139 = vunpack.c.l.b16 %v2988
  %v3140 = vunpack.c.h.b16 %v2988
  %v3141 = vunpack.c.l.b16 %v2989
  %v3142 = vunpack.c.h.b16 %v2989
  %v3143 = vunpack.c.l.b16 %v2990
  %v3144 = vunpack.c.h.b16 %v2990
  %v3145 = vunpack.c.l.b16 %v2991
  %v3146 = vunpack.c.h.b16 %v2991
  %v3147 = vunpack.c.l.b16 %v2992
  %v3148 = vunpack.c.h.b16 %v2992
  %v3149 = vunpack.c.l.b16 %v2993
  %v3150 = vunpack.c.h.b16 %v2993
  %v3151 = vunpack.c.l.b16 %v2994
  %v3152 = vunpack.c.h.b16 %v2994
  %v3153 = vunpack.c.l.b16 %v2995
  %v3154 = vunpack.c.h.b16 %v2995
  %v3155 = vunpack.c.l.b16 %v2996
  %v3156 = vunpack.c.h.b16 %v2996
  %v3157 = vunpack.c.l.b16 %v2997
  %v3158 = vunpack.c.h.b16 %v2997
  %v3159 = vunpack.c.l.b16 %v2998
  %v3160 = vunpack.c.h.b16 %v2998
  %v3161 = vunpack.c.l.b16 %v2999
  %v3162 = vunpack.c.h.b16 %v2999
  %v3163 = vunpack.c.l.b16 %v3000
  %v3164 = vunpack.c.h.b16 %v3000
  %v3165 = vunpack.c.l.b16 %v3001
  %v3166 = vunpack.c.h.b16 %v3001
  %v3167 = vunpack.c.l.b16 %v3002
  %v3168 = vunpack.c.h.b16 %v3002
  %v3169 = vunpack.c.l.b16 %v3003
  %v3170 = vunpack.c.h.b16 %v3003
  %v3171 = vunpack.c.l.b16 %v3004
  %v3172 = vunpack.c.h.b16 %v3004
  %v3173 = vpack.c.b16 %v3111, %v3109
  %v3174 = vpack.c.b16 %v3112, %v3110
  %v3175 = vpack.c.b16 %v3115, %v3113
  %v3176 = vpack.c.b16 %v3116, %v3114
  %v3177 = vpack.c.b16 %v3119, %v3117
  %v3178 = vpack.c.b16 %v3120, %v3118
  %v3179 = vpack.c.b16 %v3123, %v3121
  %v3180 = vpack.c.b16 %v3124, %v3122
  %v3181 = vpack.c.b16 %v3127, %v3125
  %v3182 = vpack.c.b16 %v3128, %v3126
  %v3183 = vpack.c.b16 %v3131, %v3129
  %v3184 = vpack.c.b16 %v3132, %v3130
  %v3185 = vpack.c.b16 %v3135, %v3133
  %v3186 = vpack.c.b16 %v3136, %v3134
  %v3187 = vpack.c.b16 %v3139, %v3137
  %v3188 = vpack.c.b16 %v3140, %v3138
  %v3189 = vpack.c.b16 %v3143, %v3141
  %v3190 = vpack.c.b16 %v3144, %v3142
  %v3191 = vpack.c.b16 %v3147, %v3145
  %v3192 = vpack.c.b16 %v3148, %v3146
  %v3193 = vpack.c.b16 %v3151, %v3149
  %v3194 = vpack.c.b16 %v3152, %v3150
  %v3195 = vpack.c.b16 %v3155, %v3153
  %v3196 = vpack.c.b16 %v3156, %v3154
  %v3197 = vpack.c.b16 %v3159, %v3157
  %v3198 = vpack.c.b16 %v3160, %v3158
  %v3199 = vpack.c.b16 %v3163, %v3161
  %v3200 = vpack.c.b16 %v3164, %v3162
  %v3201 = vpack.c.b16 %v3167, %v3165
  %v3202 = vpack.c.b16 %v3168, %v3166
  %v3203 = vpack.c.b16 %v3171, %v3169
  %v3204 = vpack.c.b16 %v3172, %v3170
  %3237 = vmatprep.subr.bf16.mxu0 %v3174
  %3238 = vmatpush1.bf16.msra.mxu0 %v3173
  %3239 = vmatprep.subr.bf16.mxu0 %v3176
  %3240 = vmatpush1.bf16.msra.mxu0 %v3175
  %3241 = vmatprep.subr.bf16.mxu0 %v3178
  %3242 = vmatpush1.bf16.msra.mxu0 %v3177
  %3243 = vmatprep.subr.bf16.mxu0 %v3180
  %3244 = vmatpush1.bf16.msra.mxu0 %v3179
  %3245 = vmatprep.subr.bf16.mxu0 %v3182
  %3246 = vmatpush1.bf16.msra.mxu0 %v3181
  %3247 = vmatprep.subr.bf16.mxu0 %v3184
  %3248 = vmatpush1.bf16.msra.mxu0 %v3183
  %3249 = vmatprep.subr.bf16.mxu0 %v3186
  %3250 = vmatpush1.bf16.msra.mxu0 %v3185
  %3251 = vmatprep.subr.bf16.mxu0 %v3188
  %3252 = vmatpush1.bf16.msra.mxu0 %v3187
  %3253 = vmatprep.subr.bf16.mxu0 %v3190
  %3254 = vmatpush1.bf16.msra.mxu0 %v3189
  %3255 = vmatprep.subr.bf16.mxu0 %v3192
  %3256 = vmatpush1.bf16.msra.mxu0 %v3191
  %3257 = vmatprep.subr.bf16.mxu0 %v3194
  %3258 = vmatpush1.bf16.msra.mxu0 %v3193
  %3259 = vmatprep.subr.bf16.mxu0 %v3196
  %3260 = vmatpush1.bf16.msra.mxu0 %v3195
  %3261 = vmatprep.subr.bf16.mxu0 %v3198
  %3262 = vmatpush1.bf16.msra.mxu0 %v3197
  %3263 = vmatprep.subr.bf16.mxu0 %v3200
  %3264 = vmatpush1.bf16.msra.mxu0 %v3199
  %3265 = vmatprep.subr.bf16.mxu0 %v3202
  %3266 = vmatpush1.bf16.msra.mxu0 %v3201
  %3267 = vmatprep.subr.bf16.mxu0 %v3204
  %3268 = vmatpush1.bf16.msra.mxu0 %v3203
  %3269 = vmatprep.mubr.bf16.mxu0 %v3042
  %3270 = vmatmul.mubr.bf16.gmra.mrb[0].mxu0 %v3041
  %v3271 = vpop.f32.mrb[0].mxu0
  %v3272 = vadd.f32 0.0, %v3271
  %v3273 = vpop.f32.mrb[0].mxu0
  %v3274 = vadd.f32 0.0, %v3273
  %v3275 = vpop.f32.mrb[0].mxu0
  %v3276 = vadd.f32 0.0, %v3275
  %v3277 = vpop.f32.mrb[0].mxu0
  %v3278 = vadd.f32 0.0, %v3277
  %3279 = vmatprep.mubr.bf16.mxu0 %v3044
  %3280 = vmatmul.mubr.bf16.gmra.mrb[0].mxu0 %v3043
  %v3281 = vpop.f32.mrb[0].mxu0
  %v3282 = vadd.f32 0.0, %v3281
  %v3283 = vpop.f32.mrb[0].mxu0
  %v3284 = vadd.f32 0.0, %v3283
  %v3285 = vpop.f32.mrb[0].mxu0
  %v3286 = vadd.f32 0.0, %v3285
  %v3287 = vpop.f32.mrb[0].mxu0
  %v3288 = vadd.f32 0.0, %v3287
  %3289 = vmatprep.mubr.bf16.mxu0 %v3046
  %3290 = vmatmul.mubr.bf16.gmra.mrb[0].mxu0 %v3045
  %v3291 = vpop.f32.mrb[0].mxu0
  %v3292 = vadd.f32 0.0, %v3291
  %v3293 = vpop.f32.mrb[0].mxu0
  %v3294 = vadd.f32 0.0, %v3293
  %v3295 = vpop.f32.mrb[0].mxu0
  %v3296 = vadd.f32 0.0, %v3295
  %v3297 = vpop.f32.mrb[0].mxu0
  %v3298 = vadd.f32 0.0, %v3297
  %3299 = vmatprep.mubr.bf16.mxu0 %v3048
  %3300 = vmatmul.mubr.bf16.gmra.mrb[0].mxu0 %v3047
  %v3301 = vpop.f32.mrb[0].mxu0
  %v3302 = vadd.f32 0.0, %v3301
  %v3303 = vpop.f32.mrb[0].mxu0
  %v3304 = vadd.f32 0.0, %v3303
  %v3305 = vpop.f32.mrb[0].mxu0
  %v3306 = vadd.f32 0.0, %v3305
  %v3307 = vpop.f32.mrb[0].mxu0
  %v3308 = vadd.f32 0.0, %v3307
  %3309 = vmatprep.mubr.bf16.mxu0 %v3050
  %3310 = vmatmul.mubr.bf16.gmra.mrb[0].mxu0 %v3049
  %v3311 = vpop.f32.mrb[0].mxu0
  %v3312 = vadd.f32 0.0, %v3311
  %v3313 = vpop.f32.mrb[0].mxu0
  %v3314 = vadd.f32 0.0, %v3313
  %v3315 = vpop.f32.mrb[0].mxu0
  %v3316 = vadd.f32 0.0, %v3315
  %v3317 = vpop.f32.mrb[0].mxu0
  %v3318 = vadd.f32 0.0, %v3317
  %3319 = vmatprep.mubr.bf16.mxu0 %v3052
  %3320 = vmatmul.mubr.bf16.gmra.mrb[0].mxu0 %v3051
  %v3321 = vpop.f32.mrb[0].mxu0
  %v3322 = vadd.f32 0.0, %v3321
  %v3323 = vpop.f32.mrb[0].mxu0
  %v3324 = vadd.f32 0.0, %v3323
  %v3325 = vpop.f32.mrb[0].mxu0
  %v3326 = vadd.f32 0.0, %v3325
  %v3327 = vpop.f32.mrb[0].mxu0
  %v3328 = vadd.f32 0.0, %v3327
  %3329 = vmatprep.mubr.bf16.mxu0 %v3054
  %3330 = vmatmul.mubr.bf16.gmra.mrb[0].mxu0 %v3053
  %v3331 = vpop.f32.mrb[0].mxu0
  %v3332 = vadd.f32 0.0, %v3331
  %v3333 = vpop.f32.mrb[0].mxu0
  %v3334 = vadd.f32 0.0, %v3333
  %v3335 = vpop.f32.mrb[0].mxu0
  %v3336 = vadd.f32 0.0, %v3335
  %v3337 = vpop.f32.mrb[0].mxu0
  %v3338 = vadd.f32 0.0, %v3337
  %3339 = vmatprep.mubr.bf16.mxu0 %v3056
  %3340 = vmatmul.mubr.bf16.gmra.mrb[0].mxu0 %v3055
  %v3341 = vpop.f32.mrb[0].mxu0
  %v3342 = vadd.f32 0.0, %v3341
  %v3343 = vpop.f32.mrb[0].mxu0
  %v3344 = vadd.f32 0.0, %v3343
  %v3345 = vpop.f32.mrb[0].mxu0
  %v3346 = vadd.f32 0.0, %v3345
  %v3347 = vpop.f32.mrb[0].mxu0
  %v3348 = vadd.f32 0.0, %v3347
  %3349 = vmatprep.mubr.bf16.mxu0 %v3058
  %3350 = vmatmul.mubr.bf16.gmra.mrb[0].mxu0 %v3057
  %v3351 = vpop.f32.mrb[0].mxu0
  %v3352 = vadd.f32 0.0, %v3351
  %v3353 = vpop.f32.mrb[0].mxu0
  %v3354 = vadd.f32 0.0, %v3353
  %v3355 = vpop.f32.mrb[0].mxu0
  %v3356 = vadd.f32 0.0, %v3355
  %v3357 = vpop.f32.mrb[0].mxu0
  %v3358 = vadd.f32 0.0, %v3357
  %3359 = vdwg.mxu0
  %v3360 = vadd.f32 %v2810, %v3272
  %v3361 = vadd.f32 %v2811, %v3274
  %v3362 = vadd.f32 %v2812, %v3276
  %v3363 = vadd.f32 %v2813, %v3278
  %v3364 = vadd.f32 %v2814, %v3282
  %v3365 = vadd.f32 %v2815, %v3284
  %v3366 = vadd.f32 %v2816, %v3286
  %v3367 = vadd.f32 %v2817, %v3288
  %v3368 = vadd.f32 %v2818, %v3292
  %v3369 = vadd.f32 %v2819, %v3294
  %v3370 = vadd.f32 %v2820, %v3296
  %v3371 = vadd.f32 %v2821, %v3298
  %v3372 = vadd.f32 %v2822, %v3302
  %v3373 = vadd.f32 %v2823, %v3304
  %v3374 = vadd.f32 %v2824, %v3306
  %v3375 = vadd.f32 %v2825, %v3308
  %v3376 = vadd.f32 %v2826, %v3312
  %v3377 = vadd.f32 %v2827, %v3314
  %v3378 = vadd.f32 %v2828, %v3316
  %v3379 = vadd.f32 %v2829, %v3318
  %v3380 = vadd.f32 %v2830, %v3322
  %v3381 = vadd.f32 %v2831, %v3324
  %v3382 = vadd.f32 %v2832, %v3326
  %v3383 = vadd.f32 %v2833, %v3328
  %v3384 = vadd.f32 %v2834, %v3332
  %v3385 = vadd.f32 %v2835, %v3334
  %v3386 = vadd.f32 %v2836, %v3336
  %v3387 = vadd.f32 %v2837, %v3338
  %v3388 = vadd.f32 %v2838, %v3342
  %v3389 = vadd.f32 %v2839, %v3344
  %v3390 = vadd.f32 %v2840, %v3346
  %v3391 = vadd.f32 %v2841, %v3348
  %v3392 = vadd.f32 %v2842, %v3352
  %v3393 = vadd.f32 %v2843, %v3354
  %v3394 = vadd.f32 %v2844, %v3356
  %v3395 = vadd.f32 %v2845, %v3358
  %s3396 = scalar_lea.vmem %s0, 32
  %v3397 = vld [vmem:[%s3396] sm:$0xff]
  %v3398 = vld [vmem:[%s3396 + $0x10] sm:$0xff]
  %v3399 = vld [vmem:[%s3396 + $0x20] sm:$0xff]
  %v3400 = vld [vmem:[%s3396 + $0x30] sm:$0xff]
  %v3401 = vld [vmem:[%s3396 + $0x40] sm:$0xff]
  %v3402 = vld [vmem:[%s3396 + $0x50] sm:$0xff]
  %v3403 = vld [vmem:[%s3396 + $0x60] sm:$0xff]
  %v3404 = vld [vmem:[%s3396 + $0x70] sm:$0xff]
  %v3405 = vld [vmem:[%s3396 + $0x80] sm:$0xff]
  %v3406 = vld [vmem:[%s3396 + $0xb0] sm:$0xff]
  %v3407 = vld [vmem:[%s3396 + $0xc0] sm:$0xff]
  %v3408 = vld [vmem:[%s3396 + $0xd0] sm:$0xff]
  %v3409 = vld [vmem:[%s3396 + $0xe0] sm:$0xff]
  %v3410 = vld [vmem:[%s3396 + $0xf0] sm:$0xff]
  %v3411 = vld [vmem:[%s3396 + $0x100] sm:$0xff]
  %v3412 = vld [vmem:[%s3396 + $0x110] sm:$0xff]
  %v3413 = vld [vmem:[%s3396 + $0x120] sm:$0xff]
  %v3414 = vld [vmem:[%s3396 + $0x130] sm:$0xff]
  %s3415 = scalar_lea.vmem %s2, 1536
  %v3416 = vld [vmem:[%s3415] sm:$0xff]
  %v3417 = vld [vmem:[%s3415 + $0x8] sm:$0xff]
  %v3418 = vld [vmem:[%s3415 + $0x10] sm:$0xff]
  %v3419 = vld [vmem:[%s3415 + $0x18] sm:$0xff]
  %v3420 = vld [vmem:[%s3415 + $0x20] sm:$0xff]
  %v3421 = vld [vmem:[%s3415 + $0x28] sm:$0xff]
  %v3422 = vld [vmem:[%s3415 + $0x30] sm:$0xff]
  %v3423 = vld [vmem:[%s3415 + $0x38] sm:$0xff]
  %v3424 = vld [vmem:[%s3415 + $0x40] sm:$0xff]
  %v3425 = vld [vmem:[%s3415 + $0x48] sm:$0xff]
  %v3426 = vld [vmem:[%s3415 + $0x50] sm:$0xff]
  %v3427 = vld [vmem:[%s3415 + $0x58] sm:$0xff]
  %v3428 = vld [vmem:[%s3415 + $0x60] sm:$0xff]
  %v3429 = vld [vmem:[%s3415 + $0x68] sm:$0xff]
  %v3430 = vld [vmem:[%s3415 + $0x70] sm:$0xff]
  %v3431 = vld [vmem:[%s3415 + $0x78] sm:$0xff]
  %v3432 = vld [vmem:[%s3415 + $0x80] sm:$0xff]
  %v3433 = vld [vmem:[%s3415 + $0x88] sm:$0xff]
  %v3434 = vld [vmem:[%s3415 + $0x90] sm:$0xff]
  %v3435 = vld [vmem:[%s3415 + $0x98] sm:$0xff]
  %v3436 = vld [vmem:[%s3415 + $0xa0] sm:$0xff]
  %v3437 = vld [vmem:[%s3415 + $0xa8] sm:$0xff]
  %v3438 = vld [vmem:[%s3415 + $0xb0] sm:$0xff]
  %v3439 = vld [vmem:[%s3415 + $0xb8] sm:$0xff]
  %v3440 = vld [vmem:[%s3415 + $0xc0] sm:$0xff]
  %v3441 = vld [vmem:[%s3415 + $0xc8] sm:$0xff]
  %v3442 = vld [vmem:[%s3415 + $0xd0] sm:$0xff]
  %v3443 = vld [vmem:[%s3415 + $0xd8] sm:$0xff]
  %v3444 = vld [vmem:[%s3415 + $0xe0] sm:$0xff]
  %v3445 = vld [vmem:[%s3415 + $0xe8] sm:$0xff]
  %v3446 = vld [vmem:[%s3415 + $0xf0] sm:$0xff]
  %v3447 = vld [vmem:[%s3415 + $0xf8] sm:$0xff]
  %v3466 = vunpack.c.l.b16 %v3397
  %v3467 = vunpack.c.h.b16 %v3397
  %v3468 = vunpack.c.l.b16 %v3398
  %v3469 = vunpack.c.h.b16 %v3398
  %v3470 = vunpack.c.l.b16 %v3399
  %v3471 = vunpack.c.h.b16 %v3399
  %v3472 = vunpack.c.l.b16 %v3400
  %v3473 = vunpack.c.h.b16 %v3400
  %v3474 = vunpack.c.l.b16 %v3401
  %v3475 = vunpack.c.h.b16 %v3401
  %v3476 = vunpack.c.l.b16 %v3402
  %v3477 = vunpack.c.h.b16 %v3402
  %v3478 = vunpack.c.l.b16 %v3403
  %v3479 = vunpack.c.h.b16 %v3403
  %v3480 = vunpack.c.l.b16 %v3404
  %v3481 = vunpack.c.h.b16 %v3404
  %v3482 = vunpack.c.l.b16 %v3405
  %v3483 = vunpack.c.h.b16 %v3405
  %v3484 = vunpack.c.l.b16 %v3406
  %v3485 = vunpack.c.h.b16 %v3406
  %v3486 = vunpack.c.l.b16 %v3407
  %v3487 = vunpack.c.h.b16 %v3407
  %v3488 = vunpack.c.l.b16 %v3408
  %v3489 = vunpack.c.h.b16 %v3408
  %v3490 = vunpack.c.l.b16 %v3409
  %v3491 = vunpack.c.h.b16 %v3409
  %v3492 = vunpack.c.l.b16 %v3410
  %v3493 = vunpack.c.h.b16 %v3410
  %v3494 = vunpack.c.l.b16 %v3411
  %v3495 = vunpack.c.h.b16 %v3411
  %v3496 = vunpack.c.l.b16 %v3412
  %v3497 = vunpack.c.h.b16 %v3412
  %v3498 = vunpack.c.l.b16 %v3413
  %v3499 = vunpack.c.h.b16 %v3413
  %v3500 = vunpack.c.l.b16 %v3414
  %v3501 = vunpack.c.h.b16 %v3414
  %v3502 = vpack.c.b16 %v3468, %v3466
  %v3503 = vpack.c.b16 %v3469, %v3467
  %v3504 = vpack.c.b16 %v3472, %v3470
  %v3505 = vpack.c.b16 %v3473, %v3471
  %v3506 = vpack.c.b16 %v3476, %v3474
  %v3507 = vpack.c.b16 %v3477, %v3475
  %v3508 = vpack.c.b16 %v3480, %v3478
  %v3509 = vpack.c.b16 %v3481, %v3479
  %v3510 = vpack.c.b16 %v3484, %v3482
  %v3511 = vpack.c.b16 %v3485, %v3483
  %v3512 = vpack.c.b16 %v3488, %v3486
  %v3513 = vpack.c.b16 %v3489, %v3487
  %v3514 = vpack.c.b16 %v3492, %v3490
  %v3515 = vpack.c.b16 %v3493, %v3491
  %v3516 = vpack.c.b16 %v3496, %v3494
  %v3517 = vpack.c.b16 %v3497, %v3495
  %v3518 = vpack.c.b16 %v3500, %v3498
  %v3519 = vpack.c.b16 %v3501, %v3499
  %v3570 = vunpack.c.l.b16 %v3416
  %v3571 = vunpack.c.h.b16 %v3416
  %v3572 = vunpack.c.l.b16 %v3417
  %v3573 = vunpack.c.h.b16 %v3417
  %v3574 = vunpack.c.l.b16 %v3418
  %v3575 = vunpack.c.h.b16 %v3418
  %v3576 = vunpack.c.l.b16 %v3419
  %v3577 = vunpack.c.h.b16 %v3419
  %v3578 = vunpack.c.l.b16 %v3420
  %v3579 = vunpack.c.h.b16 %v3420
  %v3580 = vunpack.c.l.b16 %v3421
  %v3581 = vunpack.c.h.b16 %v3421
  %v3582 = vunpack.c.l.b16 %v3422
  %v3583 = vunpack.c.h.b16 %v3422
  %v3584 = vunpack.c.l.b16 %v3423
  %v3585 = vunpack.c.h.b16 %v3423
  %v3586 = vunpack.c.l.b16 %v3424
  %v3587 = vunpack.c.h.b16 %v3424
  %v3588 = vunpack.c.l.b16 %v3425
  %v3589 = vunpack.c.h.b16 %v3425
  %v3590 = vunpack.c.l.b16 %v3426
  %v3591 = vunpack.c.h.b16 %v3426
  %v3592 = vunpack.c.l.b16 %v3427
  %v3593 = vunpack.c.h.b16 %v3427
  %v3594 = vunpack.c.l.b16 %v3428
  %v3595 = vunpack.c.h.b16 %v3428
  %v3596 = vunpack.c.l.b16 %v3429
  %v3597 = vunpack.c.h.b16 %v3429
  %v3598 = vunpack.c.l.b16 %v3430
  %v3599 = vunpack.c.h.b16 %v3430
  %v3600 = vunpack.c.l.b16 %v3431
  %v3601 = vunpack.c.h.b16 %v3431
  %v3602 = vunpack.c.l.b16 %v3432
  %v3603 = vunpack.c.h.b16 %v3432
  %v3604 = vunpack.c.l.b16 %v3433
  %v3605 = vunpack.c.h.b16 %v3433
  %v3606 = vunpack.c.l.b16 %v3434
  %v3607 = vunpack.c.h.b16 %v3434
  %v3608 = vunpack.c.l.b16 %v3435
  %v3609 = vunpack.c.h.b16 %v3435
  %v3610 = vunpack.c.l.b16 %v3436
  %v3611 = vunpack.c.h.b16 %v3436
  %v3612 = vunpack.c.l.b16 %v3437
  %v3613 = vunpack.c.h.b16 %v3437
  %v3614 = vunpack.c.l.b16 %v3438
  %v3615 = vunpack.c.h.b16 %v3438
  %v3616 = vunpack.c.l.b16 %v3439
  %v3617 = vunpack.c.h.b16 %v3439
  %v3618 = vunpack.c.l.b16 %v3440
  %v3619 = vunpack.c.h.b16 %v3440
  %v3620 = vunpack.c.l.b16 %v3441
  %v3621 = vunpack.c.h.b16 %v3441
  %v3622 = vunpack.c.l.b16 %v3442
  %v3623 = vunpack.c.h.b16 %v3442
  %v3624 = vunpack.c.l.b16 %v3443
  %v3625 = vunpack.c.h.b16 %v3443
  %v3626 = vunpack.c.l.b16 %v3444
  %v3627 = vunpack.c.h.b16 %v3444
  %v3628 = vunpack.c.l.b16 %v3445
  %v3629 = vunpack.c.h.b16 %v3445
  %v3630 = vunpack.c.l.b16 %v3446
  %v3631 = vunpack.c.h.b16 %v3446
  %v3632 = vunpack.c.l.b16 %v3447
  %v3633 = vunpack.c.h.b16 %v3447
  %v3634 = vpack.c.b16 %v3572, %v3570
  %v3635 = vpack.c.b16 %v3573, %v3571
  %v3636 = vpack.c.b16 %v3576, %v3574
  %v3637 = vpack.c.b16 %v3577, %v3575
  %v3638 = vpack.c.b16 %v3580, %v3578
  %v3639 = vpack.c.b16 %v3581, %v3579
  %v3640 = vpack.c.b16 %v3584, %v3582
  %v3641 = vpack.c.b16 %v3585, %v3583
  %v3642 = vpack.c.b16 %v3588, %v3586
  %v3643 = vpack.c.b16 %v3589, %v3587
  %v3644 = vpack.c.b16 %v3592, %v3590
  %v3645 = vpack.c.b16 %v3593, %v3591
  %v3646 = vpack.c.b16 %v3596, %v3594
  %v3647 = vpack.c.b16 %v3597, %v3595
  %v3648 = vpack.c.b16 %v3600, %v3598
  %v3649 = vpack.c.b16 %v3601, %v3599
  %v3650 = vpack.c.b16 %v3604, %v3602
  %v3651 = vpack.c.b16 %v3605, %v3603
  %v3652 = vpack.c.b16 %v3608, %v3606
  %v3653 = vpack.c.b16 %v3609, %v3607
  %v3654 = vpack.c.b16 %v3612, %v3610
  %v3655 = vpack.c.b16 %v3613, %v3611
  %v3656 = vpack.c.b16 %v3616, %v3614
  %v3657 = vpack.c.b16 %v3617, %v3615
  %v3658 = vpack.c.b16 %v3620, %v3618
  %v3659 = vpack.c.b16 %v3621, %v3619
  %v3660 = vpack.c.b16 %v3624, %v3622
  %v3661 = vpack.c.b16 %v3625, %v3623
  %v3662 = vpack.c.b16 %v3628, %v3626
  %v3663 = vpack.c.b16 %v3629, %v3627
  %v3664 = vpack.c.b16 %v3632, %v3630
  %v3665 = vpack.c.b16 %v3633, %v3631
  %3698 = vmatprep.subr.bf16.mxu0 %v3635
  %3699 = vmatpush1.bf16.msra.mxu0 %v3634
  %3700 = vmatprep.subr.bf16.mxu0 %v3637
  %3701 = vmatpush1.bf16.msra.mxu0 %v3636
  %3702 = vmatprep.subr.bf16.mxu0 %v3639
  %3703 = vmatpush1.bf16.msra.mxu0 %v3638
  %3704 = vmatprep.subr.bf16.mxu0 %v3641
  %3705 = vmatpush1.bf16.msra.mxu0 %v3640
  %3706 = vmatprep.subr.bf16.mxu0 %v3643
  %3707 = vmatpush1.bf16.msra.mxu0 %v3642
  %3708 = vmatprep.subr.bf16.mxu0 %v3645
  %3709 = vmatpush1.bf16.msra.mxu0 %v3644
  %3710 = vmatprep.subr.bf16.mxu0 %v3647
  %3711 = vmatpush1.bf16.msra.mxu0 %v3646
  %3712 = vmatprep.subr.bf16.mxu0 %v3649
  %3713 = vmatpush1.bf16.msra.mxu0 %v3648
  %3714 = vmatprep.subr.bf16.mxu0 %v3651
  %3715 = vmatpush1.bf16.msra.mxu0 %v3650
  %3716 = vmatprep.subr.bf16.mxu0 %v3653
  %3717 = vmatpush1.bf16.msra.mxu0 %v3652
  %3718 = vmatprep.subr.bf16.mxu0 %v3655
  %3719 = vmatpush1.bf16.msra.mxu0 %v3654
  %3720 = vmatprep.subr.bf16.mxu0 %v3657
  %3721 = vmatpush1.bf16.msra.mxu0 %v3656
  %3722 = vmatprep.subr.bf16.mxu0 %v3659
  %3723 = vmatpush1.bf16.msra.mxu0 %v3658
  %3724 = vmatprep.subr.bf16.mxu0 %v3661
  %3725 = vmatpush1.bf16.msra.mxu0 %v3660
  %3726 = vmatprep.subr.bf16.mxu0 %v3663
  %3727 = vmatpush1.bf16.msra.mxu0 %v3662
  %3728 = vmatprep.subr.bf16.mxu0 %v3665
  %3729 = vmatpush1.bf16.msra.mxu0 %v3664
  %3730 = vmatprep.mubr.bf16.mxu0 %v3503
  %3731 = vmatmul.mubr.bf16.gmra.mrb[0].mxu0 %v3502
  %v3732 = vpop.f32.mrb[0].mxu0
  %v3733 = vadd.f32 0.0, %v3732
  %v3734 = vpop.f32.mrb[0].mxu0
  %v3735 = vadd.f32 0.0, %v3734
  %v3736 = vpop.f32.mrb[0].mxu0
  %v3737 = vadd.f32 0.0, %v3736
  %v3738 = vpop.f32.mrb[0].mxu0
  %v3739 = vadd.f32 0.0, %v3738
  %3740 = vmatprep.mubr.bf16.mxu0 %v3505
  %3741 = vmatmul.mubr.bf16.gmra.mrb[0].mxu0 %v3504
  %v3742 = vpop.f32.mrb[0].mxu0
  %v3743 = vadd.f32 0.0, %v3742
  %v3744 = vpop.f32.mrb[0].mxu0
  %v3745 = vadd.f32 0.0, %v3744
  %v3746 = vpop.f32.mrb[0].mxu0
  %v3747 = vadd.f32 0.0, %v3746
  %v3748 = vpop.f32.mrb[0].mxu0
  %v3749 = vadd.f32 0.0, %v3748
  %3750 = vmatprep.mubr.bf16.mxu0 %v3507
  %3751 = vmatmul.mubr.bf16.gmra.mrb[0].mxu0 %v3506
  %v3752 = vpop.f32.mrb[0].mxu0
  %v3753 = vadd.f32 0.0, %v3752
  %v3754 = vpop.f32.mrb[0].mxu0
  %v3755 = vadd.f32 0.0, %v3754
  %v3756 = vpop.f32.mrb[0].mxu0
  %v3757 = vadd.f32 0.0, %v3756
  %v3758 = vpop.f32.mrb[0].mxu0
  %v3759 = vadd.f32 0.0, %v3758
  %3760 = vmatprep.mubr.bf16.mxu0 %v3509
  %3761 = vmatmul.mubr.bf16.gmra.mrb[0].mxu0 %v3508
  %v3762 = vpop.f32.mrb[0].mxu0
  %v3763 = vadd.f32 0.0, %v3762
  %v3764 = vpop.f32.mrb[0].mxu0
  %v3765 = vadd.f32 0.0, %v3764
  %v3766 = vpop.f32.mrb[0].mxu0
  %v3767 = vadd.f32 0.0, %v3766
  %v3768 = vpop.f32.mrb[0].mxu0
  %v3769 = vadd.f32 0.0, %v3768
  %3770 = vmatprep.mubr.bf16.mxu0 %v3511
  %3771 = vmatmul.mubr.bf16.gmra.mrb[0].mxu0 %v3510
  %v3772 = vpop.f32.mrb[0].mxu0
  %v3773 = vadd.f32 0.0, %v3772
  %v3774 = vpop.f32.mrb[0].mxu0
  %v3775 = vadd.f32 0.0, %v3774
  %v3776 = vpop.f32.mrb[0].mxu0
  %v3777 = vadd.f32 0.0, %v3776
  %v3778 = vpop.f32.mrb[0].mxu0
  %v3779 = vadd.f32 0.0, %v3778
  %3780 = vmatprep.mubr.bf16.mxu0 %v3513
  %3781 = vmatmul.mubr.bf16.gmra.mrb[0].mxu0 %v3512
  %v3782 = vpop.f32.mrb[0].mxu0
  %v3783 = vadd.f32 0.0, %v3782
  %v3784 = vpop.f32.mrb[0].mxu0
  %v3785 = vadd.f32 0.0, %v3784
  %v3786 = vpop.f32.mrb[0].mxu0
  %v3787 = vadd.f32 0.0, %v3786
  %v3788 = vpop.f32.mrb[0].mxu0
  %v3789 = vadd.f32 0.0, %v3788
  %3790 = vmatprep.mubr.bf16.mxu0 %v3515
  %3791 = vmatmul.mubr.bf16.gmra.mrb[0].mxu0 %v3514
  %v3792 = vpop.f32.mrb[0].mxu0
  %v3793 = vadd.f32 0.0, %v3792
  %v3794 = vpop.f32.mrb[0].mxu0
  %v3795 = vadd.f32 0.0, %v3794
  %v3796 = vpop.f32.mrb[0].mxu0
  %v3797 = vadd.f32 0.0, %v3796
  %v3798 = vpop.f32.mrb[0].mxu0
  %v3799 = vadd.f32 0.0, %v3798
  %3800 = vmatprep.mubr.bf16.mxu0 %v3517
  %3801 = vmatmul.mubr.bf16.gmra.mrb[0].mxu0 %v3516
  %v3802 = vpop.f32.mrb[0].mxu0
  %v3803 = vadd.f32 0.0, %v3802
  %v3804 = vpop.f32.mrb[0].mxu0
  %v3805 = vadd.f32 0.0, %v3804
  %v3806 = vpop.f32.mrb[0].mxu0
  %v3807 = vadd.f32 0.0, %v3806
  %v3808 = vpop.f32.mrb[0].mxu0
  %v3809 = vadd.f32 0.0, %v3808
  %3810 = vmatprep.mubr.bf16.mxu0 %v3519
  %3811 = vmatmul.mubr.bf16.gmra.mrb[0].mxu0 %v3518
  %v3812 = vpop.f32.mrb[0].mxu0
  %v3813 = vadd.f32 0.0, %v3812
  %v3814 = vpop.f32.mrb[0].mxu0
  %v3815 = vadd.f32 0.0, %v3814
  %v3816 = vpop.f32.mrb[0].mxu0
  %v3817 = vadd.f32 0.0, %v3816
  %v3818 = vpop.f32.mrb[0].mxu0
  %v3819 = vadd.f32 0.0, %v3818
  %3820 = vdwg.mxu0
  %v3821 = vadd.f32 %v3360, %v3733
  %v3822 = vadd.f32 %v3361, %v3735
  %v3823 = vadd.f32 %v3362, %v3737
  %v3824 = vadd.f32 %v3363, %v3739
  %v3825 = vadd.f32 %v3364, %v3743
  %v3826 = vadd.f32 %v3365, %v3745
  %v3827 = vadd.f32 %v3366, %v3747
  %v3828 = vadd.f32 %v3367, %v3749
  %v3829 = vadd.f32 %v3368, %v3753
  %v3830 = vadd.f32 %v3369, %v3755
  %v3831 = vadd.f32 %v3370, %v3757
  %v3832 = vadd.f32 %v3371, %v3759
  %v3833 = vadd.f32 %v3372, %v3763
  %v3834 = vadd.f32 %v3373, %v3765
  %v3835 = vadd.f32 %v3374, %v3767
  %v3836 = vadd.f32 %v3375, %v3769
  %v3837 = vadd.f32 %v3376, %v3773
  %v3838 = vadd.f32 %v3377, %v3775
  %v3839 = vadd.f32 %v3378, %v3777
  %v3840 = vadd.f32 %v3379, %v3779
  %v3841 = vadd.f32 %v3380, %v3783
  %v3842 = vadd.f32 %v3381, %v3785
  %v3843 = vadd.f32 %v3382, %v3787
  %v3844 = vadd.f32 %v3383, %v3789
  %v3845 = vadd.f32 %v3384, %v3793
  %v3846 = vadd.f32 %v3385, %v3795
  %v3847 = vadd.f32 %v3386, %v3797
  %v3848 = vadd.f32 %v3387, %v3799
  %v3849 = vadd.f32 %v3388, %v3803
  %v3850 = vadd.f32 %v3389, %v3805
  %v3851 = vadd.f32 %v3390, %v3807
  %v3852 = vadd.f32 %v3391, %v3809
  %v3853 = vadd.f32 %v3392, %v3813
  %v3854 = vadd.f32 %v3393, %v3815
  %v3855 = vadd.f32 %v3394, %v3817
  %v3856 = vadd.f32 %v3395, %v3819
  %v3857 = vld [vmem:[%s3396] sm:$0xff]
  %v3858 = vld [vmem:[%s3396 + $0x8] sm:$0x11]
  %v3859 = vld [vmem:[%s3396 + $0x10] sm:$0xff]
  %v3860 = vld [vmem:[%s3396 + $0x18] sm:$0x11]
  %v3861 = vld [vmem:[%s3396 + $0x20] sm:$0xff]
  %v3862 = vld [vmem:[%s3396 + $0x28] sm:$0x11]
  %v3863 = vld [vmem:[%s3396 + $0x30] sm:$0xff]
  %v3864 = vld [vmem:[%s3396 + $0x38] sm:$0x11]
  %v3865 = vld [vmem:[%s3396 + $0x40] sm:$0xff]
  %v3866 = vld [vmem:[%s3396 + $0x48] sm:$0x11]
  %v3867 = vld [vmem:[%s3396 + $0x50] sm:$0xff]
  %v3868 = vld [vmem:[%s3396 + $0x58] sm:$0x11]
  %v3869 = vld [vmem:[%s3396 + $0x60] sm:$0xff]
  %v3870 = vld [vmem:[%s3396 + $0x68] sm:$0x11]
  %v3871 = vld [vmem:[%s3396 + $0x70] sm:$0xff]
  %v3872 = vld [vmem:[%s3396 + $0x78] sm:$0x11]
  %v3873 = vld [vmem:[%s3396 + $0x80] sm:$0xff]
  %v3874 = vld [vmem:[%s3396 + $0x88] sm:$0x11]
  %v3875 = vld [vmem:[%s3396 + $0xb0] sm:$0xff]
  %v3876 = vld [vmem:[%s3396 + $0xb8] sm:$0x11]
  %v3877 = vld [vmem:[%s3396 + $0xc0] sm:$0xff]
  %v3878 = vld [vmem:[%s3396 + $0xc8] sm:$0x11]
  %v3879 = vld [vmem:[%s3396 + $0xd0] sm:$0xff]
  %v3880 = vld [vmem:[%s3396 + $0xd8] sm:$0x11]
  %v3881 = vld [vmem:[%s3396 + $0xe0] sm:$0xff]
  %v3882 = vld [vmem:[%s3396 + $0xe8] sm:$0x11]
  %v3883 = vld [vmem:[%s3396 + $0xf0] sm:$0xff]
  %v3884 = vld [vmem:[%s3396 + $0xf8] sm:$0x11]
  %v3885 = vld [vmem:[%s3396 + $0x100] sm:$0xff]
  %v3886 = vld [vmem:[%s3396 + $0x108] sm:$0x11]
  %v3887 = vld [vmem:[%s3396 + $0x110] sm:$0xff]
  %v3888 = vld [vmem:[%s3396 + $0x118] sm:$0x11]
  %v3889 = vld [vmem:[%s3396 + $0x120] sm:$0xff]
  %v3890 = vld [vmem:[%s3396 + $0x128] sm:$0x11]
  %v3891 = vld [vmem:[%s3396 + $0x130] sm:$0xff]
  %v3892 = vld [vmem:[%s3396 + $0x138] sm:$0x11]
  %v3894 = vshrl.u32 %v3857, 16
  %v3896 = vrot.slane %v3894, 4
  %v3897 = vshll.u32 %v3857, 16
  %v3899 = vrot.slane %v3897, 5
  %v3900 = vor.u32 %v3896, %v3899
  %v3901 = vrot.slane %v3900, 4
  %v3903 = vshll.u32 %v3858, 16
  %v3905 = vrot.slane %v3903, 5
  %v3906 = vsel %vm106, %v3901, %v3905
  %v3908 = vshrl.u32 %v3859, 16
  %v3910 = vrot.slane %v3908, 4
  %v3911 = vshll.u32 %v3859, 16
  %v3913 = vrot.slane %v3911, 5
  %v3914 = vor.u32 %v3910, %v3913
  %v3915 = vrot.slane %v3914, 4
  %v3917 = vshll.u32 %v3860, 16
  %v3919 = vrot.slane %v3917, 5
  %v3920 = vsel %vm106, %v3915, %v3919
  %v3922 = vshrl.u32 %v3861, 16
  %v3924 = vrot.slane %v3922, 4
  %v3925 = vshll.u32 %v3861, 16
  %v3927 = vrot.slane %v3925, 5
  %v3928 = vor.u32 %v3924, %v3927
  %v3929 = vrot.slane %v3928, 4
  %v3931 = vshll.u32 %v3862, 16
  %v3933 = vrot.slane %v3931, 5
  %v3934 = vsel %vm106, %v3929, %v3933
  %v3936 = vshrl.u32 %v3863, 16
  %v3938 = vrot.slane %v3936, 4
  %v3939 = vshll.u32 %v3863, 16
  %v3941 = vrot.slane %v3939, 5
  %v3942 = vor.u32 %v3938, %v3941
  %v3943 = vrot.slane %v3942, 4
  %v3945 = vshll.u32 %v3864, 16
  %v3947 = vrot.slane %v3945, 5
  %v3948 = vsel %vm106, %v3943, %v3947
  %v3950 = vshrl.u32 %v3865, 16
  %v3952 = vrot.slane %v3950, 4
  %v3953 = vshll.u32 %v3865, 16
  %v3955 = vrot.slane %v3953, 5
  %v3956 = vor.u32 %v3952, %v3955
  %v3957 = vrot.slane %v3956, 4
  %v3959 = vshll.u32 %v3866, 16
  %v3961 = vrot.slane %v3959, 5
  %v3962 = vsel %vm106, %v3957, %v3961
  %v3964 = vshrl.u32 %v3867, 16
  %v3966 = vrot.slane %v3964, 4
  %v3967 = vshll.u32 %v3867, 16
  %v3969 = vrot.slane %v3967, 5
  %v3970 = vor.u32 %v3966, %v3969
  %v3971 = vrot.slane %v3970, 4
  %v3973 = vshll.u32 %v3868, 16
  %v3975 = vrot.slane %v3973, 5
  %v3976 = vsel %vm106, %v3971, %v3975
  %v3978 = vshrl.u32 %v3869, 16
  %v3980 = vrot.slane %v3978, 4
  %v3981 = vshll.u32 %v3869, 16
  %v3983 = vrot.slane %v3981, 5
  %v3984 = vor.u32 %v3980, %v3983
  %v3985 = vrot.slane %v3984, 4
  %v3987 = vshll.u32 %v3870, 16
  %v3989 = vrot.slane %v3987, 5
  %v3990 = vsel %vm106, %v3985, %v3989
  %v3992 = vshrl.u32 %v3871, 16
  %v3994 = vrot.slane %v3992, 4
  %v3995 = vshll.u32 %v3871, 16
  %v3997 = vrot.slane %v3995, 5
  %v3998 = vor.u32 %v3994, %v3997
  %v3999 = vrot.slane %v3998, 4
  %v4001 = vshll.u32 %v3872, 16
  %v4003 = vrot.slane %v4001, 5
  %v4004 = vsel %vm106, %v3999, %v4003
  %v4006 = vshrl.u32 %v3873, 16
  %v4008 = vrot.slane %v4006, 4
  %v4009 = vshll.u32 %v3873, 16
  %v4011 = vrot.slane %v4009, 5
  %v4012 = vor.u32 %v4008, %v4011
  %v4013 = vrot.slane %v4012, 4
  %v4015 = vshll.u32 %v3874, 16
  %v4017 = vrot.slane %v4015, 5
  %v4018 = vsel %vm106, %v4013, %v4017
  %v4020 = vshrl.u32 %v3875, 16
  %v4022 = vrot.slane %v4020, 4
  %v4023 = vshll.u32 %v3875, 16
  %v4025 = vrot.slane %v4023, 5
  %v4026 = vor.u32 %v4022, %v4025
  %v4027 = vrot.slane %v4026, 4
  %v4029 = vshll.u32 %v3876, 16
  %v4031 = vrot.slane %v4029, 5
  %v4032 = vsel %vm106, %v4027, %v4031
  %v4034 = vshrl.u32 %v3877, 16
  %v4036 = vrot.slane %v4034, 4
  %v4037 = vshll.u32 %v3877, 16
  %v4039 = vrot.slane %v4037, 5
  %v4040 = vor.u32 %v4036, %v4039
  %v4041 = vrot.slane %v4040, 4
  %v4043 = vshll.u32 %v3878, 16
  %v4045 = vrot.slane %v4043, 5
  %v4046 = vsel %vm106, %v4041, %v4045
  %v4048 = vshrl.u32 %v3879, 16
  %v4050 = vrot.slane %v4048, 4
  %v4051 = vshll.u32 %v3879, 16
  %v4053 = vrot.slane %v4051, 5
  %v4054 = vor.u32 %v4050, %v4053
  %v4055 = vrot.slane %v4054, 4
  %v4057 = vshll.u32 %v3880, 16
  %v4059 = vrot.slane %v4057, 5
  %v4060 = vsel %vm106, %v4055, %v4059
  %v4062 = vshrl.u32 %v3881, 16
  %v4064 = vrot.slane %v4062, 4
  %v4065 = vshll.u32 %v3881, 16
  %v4067 = vrot.slane %v4065, 5
  %v4068 = vor.u32 %v4064, %v4067
  %v4069 = vrot.slane %v4068, 4
  %v4071 = vshll.u32 %v3882, 16
  %v4073 = vrot.slane %v4071, 5
  %v4074 = vsel %vm106, %v4069, %v4073
  %v4076 = vshrl.u32 %v3883, 16
  %v4078 = vrot.slane %v4076, 4
  %v4079 = vshll.u32 %v3883, 16
  %v4081 = vrot.slane %v4079, 5
  %v4082 = vor.u32 %v4078, %v4081
  %v4083 = vrot.slane %v4082, 4
  %v4085 = vshll.u32 %v3884, 16
  %v4087 = vrot.slane %v4085, 5
  %v4088 = vsel %vm106, %v4083, %v4087
  %v4090 = vshrl.u32 %v3885, 16
  %v4092 = vrot.slane %v4090, 4
  %v4093 = vshll.u32 %v3885, 16
  %v4095 = vrot.slane %v4093, 5
  %v4096 = vor.u32 %v4092, %v4095
  %v4097 = vrot.slane %v4096, 4
  %v4099 = vshll.u32 %v3886, 16
  %v4101 = vrot.slane %v4099, 5
  %v4102 = vsel %vm106, %v4097, %v4101
  %v4104 = vshrl.u32 %v3887, 16
  %v4106 = vrot.slane %v4104, 4
  %v4107 = vshll.u32 %v3887, 16
  %v4109 = vrot.slane %v4107, 5
  %v4110 = vor.u32 %v4106, %v4109
  %v4111 = vrot.slane %v4110, 4
  %v4113 = vshll.u32 %v3888, 16
  %v4115 = vrot.slane %v4113, 5
  %v4116 = vsel %vm106, %v4111, %v4115
  %v4118 = vshrl.u32 %v3889, 16
  %v4120 = vrot.slane %v4118, 4
  %v4121 = vshll.u32 %v3889, 16
  %v4123 = vrot.slane %v4121, 5
  %v4124 = vor.u32 %v4120, %v4123
  %v4125 = vrot.slane %v4124, 4
  %v4127 = vshll.u32 %v3890, 16
  %v4129 = vrot.slane %v4127, 5
  %v4130 = vsel %vm106, %v4125, %v4129
  %v4132 = vshrl.u32 %v3891, 16
  %v4134 = vrot.slane %v4132, 4
  %v4135 = vshll.u32 %v3891, 16
  %v4137 = vrot.slane %v4135, 5
  %v4138 = vor.u32 %v4134, %v4137
  %v4139 = vrot.slane %v4138, 4
  %v4141 = vshll.u32 %v3892, 16
  %v4143 = vrot.slane %v4141, 5
  %v4144 = vsel %vm106, %v4139, %v4143
  %s4145 = scalar_lea.vmem %s2, 1792
  %v4146 = vld [vmem:[%s4145] sm:$0xff]
  %v4147 = vld [vmem:[%s4145 + $0x8] sm:$0xff]
  %v4148 = vld [vmem:[%s4145 + $0x10] sm:$0xff]
  %v4149 = vld [vmem:[%s4145 + $0x18] sm:$0xff]
  %v4150 = vld [vmem:[%s4145 + $0x20] sm:$0xff]
  %v4151 = vld [vmem:[%s4145 + $0x28] sm:$0xff]
  %v4152 = vld [vmem:[%s4145 + $0x30] sm:$0xff]
  %v4153 = vld [vmem:[%s4145 + $0x38] sm:$0xff]
  %v4154 = vld [vmem:[%s4145 + $0x40] sm:$0xff]
  %v4155 = vld [vmem:[%s4145 + $0x48] sm:$0xff]
  %v4156 = vld [vmem:[%s4145 + $0x50] sm:$0xff]
  %v4157 = vld [vmem:[%s4145 + $0x58] sm:$0xff]
  %v4158 = vld [vmem:[%s4145 + $0x60] sm:$0xff]
  %v4159 = vld [vmem:[%s4145 + $0x68] sm:$0xff]
  %v4160 = vld [vmem:[%s4145 + $0x70] sm:$0xff]
  %v4161 = vld [vmem:[%s4145 + $0x78] sm:$0xff]
  %v4162 = vld [vmem:[%s4145 + $0x80] sm:$0xff]
  %v4163 = vld [vmem:[%s4145 + $0x88] sm:$0xff]
  %v4164 = vld [vmem:[%s4145 + $0x90] sm:$0xff]
  %v4165 = vld [vmem:[%s4145 + $0x98] sm:$0xff]
  %v4166 = vld [vmem:[%s4145 + $0xa0] sm:$0xff]
  %v4167 = vld [vmem:[%s4145 + $0xa8] sm:$0xff]
  %v4168 = vld [vmem:[%s4145 + $0xb0] sm:$0xff]
  %v4169 = vld [vmem:[%s4145 + $0xb8] sm:$0xff]
  %v4170 = vld [vmem:[%s4145 + $0xc0] sm:$0xff]
  %v4171 = vld [vmem:[%s4145 + $0xc8] sm:$0xff]
  %v4172 = vld [vmem:[%s4145 + $0xd0] sm:$0xff]
  %v4173 = vld [vmem:[%s4145 + $0xd8] sm:$0xff]
  %v4174 = vld [vmem:[%s4145 + $0xe0] sm:$0xff]
  %v4175 = vld [vmem:[%s4145 + $0xe8] sm:$0xff]
  %v4176 = vld [vmem:[%s4145 + $0xf0] sm:$0xff]
  %v4177 = vld [vmem:[%s4145 + $0xf8] sm:$0xff]
  %v4178 = vunpack.c.l.b16 %v3906
  %v4179 = vunpack.c.h.b16 %v3906
  %v4180 = vunpack.c.l.b16 %v3920
  %v4181 = vunpack.c.h.b16 %v3920
  %v4182 = vunpack.c.l.b16 %v3934
  %v4183 = vunpack.c.h.b16 %v3934
  %v4184 = vunpack.c.l.b16 %v3948
  %v4185 = vunpack.c.h.b16 %v3948
  %v4186 = vunpack.c.l.b16 %v3962
  %v4187 = vunpack.c.h.b16 %v3962
  %v4188 = vunpack.c.l.b16 %v3976
  %v4189 = vunpack.c.h.b16 %v3976
  %v4190 = vunpack.c.l.b16 %v3990
  %v4191 = vunpack.c.h.b16 %v3990
  %v4192 = vunpack.c.l.b16 %v4004
  %v4193 = vunpack.c.h.b16 %v4004
  %v4194 = vunpack.c.l.b16 %v4018
  %v4195 = vunpack.c.h.b16 %v4018
  %v4196 = vunpack.c.l.b16 %v4032
  %v4197 = vunpack.c.h.b16 %v4032
  %v4198 = vunpack.c.l.b16 %v4046
  %v4199 = vunpack.c.h.b16 %v4046
  %v4200 = vunpack.c.l.b16 %v4060
  %v4201 = vunpack.c.h.b16 %v4060
  %v4202 = vunpack.c.l.b16 %v4074
  %v4203 = vunpack.c.h.b16 %v4074
  %v4204 = vunpack.c.l.b16 %v4088
  %v4205 = vunpack.c.h.b16 %v4088
  %v4206 = vunpack.c.l.b16 %v4102
  %v4207 = vunpack.c.h.b16 %v4102
  %v4208 = vunpack.c.l.b16 %v4116
  %v4209 = vunpack.c.h.b16 %v4116
  %v4210 = vunpack.c.l.b16 %v4130
  %v4211 = vunpack.c.h.b16 %v4130
  %v4212 = vunpack.c.l.b16 %v4144
  %v4213 = vunpack.c.h.b16 %v4144
  %v4214 = vpack.c.b16 %v4180, %v4178
  %v4215 = vpack.c.b16 %v4181, %v4179
  %v4216 = vpack.c.b16 %v4184, %v4182
  %v4217 = vpack.c.b16 %v4185, %v4183
  %v4218 = vpack.c.b16 %v4188, %v4186
  %v4219 = vpack.c.b16 %v4189, %v4187
  %v4220 = vpack.c.b16 %v4192, %v4190
  %v4221 = vpack.c.b16 %v4193, %v4191
  %v4222 = vpack.c.b16 %v4196, %v4194
  %v4223 = vpack.c.b16 %v4197, %v4195
  %v4224 = vpack.c.b16 %v4200, %v4198
  %v4225 = vpack.c.b16 %v4201, %v4199
  %v4226 = vpack.c.b16 %v4204, %v4202
  %v4227 = vpack.c.b16 %v4205, %v4203
  %v4228 = vpack.c.b16 %v4208, %v4206
  %v4229 = vpack.c.b16 %v4209, %v4207
  %v4230 = vpack.c.b16 %v4212, %v4210
  %v4231 = vpack.c.b16 %v4213, %v4211
  %v4282 = vunpack.c.l.b16 %v4146
  %v4283 = vunpack.c.h.b16 %v4146
  %v4284 = vunpack.c.l.b16 %v4147
  %v4285 = vunpack.c.h.b16 %v4147
  %v4286 = vunpack.c.l.b16 %v4148
  %v4287 = vunpack.c.h.b16 %v4148
  %v4288 = vunpack.c.l.b16 %v4149
  %v4289 = vunpack.c.h.b16 %v4149
  %v4290 = vunpack.c.l.b16 %v4150
  %v4291 = vunpack.c.h.b16 %v4150
  %v4292 = vunpack.c.l.b16 %v4151
  %v4293 = vunpack.c.h.b16 %v4151
  %v4294 = vunpack.c.l.b16 %v4152
  %v4295 = vunpack.c.h.b16 %v4152
  %v4296 = vunpack.c.l.b16 %v4153
  %v4297 = vunpack.c.h.b16 %v4153
  %v4298 = vunpack.c.l.b16 %v4154
  %v4299 = vunpack.c.h.b16 %v4154
  %v4300 = vunpack.c.l.b16 %v4155
  %v4301 = vunpack.c.h.b16 %v4155
  %v4302 = vunpack.c.l.b16 %v4156
  %v4303 = vunpack.c.h.b16 %v4156
  %v4304 = vunpack.c.l.b16 %v4157
  %v4305 = vunpack.c.h.b16 %v4157
  %v4306 = vunpack.c.l.b16 %v4158
  %v4307 = vunpack.c.h.b16 %v4158
  %v4308 = vunpack.c.l.b16 %v4159
  %v4309 = vunpack.c.h.b16 %v4159
  %v4310 = vunpack.c.l.b16 %v4160
  %v4311 = vunpack.c.h.b16 %v4160
  %v4312 = vunpack.c.l.b16 %v4161
  %v4313 = vunpack.c.h.b16 %v4161
  %v4314 = vunpack.c.l.b16 %v4162
  %v4315 = vunpack.c.h.b16 %v4162
  %v4316 = vunpack.c.l.b16 %v4163
  %v4317 = vunpack.c.h.b16 %v4163
  %v4318 = vunpack.c.l.b16 %v4164
  %v4319 = vunpack.c.h.b16 %v4164
  %v4320 = vunpack.c.l.b16 %v4165
  %v4321 = vunpack.c.h.b16 %v4165
  %v4322 = vunpack.c.l.b16 %v4166
  %v4323 = vunpack.c.h.b16 %v4166
  %v4324 = vunpack.c.l.b16 %v4167
  %v4325 = vunpack.c.h.b16 %v4167
  %v4326 = vunpack.c.l.b16 %v4168
  %v4327 = vunpack.c.h.b16 %v4168
  %v4328 = vunpack.c.l.b16 %v4169
  %v4329 = vunpack.c.h.b16 %v4169
  %v4330 = vunpack.c.l.b16 %v4170
  %v4331 = vunpack.c.h.b16 %v4170
  %v4332 = vunpack.c.l.b16 %v4171
  %v4333 = vunpack.c.h.b16 %v4171
  %v4334 = vunpack.c.l.b16 %v4172
  %v4335 = vunpack.c.h.b16 %v4172
  %v4336 = vunpack.c.l.b16 %v4173
  %v4337 = vunpack.c.h.b16 %v4173
  %v4338 = vunpack.c.l.b16 %v4174
  %v4339 = vunpack.c.h.b16 %v4174
  %v4340 = vunpack.c.l.b16 %v4175
  %v4341 = vunpack.c.h.b16 %v4175
  %v4342 = vunpack.c.l.b16 %v4176
  %v4343 = vunpack.c.h.b16 %v4176
  %v4344 = vunpack.c.l.b16 %v4177
  %v4345 = vunpack.c.h.b16 %v4177
  %v4346 = vpack.c.b16 %v4284, %v4282
  %v4347 = vpack.c.b16 %v4285, %v4283
  %v4348 = vpack.c.b16 %v4288, %v4286
  %v4349 = vpack.c.b16 %v4289, %v4287
  %v4350 = vpack.c.b16 %v4292, %v4290
  %v4351 = vpack.c.b16 %v4293, %v4291
  %v4352 = vpack.c.b16 %v4296, %v4294
  %v4353 = vpack.c.b16 %v4297, %v4295
  %v4354 = vpack.c.b16 %v4300, %v4298
  %v4355 = vpack.c.b16 %v4301, %v4299
  %v4356 = vpack.c.b16 %v4304, %v4302
  %v4357 = vpack.c.b16 %v4305, %v4303
  %v4358 = vpack.c.b16 %v4308, %v4306
  %v4359 = vpack.c.b16 %v4309, %v4307
  %v4360 = vpack.c.b16 %v4312, %v4310
  %v4361 = vpack.c.b16 %v4313, %v4311
  %v4362 = vpack.c.b16 %v4316, %v4314
  %v4363 = vpack.c.b16 %v4317, %v4315
  %v4364 = vpack.c.b16 %v4320, %v4318
  %v4365 = vpack.c.b16 %v4321, %v4319
  %v4366 = vpack.c.b16 %v4324, %v4322
  %v4367 = vpack.c.b16 %v4325, %v4323
  %v4368 = vpack.c.b16 %v4328, %v4326
  %v4369 = vpack.c.b16 %v4329, %v4327
  %v4370 = vpack.c.b16 %v4332, %v4330
  %v4371 = vpack.c.b16 %v4333, %v4331
  %v4372 = vpack.c.b16 %v4336, %v4334
  %v4373 = vpack.c.b16 %v4337, %v4335
  %v4374 = vpack.c.b16 %v4340, %v4338
  %v4375 = vpack.c.b16 %v4341, %v4339
  %v4376 = vpack.c.b16 %v4344, %v4342
  %v4377 = vpack.c.b16 %v4345, %v4343
  %4410 = vmatprep.subr.bf16.mxu0 %v4347
  %4411 = vmatpush1.bf16.msra.mxu0 %v4346
  %4412 = vmatprep.subr.bf16.mxu0 %v4349
  %4413 = vmatpush1.bf16.msra.mxu0 %v4348
  %4414 = vmatprep.subr.bf16.mxu0 %v4351
  %4415 = vmatpush1.bf16.msra.mxu0 %v4350
  %4416 = vmatprep.subr.bf16.mxu0 %v4353
  %4417 = vmatpush1.bf16.msra.mxu0 %v4352
  %4418 = vmatprep.subr.bf16.mxu0 %v4355
  %4419 = vmatpush1.bf16.msra.mxu0 %v4354
  %4420 = vmatprep.subr.bf16.mxu0 %v4357
  %4421 = vmatpush1.bf16.msra.mxu0 %v4356
  %4422 = vmatprep.subr.bf16.mxu0 %v4359
  %4423 = vmatpush1.bf16.msra.mxu0 %v4358
  %4424 = vmatprep.subr.bf16.mxu0 %v4361
  %4425 = vmatpush1.bf16.msra.mxu0 %v4360
  %4426 = vmatprep.subr.bf16.mxu0 %v4363
  %4427 = vmatpush1.bf16.msra.mxu0 %v4362
  %4428 = vmatprep.subr.bf16.mxu0 %v4365
  %4429 = vmatpush1.bf16.msra.mxu0 %v4364
  %4430 = vmatprep.subr.bf16.mxu0 %v4367
  %4431 = vmatpush1.bf16.msra.mxu0 %v4366
  %4432 = vmatprep.subr.bf16.mxu0 %v4369
  %4433 = vmatpush1.bf16.msra.mxu0 %v4368
  %4434 = vmatprep.subr.bf16.mxu0 %v4371
  %4435 = vmatpush1.bf16.msra.mxu0 %v4370
  %4436 = vmatprep.subr.bf16.mxu0 %v4373
  %4437 = vmatpush1.bf16.msra.mxu0 %v4372
  %4438 = vmatprep.subr.bf16.mxu0 %v4375
  %4439 = vmatpush1.bf16.msra.mxu0 %v4374
  %4440 = vmatprep.subr.bf16.mxu0 %v4377
  %4441 = vmatpush1.bf16.msra.mxu0 %v4376
  %4442 = vmatprep.mubr.bf16.mxu0 %v4215
  %4443 = vmatmul.mubr.bf16.gmra.mrb[0].mxu0 %v4214
  %v4444 = vpop.f32.mrb[0].mxu0
  %v4445 = vadd.f32 0.0, %v4444
  %v4446 = vpop.f32.mrb[0].mxu0
  %v4447 = vadd.f32 0.0, %v4446
  %v4448 = vpop.f32.mrb[0].mxu0
  %v4449 = vadd.f32 0.0, %v4448
  %v4450 = vpop.f32.mrb[0].mxu0
  %v4451 = vadd.f32 0.0, %v4450
  %4452 = vmatprep.mubr.bf16.mxu0 %v4217
  %4453 = vmatmul.mubr.bf16.gmra.mrb[0].mxu0 %v4216
  %v4454 = vpop.f32.mrb[0].mxu0
  %v4455 = vadd.f32 0.0, %v4454
  %v4456 = vpop.f32.mrb[0].mxu0
  %v4457 = vadd.f32 0.0, %v4456
  %v4458 = vpop.f32.mrb[0].mxu0
  %v4459 = vadd.f32 0.0, %v4458
  %v4460 = vpop.f32.mrb[0].mxu0
  %v4461 = vadd.f32 0.0, %v4460
  %4462 = vmatprep.mubr.bf16.mxu0 %v4219
  %4463 = vmatmul.mubr.bf16.gmra.mrb[0].mxu0 %v4218
  %v4464 = vpop.f32.mrb[0].mxu0
  %v4465 = vadd.f32 0.0, %v4464
  %v4466 = vpop.f32.mrb[0].mxu0
  %v4467 = vadd.f32 0.0, %v4466
  %v4468 = vpop.f32.mrb[0].mxu0
  %v4469 = vadd.f32 0.0, %v4468
  %v4470 = vpop.f32.mrb[0].mxu0
  %v4471 = vadd.f32 0.0, %v4470
  %4472 = vmatprep.mubr.bf16.mxu0 %v4221
  %4473 = vmatmul.mubr.bf16.gmra.mrb[0].mxu0 %v4220
  %v4474 = vpop.f32.mrb[0].mxu0
  %v4475 = vadd.f32 0.0, %v4474
  %v4476 = vpop.f32.mrb[0].mxu0
  %v4477 = vadd.f32 0.0, %v4476
  %v4478 = vpop.f32.mrb[0].mxu0
  %v4479 = vadd.f32 0.0, %v4478
  %v4480 = vpop.f32.mrb[0].mxu0
  %v4481 = vadd.f32 0.0, %v4480
  %4482 = vmatprep.mubr.bf16.mxu0 %v4223
  %4483 = vmatmul.mubr.bf16.gmra.mrb[0].mxu0 %v4222
  %v4484 = vpop.f32.mrb[0].mxu0
  %v4485 = vadd.f32 0.0, %v4484
  %v4486 = vpop.f32.mrb[0].mxu0
  %v4487 = vadd.f32 0.0, %v4486
  %v4488 = vpop.f32.mrb[0].mxu0
  %v4489 = vadd.f32 0.0, %v4488
  %v4490 = vpop.f32.mrb[0].mxu0
  %v4491 = vadd.f32 0.0, %v4490
  %4492 = vmatprep.mubr.bf16.mxu0 %v4225
  %4493 = vmatmul.mubr.bf16.gmra.mrb[0].mxu0 %v4224
  %v4494 = vpop.f32.mrb[0].mxu0
  %v4495 = vadd.f32 0.0, %v4494
  %v4496 = vpop.f32.mrb[0].mxu0
  %v4497 = vadd.f32 0.0, %v4496
  %v4498 = vpop.f32.mrb[0].mxu0
  %v4499 = vadd.f32 0.0, %v4498
  %v4500 = vpop.f32.mrb[0].mxu0
  %v4501 = vadd.f32 0.0, %v4500
  %4502 = vmatprep.mubr.bf16.mxu0 %v4227
  %4503 = vmatmul.mubr.bf16.gmra.mrb[0].mxu0 %v4226
  %v4504 = vpop.f32.mrb[0].mxu0
  %v4505 = vadd.f32 0.0, %v4504
  %v4506 = vpop.f32.mrb[0].mxu0
  %v4507 = vadd.f32 0.0, %v4506
  %v4508 = vpop.f32.mrb[0].mxu0
  %v4509 = vadd.f32 0.0, %v4508
  %v4510 = vpop.f32.mrb[0].mxu0
  %v4511 = vadd.f32 0.0, %v4510
  %4512 = vmatprep.mubr.bf16.mxu0 %v4229
  %4513 = vmatmul.mubr.bf16.gmra.mrb[0].mxu0 %v4228
  %v4514 = vpop.f32.mrb[0].mxu0
  %v4515 = vadd.f32 0.0, %v4514
  %v4516 = vpop.f32.mrb[0].mxu0
  %v4517 = vadd.f32 0.0, %v4516
  %v4518 = vpop.f32.mrb[0].mxu0
  %v4519 = vadd.f32 0.0, %v4518
  %v4520 = vpop.f32.mrb[0].mxu0
  %v4521 = vadd.f32 0.0, %v4520
  %4522 = vmatprep.mubr.bf16.mxu0 %v4231
  %4523 = vmatmul.mubr.bf16.gmra.mrb[0].mxu0 %v4230
  %v4524 = vpop.f32.mrb[0].mxu0
  %v4525 = vadd.f32 0.0, %v4524
  %v4526 = vpop.f32.mrb[0].mxu0
  %v4527 = vadd.f32 0.0, %v4526
  %v4528 = vpop.f32.mrb[0].mxu0
  %v4529 = vadd.f32 0.0, %v4528
  %v4530 = vpop.f32.mrb[0].mxu0
  %v4531 = vadd.f32 0.0, %v4530
  %4532 = vdwg.mxu0
  %v4533 = vadd.f32 %v3821, %v4445
  %v4534 = vadd.f32 %v3822, %v4447
  %v4535 = vadd.f32 %v3823, %v4449
  %v4536 = vadd.f32 %v3824, %v4451
  %v4537 = vadd.f32 %v3825, %v4455
  %v4538 = vadd.f32 %v3826, %v4457
  %v4539 = vadd.f32 %v3827, %v4459
  %v4540 = vadd.f32 %v3828, %v4461
  %v4541 = vadd.f32 %v3829, %v4465
  %v4542 = vadd.f32 %v3830, %v4467
  %v4543 = vadd.f32 %v3831, %v4469
  %v4544 = vadd.f32 %v3832, %v4471
  %v4545 = vadd.f32 %v3833, %v4475
  %v4546 = vadd.f32 %v3834, %v4477
  %v4547 = vadd.f32 %v3835, %v4479
  %v4548 = vadd.f32 %v3836, %v4481
  %v4549 = vadd.f32 %v3837, %v4485
  %v4550 = vadd.f32 %v3838, %v4487
  %v4551 = vadd.f32 %v3839, %v4489
  %v4552 = vadd.f32 %v3840, %v4491
  %v4553 = vadd.f32 %v3841, %v4495
  %v4554 = vadd.f32 %v3842, %v4497
  %v4555 = vadd.f32 %v3843, %v4499
  %v4556 = vadd.f32 %v3844, %v4501
  %v4557 = vadd.f32 %v3845, %v4505
  %v4558 = vadd.f32 %v3846, %v4507
  %v4559 = vadd.f32 %v3847, %v4509
  %v4560 = vadd.f32 %v3848, %v4511
  %v4561 = vadd.f32 %v3849, %v4515
  %v4562 = vadd.f32 %v3850, %v4517
  %v4563 = vadd.f32 %v3851, %v4519
  %v4564 = vadd.f32 %v3852, %v4521
  %v4565 = vadd.f32 %v3853, %v4525
  %v4566 = vadd.f32 %v3854, %v4527
  %v4567 = vadd.f32 %v3855, %v4529
  %v4568 = vadd.f32 %v3856, %v4531
  %v4569 = vld [vmem:[%s3396] sm:$0xee]
  %v4570 = vld [vmem:[%s3396 + $0x10] sm:$0xee]
  %v4571 = vld [vmem:[%s3396 + $0x20] sm:$0xee]
  %v4572 = vld [vmem:[%s3396 + $0x30] sm:$0xee]
  %v4573 = vld [vmem:[%s3396 + $0x40] sm:$0xee]
  %v4574 = vld [vmem:[%s3396 + $0x50] sm:$0xee]
  %v4575 = vld [vmem:[%s3396 + $0x60] sm:$0xee]
  %v4576 = vld [vmem:[%s3396 + $0x70] sm:$0xee]
  %v4577 = vld [vmem:[%s3396 + $0x80] sm:$0xee]
  %v4578 = vld [vmem:[%s3396 + $0xb0] sm:$0xee]
  %v4579 = vld [vmem:[%s3396 + $0xc0] sm:$0xee]
  %v4580 = vld [vmem:[%s3396 + $0xd0] sm:$0xee]
  %v4581 = vld [vmem:[%s3396 + $0xe0] sm:$0xee]
  %v4582 = vld [vmem:[%s3396 + $0xf0] sm:$0xee]
  %v4583 = vld [vmem:[%s3396 + $0x100] sm:$0xee]
  %v4584 = vld [vmem:[%s3396 + $0x110] sm:$0xee]
  %v4585 = vld [vmem:[%s3396 + $0x120] sm:$0xee]
  %v4586 = vld [vmem:[%s3396 + $0x130] sm:$0xee]
  %v4623 = vrot.slane %v4569, 5
  %v4624 = vrot.slane %v4623, 4
  %v4625 = vrot.slane %v3858, 5
  %v4626 = vsel %vm1176, %v4624, %v4625
  %v4627 = vrot.slane %v4570, 5
  %v4628 = vrot.slane %v4627, 4
  %v4629 = vrot.slane %v3860, 5
  %v4630 = vsel %vm1176, %v4628, %v4629
  %v4631 = vrot.slane %v4571, 5
  %v4632 = vrot.slane %v4631, 4
  %v4633 = vrot.slane %v3862, 5
  %v4634 = vsel %vm1176, %v4632, %v4633
  %v4635 = vrot.slane %v4572, 5
  %v4636 = vrot.slane %v4635, 4
  %v4637 = vrot.slane %v3864, 5
  %v4638 = vsel %vm1176, %v4636, %v4637
  %v4639 = vrot.slane %v4573, 5
  %v4640 = vrot.slane %v4639, 4
  %v4641 = vrot.slane %v3866, 5
  %v4642 = vsel %vm1176, %v4640, %v4641
  %v4643 = vrot.slane %v4574, 5
  %v4644 = vrot.slane %v4643, 4
  %v4645 = vrot.slane %v3868, 5
  %v4646 = vsel %vm1176, %v4644, %v4645
  %v4647 = vrot.slane %v4575, 5
  %v4648 = vrot.slane %v4647, 4
  %v4649 = vrot.slane %v3870, 5
  %v4650 = vsel %vm1176, %v4648, %v4649
  %v4651 = vrot.slane %v4576, 5
  %v4652 = vrot.slane %v4651, 4
  %v4653 = vrot.slane %v3872, 5
  %v4654 = vsel %vm1176, %v4652, %v4653
  %v4655 = vrot.slane %v4577, 5
  %v4656 = vrot.slane %v4655, 4
  %v4657 = vrot.slane %v3874, 5
  %v4658 = vsel %vm1176, %v4656, %v4657
  %v4659 = vrot.slane %v4578, 5
  %v4660 = vrot.slane %v4659, 4
  %v4661 = vrot.slane %v3876, 5
  %v4662 = vsel %vm1176, %v4660, %v4661
  %v4663 = vrot.slane %v4579, 5
  %v4664 = vrot.slane %v4663, 4
  %v4665 = vrot.slane %v3878, 5
  %v4666 = vsel %vm1176, %v4664, %v4665
  %v4667 = vrot.slane %v4580, 5
  %v4668 = vrot.slane %v4667, 4
  %v4669 = vrot.slane %v3880, 5
  %v4670 = vsel %vm1176, %v4668, %v4669
  %v4671 = vrot.slane %v4581, 5
  %v4672 = vrot.slane %v4671, 4
  %v4673 = vrot.slane %v3882, 5
  %v4674 = vsel %vm1176, %v4672, %v4673
  %v4675 = vrot.slane %v4582, 5
  %v4676 = vrot.slane %v4675, 4
  %v4677 = vrot.slane %v3884, 5
  %v4678 = vsel %vm1176, %v4676, %v4677
  %v4679 = vrot.slane %v4583, 5
  %v4680 = vrot.slane %v4679, 4
  %v4681 = vrot.slane %v3886, 5
  %v4682 = vsel %vm1176, %v4680, %v4681
  %v4683 = vrot.slane %v4584, 5
  %v4684 = vrot.slane %v4683, 4
  %v4685 = vrot.slane %v3888, 5
  %v4686 = vsel %vm1176, %v4684, %v4685
  %v4687 = vrot.slane %v4585, 5
  %v4688 = vrot.slane %v4687, 4
  %v4689 = vrot.slane %v3890, 5
  %v4690 = vsel %vm1176, %v4688, %v4689
  %v4691 = vrot.slane %v4586, 5
  %v4692 = vrot.slane %v4691, 4
  %v4693 = vrot.slane %v3892, 5
  %v4694 = vsel %vm1176, %v4692, %v4693
  %s4695 = scalar_lea.vmem %s2, 2048
  %v4696 = vld [vmem:[%s4695] sm:$0xff]
  %v4697 = vld [vmem:[%s4695 + $0x8] sm:$0xff]
  %v4698 = vld [vmem:[%s4695 + $0x10] sm:$0xff]
  %v4699 = vld [vmem:[%s4695 + $0x18] sm:$0xff]
  %v4700 = vld [vmem:[%s4695 + $0x20] sm:$0xff]
  %v4701 = vld [vmem:[%s4695 + $0x28] sm:$0xff]
  %v4702 = vld [vmem:[%s4695 + $0x30] sm:$0xff]
  %v4703 = vld [vmem:[%s4695 + $0x38] sm:$0xff]
  %v4704 = vld [vmem:[%s4695 + $0x40] sm:$0xff]
  %v4705 = vld [vmem:[%s4695 + $0x48] sm:$0xff]
  %v4706 = vld [vmem:[%s4695 + $0x50] sm:$0xff]
  %v4707 = vld [vmem:[%s4695 + $0x58] sm:$0xff]
  %v4708 = vld [vmem:[%s4695 + $0x60] sm:$0xff]
  %v4709 = vld [vmem:[%s4695 + $0x68] sm:$0xff]
  %v4710 = vld [vmem:[%s4695 + $0x70] sm:$0xff]
  %v4711 = vld [vmem:[%s4695 + $0x78] sm:$0xff]
  %v4712 = vld [vmem:[%s4695 + $0x80] sm:$0xff]
  %v4713 = vld [vmem:[%s4695 + $0x88] sm:$0xff]
  %v4714 = vld [vmem:[%s4695 + $0x90] sm:$0xff]
  %v4715 = vld [vmem:[%s4695 + $0x98] sm:$0xff]
  %v4716 = vld [vmem:[%s4695 + $0xa0] sm:$0xff]
  %v4717 = vld [vmem:[%s4695 + $0xa8] sm:$0xff]
  %v4718 = vld [vmem:[%s4695 + $0xb0] sm:$0xff]
  %v4719 = vld [vmem:[%s4695 + $0xb8] sm:$0xff]
  %v4720 = vld [vmem:[%s4695 + $0xc0] sm:$0xff]
  %v4721 = vld [vmem:[%s4695 + $0xc8] sm:$0xff]
  %v4722 = vld [vmem:[%s4695 + $0xd0] sm:$0xff]
  %v4723 = vld [vmem:[%s4695 + $0xd8] sm:$0xff]
  %v4724 = vld [vmem:[%s4695 + $0xe0] sm:$0xff]
  %v4725 = vld [vmem:[%s4695 + $0xe8] sm:$0xff]
  %v4726 = vld [vmem:[%s4695 + $0xf0] sm:$0xff]
  %v4727 = vld [vmem:[%s4695 + $0xf8] sm:$0xff]
  %v4728 = vunpack.c.l.b16 %v4626
  %v4729 = vunpack.c.h.b16 %v4626
  %v4730 = vunpack.c.l.b16 %v4630
  %v4731 = vunpack.c.h.b16 %v4630
  %v4732 = vunpack.c.l.b16 %v4634
  %v4733 = vunpack.c.h.b16 %v4634
  %v4734 = vunpack.c.l.b16 %v4638
  %v4735 = vunpack.c.h.b16 %v4638
  %v4736 = vunpack.c.l.b16 %v4642
  %v4737 = vunpack.c.h.b16 %v4642
  %v4738 = vunpack.c.l.b16 %v4646
  %v4739 = vunpack.c.h.b16 %v4646
  %v4740 = vunpack.c.l.b16 %v4650
  %v4741 = vunpack.c.h.b16 %v4650
  %v4742 = vunpack.c.l.b16 %v4654
  %v4743 = vunpack.c.h.b16 %v4654
  %v4744 = vunpack.c.l.b16 %v4658
  %v4745 = vunpack.c.h.b16 %v4658
  %v4746 = vunpack.c.l.b16 %v4662
  %v4747 = vunpack.c.h.b16 %v4662
  %v4748 = vunpack.c.l.b16 %v4666
  %v4749 = vunpack.c.h.b16 %v4666
  %v4750 = vunpack.c.l.b16 %v4670
  %v4751 = vunpack.c.h.b16 %v4670
  %v4752 = vunpack.c.l.b16 %v4674
  %v4753 = vunpack.c.h.b16 %v4674
  %v4754 = vunpack.c.l.b16 %v4678
  %v4755 = vunpack.c.h.b16 %v4678
  %v4756 = vunpack.c.l.b16 %v4682
  %v4757 = vunpack.c.h.b16 %v4682
  %v4758 = vunpack.c.l.b16 %v4686
  %v4759 = vunpack.c.h.b16 %v4686
  %v4760 = vunpack.c.l.b16 %v4690
  %v4761 = vunpack.c.h.b16 %v4690
  %v4762 = vunpack.c.l.b16 %v4694
  %v4763 = vunpack.c.h.b16 %v4694
  %v4764 = vpack.c.b16 %v4730, %v4728
  %v4765 = vpack.c.b16 %v4731, %v4729
  %v4766 = vpack.c.b16 %v4734, %v4732
  %v4767 = vpack.c.b16 %v4735, %v4733
  %v4768 = vpack.c.b16 %v4738, %v4736
  %v4769 = vpack.c.b16 %v4739, %v4737
  %v4770 = vpack.c.b16 %v4742, %v4740
  %v4771 = vpack.c.b16 %v4743, %v4741
  %v4772 = vpack.c.b16 %v4746, %v4744
  %v4773 = vpack.c.b16 %v4747, %v4745
  %v4774 = vpack.c.b16 %v4750, %v4748
  %v4775 = vpack.c.b16 %v4751, %v4749
  %v4776 = vpack.c.b16 %v4754, %v4752
  %v4777 = vpack.c.b16 %v4755, %v4753
  %v4778 = vpack.c.b16 %v4758, %v4756
  %v4779 = vpack.c.b16 %v4759, %v4757
  %v4780 = vpack.c.b16 %v4762, %v4760
  %v4781 = vpack.c.b16 %v4763, %v4761
  %v4832 = vunpack.c.l.b16 %v4696
  %v4833 = vunpack.c.h.b16 %v4696
  %v4834 = vunpack.c.l.b16 %v4697
  %v4835 = vunpack.c.h.b16 %v4697
  %v4836 = vunpack.c.l.b16 %v4698
  %v4837 = vunpack.c.h.b16 %v4698
  %v4838 = vunpack.c.l.b16 %v4699
  %v4839 = vunpack.c.h.b16 %v4699
  %v4840 = vunpack.c.l.b16 %v4700
  %v4841 = vunpack.c.h.b16 %v4700
  %v4842 = vunpack.c.l.b16 %v4701
  %v4843 = vunpack.c.h.b16 %v4701
  %v4844 = vunpack.c.l.b16 %v4702
  %v4845 = vunpack.c.h.b16 %v4702
  %v4846 = vunpack.c.l.b16 %v4703
  %v4847 = vunpack.c.h.b16 %v4703
  %v4848 = vunpack.c.l.b16 %v4704
  %v4849 = vunpack.c.h.b16 %v4704
  %v4850 = vunpack.c.l.b16 %v4705
  %v4851 = vunpack.c.h.b16 %v4705
  %v4852 = vunpack.c.l.b16 %v4706
  %v4853 = vunpack.c.h.b16 %v4706
  %v4854 = vunpack.c.l.b16 %v4707
  %v4855 = vunpack.c.h.b16 %v4707
  %v4856 = vunpack.c.l.b16 %v4708
  %v4857 = vunpack.c.h.b16 %v4708
  %v4858 = vunpack.c.l.b16 %v4709
  %v4859 = vunpack.c.h.b16 %v4709
  %v4860 = vunpack.c.l.b16 %v4710
  %v4861 = vunpack.c.h.b16 %v4710
  %v4862 = vunpack.c.l.b16 %v4711
  %v4863 = vunpack.c.h.b16 %v4711
  %v4864 = vunpack.c.l.b16 %v4712
  %v4865 = vunpack.c.h.b16 %v4712
  %v4866 = vunpack.c.l.b16 %v4713
  %v4867 = vunpack.c.h.b16 %v4713
  %v4868 = vunpack.c.l.b16 %v4714
  %v4869 = vunpack.c.h.b16 %v4714
  %v4870 = vunpack.c.l.b16 %v4715
  %v4871 = vunpack.c.h.b16 %v4715
  %v4872 = vunpack.c.l.b16 %v4716
  %v4873 = vunpack.c.h.b16 %v4716
  %v4874 = vunpack.c.l.b16 %v4717
  %v4875 = vunpack.c.h.b16 %v4717
  %v4876 = vunpack.c.l.b16 %v4718
  %v4877 = vunpack.c.h.b16 %v4718
  %v4878 = vunpack.c.l.b16 %v4719
  %v4879 = vunpack.c.h.b16 %v4719
  %v4880 = vunpack.c.l.b16 %v4720
  %v4881 = vunpack.c.h.b16 %v4720
  %v4882 = vunpack.c.l.b16 %v4721
  %v4883 = vunpack.c.h.b16 %v4721
  %v4884 = vunpack.c.l.b16 %v4722
  %v4885 = vunpack.c.h.b16 %v4722
  %v4886 = vunpack.c.l.b16 %v4723
  %v4887 = vunpack.c.h.b16 %v4723
  %v4888 = vunpack.c.l.b16 %v4724
  %v4889 = vunpack.c.h.b16 %v4724
  %v4890 = vunpack.c.l.b16 %v4725
  %v4891 = vunpack.c.h.b16 %v4725
  %v4892 = vunpack.c.l.b16 %v4726
  %v4893 = vunpack.c.h.b16 %v4726
  %v4894 = vunpack.c.l.b16 %v4727
  %v4895 = vunpack.c.h.b16 %v4727
  %v4896 = vpack.c.b16 %v4834, %v4832
  %v4897 = vpack.c.b16 %v4835, %v4833
  %v4898 = vpack.c.b16 %v4838, %v4836
  %v4899 = vpack.c.b16 %v4839, %v4837
  %v4900 = vpack.c.b16 %v4842, %v4840
  %v4901 = vpack.c.b16 %v4843, %v4841
  %v4902 = vpack.c.b16 %v4846, %v4844
  %v4903 = vpack.c.b16 %v4847, %v4845
  %v4904 = vpack.c.b16 %v4850, %v4848
  %v4905 = vpack.c.b16 %v4851, %v4849
  %v4906 = vpack.c.b16 %v4854, %v4852
  %v4907 = vpack.c.b16 %v4855, %v4853
  %v4908 = vpack.c.b16 %v4858, %v4856
  %v4909 = vpack.c.b16 %v4859, %v4857
  %v4910 = vpack.c.b16 %v4862, %v4860
  %v4911 = vpack.c.b16 %v4863, %v4861
  %v4912 = vpack.c.b16 %v4866, %v4864
  %v4913 = vpack.c.b16 %v4867, %v4865
  %v4914 = vpack.c.b16 %v4870, %v4868
  %v4915 = vpack.c.b16 %v4871, %v4869
  %v4916 = vpack.c.b16 %v4874, %v4872
  %v4917 = vpack.c.b16 %v4875, %v4873
  %v4918 = vpack.c.b16 %v4878, %v4876
  %v4919 = vpack.c.b16 %v4879, %v4877
  %v4920 = vpack.c.b16 %v4882, %v4880
  %v4921 = vpack.c.b16 %v4883, %v4881
  %v4922 = vpack.c.b16 %v4886, %v4884
  %v4923 = vpack.c.b16 %v4887, %v4885
  %v4924 = vpack.c.b16 %v4890, %v4888
  %v4925 = vpack.c.b16 %v4891, %v4889
  %v4926 = vpack.c.b16 %v4894, %v4892
  %v4927 = vpack.c.b16 %v4895, %v4893
  %4960 = vmatprep.subr.bf16.mxu0 %v4897
  %4961 = vmatpush1.bf16.msra.mxu0 %v4896
  %4962 = vmatprep.subr.bf16.mxu0 %v4899
  %4963 = vmatpush1.bf16.msra.mxu0 %v4898
  %4964 = vmatprep.subr.bf16.mxu0 %v4901
  %4965 = vmatpush1.bf16.msra.mxu0 %v4900
  %4966 = vmatprep.subr.bf16.mxu0 %v4903
  %4967 = vmatpush1.bf16.msra.mxu0 %v4902
  %4968 = vmatprep.subr.bf16.mxu0 %v4905
  %4969 = vmatpush1.bf16.msra.mxu0 %v4904
  %4970 = vmatprep.subr.bf16.mxu0 %v4907
  %4971 = vmatpush1.bf16.msra.mxu0 %v4906
  %4972 = vmatprep.subr.bf16.mxu0 %v4909
  %4973 = vmatpush1.bf16.msra.mxu0 %v4908
  %4974 = vmatprep.subr.bf16.mxu0 %v4911
  %4975 = vmatpush1.bf16.msra.mxu0 %v4910
  %4976 = vmatprep.subr.bf16.mxu0 %v4913
  %4977 = vmatpush1.bf16.msra.mxu0 %v4912
  %4978 = vmatprep.subr.bf16.mxu0 %v4915
  %4979 = vmatpush1.bf16.msra.mxu0 %v4914
  %4980 = vmatprep.subr.bf16.mxu0 %v4917
  %4981 = vmatpush1.bf16.msra.mxu0 %v4916
  %4982 = vmatprep.subr.bf16.mxu0 %v4919
  %4983 = vmatpush1.bf16.msra.mxu0 %v4918
  %4984 = vmatprep.subr.bf16.mxu0 %v4921
  %4985 = vmatpush1.bf16.msra.mxu0 %v4920
  %4986 = vmatprep.subr.bf16.mxu0 %v4923
  %4987 = vmatpush1.bf16.msra.mxu0 %v4922
  %4988 = vmatprep.subr.bf16.mxu0 %v4925
  %4989 = vmatpush1.bf16.msra.mxu0 %v4924
  %4990 = vmatprep.subr.bf16.mxu0 %v4927
  %4991 = vmatpush1.bf16.msra.mxu0 %v4926
  %4992 = vmatprep.mubr.bf16.mxu0 %v4765
  %4993 = vmatmul.mubr.bf16.gmra.mrb[0].mxu0 %v4764
  %v4994 = vpop.f32.mrb[0].mxu0
  %v4995 = vadd.f32 0.0, %v4994
  %v4996 = vpop.f32.mrb[0].mxu0
  %v4997 = vadd.f32 0.0, %v4996
  %v4998 = vpop.f32.mrb[0].mxu0
  %v4999 = vadd.f32 0.0, %v4998
  %v5000 = vpop.f32.mrb[0].mxu0
  %v5001 = vadd.f32 0.0, %v5000
  %5002 = vmatprep.mubr.bf16.mxu0 %v4767
  %5003 = vmatmul.mubr.bf16.gmra.mrb[0].mxu0 %v4766
  %v5004 = vpop.f32.mrb[0].mxu0
  %v5005 = vadd.f32 0.0, %v5004
  %v5006 = vpop.f32.mrb[0].mxu0
  %v5007 = vadd.f32 0.0, %v5006
  %v5008 = vpop.f32.mrb[0].mxu0
  %v5009 = vadd.f32 0.0, %v5008
  %v5010 = vpop.f32.mrb[0].mxu0
  %v5011 = vadd.f32 0.0, %v5010
  %5012 = vmatprep.mubr.bf16.mxu0 %v4769
  %5013 = vmatmul.mubr.bf16.gmra.mrb[0].mxu0 %v4768
  %v5014 = vpop.f32.mrb[0].mxu0
  %v5015 = vadd.f32 0.0, %v5014
  %v5016 = vpop.f32.mrb[0].mxu0
  %v5017 = vadd.f32 0.0, %v5016
  %v5018 = vpop.f32.mrb[0].mxu0
  %v5019 = vadd.f32 0.0, %v5018
  %v5020 = vpop.f32.mrb[0].mxu0
  %v5021 = vadd.f32 0.0, %v5020
  %5022 = vmatprep.mubr.bf16.mxu0 %v4771
  %5023 = vmatmul.mubr.bf16.gmra.mrb[0].mxu0 %v4770
  %v5024 = vpop.f32.mrb[0].mxu0
  %v5025 = vadd.f32 0.0, %v5024
  %v5026 = vpop.f32.mrb[0].mxu0
  %v5027 = vadd.f32 0.0, %v5026
  %v5028 = vpop.f32.mrb[0].mxu0
  %v5029 = vadd.f32 0.0, %v5028
  %v5030 = vpop.f32.mrb[0].mxu0
  %v5031 = vadd.f32 0.0, %v5030
  %5032 = vmatprep.mubr.bf16.mxu0 %v4773
  %5033 = vmatmul.mubr.bf16.gmra.mrb[0].mxu0 %v4772
  %v5034 = vpop.f32.mrb[0].mxu0
  %v5035 = vadd.f32 0.0, %v5034
  %v5036 = vpop.f32.mrb[0].mxu0
  %v5037 = vadd.f32 0.0, %v5036
  %v5038 = vpop.f32.mrb[0].mxu0
  %v5039 = vadd.f32 0.0, %v5038
  %v5040 = vpop.f32.mrb[0].mxu0
  %v5041 = vadd.f32 0.0, %v5040
  %5042 = vmatprep.mubr.bf16.mxu0 %v4775
  %5043 = vmatmul.mubr.bf16.gmra.mrb[0].mxu0 %v4774
  %v5044 = vpop.f32.mrb[0].mxu0
  %v5045 = vadd.f32 0.0, %v5044
  %v5046 = vpop.f32.mrb[0].mxu0
  %v5047 = vadd.f32 0.0, %v5046
  %v5048 = vpop.f32.mrb[0].mxu0
  %v5049 = vadd.f32 0.0, %v5048
  %v5050 = vpop.f32.mrb[0].mxu0
  %v5051 = vadd.f32 0.0, %v5050
  %5052 = vmatprep.mubr.bf16.mxu0 %v4777
  %5053 = vmatmul.mubr.bf16.gmra.mrb[0].mxu0 %v4776
  %v5054 = vpop.f32.mrb[0].mxu0
  %v5055 = vadd.f32 0.0, %v5054
  %v5056 = vpop.f32.mrb[0].mxu0
  %v5057 = vadd.f32 0.0, %v5056
  %v5058 = vpop.f32.mrb[0].mxu0
  %v5059 = vadd.f32 0.0, %v5058
  %v5060 = vpop.f32.mrb[0].mxu0
  %v5061 = vadd.f32 0.0, %v5060
  %5062 = vmatprep.mubr.bf16.mxu0 %v4779
  %5063 = vmatmul.mubr.bf16.gmra.mrb[0].mxu0 %v4778
  %v5064 = vpop.f32.mrb[0].mxu0
  %v5065 = vadd.f32 0.0, %v5064
  %v5066 = vpop.f32.mrb[0].mxu0
  %v5067 = vadd.f32 0.0, %v5066
  %v5068 = vpop.f32.mrb[0].mxu0
  %v5069 = vadd.f32 0.0, %v5068
  %v5070 = vpop.f32.mrb[0].mxu0
  %v5071 = vadd.f32 0.0, %v5070
  %5072 = vmatprep.mubr.bf16.mxu0 %v4781
  %5073 = vmatmul.mubr.bf16.gmra.mrb[0].mxu0 %v4780
  %v5074 = vpop.f32.mrb[0].mxu0
  %v5075 = vadd.f32 0.0, %v5074
  %v5076 = vpop.f32.mrb[0].mxu0
  %v5077 = vadd.f32 0.0, %v5076
  %v5078 = vpop.f32.mrb[0].mxu0
  %v5079 = vadd.f32 0.0, %v5078
  %v5080 = vpop.f32.mrb[0].mxu0
  %v5081 = vadd.f32 0.0, %v5080
  %5082 = vdwg.mxu0
  %v5083 = vadd.f32 %v4533, %v4995
  %v5084 = vadd.f32 %v4534, %v4997
  %v5085 = vadd.f32 %v4535, %v4999
  %v5086 = vadd.f32 %v4536, %v5001
  %v5087 = vadd.f32 %v4537, %v5005
  %v5088 = vadd.f32 %v4538, %v5007
  %v5089 = vadd.f32 %v4539, %v5009
  %v5090 = vadd.f32 %v4540, %v5011
  %v5091 = vadd.f32 %v4541, %v5015
  %v5092 = vadd.f32 %v4542, %v5017
  %v5093 = vadd.f32 %v4543, %v5019
  %v5094 = vadd.f32 %v4544, %v5021
  %v5095 = vadd.f32 %v4545, %v5025
  %v5096 = vadd.f32 %v4546, %v5027
  %v5097 = vadd.f32 %v4547, %v5029
  %v5098 = vadd.f32 %v4548, %v5031
  %v5099 = vadd.f32 %v4549, %v5035
  %v5100 = vadd.f32 %v4550, %v5037
  %v5101 = vadd.f32 %v4551, %v5039
  %v5102 = vadd.f32 %v4552, %v5041
  %v5103 = vadd.f32 %v4553, %v5045
  %v5104 = vadd.f32 %v4554, %v5047
  %v5105 = vadd.f32 %v4555, %v5049
  %v5106 = vadd.f32 %v4556, %v5051
  %v5107 = vadd.f32 %v4557, %v5055
  %v5108 = vadd.f32 %v4558, %v5057
  %v5109 = vadd.f32 %v4559, %v5059
  %v5110 = vadd.f32 %v4560, %v5061
  %v5111 = vadd.f32 %v4561, %v5065
  %v5112 = vadd.f32 %v4562, %v5067
  %v5113 = vadd.f32 %v4563, %v5069
  %v5114 = vadd.f32 %v4564, %v5071
  %v5115 = vadd.f32 %v4565, %v5075
  %v5116 = vadd.f32 %v4566, %v5077
  %v5117 = vadd.f32 %v4567, %v5079
  %v5118 = vadd.f32 %v4568, %v5081
  %v5119 = vld [vmem:[%s3] sm:$0x3]
  %v5121 = vlaneseq
  %v5122 = vshrl.u32 %v5121, 7
  %v5123 = vsub.s32 0, %v5122
  %v5124 = vrot.slane %v5119, %v5123
  %v5125 = vlaneseq
  %v5126 = vshrl.u32 %v5125, 7
  %v5127 = vsub.s32 1, %v5126
  %v5128 = vrot.slane %v5119, %v5127
  %v5131 = vadd.f32 %v5083, %v5124
  %v5132 = vadd.f32 %v5084, %v5128
  %v5133 = vadd.f32 %v5085, %v5124
  %v5134 = vadd.f32 %v5086, %v5128
  %v5135 = vadd.f32 %v5087, %v5124
  %v5136 = vadd.f32 %v5088, %v5128
  %v5137 = vadd.f32 %v5089, %v5124
  %v5138 = vadd.f32 %v5090, %v5128
  %v5139 = vadd.f32 %v5091, %v5124
  %v5140 = vadd.f32 %v5092, %v5128
  %v5141 = vadd.f32 %v5093, %v5124
  %v5142 = vadd.f32 %v5094, %v5128
  %v5143 = vadd.f32 %v5095, %v5124
  %v5144 = vadd.f32 %v5096, %v5128
  %v5145 = vadd.f32 %v5097, %v5124
  %v5146 = vadd.f32 %v5098, %v5128
  %v5147 = vadd.f32 %v5099, %v5124
  %v5148 = vadd.f32 %v5100, %v5128
  %v5149 = vadd.f32 %v5101, %v5124
  %v5150 = vadd.f32 %v5102, %v5128
  %v5151 = vadd.f32 %v5103, %v5124
  %v5152 = vadd.f32 %v5104, %v5128
  %v5153 = vadd.f32 %v5105, %v5124
  %v5154 = vadd.f32 %v5106, %v5128
  %v5155 = vadd.f32 %v5107, %v5124
  %v5156 = vadd.f32 %v5108, %v5128
  %v5157 = vadd.f32 %v5109, %v5124
  %v5158 = vadd.f32 %v5110, %v5128
  %v5159 = vadd.f32 %v5111, %v5124
  %v5160 = vadd.f32 %v5112, %v5128
  %v5161 = vadd.f32 %v5113, %v5124
  %v5162 = vadd.f32 %v5114, %v5128
  %v5163 = vadd.f32 %v5115, %v5124
  %v5164 = vadd.f32 %v5116, %v5128
  %v5165 = vadd.f32 %v5117, %v5124
  %v5166 = vadd.f32 %v5118, %v5128
  %vm5167 = vcmp.ge.f32.partialorder %v5131, 0.0
  %vm5168 = vcmp.ge.f32.partialorder %v5132, 0.0
  %vm5169 = vcmp.ge.f32.partialorder %v5133, 0.0
  %vm5170 = vcmp.ge.f32.partialorder %v5134, 0.0
  %vm5171 = vcmp.ge.f32.partialorder %v5135, 0.0
  %vm5172 = vcmp.ge.f32.partialorder %v5136, 0.0
  %vm5173 = vcmp.ge.f32.partialorder %v5137, 0.0
  %vm5174 = vcmp.ge.f32.partialorder %v5138, 0.0
  %vm5175 = vcmp.ge.f32.partialorder %v5139, 0.0
  %vm5176 = vcmp.ge.f32.partialorder %v5140, 0.0
  %vm5177 = vcmp.ge.f32.partialorder %v5141, 0.0
  %vm5178 = vcmp.ge.f32.partialorder %v5142, 0.0
  %vm5179 = vcmp.ge.f32.partialorder %v5143, 0.0
  %vm5180 = vcmp.ge.f32.partialorder %v5144, 0.0
  %vm5181 = vcmp.ge.f32.partialorder %v5145, 0.0
  %vm5182 = vcmp.ge.f32.partialorder %v5146, 0.0
  %vm5183 = vcmp.ge.f32.partialorder %v5147, 0.0
  %vm5184 = vcmp.ge.f32.partialorder %v5148, 0.0
  %vm5185 = vcmp.ge.f32.partialorder %v5149, 0.0
  %vm5186 = vcmp.ge.f32.partialorder %v5150, 0.0
  %vm5187 = vcmp.ge.f32.partialorder %v5151, 0.0
  %vm5188 = vcmp.ge.f32.partialorder %v5152, 0.0
  %vm5189 = vcmp.ge.f32.partialorder %v5153, 0.0
  %vm5190 = vcmp.ge.f32.partialorder %v5154, 0.0
  %vm5191 = vcmp.ge.f32.partialorder %v5155, 0.0
  %vm5192 = vcmp.ge.f32.partialorder %v5156, 0.0
  %vm5193 = vcmp.ge.f32.partialorder %v5157, 0.0
  %vm5194 = vcmp.ge.f32.partialorder %v5158, 0.0
  %vm5195 = vcmp.ge.f32.partialorder %v5159, 0.0
  %vm5196 = vcmp.ge.f32.partialorder %v5160, 0.0
  %vm5197 = vcmp.ge.f32.partialorder %v5161, 0.0
  %vm5198 = vcmp.ge.f32.partialorder %v5162, 0.0
  %vm5199 = vcmp.ge.f32.partialorder %v5163, 0.0
  %vm5200 = vcmp.ge.f32.partialorder %v5164, 0.0
  %vm5201 = vcmp.ge.f32.partialorder %v5165, 0.0
  %vm5202 = vcmp.ge.f32.partialorder %v5166, 0.0
  %v5203 = vmul.f32 %v5131, 0.1
  %v5204 = vmul.f32 %v5132, 0.1
  %v5205 = vmul.f32 %v5133, 0.1
  %v5206 = vmul.f32 %v5134, 0.1
  %v5207 = vmul.f32 %v5135, 0.1
  %v5208 = vmul.f32 %v5136, 0.1
  %v5209 = vmul.f32 %v5137, 0.1
  %v5210 = vmul.f32 %v5138, 0.1
  %v5211 = vmul.f32 %v5139, 0.1
  %v5212 = vmul.f32 %v5140, 0.1
  %v5213 = vmul.f32 %v5141, 0.1
  %v5214 = vmul.f32 %v5142, 0.1
  %v5215 = vmul.f32 %v5143, 0.1
  %v5216 = vmul.f32 %v5144, 0.1
  %v5217 = vmul.f32 %v5145, 0.1
  %v5218 = vmul.f32 %v5146, 0.1
  %v5219 = vmul.f32 %v5147, 0.1
  %v5220 = vmul.f32 %v5148, 0.1
  %v5221 = vmul.f32 %v5149, 0.1
  %v5222 = vmul.f32 %v5150, 0.1
  %v5223 = vmul.f32 %v5151, 0.1
  %v5224 = vmul.f32 %v5152, 0.1
  %v5225 = vmul.f32 %v5153, 0.1
  %v5226 = vmul.f32 %v5154, 0.1
  %v5227 = vmul.f32 %v5155, 0.1
  %v5228 = vmul.f32 %v5156, 0.1
  %v5229 = vmul.f32 %v5157, 0.1
  %v5230 = vmul.f32 %v5158, 0.1
  %v5231 = vmul.f32 %v5159, 0.1
  %v5232 = vmul.f32 %v5160, 0.1
  %v5233 = vmul.f32 %v5161, 0.1
  %v5234 = vmul.f32 %v5162, 0.1
  %v5235 = vmul.f32 %v5163, 0.1
  %v5236 = vmul.f32 %v5164, 0.1
  %v5237 = vmul.f32 %v5165, 0.1
  %v5238 = vmul.f32 %v5166, 0.1
  %v5239 = vsel %vm5167, %v5131, %v5203
  %v5240 = vsel %vm5168, %v5132, %v5204
  %v5241 = vsel %vm5169, %v5133, %v5205
  %v5242 = vsel %vm5170, %v5134, %v5206
  %v5243 = vsel %vm5171, %v5135, %v5207
  %v5244 = vsel %vm5172, %v5136, %v5208
  %v5245 = vsel %vm5173, %v5137, %v5209
  %v5246 = vsel %vm5174, %v5138, %v5210
  %v5247 = vsel %vm5175, %v5139, %v5211
  %v5248 = vsel %vm5176, %v5140, %v5212
  %v5249 = vsel %vm5177, %v5141, %v5213
  %v5250 = vsel %vm5178, %v5142, %v5214
  %v5251 = vsel %vm5179, %v5143, %v5215
  %v5252 = vsel %vm5180, %v5144, %v5216
  %v5253 = vsel %vm5181, %v5145, %v5217
  %v5254 = vsel %vm5182, %v5146, %v5218
  %v5255 = vsel %vm5183, %v5147, %v5219
  %v5256 = vsel %vm5184, %v5148, %v5220
  %v5257 = vsel %vm5185, %v5149, %v5221
  %v5258 = vsel %vm5186, %v5150, %v5222
  %v5259 = vsel %vm5187, %v5151, %v5223
  %v5260 = vsel %vm5188, %v5152, %v5224
  %v5261 = vsel %vm5189, %v5153, %v5225
  %v5262 = vsel %vm5190, %v5154, %v5226
  %v5263 = vsel %vm5191, %v5155, %v5227
  %v5264 = vsel %vm5192, %v5156, %v5228
  %v5265 = vsel %vm5193, %v5157, %v5229
  %v5266 = vsel %vm5194, %v5158, %v5230
  %v5267 = vsel %vm5195, %v5159, %v5231
  %v5268 = vsel %vm5196, %v5160, %v5232
  %v5269 = vsel %vm5197, %v5161, %v5233
  %v5270 = vsel %vm5198, %v5162, %v5234
  %v5271 = vsel %vm5199, %v5163, %v5235
  %v5272 = vsel %vm5200, %v5164, %v5236
  %v5273 = vsel %vm5201, %v5165, %v5237
  %v5274 = vsel %vm5202, %v5166, %v5238
  %5275 = vst [vmem:[#allocation2] sm:$0xff] 0
  %5276 = vst [vmem:[#allocation2 + $0x8] sm:$0x11] 0
  %5277 = vst [vmem:[#allocation2 + $0x10] sm:$0xff] 0
  %5278 = vst [vmem:[#allocation2 + $0x18] sm:$0x11] 0
  %5279 = vst [vmem:[#allocation2 + $0x20] sm:$0xff] 0
  %5280 = vst [vmem:[#allocation2 + $0x28] sm:$0x11] 0
  %5281 = vst [vmem:[#allocation2 + $0x30] sm:$0xff] 0
  %5282 = vst [vmem:[#allocation2 + $0x38] sm:$0x11] 0
  %5283 = vst [vmem:[#allocation2 + $0x40] sm:$0xff] 0
  %5284 = vst [vmem:[#allocation2 + $0x48] sm:$0x11] 0
  %5285 = vst [vmem:[#allocation2 + $0x50] sm:$0xff] 0
  %5286 = vst [vmem:[#allocation2 + $0x58] sm:$0x11] 0
  %5287 = vst [vmem:[#allocation2 + $0x60] sm:$0xff] 0
  %5288 = vst [vmem:[#allocation2 + $0x68] sm:$0x11] 0
  %5289 = vst [vmem:[#allocation2 + $0x70] sm:$0xff] 0
  %5290 = vst [vmem:[#allocation2 + $0x78] sm:$0x11] 0
  %5291 = vst [vmem:[#allocation2 + $0x80] sm:$0xff] 0
  %5292 = vst [vmem:[#allocation2 + $0x88] sm:$0x11] 0
  %5293 = vst [vmem:[#allocation2 + $0x90] sm:$0xff] 0
  %5294 = vst [vmem:[#allocation2 + $0x98] sm:$0x11] 0
  %5295 = vst [vmem:[#allocation2 + $0xa0] sm:$0xff] 0
  %5296 = vst [vmem:[#allocation2 + $0xa8] sm:$0x11] 0
  %5297 = vst [vmem:[#allocation2 + $0xb0] sm:$0xff] 0
  %5298 = vst [vmem:[#allocation2 + $0xb8] sm:$0x11] 0
  %5299 = vst [vmem:[#allocation2 + $0xc0] sm:$0xff] 0
  %5300 = vst [vmem:[#allocation2 + $0xc8] sm:$0x11] 0
  %5301 = vst [vmem:[#allocation2 + $0xd0] sm:$0xff] 0
  %5302 = vst [vmem:[#allocation2 + $0xd8] sm:$0x11] 0
  %5303 = vst [vmem:[#allocation2 + $0xe0] sm:$0xff] 0
  %5304 = vst [vmem:[#allocation2 + $0xe8] sm:$0x11] 0
  %5305 = vst [vmem:[#allocation2 + $0xf0] sm:$0xff] 0
  %5306 = vst [vmem:[#allocation2 + $0xf8] sm:$0x11] 0
  %5307 = vst [vmem:[#allocation2 + $0x100] sm:$0xff] 0
  %5308 = vst [vmem:[#allocation2 + $0x108] sm:$0x11] 0
  %5309 = vst [vmem:[#allocation2 + $0x110] sm:$0xff] 0
  %5310 = vst [vmem:[#allocation2 + $0x118] sm:$0x11] 0
  %5311 = vst [vmem:[#allocation2 + $0x120] sm:$0xff] 0
  %5312 = vst [vmem:[#allocation2 + $0x128] sm:$0x11] 0
  %5313 = vst [vmem:[#allocation2 + $0x130] sm:$0xff] 0
  %5314 = vst [vmem:[#allocation2 + $0x138] sm:$0x11] 0
  %5315 = vst [vmem:[#allocation2 + $0x140] sm:$0xff] 0
  %5316 = vst [vmem:[#allocation2 + $0x148] sm:$0x11] 0
  %5317 = vst [vmem:[#allocation2 + $0x150] sm:$0xff] 0
  %5318 = vst [vmem:[#allocation2 + $0x158] sm:$0x11] 0
  %v5319 = vpack.c.bf16 %v5239, %v5239
  %v5320 = vpack.c.bf16 %v5240, %v5240
  %v5321 = vpack.c.bf16 %v5241, %v5241
  %v5322 = vpack.c.bf16 %v5242, %v5242
  %v5323 = vpack.c.bf16 %v5243, %v5243
  %v5324 = vpack.c.bf16 %v5244, %v5244
  %v5325 = vpack.c.bf16 %v5245, %v5245
  %v5326 = vpack.c.bf16 %v5246, %v5246
  %v5327 = vpack.c.bf16 %v5247, %v5247
  %v5328 = vpack.c.bf16 %v5248, %v5248
  %v5329 = vpack.c.bf16 %v5249, %v5249
  %v5330 = vpack.c.bf16 %v5250, %v5250
  %v5331 = vpack.c.bf16 %v5251, %v5251
  %v5332 = vpack.c.bf16 %v5252, %v5252
  %v5333 = vpack.c.bf16 %v5253, %v5253
  %v5334 = vpack.c.bf16 %v5254, %v5254
  %v5335 = vpack.c.bf16 %v5255, %v5255
  %v5336 = vpack.c.bf16 %v5256, %v5256
  %v5337 = vpack.c.bf16 %v5257, %v5257
  %v5338 = vpack.c.bf16 %v5258, %v5258
  %v5339 = vpack.c.bf16 %v5259, %v5259
  %v5340 = vpack.c.bf16 %v5260, %v5260
  %v5341 = vpack.c.bf16 %v5261, %v5261
  %v5342 = vpack.c.bf16 %v5262, %v5262
  %v5343 = vpack.c.bf16 %v5263, %v5263
  %v5344 = vpack.c.bf16 %v5264, %v5264
  %v5345 = vpack.c.bf16 %v5265, %v5265
  %v5346 = vpack.c.bf16 %v5266, %v5266
  %v5347 = vpack.c.bf16 %v5267, %v5267
  %v5348 = vpack.c.bf16 %v5268, %v5268
  %v5349 = vpack.c.bf16 %v5269, %v5269
  %v5350 = vpack.c.bf16 %v5270, %v5270
  %v5351 = vpack.c.bf16 %v5271, %v5271
  %v5352 = vpack.c.bf16 %v5272, %v5272
  %v5353 = vpack.c.bf16 %v5273, %v5273
  %v5354 = vpack.c.bf16 %v5274, %v5274
  %v5391 = vunpack.c.l.b16 %v5319
  %v5392 = vunpack.c.l.b16 %v5320
  %v5393 = vunpack.c.l.b16 %v5321
  %v5394 = vunpack.c.l.b16 %v5322
  %v5395 = vunpack.c.l.b16 %v5323
  %v5396 = vunpack.c.l.b16 %v5324
  %v5397 = vunpack.c.l.b16 %v5325
  %v5398 = vunpack.c.l.b16 %v5326
  %v5399 = vunpack.c.l.b16 %v5327
  %v5400 = vunpack.c.l.b16 %v5328
  %v5401 = vunpack.c.l.b16 %v5329
  %v5402 = vunpack.c.l.b16 %v5330
  %v5403 = vunpack.c.l.b16 %v5331
  %v5404 = vunpack.c.l.b16 %v5332
  %v5405 = vunpack.c.l.b16 %v5333
  %v5406 = vunpack.c.l.b16 %v5334
  %v5407 = vunpack.c.l.b16 %v5335
  %v5408 = vunpack.c.l.b16 %v5336
  %v5409 = vunpack.c.l.b16 %v5337
  %v5410 = vunpack.c.l.b16 %v5338
  %v5411 = vunpack.c.l.b16 %v5339
  %v5412 = vunpack.c.l.b16 %v5340
  %v5413 = vunpack.c.l.b16 %v5341
  %v5414 = vunpack.c.l.b16 %v5342
  %v5415 = vunpack.c.l.b16 %v5343
  %v5416 = vunpack.c.l.b16 %v5344
  %v5417 = vunpack.c.l.b16 %v5345
  %v5418 = vunpack.c.l.b16 %v5346
  %v5419 = vunpack.c.l.b16 %v5347
  %v5420 = vunpack.c.l.b16 %v5348
  %v5421 = vunpack.c.l.b16 %v5349
  %v5422 = vunpack.c.l.b16 %v5350
  %v5423 = vunpack.c.l.b16 %v5351
  %v5424 = vunpack.c.l.b16 %v5352
  %v5425 = vunpack.c.l.b16 %v5353
  %v5426 = vunpack.c.l.b16 %v5354
  %v5427 = vpack.c.b16 %v5392, %v5391
  %v5428 = vpack.c.b16 %v5394, %v5393
  %v5429 = vpack.c.b16 %v5396, %v5395
  %v5430 = vpack.c.b16 %v5398, %v5397
  %v5431 = vpack.c.b16 %v5400, %v5399
  %v5432 = vpack.c.b16 %v5402, %v5401
  %v5433 = vpack.c.b16 %v5404, %v5403
  %v5434 = vpack.c.b16 %v5406, %v5405
  %v5435 = vpack.c.b16 %v5408, %v5407
  %v5436 = vpack.c.b16 %v5410, %v5409
  %v5437 = vpack.c.b16 %v5412, %v5411
  %v5438 = vpack.c.b16 %v5414, %v5413
  %v5439 = vpack.c.b16 %v5416, %v5415
  %v5440 = vpack.c.b16 %v5418, %v5417
  %v5441 = vpack.c.b16 %v5420, %v5419
  %v5442 = vpack.c.b16 %v5422, %v5421
  %v5443 = vpack.c.b16 %v5424, %v5423
  %v5444 = vpack.c.b16 %v5426, %v5425
  %v5446 = vshrl.u32 %v5427, 16
  %v5448 = vrot.slane %v5446, 7
  %v5449 = vshll.u32 %v5427, 16
  %v5451 = vor.u32 %v5448, %v5449
  %v5452 = vrot.slane %v5448, 4
  %v5454 = vshrl.u32 %v5428, 16
  %v5456 = vrot.slane %v5454, 7
  %v5457 = vshll.u32 %v5428, 16
  %v5459 = vor.u32 %v5456, %v5457
  %v5460 = vrot.slane %v5456, 4
  %v5462 = vshrl.u32 %v5429, 16
  %v5464 = vrot.slane %v5462, 7
  %v5465 = vshll.u32 %v5429, 16
  %v5467 = vor.u32 %v5464, %v5465
  %v5468 = vrot.slane %v5464, 4
  %v5470 = vshrl.u32 %v5430, 16
  %v5472 = vrot.slane %v5470, 7
  %v5473 = vshll.u32 %v5430, 16
  %v5475 = vor.u32 %v5472, %v5473
  %v5476 = vrot.slane %v5472, 4
  %v5478 = vshrl.u32 %v5431, 16
  %v5480 = vrot.slane %v5478, 7
  %v5481 = vshll.u32 %v5431, 16
  %v5483 = vor.u32 %v5480, %v5481
  %v5484 = vrot.slane %v5480, 4
  %v5486 = vshrl.u32 %v5432, 16
  %v5488 = vrot.slane %v5486, 7
  %v5489 = vshll.u32 %v5432, 16
  %v5491 = vor.u32 %v5488, %v5489
  %v5492 = vrot.slane %v5488, 4
  %v5494 = vshrl.u32 %v5433, 16
  %v5496 = vrot.slane %v5494, 7
  %v5497 = vshll.u32 %v5433, 16
  %v5499 = vor.u32 %v5496, %v5497
  %v5500 = vrot.slane %v5496, 4
  %v5502 = vshrl.u32 %v5434, 16
  %v5504 = vrot.slane %v5502, 7
  %v5505 = vshll.u32 %v5434, 16
  %v5507 = vor.u32 %v5504, %v5505
  %v5508 = vrot.slane %v5504, 4
  %v5510 = vshrl.u32 %v5435, 16
  %v5512 = vrot.slane %v5510, 7
  %v5513 = vshll.u32 %v5435, 16
  %v5515 = vor.u32 %v5512, %v5513
  %v5516 = vrot.slane %v5512, 4
  %v5518 = vshrl.u32 %v5436, 16
  %v5520 = vrot.slane %v5518, 7
  %v5521 = vshll.u32 %v5436, 16
  %v5523 = vor.u32 %v5520, %v5521
  %v5524 = vrot.slane %v5520, 4
  %v5526 = vshrl.u32 %v5437, 16
  %v5528 = vrot.slane %v5526, 7
  %v5529 = vshll.u32 %v5437, 16
  %v5531 = vor.u32 %v5528, %v5529
  %v5532 = vrot.slane %v5528, 4
  %v5534 = vshrl.u32 %v5438, 16
  %v5536 = vrot.slane %v5534, 7
  %v5537 = vshll.u32 %v5438, 16
  %v5539 = vor.u32 %v5536, %v5537
  %v5540 = vrot.slane %v5536, 4
  %v5542 = vshrl.u32 %v5439, 16
  %v5544 = vrot.slane %v5542, 7
  %v5545 = vshll.u32 %v5439, 16
  %v5547 = vor.u32 %v5544, %v5545
  %v5548 = vrot.slane %v5544, 4
  %v5550 = vshrl.u32 %v5440, 16
  %v5552 = vrot.slane %v5550, 7
  %v5553 = vshll.u32 %v5440, 16
  %v5555 = vor.u32 %v5552, %v5553
  %v5556 = vrot.slane %v5552, 4
  %v5558 = vshrl.u32 %v5441, 16
  %v5560 = vrot.slane %v5558, 7
  %v5561 = vshll.u32 %v5441, 16
  %v5563 = vor.u32 %v5560, %v5561
  %v5564 = vrot.slane %v5560, 4
  %v5566 = vshrl.u32 %v5442, 16
  %v5568 = vrot.slane %v5566, 7
  %v5569 = vshll.u32 %v5442, 16
  %v5571 = vor.u32 %v5568, %v5569
  %v5572 = vrot.slane %v5568, 4
  %v5574 = vshrl.u32 %v5443, 16
  %v5576 = vrot.slane %v5574, 7
  %v5577 = vshll.u32 %v5443, 16
  %v5579 = vor.u32 %v5576, %v5577
  %v5580 = vrot.slane %v5576, 4
  %v5582 = vshrl.u32 %v5444, 16
  %v5584 = vrot.slane %v5582, 7
  %v5585 = vshll.u32 %v5444, 16
  %v5587 = vor.u32 %v5584, %v5585
  %v5588 = vrot.slane %v5584, 4
  %s5625 = scalar_lea.vmem [#allocation2], 16
  %vm5626 = vcmask 1043456
  %vm5627 = vsmask.f32 7938
  %vm5628 = vmand %vm5626, %vm5627
  %vm5629 = vcmask 1047556
  %vm5630 = vsmask.f32 7954
  %vm5631 = vmand %vm5629, %vm5630
  %vm5632 = vmor %vm5631, %vm5628
  %v5633 = vld [vmem:[%s5625] sm:$0xff]
  %v5634 = vsel %vm5632, %v5451, %v5633
  %5635 = vst [vmem:[%s5625] sm:$0xff] %v5634
  %vm5636 = vcmask 1040384
  %vm5637 = vsmask.f32 256
  %vm5638 = vmand %vm5636, %vm5637
  %vm5639 = vcmask 1044484
  %vm5640 = vsmask.f32 4352
  %vm5641 = vmand %vm5639, %vm5640
  %vm5642 = vmor %vm5641, %vm5638
  %v5643 = vld [vmem:[%s5625 + $0x8] sm:$0x11]
  %v5644 = vsel %vm5642, %v5452, %v5643
  %5645 = vst [vmem:[%s5625 + $0x8] sm:$0x11] %v5644
  %v5646 = vld [vmem:[%s5625 + $0x10] sm:$0xff]
  %v5647 = vsel %vm5632, %v5459, %v5646
  %5648 = vst [vmem:[%s5625 + $0x10] sm:$0xff] %v5647
  %v5649 = vld [vmem:[%s5625 + $0x18] sm:$0x11]
  %v5650 = vsel %vm5642, %v5460, %v5649
  %5651 = vst [vmem:[%s5625 + $0x18] sm:$0x11] %v5650
  %v5652 = vld [vmem:[%s5625 + $0x20] sm:$0xff]
  %v5653 = vsel %vm5632, %v5467, %v5652
  %5654 = vst [vmem:[%s5625 + $0x20] sm:$0xff] %v5653
  %v5655 = vld [vmem:[%s5625 + $0x28] sm:$0x11]
  %v5656 = vsel %vm5642, %v5468, %v5655
  %5657 = vst [vmem:[%s5625 + $0x28] sm:$0x11] %v5656
  %v5658 = vld [vmem:[%s5625 + $0x30] sm:$0xff]
  %v5659 = vsel %vm5632, %v5475, %v5658
  %5660 = vst [vmem:[%s5625 + $0x30] sm:$0xff] %v5659
  %v5661 = vld [vmem:[%s5625 + $0x38] sm:$0x11]
  %v5662 = vsel %vm5642, %v5476, %v5661
  %5663 = vst [vmem:[%s5625 + $0x38] sm:$0x11] %v5662
  %v5664 = vld [vmem:[%s5625 + $0x40] sm:$0xff]
  %v5665 = vsel %vm5632, %v5483, %v5664
  %5666 = vst [vmem:[%s5625 + $0x40] sm:$0xff] %v5665
  %v5667 = vld [vmem:[%s5625 + $0x48] sm:$0x11]
  %v5668 = vsel %vm5642, %v5484, %v5667
  %5669 = vst [vmem:[%s5625 + $0x48] sm:$0x11] %v5668
  %v5670 = vld [vmem:[%s5625 + $0x50] sm:$0xff]
  %v5671 = vsel %vm5632, %v5491, %v5670
  %5672 = vst [vmem:[%s5625 + $0x50] sm:$0xff] %v5671
  %v5673 = vld [vmem:[%s5625 + $0x58] sm:$0x11]
  %v5674 = vsel %vm5642, %v5492, %v5673
  %5675 = vst [vmem:[%s5625 + $0x58] sm:$0x11] %v5674
  %v5676 = vld [vmem:[%s5625 + $0x60] sm:$0xff]
  %v5677 = vsel %vm5632, %v5499, %v5676
  %5678 = vst [vmem:[%s5625 + $0x60] sm:$0xff] %v5677
  %v5679 = vld [vmem:[%s5625 + $0x68] sm:$0x11]
  %v5680 = vsel %vm5642, %v5500, %v5679
  %5681 = vst [vmem:[%s5625 + $0x68] sm:$0x11] %v5680
  %v5682 = vld [vmem:[%s5625 + $0x70] sm:$0xff]
  %v5683 = vsel %vm5632, %v5507, %v5682
  %5684 = vst [vmem:[%s5625 + $0x70] sm:$0xff] %v5683
  %v5685 = vld [vmem:[%s5625 + $0x78] sm:$0x11]
  %v5686 = vsel %vm5642, %v5508, %v5685
  %5687 = vst [vmem:[%s5625 + $0x78] sm:$0x11] %v5686
  %v5688 = vld [vmem:[%s5625 + $0x80] sm:$0xff]
  %v5689 = vsel %vm5632, %v5515, %v5688
  %5690 = vst [vmem:[%s5625 + $0x80] sm:$0xff] %v5689
  %v5691 = vld [vmem:[%s5625 + $0x88] sm:$0x11]
  %v5692 = vsel %vm5642, %v5516, %v5691
  %5693 = vst [vmem:[%s5625 + $0x88] sm:$0x11] %v5692
  %v5694 = vld [vmem:[%s5625 + $0xb0] sm:$0xff]
  %v5695 = vsel %vm5632, %v5523, %v5694
  %5696 = vst [vmem:[%s5625 + $0xb0] sm:$0xff] %v5695
  %v5697 = vld [vmem:[%s5625 + $0xb8] sm:$0x11]
  %v5698 = vsel %vm5642, %v5524, %v5697
  %5699 = vst [vmem:[%s5625 + $0xb8] sm:$0x11] %v5698
  %v5700 = vld [vmem:[%s5625 + $0xc0] sm:$0xff]
  %v5701 = vsel %vm5632, %v5531, %v5700
  %5702 = vst [vmem:[%s5625 + $0xc0] sm:$0xff] %v5701
  %v5703 = vld [vmem:[%s5625 + $0xc8] sm:$0x11]
  %v5704 = vsel %vm5642, %v5532, %v5703
  %5705 = vst [vmem:[%s5625 + $0xc8] sm:$0x11] %v5704
  %v5706 = vld [vmem:[%s5625 + $0xd0] sm:$0xff]
  %v5707 = vsel %vm5632, %v5539, %v5706
  %5708 = vst [vmem:[%s5625 + $0xd0] sm:$0xff] %v5707
  %v5709 = vld [vmem:[%s5625 + $0xd8] sm:$0x11]
  %v5710 = vsel %vm5642, %v5540, %v5709
  %5711 = vst [vmem:[%s5625 + $0xd8] sm:$0x11] %v5710
  %v5712 = vld [vmem:[%s5625 + $0xe0] sm:$0xff]
  %v5713 = vsel %vm5632, %v5547, %v5712
  %5714 = vst [vmem:[%s5625 + $0xe0] sm:$0xff] %v5713
  %v5715 = vld [vmem:[%s5625 + $0xe8] sm:$0x11]
  %v5716 = vsel %vm5642, %v5548, %v5715
  %5717 = vst [vmem:[%s5625 + $0xe8] sm:$0x11] %v5716
  %v5718 = vld [vmem:[%s5625 + $0xf0] sm:$0xff]
  %v5719 = vsel %vm5632, %v5555, %v5718
  %5720 = vst [vmem:[%s5625 + $0xf0] sm:$0xff] %v5719
  %v5721 = vld [vmem:[%s5625 + $0xf8] sm:$0x11]
  %v5722 = vsel %vm5642, %v5556, %v5721
  %5723 = vst [vmem:[%s5625 + $0xf8] sm:$0x11] %v5722
  %v5724 = vld [vmem:[%s5625 + $0x100] sm:$0xff]
  %v5725 = vsel %vm5632, %v5563, %v5724
  %5726 = vst [vmem:[%s5625 + $0x100] sm:$0xff] %v5725
  %v5727 = vld [vmem:[%s5625 + $0x108] sm:$0x11]
  %v5728 = vsel %vm5642, %v5564, %v5727
  %5729 = vst [vmem:[%s5625 + $0x108] sm:$0x11] %v5728
  %v5730 = vld [vmem:[%s5625 + $0x110] sm:$0xff]
  %v5731 = vsel %vm5632, %v5571, %v5730
  %5732 = vst [vmem:[%s5625 + $0x110] sm:$0xff] %v5731
  %v5733 = vld [vmem:[%s5625 + $0x118] sm:$0x11]
  %v5734 = vsel %vm5642, %v5572, %v5733
  %5735 = vst [vmem:[%s5625 + $0x118] sm:$0x11] %v5734
  %v5736 = vld [vmem:[%s5625 + $0x120] sm:$0xff]
  %v5737 = vsel %vm5632, %v5579, %v5736
  %5738 = vst [vmem:[%s5625 + $0x120] sm:$0xff] %v5737
  %v5739 = vld [vmem:[%s5625 + $0x128] sm:$0x11]
  %v5740 = vsel %vm5642, %v5580, %v5739
  %5741 = vst [vmem:[%s5625 + $0x128] sm:$0x11] %v5740
  %v5742 = vld [vmem:[%s5625 + $0x130] sm:$0xff]
  %v5743 = vsel %vm5632, %v5587, %v5742
  %5744 = vst [vmem:[%s5625 + $0x130] sm:$0xff] %v5743
  %v5745 = vld [vmem:[%s5625 + $0x138] sm:$0x11]
  %v5746 = vsel %vm5642, %v5588, %v5745
  %5747 = vst [vmem:[%s5625 + $0x138] sm:$0x11] %v5746
  %v5748 = vld [vmem:[#allocation2] sm:$0xff]
  %v5749 = vld [vmem:[#allocation2 + $0x10] sm:$0xff]
  %v5750 = vld [vmem:[#allocation2 + $0x20] sm:$0xff]
  %v5751 = vld [vmem:[#allocation2 + $0x30] sm:$0xff]
  %v5752 = vld [vmem:[#allocation2 + $0x40] sm:$0xff]
  %v5753 = vld [vmem:[#allocation2 + $0x50] sm:$0xff]
  %v5754 = vld [vmem:[#allocation2 + $0x60] sm:$0xff]
  %v5755 = vld [vmem:[#allocation2 + $0x70] sm:$0xff]
  %v5756 = vld [vmem:[#allocation2 + $0x80] sm:$0xff]
  %v5757 = vld [vmem:[#allocation2 + $0xb0] sm:$0xff]
  %v5758 = vld [vmem:[#allocation2 + $0xc0] sm:$0xff]
  %v5759 = vld [vmem:[#allocation2 + $0xd0] sm:$0xff]
  %v5760 = vld [vmem:[#allocation2 + $0xe0] sm:$0xff]
  %v5761 = vld [vmem:[#allocation2 + $0xf0] sm:$0xff]
  %v5762 = vld [vmem:[#allocation2 + $0x100] sm:$0xff]
  %v5763 = vld [vmem:[#allocation2 + $0x110] sm:$0xff]
  %v5764 = vld [vmem:[#allocation2 + $0x120] sm:$0xff]
  %v5765 = vld [vmem:[#allocation2 + $0x130] sm:$0xff]
  %v5766 = vld [vmem:[%s4] sm:$0xff]
  %v5767 = vld [vmem:[%s4 + $0x8] sm:$0xff]
  %v5768 = vld [vmem:[%s4 + $0x10] sm:$0xff]
  %v5769 = vld [vmem:[%s4 + $0x18] sm:$0xff]
  %v5770 = vld [vmem:[%s4 + $0x20] sm:$0xff]
  %v5771 = vld [vmem:[%s4 + $0x28] sm:$0xff]
  %v5772 = vld [vmem:[%s4 + $0x30] sm:$0xff]
  %v5773 = vld [vmem:[%s4 + $0x38] sm:$0xff]
  %v5774 = vld [vmem:[%s4 + $0x40] sm:$0xff]
  %v5775 = vld [vmem:[%s4 + $0x48] sm:$0xff]
  %v5776 = vld [vmem:[%s4 + $0x50] sm:$0xff]
  %v5777 = vld [vmem:[%s4 + $0x58] sm:$0xff]
  %v5778 = vld [vmem:[%s4 + $0x60] sm:$0xff]
  %v5779 = vld [vmem:[%s4 + $0x68] sm:$0xff]
  %v5780 = vld [vmem:[%s4 + $0x70] sm:$0xff]
  %v5781 = vld [vmem:[%s4 + $0x78] sm:$0xff]
  %v5782 = vld [vmem:[%s4 + $0x80] sm:$0xff]
  %v5783 = vld [vmem:[%s4 + $0x88] sm:$0xff]
  %v5784 = vld [vmem:[%s4 + $0x90] sm:$0xff]
  %v5785 = vld [vmem:[%s4 + $0x98] sm:$0xff]
  %v5786 = vld [vmem:[%s4 + $0xa0] sm:$0xff]
  %v5787 = vld [vmem:[%s4 + $0xa8] sm:$0xff]
  %v5788 = vld [vmem:[%s4 + $0xb0] sm:$0xff]
  %v5789 = vld [vmem:[%s4 + $0xb8] sm:$0xff]
  %v5790 = vld [vmem:[%s4 + $0xc0] sm:$0xff]
  %v5791 = vld [vmem:[%s4 + $0xc8] sm:$0xff]
  %v5792 = vld [vmem:[%s4 + $0xd0] sm:$0xff]
  %v5793 = vld [vmem:[%s4 + $0xd8] sm:$0xff]
  %v5794 = vld [vmem:[%s4 + $0xe0] sm:$0xff]
  %v5795 = vld [vmem:[%s4 + $0xe8] sm:$0xff]
  %v5796 = vld [vmem:[%s4 + $0xf0] sm:$0xff]
  %v5797 = vld [vmem:[%s4 + $0xf8] sm:$0xff]
  %v5798 = vld [vmem:[#allocation2 + $0x8] sm:$0x11]
  %v5799 = vld [vmem:[#allocation2 + $0x18] sm:$0x11]
  %v5800 = vld [vmem:[#allocation2 + $0x28] sm:$0x11]
  %v5801 = vld [vmem:[#allocation2 + $0x38] sm:$0x11]
  %v5802 = vld [vmem:[#allocation2 + $0x48] sm:$0x11]
  %v5803 = vld [vmem:[#allocation2 + $0x58] sm:$0x11]
  %v5804 = vld [vmem:[#allocation2 + $0x68] sm:$0x11]
  %v5805 = vld [vmem:[#allocation2 + $0x78] sm:$0x11]
  %v5806 = vld [vmem:[#allocation2 + $0x88] sm:$0x11]
  %v5807 = vld [vmem:[#allocation2 + $0xb8] sm:$0x11]
  %v5808 = vld [vmem:[#allocation2 + $0xc8] sm:$0x11]
  %v5809 = vld [vmem:[#allocation2 + $0xd8] sm:$0x11]
  %v5810 = vld [vmem:[#allocation2 + $0xe8] sm:$0x11]
  %v5811 = vld [vmem:[#allocation2 + $0xf8] sm:$0x11]
  %v5812 = vld [vmem:[#allocation2 + $0x108] sm:$0x11]
  %v5813 = vld [vmem:[#allocation2 + $0x118] sm:$0x11]
  %v5814 = vld [vmem:[#allocation2 + $0x128] sm:$0x11]
  %v5815 = vld [vmem:[#allocation2 + $0x138] sm:$0x11]
  %v5817 = vshrl.u32 %v5748, 16
  %v5819 = vrot.slane %v5817, 4
  %v5820 = vshll.u32 %v5748, 16
  %v5822 = vrot.slane %v5820, 5
  %v5823 = vor.u32 %v5819, %v5822
  %v5824 = vrot.slane %v5823, 4
  %v5826 = vshll.u32 %v5798, 16
  %v5828 = vrot.slane %v5826, 5
  %v5829 = vsel %vm106, %v5824, %v5828
  %v5831 = vshrl.u32 %v5749, 16
  %v5833 = vrot.slane %v5831, 4
  %v5834 = vshll.u32 %v5749, 16
  %v5836 = vrot.slane %v5834, 5
  %v5837 = vor.u32 %v5833, %v5836
  %v5838 = vrot.slane %v5837, 4
  %v5840 = vshll.u32 %v5799, 16
  %v5842 = vrot.slane %v5840, 5
  %v5843 = vsel %vm106, %v5838, %v5842
  %v5845 = vshrl.u32 %v5750, 16
  %v5847 = vrot.slane %v5845, 4
  %v5848 = vshll.u32 %v5750, 16
  %v5850 = vrot.slane %v5848, 5
  %v5851 = vor.u32 %v5847, %v5850
  %v5852 = vrot.slane %v5851, 4
  %v5854 = vshll.u32 %v5800, 16
  %v5856 = vrot.slane %v5854, 5
  %v5857 = vsel %vm106, %v5852, %v5856
  %v5859 = vshrl.u32 %v5751, 16
  %v5861 = vrot.slane %v5859, 4
  %v5862 = vshll.u32 %v5751, 16
  %v5864 = vrot.slane %v5862, 5
  %v5865 = vor.u32 %v5861, %v5864
  %v5866 = vrot.slane %v5865, 4
  %v5868 = vshll.u32 %v5801, 16
  %v5870 = vrot.slane %v5868, 5
  %v5871 = vsel %vm106, %v5866, %v5870
  %v5873 = vshrl.u32 %v5752, 16
  %v5875 = vrot.slane %v5873, 4
  %v5876 = vshll.u32 %v5752, 16
  %v5878 = vrot.slane %v5876, 5
  %v5879 = vor.u32 %v5875, %v5878
  %v5880 = vrot.slane %v5879, 4
  %v5882 = vshll.u32 %v5802, 16
  %v5884 = vrot.slane %v5882, 5
  %v5885 = vsel %vm106, %v5880, %v5884
  %v5887 = vshrl.u32 %v5753, 16
  %v5889 = vrot.slane %v5887, 4
  %v5890 = vshll.u32 %v5753, 16
  %v5892 = vrot.slane %v5890, 5
  %v5893 = vor.u32 %v5889, %v5892
  %v5894 = vrot.slane %v5893, 4
  %v5896 = vshll.u32 %v5803, 16
  %v5898 = vrot.slane %v5896, 5
  %v5899 = vsel %vm106, %v5894, %v5898
  %v5901 = vshrl.u32 %v5754, 16
  %v5903 = vrot.slane %v5901, 4
  %v5904 = vshll.u32 %v5754, 16
  %v5906 = vrot.slane %v5904, 5
  %v5907 = vor.u32 %v5903, %v5906
  %v5908 = vrot.slane %v5907, 4
  %v5910 = vshll.u32 %v5804, 16
  %v5912 = vrot.slane %v5910, 5
  %v5913 = vsel %vm106, %v5908, %v5912
  %v5915 = vshrl.u32 %v5755, 16
  %v5917 = vrot.slane %v5915, 4
  %v5918 = vshll.u32 %v5755, 16
  %v5920 = vrot.slane %v5918, 5
  %v5921 = vor.u32 %v5917, %v5920
  %v5922 = vrot.slane %v5921, 4
  %v5924 = vshll.u32 %v5805, 16
  %v5926 = vrot.slane %v5924, 5
  %v5927 = vsel %vm106, %v5922, %v5926
  %v5929 = vshrl.u32 %v5756, 16
  %v5931 = vrot.slane %v5929, 4
  %v5932 = vshll.u32 %v5756, 16
  %v5934 = vrot.slane %v5932, 5
  %v5935 = vor.u32 %v5931, %v5934
  %v5936 = vrot.slane %v5935, 4
  %v5938 = vshll.u32 %v5806, 16
  %v5940 = vrot.slane %v5938, 5
  %v5941 = vsel %vm106, %v5936, %v5940
  %v5943 = vshrl.u32 %v5757, 16
  %v5945 = vrot.slane %v5943, 4
  %v5946 = vshll.u32 %v5757, 16
  %v5948 = vrot.slane %v5946, 5
  %v5949 = vor.u32 %v5945, %v5948
  %v5950 = vrot.slane %v5949, 4
  %v5952 = vshll.u32 %v5807, 16
  %v5954 = vrot.slane %v5952, 5
  %v5955 = vsel %vm106, %v5950, %v5954
  %v5957 = vshrl.u32 %v5758, 16
  %v5959 = vrot.slane %v5957, 4
  %v5960 = vshll.u32 %v5758, 16
  %v5962 = vrot.slane %v5960, 5
  %v5963 = vor.u32 %v5959, %v5962
  %v5964 = vrot.slane %v5963, 4
  %v5966 = vshll.u32 %v5808, 16
  %v5968 = vrot.slane %v5966, 5
  %v5969 = vsel %vm106, %v5964, %v5968
  %v5971 = vshrl.u32 %v5759, 16
  %v5973 = vrot.slane %v5971, 4
  %v5974 = vshll.u32 %v5759, 16
  %v5976 = vrot.slane %v5974, 5
  %v5977 = vor.u32 %v5973, %v5976
  %v5978 = vrot.slane %v5977, 4
  %v5980 = vshll.u32 %v5809, 16
  %v5982 = vrot.slane %v5980, 5
  %v5983 = vsel %vm106, %v5978, %v5982
  %v5985 = vshrl.u32 %v5760, 16
  %v5987 = vrot.slane %v5985, 4
  %v5988 = vshll.u32 %v5760, 16
  %v5990 = vrot.slane %v5988, 5
  %v5991 = vor.u32 %v5987, %v5990
  %v5992 = vrot.slane %v5991, 4
  %v5994 = vshll.u32 %v5810, 16
  %v5996 = vrot.slane %v5994, 5
  %v5997 = vsel %vm106, %v5992, %v5996
  %v5999 = vshrl.u32 %v5761, 16
  %v6001 = vrot.slane %v5999, 4
  %v6002 = vshll.u32 %v5761, 16
  %v6004 = vrot.slane %v6002, 5
  %v6005 = vor.u32 %v6001, %v6004
  %v6006 = vrot.slane %v6005, 4
  %v6008 = vshll.u32 %v5811, 16
  %v6010 = vrot.slane %v6008, 5
  %v6011 = vsel %vm106, %v6006, %v6010
  %v6013 = vshrl.u32 %v5762, 16
  %v6015 = vrot.slane %v6013, 4
  %v6016 = vshll.u32 %v5762, 16
  %v6018 = vrot.slane %v6016, 5
  %v6019 = vor.u32 %v6015, %v6018
  %v6020 = vrot.slane %v6019, 4
  %v6022 = vshll.u32 %v5812, 16
  %v6024 = vrot.slane %v6022, 5
  %v6025 = vsel %vm106, %v6020, %v6024
  %v6027 = vshrl.u32 %v5763, 16
  %v6029 = vrot.slane %v6027, 4
  %v6030 = vshll.u32 %v5763, 16
  %v6032 = vrot.slane %v6030, 5
  %v6033 = vor.u32 %v6029, %v6032
  %v6034 = vrot.slane %v6033, 4
  %v6036 = vshll.u32 %v5813, 16
  %v6038 = vrot.slane %v6036, 5
  %v6039 = vsel %vm106, %v6034, %v6038
  %v6041 = vshrl.u32 %v5764, 16
  %v6043 = vrot.slane %v6041, 4
  %v6044 = vshll.u32 %v5764, 16
  %v6046 = vrot.slane %v6044, 5
  %v6047 = vor.u32 %v6043, %v6046
  %v6048 = vrot.slane %v6047, 4
  %v6050 = vshll.u32 %v5814, 16
  %v6052 = vrot.slane %v6050, 5
  %v6053 = vsel %vm106, %v6048, %v6052
  %v6055 = vshrl.u32 %v5765, 16
  %v6057 = vrot.slane %v6055, 4
  %v6058 = vshll.u32 %v5765, 16
  %v6060 = vrot.slane %v6058, 5
  %v6061 = vor.u32 %v6057, %v6060
  %v6062 = vrot.slane %v6061, 4
  %v6064 = vshll.u32 %v5815, 16
  %v6066 = vrot.slane %v6064, 5
  %v6067 = vsel %vm106, %v6062, %v6066
  %s6068 = scalar_lea.vmem %s4, 256
  %v6069 = vld [vmem:[%s6068] sm:$0xff]
  %v6070 = vld [vmem:[%s6068 + $0x8] sm:$0xff]
  %v6071 = vld [vmem:[%s6068 + $0x10] sm:$0xff]
  %v6072 = vld [vmem:[%s6068 + $0x18] sm:$0xff]
  %v6073 = vld [vmem:[%s6068 + $0x20] sm:$0xff]
  %v6074 = vld [vmem:[%s6068 + $0x28] sm:$0xff]
  %v6075 = vld [vmem:[%s6068 + $0x30] sm:$0xff]
  %v6076 = vld [vmem:[%s6068 + $0x38] sm:$0xff]
  %v6077 = vld [vmem:[%s6068 + $0x40] sm:$0xff]
  %v6078 = vld [vmem:[%s6068 + $0x48] sm:$0xff]
  %v6079 = vld [vmem:[%s6068 + $0x50] sm:$0xff]
  %v6080 = vld [vmem:[%s6068 + $0x58] sm:$0xff]
  %v6081 = vld [vmem:[%s6068 + $0x60] sm:$0xff]
  %v6082 = vld [vmem:[%s6068 + $0x68] sm:$0xff]
  %v6083 = vld [vmem:[%s6068 + $0x70] sm:$0xff]
  %v6084 = vld [vmem:[%s6068 + $0x78] sm:$0xff]
  %v6085 = vld [vmem:[%s6068 + $0x80] sm:$0xff]
  %v6086 = vld [vmem:[%s6068 + $0x88] sm:$0xff]
  %v6087 = vld [vmem:[%s6068 + $0x90] sm:$0xff]
  %v6088 = vld [vmem:[%s6068 + $0x98] sm:$0xff]
  %v6089 = vld [vmem:[%s6068 + $0xa0] sm:$0xff]
  %v6090 = vld [vmem:[%s6068 + $0xa8] sm:$0xff]
  %v6091 = vld [vmem:[%s6068 + $0xb0] sm:$0xff]
  %v6092 = vld [vmem:[%s6068 + $0xb8] sm:$0xff]
  %v6093 = vld [vmem:[%s6068 + $0xc0] sm:$0xff]
  %v6094 = vld [vmem:[%s6068 + $0xc8] sm:$0xff]
  %v6095 = vld [vmem:[%s6068 + $0xd0] sm:$0xff]
  %v6096 = vld [vmem:[%s6068 + $0xd8] sm:$0xff]
  %v6097 = vld [vmem:[%s6068 + $0xe0] sm:$0xff]
  %v6098 = vld [vmem:[%s6068 + $0xe8] sm:$0xff]
  %v6099 = vld [vmem:[%s6068 + $0xf0] sm:$0xff]
  %v6100 = vld [vmem:[%s6068 + $0xf8] sm:$0xff]
  %v6101 = vunpack.c.l.b16 %v5829
  %v6102 = vunpack.c.h.b16 %v5829
  %v6103 = vunpack.c.l.b16 %v5843
  %v6104 = vunpack.c.h.b16 %v5843
  %v6105 = vunpack.c.l.b16 %v5857
  %v6106 = vunpack.c.h.b16 %v5857
  %v6107 = vunpack.c.l.b16 %v5871
  %v6108 = vunpack.c.h.b16 %v5871
  %v6109 = vunpack.c.l.b16 %v5885
  %v6110 = vunpack.c.h.b16 %v5885
  %v6111 = vunpack.c.l.b16 %v5899
  %v6112 = vunpack.c.h.b16 %v5899
  %v6113 = vunpack.c.l.b16 %v5913
  %v6114 = vunpack.c.h.b16 %v5913
  %v6115 = vunpack.c.l.b16 %v5927
  %v6116 = vunpack.c.h.b16 %v5927
  %v6117 = vunpack.c.l.b16 %v5941
  %v6118 = vunpack.c.h.b16 %v5941
  %v6119 = vunpack.c.l.b16 %v5955
  %v6120 = vunpack.c.h.b16 %v5955
  %v6121 = vunpack.c.l.b16 %v5969
  %v6122 = vunpack.c.h.b16 %v5969
  %v6123 = vunpack.c.l.b16 %v5983
  %v6124 = vunpack.c.h.b16 %v5983
  %v6125 = vunpack.c.l.b16 %v5997
  %v6126 = vunpack.c.h.b16 %v5997
  %v6127 = vunpack.c.l.b16 %v6011
  %v6128 = vunpack.c.h.b16 %v6011
  %v6129 = vunpack.c.l.b16 %v6025
  %v6130 = vunpack.c.h.b16 %v6025
  %v6131 = vunpack.c.l.b16 %v6039
  %v6132 = vunpack.c.h.b16 %v6039
  %v6133 = vunpack.c.l.b16 %v6053
  %v6134 = vunpack.c.h.b16 %v6053
  %v6135 = vunpack.c.l.b16 %v6067
  %v6136 = vunpack.c.h.b16 %v6067
  %v6137 = vpack.c.b16 %v6103, %v6101
  %v6138 = vpack.c.b16 %v6104, %v6102
  %v6139 = vpack.c.b16 %v6107, %v6105
  %v6140 = vpack.c.b16 %v6108, %v6106
  %v6141 = vpack.c.b16 %v6111, %v6109
  %v6142 = vpack.c.b16 %v6112, %v6110
  %v6143 = vpack.c.b16 %v6115, %v6113
  %v6144 = vpack.c.b16 %v6116, %v6114
  %v6145 = vpack.c.b16 %v6119, %v6117
  %v6146 = vpack.c.b16 %v6120, %v6118
  %v6147 = vpack.c.b16 %v6123, %v6121
  %v6148 = vpack.c.b16 %v6124, %v6122
  %v6149 = vpack.c.b16 %v6127, %v6125
  %v6150 = vpack.c.b16 %v6128, %v6126
  %v6151 = vpack.c.b16 %v6131, %v6129
  %v6152 = vpack.c.b16 %v6132, %v6130
  %v6153 = vpack.c.b16 %v6135, %v6133
  %v6154 = vpack.c.b16 %v6136, %v6134
  %v6205 = vunpack.c.l.b16 %v6069
  %v6206 = vunpack.c.h.b16 %v6069
  %v6207 = vunpack.c.l.b16 %v6070
  %v6208 = vunpack.c.h.b16 %v6070
  %v6209 = vunpack.c.l.b16 %v6071
  %v6210 = vunpack.c.h.b16 %v6071
  %v6211 = vunpack.c.l.b16 %v6072
  %v6212 = vunpack.c.h.b16 %v6072
  %v6213 = vunpack.c.l.b16 %v6073
  %v6214 = vunpack.c.h.b16 %v6073
  %v6215 = vunpack.c.l.b16 %v6074
  %v6216 = vunpack.c.h.b16 %v6074
  %v6217 = vunpack.c.l.b16 %v6075
  %v6218 = vunpack.c.h.b16 %v6075
  %v6219 = vunpack.c.l.b16 %v6076
  %v6220 = vunpack.c.h.b16 %v6076
  %v6221 = vunpack.c.l.b16 %v6077
  %v6222 = vunpack.c.h.b16 %v6077
  %v6223 = vunpack.c.l.b16 %v6078
  %v6224 = vunpack.c.h.b16 %v6078
  %v6225 = vunpack.c.l.b16 %v6079
  %v6226 = vunpack.c.h.b16 %v6079
  %v6227 = vunpack.c.l.b16 %v6080
  %v6228 = vunpack.c.h.b16 %v6080
  %v6229 = vunpack.c.l.b16 %v6081
  %v6230 = vunpack.c.h.b16 %v6081
  %v6231 = vunpack.c.l.b16 %v6082
  %v6232 = vunpack.c.h.b16 %v6082
  %v6233 = vunpack.c.l.b16 %v6083
  %v6234 = vunpack.c.h.b16 %v6083
  %v6235 = vunpack.c.l.b16 %v6084
  %v6236 = vunpack.c.h.b16 %v6084
  %v6237 = vunpack.c.l.b16 %v6085
  %v6238 = vunpack.c.h.b16 %v6085
  %v6239 = vunpack.c.l.b16 %v6086
  %v6240 = vunpack.c.h.b16 %v6086
  %v6241 = vunpack.c.l.b16 %v6087
  %v6242 = vunpack.c.h.b16 %v6087
  %v6243 = vunpack.c.l.b16 %v6088
  %v6244 = vunpack.c.h.b16 %v6088
  %v6245 = vunpack.c.l.b16 %v6089
  %v6246 = vunpack.c.h.b16 %v6089
  %v6247 = vunpack.c.l.b16 %v6090
  %v6248 = vunpack.c.h.b16 %v6090
  %v6249 = vunpack.c.l.b16 %v6091
  %v6250 = vunpack.c.h.b16 %v6091
  %v6251 = vunpack.c.l.b16 %v6092
  %v6252 = vunpack.c.h.b16 %v6092
  %v6253 = vunpack.c.l.b16 %v6093
  %v6254 = vunpack.c.h.b16 %v6093
  %v6255 = vunpack.c.l.b16 %v6094
  %v6256 = vunpack.c.h.b16 %v6094
  %v6257 = vunpack.c.l.b16 %v6095
  %v6258 = vunpack.c.h.b16 %v6095
  %v6259 = vunpack.c.l.b16 %v6096
  %v6260 = vunpack.c.h.b16 %v6096
  %v6261 = vunpack.c.l.b16 %v6097
  %v6262 = vunpack.c.h.b16 %v6097
  %v6263 = vunpack.c.l.b16 %v6098
  %v6264 = vunpack.c.h.b16 %v6098
  %v6265 = vunpack.c.l.b16 %v6099
  %v6266 = vunpack.c.h.b16 %v6099
  %v6267 = vunpack.c.l.b16 %v6100
  %v6268 = vunpack.c.h.b16 %v6100
  %v6269 = vpack.c.b16 %v6207, %v6205
  %v6270 = vpack.c.b16 %v6208, %v6206
  %v6271 = vpack.c.b16 %v6211, %v6209
  %v6272 = vpack.c.b16 %v6212, %v6210
  %v6273 = vpack.c.b16 %v6215, %v6213
  %v6274 = vpack.c.b16 %v6216, %v6214
  %v6275 = vpack.c.b16 %v6219, %v6217
  %v6276 = vpack.c.b16 %v6220, %v6218
  %v6277 = vpack.c.b16 %v6223, %v6221
  %v6278 = vpack.c.b16 %v6224, %v6222
  %v6279 = vpack.c.b16 %v6227, %v6225
  %v6280 = vpack.c.b16 %v6228, %v6226
  %v6281 = vpack.c.b16 %v6231, %v6229
  %v6282 = vpack.c.b16 %v6232, %v6230
  %v6283 = vpack.c.b16 %v6235, %v6233
  %v6284 = vpack.c.b16 %v6236, %v6234
  %v6285 = vpack.c.b16 %v6239, %v6237
  %v6286 = vpack.c.b16 %v6240, %v6238
  %v6287 = vpack.c.b16 %v6243, %v6241
  %v6288 = vpack.c.b16 %v6244, %v6242
  %v6289 = vpack.c.b16 %v6247, %v6245
  %v6290 = vpack.c.b16 %v6248, %v6246
  %v6291 = vpack.c.b16 %v6251, %v6249
  %v6292 = vpack.c.b16 %v6252, %v6250
  %v6293 = vpack.c.b16 %v6255, %v6253
  %v6294 = vpack.c.b16 %v6256, %v6254
  %v6295 = vpack.c.b16 %v6259, %v6257
  %v6296 = vpack.c.b16 %v6260, %v6258
  %v6297 = vpack.c.b16 %v6263, %v6261
  %v6298 = vpack.c.b16 %v6264, %v6262
  %v6299 = vpack.c.b16 %v6267, %v6265
  %v6300 = vpack.c.b16 %v6268, %v6266
  %6333 = vmatprep.subr.bf16.mxu0 %v6270
  %6334 = vmatpush1.bf16.msra.mxu0 %v6269
  %6335 = vmatprep.subr.bf16.mxu0 %v6272
  %6336 = vmatpush1.bf16.msra.mxu0 %v6271
  %6337 = vmatprep.subr.bf16.mxu0 %v6274
  %6338 = vmatpush1.bf16.msra.mxu0 %v6273
  %6339 = vmatprep.subr.bf16.mxu0 %v6276
  %6340 = vmatpush1.bf16.msra.mxu0 %v6275
  %6341 = vmatprep.subr.bf16.mxu0 %v6278
  %6342 = vmatpush1.bf16.msra.mxu0 %v6277
  %6343 = vmatprep.subr.bf16.mxu0 %v6280
  %6344 = vmatpush1.bf16.msra.mxu0 %v6279
  %6345 = vmatprep.subr.bf16.mxu0 %v6282
  %6346 = vmatpush1.bf16.msra.mxu0 %v6281
  %6347 = vmatprep.subr.bf16.mxu0 %v6284
  %6348 = vmatpush1.bf16.msra.mxu0 %v6283
  %6349 = vmatprep.subr.bf16.mxu0 %v6286
  %6350 = vmatpush1.bf16.msra.mxu0 %v6285
  %6351 = vmatprep.subr.bf16.mxu0 %v6288
  %6352 = vmatpush1.bf16.msra.mxu0 %v6287
  %6353 = vmatprep.subr.bf16.mxu0 %v6290
  %6354 = vmatpush1.bf16.msra.mxu0 %v6289
  %6355 = vmatprep.subr.bf16.mxu0 %v6292
  %6356 = vmatpush1.bf16.msra.mxu0 %v6291
  %6357 = vmatprep.subr.bf16.mxu0 %v6294
  %6358 = vmatpush1.bf16.msra.mxu0 %v6293
  %6359 = vmatprep.subr.bf16.mxu0 %v6296
  %6360 = vmatpush1.bf16.msra.mxu0 %v6295
  %6361 = vmatprep.subr.bf16.mxu0 %v6298
  %6362 = vmatpush1.bf16.msra.mxu0 %v6297
  %6363 = vmatprep.subr.bf16.mxu0 %v6300
  %6364 = vmatpush1.bf16.msra.mxu0 %v6299
  %6365 = vmatprep.mubr.bf16.mxu0 %v6138
  %6366 = vmatmul.mubr.bf16.gmra.mrb[0].mxu0 %v6137
  %v6367 = vpop.f32.mrb[0].mxu0
  %v6368 = vadd.f32 0.0, %v6367
  %v6369 = vpop.f32.mrb[0].mxu0
  %v6370 = vadd.f32 0.0, %v6369
  %v6371 = vpop.f32.mrb[0].mxu0
  %v6372 = vadd.f32 0.0, %v6371
  %v6373 = vpop.f32.mrb[0].mxu0
  %v6374 = vadd.f32 0.0, %v6373
  %6375 = vmatprep.mubr.bf16.mxu0 %v6140
  %6376 = vmatmul.mubr.bf16.gmra.mrb[0].mxu0 %v6139
  %v6377 = vpop.f32.mrb[0].mxu0
  %v6378 = vadd.f32 0.0, %v6377
  %v6379 = vpop.f32.mrb[0].mxu0
  %v6380 = vadd.f32 0.0, %v6379
  %v6381 = vpop.f32.mrb[0].mxu0
  %v6382 = vadd.f32 0.0, %v6381
  %v6383 = vpop.f32.mrb[0].mxu0
  %v6384 = vadd.f32 0.0, %v6383
  %6385 = vmatprep.mubr.bf16.mxu0 %v6142
  %6386 = vmatmul.mubr.bf16.gmra.mrb[0].mxu0 %v6141
  %v6387 = vpop.f32.mrb[0].mxu0
  %v6388 = vadd.f32 0.0, %v6387
  %v6389 = vpop.f32.mrb[0].mxu0
  %v6390 = vadd.f32 0.0, %v6389
  %v6391 = vpop.f32.mrb[0].mxu0
  %v6392 = vadd.f32 0.0, %v6391
  %v6393 = vpop.f32.mrb[0].mxu0
  %v6394 = vadd.f32 0.0, %v6393
  %6395 = vmatprep.mubr.bf16.mxu0 %v6144
  %6396 = vmatmul.mubr.bf16.gmra.mrb[0].mxu0 %v6143
  %v6397 = vpop.f32.mrb[0].mxu0
  %v6398 = vadd.f32 0.0, %v6397
  %v6399 = vpop.f32.mrb[0].mxu0
  %v6400 = vadd.f32 0.0, %v6399
  %v6401 = vpop.f32.mrb[0].mxu0
  %v6402 = vadd.f32 0.0, %v6401
  %v6403 = vpop.f32.mrb[0].mxu0
  %v6404 = vadd.f32 0.0, %v6403
  %6405 = vmatprep.mubr.bf16.mxu0 %v6146
  %6406 = vmatmul.mubr.bf16.gmra.mrb[0].mxu0 %v6145
  %v6407 = vpop.f32.mrb[0].mxu0
  %v6408 = vadd.f32 0.0, %v6407
  %v6409 = vpop.f32.mrb[0].mxu0
  %v6410 = vadd.f32 0.0, %v6409
  %v6411 = vpop.f32.mrb[0].mxu0
  %v6412 = vadd.f32 0.0, %v6411
  %v6413 = vpop.f32.mrb[0].mxu0
  %v6414 = vadd.f32 0.0, %v6413
  %6415 = vmatprep.mubr.bf16.mxu0 %v6148
  %6416 = vmatmul.mubr.bf16.gmra.mrb[0].mxu0 %v6147
  %v6417 = vpop.f32.mrb[0].mxu0
  %v6418 = vadd.f32 0.0, %v6417
  %v6419 = vpop.f32.mrb[0].mxu0
  %v6420 = vadd.f32 0.0, %v6419
  %v6421 = vpop.f32.mrb[0].mxu0
  %v6422 = vadd.f32 0.0, %v6421
  %v6423 = vpop.f32.mrb[0].mxu0
  %v6424 = vadd.f32 0.0, %v6423
  %6425 = vmatprep.mubr.bf16.mxu0 %v6150
  %6426 = vmatmul.mubr.bf16.gmra.mrb[0].mxu0 %v6149
  %v6427 = vpop.f32.mrb[0].mxu0
  %v6428 = vadd.f32 0.0, %v6427
  %v6429 = vpop.f32.mrb[0].mxu0
  %v6430 = vadd.f32 0.0, %v6429
  %v6431 = vpop.f32.mrb[0].mxu0
  %v6432 = vadd.f32 0.0, %v6431
  %v6433 = vpop.f32.mrb[0].mxu0
  %v6434 = vadd.f32 0.0, %v6433
  %6435 = vmatprep.mubr.bf16.mxu0 %v6152
  %6436 = vmatmul.mubr.bf16.gmra.mrb[0].mxu0 %v6151
  %v6437 = vpop.f32.mrb[0].mxu0
  %v6438 = vadd.f32 0.0, %v6437
  %v6439 = vpop.f32.mrb[0].mxu0
  %v6440 = vadd.f32 0.0, %v6439
  %v6441 = vpop.f32.mrb[0].mxu0
  %v6442 = vadd.f32 0.0, %v6441
  %v6443 = vpop.f32.mrb[0].mxu0
  %v6444 = vadd.f32 0.0, %v6443
  %6445 = vmatprep.mubr.bf16.mxu0 %v6154
  %6446 = vmatmul.mubr.bf16.gmra.mrb[0].mxu0 %v6153
  %v6447 = vpop.f32.mrb[0].mxu0
  %v6448 = vadd.f32 0.0, %v6447
  %v6449 = vpop.f32.mrb[0].mxu0
  %v6450 = vadd.f32 0.0, %v6449
  %v6451 = vpop.f32.mrb[0].mxu0
  %v6452 = vadd.f32 0.0, %v6451
  %v6453 = vpop.f32.mrb[0].mxu0
  %v6454 = vadd.f32 0.0, %v6453
  %6455 = vdwg.mxu0
  %v6474 = vunpack.c.l.b16 %v5748
  %v6475 = vunpack.c.h.b16 %v5748
  %v6476 = vunpack.c.l.b16 %v5749
  %v6477 = vunpack.c.h.b16 %v5749
  %v6478 = vunpack.c.l.b16 %v5750
  %v6479 = vunpack.c.h.b16 %v5750
  %v6480 = vunpack.c.l.b16 %v5751
  %v6481 = vunpack.c.h.b16 %v5751
  %v6482 = vunpack.c.l.b16 %v5752
  %v6483 = vunpack.c.h.b16 %v5752
  %v6484 = vunpack.c.l.b16 %v5753
  %v6485 = vunpack.c.h.b16 %v5753
  %v6486 = vunpack.c.l.b16 %v5754
  %v6487 = vunpack.c.h.b16 %v5754
  %v6488 = vunpack.c.l.b16 %v5755
  %v6489 = vunpack.c.h.b16 %v5755
  %v6490 = vunpack.c.l.b16 %v5756
  %v6491 = vunpack.c.h.b16 %v5756
  %v6492 = vunpack.c.l.b16 %v5757
  %v6493 = vunpack.c.h.b16 %v5757
  %v6494 = vunpack.c.l.b16 %v5758
  %v6495 = vunpack.c.h.b16 %v5758
  %v6496 = vunpack.c.l.b16 %v5759
  %v6497 = vunpack.c.h.b16 %v5759
  %v6498 = vunpack.c.l.b16 %v5760
  %v6499 = vunpack.c.h.b16 %v5760
  %v6500 = vunpack.c.l.b16 %v5761
  %v6501 = vunpack.c.h.b16 %v5761
  %v6502 = vunpack.c.l.b16 %v5762
  %v6503 = vunpack.c.h.b16 %v5762
  %v6504 = vunpack.c.l.b16 %v5763
  %v6505 = vunpack.c.h.b16 %v5763
  %v6506 = vunpack.c.l.b16 %v5764
  %v6507 = vunpack.c.h.b16 %v5764
  %v6508 = vunpack.c.l.b16 %v5765
  %v6509 = vunpack.c.h.b16 %v5765
  %v6510 = vpack.c.b16 %v6476, %v6474
  %v6511 = vpack.c.b16 %v6477, %v6475
  %v6512 = vpack.c.b16 %v6480, %v6478
  %v6513 = vpack.c.b16 %v6481, %v6479
  %v6514 = vpack.c.b16 %v6484, %v6482
  %v6515 = vpack.c.b16 %v6485, %v6483
  %v6516 = vpack.c.b16 %v6488, %v6486
  %v6517 = vpack.c.b16 %v6489, %v6487
  %v6518 = vpack.c.b16 %v6492, %v6490
  %v6519 = vpack.c.b16 %v6493, %v6491
  %v6520 = vpack.c.b16 %v6496, %v6494
  %v6521 = vpack.c.b16 %v6497, %v6495
  %v6522 = vpack.c.b16 %v6500, %v6498
  %v6523 = vpack.c.b16 %v6501, %v6499
  %v6524 = vpack.c.b16 %v6504, %v6502
  %v6525 = vpack.c.b16 %v6505, %v6503
  %v6526 = vpack.c.b16 %v6508, %v6506
  %v6527 = vpack.c.b16 %v6509, %v6507
  %v6578 = vunpack.c.l.b16 %v5766
  %v6579 = vunpack.c.h.b16 %v5766
  %v6580 = vunpack.c.l.b16 %v5767
  %v6581 = vunpack.c.h.b16 %v5767
  %v6582 = vunpack.c.l.b16 %v5768
  %v6583 = vunpack.c.h.b16 %v5768
  %v6584 = vunpack.c.l.b16 %v5769
  %v6585 = vunpack.c.h.b16 %v5769
  %v6586 = vunpack.c.l.b16 %v5770
  %v6587 = vunpack.c.h.b16 %v5770
  %v6588 = vunpack.c.l.b16 %v5771
  %v6589 = vunpack.c.h.b16 %v5771
  %v6590 = vunpack.c.l.b16 %v5772
  %v6591 = vunpack.c.h.b16 %v5772
  %v6592 = vunpack.c.l.b16 %v5773
  %v6593 = vunpack.c.h.b16 %v5773
  %v6594 = vunpack.c.l.b16 %v5774
  %v6595 = vunpack.c.h.b16 %v5774
  %v6596 = vunpack.c.l.b16 %v5775
  %v6597 = vunpack.c.h.b16 %v5775
  %v6598 = vunpack.c.l.b16 %v5776
  %v6599 = vunpack.c.h.b16 %v5776
  %v6600 = vunpack.c.l.b16 %v5777
  %v6601 = vunpack.c.h.b16 %v5777
  %v6602 = vunpack.c.l.b16 %v5778
  %v6603 = vunpack.c.h.b16 %v5778
  %v6604 = vunpack.c.l.b16 %v5779
  %v6605 = vunpack.c.h.b16 %v5779
  %v6606 = vunpack.c.l.b16 %v5780
  %v6607 = vunpack.c.h.b16 %v5780
  %v6608 = vunpack.c.l.b16 %v5781
  %v6609 = vunpack.c.h.b16 %v5781
  %v6610 = vunpack.c.l.b16 %v5782
  %v6611 = vunpack.c.h.b16 %v5782
  %v6612 = vunpack.c.l.b16 %v5783
  %v6613 = vunpack.c.h.b16 %v5783
  %v6614 = vunpack.c.l.b16 %v5784
  %v6615 = vunpack.c.h.b16 %v5784
  %v6616 = vunpack.c.l.b16 %v5785
  %v6617 = vunpack.c.h.b16 %v5785
  %v6618 = vunpack.c.l.b16 %v5786
  %v6619 = vunpack.c.h.b16 %v5786
  %v6620 = vunpack.c.l.b16 %v5787
  %v6621 = vunpack.c.h.b16 %v5787
  %v6622 = vunpack.c.l.b16 %v5788
  %v6623 = vunpack.c.h.b16 %v5788
  %v6624 = vunpack.c.l.b16 %v5789
  %v6625 = vunpack.c.h.b16 %v5789
  %v6626 = vunpack.c.l.b16 %v5790
  %v6627 = vunpack.c.h.b16 %v5790
  %v6628 = vunpack.c.l.b16 %v5791
  %v6629 = vunpack.c.h.b16 %v5791
  %v6630 = vunpack.c.l.b16 %v5792
  %v6631 = vunpack.c.h.b16 %v5792
  %v6632 = vunpack.c.l.b16 %v5793
  %v6633 = vunpack.c.h.b16 %v5793
  %v6634 = vunpack.c.l.b16 %v5794
  %v6635 = vunpack.c.h.b16 %v5794
  %v6636 = vunpack.c.l.b16 %v5795
  %v6637 = vunpack.c.h.b16 %v5795
  %v6638 = vunpack.c.l.b16 %v5796
  %v6639 = vunpack.c.h.b16 %v5796
  %v6640 = vunpack.c.l.b16 %v5797
  %v6641 = vunpack.c.h.b16 %v5797
  %v6642 = vpack.c.b16 %v6580, %v6578
  %v6643 = vpack.c.b16 %v6581, %v6579
  %v6644 = vpack.c.b16 %v6584, %v6582
  %v6645 = vpack.c.b16 %v6585, %v6583
  %v6646 = vpack.c.b16 %v6588, %v6586
  %v6647 = vpack.c.b16 %v6589, %v6587
  %v6648 = vpack.c.b16 %v6592, %v6590
  %v6649 = vpack.c.b16 %v6593, %v6591
  %v6650 = vpack.c.b16 %v6596, %v6594
  %v6651 = vpack.c.b16 %v6597, %v6595
  %v6652 = vpack.c.b16 %v6600, %v6598
  %v6653 = vpack.c.b16 %v6601, %v6599
  %v6654 = vpack.c.b16 %v6604, %v6602
  %v6655 = vpack.c.b16 %v6605, %v6603
  %v6656 = vpack.c.b16 %v6608, %v6606
  %v6657 = vpack.c.b16 %v6609, %v6607
  %v6658 = vpack.c.b16 %v6612, %v6610
  %v6659 = vpack.c.b16 %v6613, %v6611
  %v6660 = vpack.c.b16 %v6616, %v6614
  %v6661 = vpack.c.b16 %v6617, %v6615
  %v6662 = vpack.c.b16 %v6620, %v6618
  %v6663 = vpack.c.b16 %v6621, %v6619
  %v6664 = vpack.c.b16 %v6624, %v6622
  %v6665 = vpack.c.b16 %v6625, %v6623
  %v6666 = vpack.c.b16 %v6628, %v6626
  %v6667 = vpack.c.b16 %v6629, %v6627
  %v6668 = vpack.c.b16 %v6632, %v6630
  %v6669 = vpack.c.b16 %v6633, %v6631
  %v6670 = vpack.c.b16 %v6636, %v6634
  %v6671 = vpack.c.b16 %v6637, %v6635
  %v6672 = vpack.c.b16 %v6640, %v6638
  %v6673 = vpack.c.b16 %v6641, %v6639
  %6706 = vmatprep.subr.bf16.mxu0 %v6643
  %6707 = vmatpush1.bf16.msra.mxu0 %v6642
  %6708 = vmatprep.subr.bf16.mxu0 %v6645
  %6709 = vmatpush1.bf16.msra.mxu0 %v6644
  %6710 = vmatprep.subr.bf16.mxu0 %v6647
  %6711 = vmatpush1.bf16.msra.mxu0 %v6646
  %6712 = vmatprep.subr.bf16.mxu0 %v6649
  %6713 = vmatpush1.bf16.msra.mxu0 %v6648
  %6714 = vmatprep.subr.bf16.mxu0 %v6651
  %6715 = vmatpush1.bf16.msra.mxu0 %v6650
  %6716 = vmatprep.subr.bf16.mxu0 %v6653
  %6717 = vmatpush1.bf16.msra.mxu0 %v6652
  %6718 = vmatprep.subr.bf16.mxu0 %v6655
  %6719 = vmatpush1.bf16.msra.mxu0 %v6654
  %6720 = vmatprep.subr.bf16.mxu0 %v6657
  %6721 = vmatpush1.bf16.msra.mxu0 %v6656
  %6722 = vmatprep.subr.bf16.mxu0 %v6659
  %6723 = vmatpush1.bf16.msra.mxu0 %v6658
  %6724 = vmatprep.subr.bf16.mxu0 %v6661
  %6725 = vmatpush1.bf16.msra.mxu0 %v6660
  %6726 = vmatprep.subr.bf16.mxu0 %v6663
  %6727 = vmatpush1.bf16.msra.mxu0 %v6662
  %6728 = vmatprep.subr.bf16.mxu0 %v6665
  %6729 = vmatpush1.bf16.msra.mxu0 %v6664
  %6730 = vmatprep.subr.bf16.mxu0 %v6667
  %6731 = vmatpush1.bf16.msra.mxu0 %v6666
  %6732 = vmatprep.subr.bf16.mxu0 %v6669
  %6733 = vmatpush1.bf16.msra.mxu0 %v6668
  %6734 = vmatprep.subr.bf16.mxu0 %v6671
  %6735 = vmatpush1.bf16.msra.mxu0 %v6670
  %6736 = vmatprep.subr.bf16.mxu0 %v6673
  %6737 = vmatpush1.bf16.msra.mxu0 %v6672
  %6738 = vmatprep.mubr.bf16.mxu0 %v6511
  %6739 = vmatmul.mubr.bf16.gmra.mrb[0].mxu0 %v6510
  %v6740 = vpop.f32.mrb[0].mxu0
  %v6741 = vadd.f32 %v6368, %v6740
  %v6742 = vpop.f32.mrb[0].mxu0
  %v6743 = vadd.f32 %v6370, %v6742
  %v6744 = vpop.f32.mrb[0].mxu0
  %v6745 = vadd.f32 %v6372, %v6744
  %v6746 = vpop.f32.mrb[0].mxu0
  %v6747 = vadd.f32 %v6374, %v6746
  %6748 = vmatprep.mubr.bf16.mxu0 %v6513
  %6749 = vmatmul.mubr.bf16.gmra.mrb[0].mxu0 %v6512
  %v6750 = vpop.f32.mrb[0].mxu0
  %v6751 = vadd.f32 %v6378, %v6750
  %v6752 = vpop.f32.mrb[0].mxu0
  %v6753 = vadd.f32 %v6380, %v6752
  %v6754 = vpop.f32.mrb[0].mxu0
  %v6755 = vadd.f32 %v6382, %v6754
  %v6756 = vpop.f32.mrb[0].mxu0
  %v6757 = vadd.f32 %v6384, %v6756
  %6758 = vmatprep.mubr.bf16.mxu0 %v6515
  %6759 = vmatmul.mubr.bf16.gmra.mrb[0].mxu0 %v6514
  %v6760 = vpop.f32.mrb[0].mxu0
  %v6761 = vadd.f32 %v6388, %v6760
  %v6762 = vpop.f32.mrb[0].mxu0
  %v6763 = vadd.f32 %v6390, %v6762
  %v6764 = vpop.f32.mrb[0].mxu0
  %v6765 = vadd.f32 %v6392, %v6764
  %v6766 = vpop.f32.mrb[0].mxu0
  %v6767 = vadd.f32 %v6394, %v6766
  %6768 = vmatprep.mubr.bf16.mxu0 %v6517
  %6769 = vmatmul.mubr.bf16.gmra.mrb[0].mxu0 %v6516
  %v6770 = vpop.f32.mrb[0].mxu0
  %v6771 = vadd.f32 %v6398, %v6770
  %v6772 = vpop.f32.mrb[0].mxu0
  %v6773 = vadd.f32 %v6400, %v6772
  %v6774 = vpop.f32.mrb[0].mxu0
  %v6775 = vadd.f32 %v6402, %v6774
  %v6776 = vpop.f32.mrb[0].mxu0
  %v6777 = vadd.f32 %v6404, %v6776
  %6778 = vmatprep.mubr.bf16.mxu0 %v6519
  %6779 = vmatmul.mubr.bf16.gmra.mrb[0].mxu0 %v6518
  %v6780 = vpop.f32.mrb[0].mxu0
  %v6781 = vadd.f32 %v6408, %v6780
  %v6782 = vpop.f32.mrb[0].mxu0
  %v6783 = vadd.f32 %v6410, %v6782
  %v6784 = vpop.f32.mrb[0].mxu0
  %v6785 = vadd.f32 %v6412, %v6784
  %v6786 = vpop.f32.mrb[0].mxu0
  %v6787 = vadd.f32 %v6414, %v6786
  %6788 = vmatprep.mubr.bf16.mxu0 %v6521
  %6789 = vmatmul.mubr.bf16.gmra.mrb[0].mxu0 %v6520
  %v6790 = vpop.f32.mrb[0].mxu0
  %v6791 = vadd.f32 %v6418, %v6790
  %v6792 = vpop.f32.mrb[0].mxu0
  %v6793 = vadd.f32 %v6420, %v6792
  %v6794 = vpop.f32.mrb[0].mxu0
  %v6795 = vadd.f32 %v6422, %v6794
  %v6796 = vpop.f32.mrb[0].mxu0
  %v6797 = vadd.f32 %v6424, %v6796
  %6798 = vmatprep.mubr.bf16.mxu0 %v6523
  %6799 = vmatmul.mubr.bf16.gmra.mrb[0].mxu0 %v6522
  %v6800 = vpop.f32.mrb[0].mxu0
  %v6801 = vadd.f32 %v6428, %v6800
  %v6802 = vpop.f32.mrb[0].mxu0
  %v6803 = vadd.f32 %v6430, %v6802
  %v6804 = vpop.f32.mrb[0].mxu0
  %v6805 = vadd.f32 %v6432, %v6804
  %v6806 = vpop.f32.mrb[0].mxu0
  %v6807 = vadd.f32 %v6434, %v6806
  %6808 = vmatprep.mubr.bf16.mxu0 %v6525
  %6809 = vmatmul.mubr.bf16.gmra.mrb[0].mxu0 %v6524
  %v6810 = vpop.f32.mrb[0].mxu0
  %v6811 = vadd.f32 %v6438, %v6810
  %v6812 = vpop.f32.mrb[0].mxu0
  %v6813 = vadd.f32 %v6440, %v6812
  %v6814 = vpop.f32.mrb[0].mxu0
  %v6815 = vadd.f32 %v6442, %v6814
  %v6816 = vpop.f32.mrb[0].mxu0
  %v6817 = vadd.f32 %v6444, %v6816
  %6818 = vmatprep.mubr.bf16.mxu0 %v6527
  %6819 = vmatmul.mubr.bf16.gmra.mrb[0].mxu0 %v6526
  %v6820 = vpop.f32.mrb[0].mxu0
  %v6821 = vadd.f32 %v6448, %v6820
  %v6822 = vpop.f32.mrb[0].mxu0
  %v6823 = vadd.f32 %v6450, %v6822
  %v6824 = vpop.f32.mrb[0].mxu0
  %v6825 = vadd.f32 %v6452, %v6824
  %v6826 = vpop.f32.mrb[0].mxu0
  %v6827 = vadd.f32 %v6454, %v6826
  %6828 = vdwg.mxu0
  %v6829 = vld [vmem:[#allocation2] sm:$0xee]
  %v6830 = vld [vmem:[#allocation2 + $0x10] sm:$0xee]
  %v6831 = vld [vmem:[#allocation2 + $0x20] sm:$0xee]
  %v6832 = vld [vmem:[#allocation2 + $0x30] sm:$0xee]
  %v6833 = vld [vmem:[#allocation2 + $0x40] sm:$0xee]
  %v6834 = vld [vmem:[#allocation2 + $0x50] sm:$0xee]
  %v6835 = vld [vmem:[#allocation2 + $0x60] sm:$0xee]
  %v6836 = vld [vmem:[#allocation2 + $0x70] sm:$0xee]
  %v6837 = vld [vmem:[#allocation2 + $0x80] sm:$0xee]
  %v6838 = vld [vmem:[#allocation2 + $0xb0] sm:$0xee]
  %v6839 = vld [vmem:[#allocation2 + $0xc0] sm:$0xee]
  %v6840 = vld [vmem:[#allocation2 + $0xd0] sm:$0xee]
  %v6841 = vld [vmem:[#allocation2 + $0xe0] sm:$0xee]
  %v6842 = vld [vmem:[#allocation2 + $0xf0] sm:$0xee]
  %v6843 = vld [vmem:[#allocation2 + $0x100] sm:$0xee]
  %v6844 = vld [vmem:[#allocation2 + $0x110] sm:$0xee]
  %v6845 = vld [vmem:[#allocation2 + $0x120] sm:$0xee]
  %v6846 = vld [vmem:[#allocation2 + $0x130] sm:$0xee]
  %v6883 = vrot.slane %v6829, 5
  %v6884 = vrot.slane %v6883, 4
  %v6885 = vrot.slane %v5798, 5
  %v6886 = vsel %vm1176, %v6884, %v6885
  %v6887 = vrot.slane %v6830, 5
  %v6888 = vrot.slane %v6887, 4
  %v6889 = vrot.slane %v5799, 5
  %v6890 = vsel %vm1176, %v6888, %v6889
  %v6891 = vrot.slane %v6831, 5
  %v6892 = vrot.slane %v6891, 4
  %v6893 = vrot.slane %v5800, 5
  %v6894 = vsel %vm1176, %v6892, %v6893
  %v6895 = vrot.slane %v6832, 5
  %v6896 = vrot.slane %v6895, 4
  %v6897 = vrot.slane %v5801, 5
  %v6898 = vsel %vm1176, %v6896, %v6897
  %v6899 = vrot.slane %v6833, 5
  %v6900 = vrot.slane %v6899, 4
  %v6901 = vrot.slane %v5802, 5
  %v6902 = vsel %vm1176, %v6900, %v6901
  %v6903 = vrot.slane %v6834, 5
  %v6904 = vrot.slane %v6903, 4
  %v6905 = vrot.slane %v5803, 5
  %v6906 = vsel %vm1176, %v6904, %v6905
  %v6907 = vrot.slane %v6835, 5
  %v6908 = vrot.slane %v6907, 4
  %v6909 = vrot.slane %v5804, 5
  %v6910 = vsel %vm1176, %v6908, %v6909
  %v6911 = vrot.slane %v6836, 5
  %v6912 = vrot.slane %v6911, 4
  %v6913 = vrot.slane %v5805, 5
  %v6914 = vsel %vm1176, %v6912, %v6913
  %v6915 = vrot.slane %v6837, 5
  %v6916 = vrot.slane %v6915, 4
  %v6917 = vrot.slane %v5806, 5
  %v6918 = vsel %vm1176, %v6916, %v6917
  %v6919 = vrot.slane %v6838, 5
  %v6920 = vrot.slane %v6919, 4
  %v6921 = vrot.slane %v5807, 5
  %v6922 = vsel %vm1176, %v6920, %v6921
  %v6923 = vrot.slane %v6839, 5
  %v6924 = vrot.slane %v6923, 4
  %v6925 = vrot.slane %v5808, 5
  %v6926 = vsel %vm1176, %v6924, %v6925
  %v6927 = vrot.slane %v6840, 5
  %v6928 = vrot.slane %v6927, 4
  %v6929 = vrot.slane %v5809, 5
  %v6930 = vsel %vm1176, %v6928, %v6929
  %v6931 = vrot.slane %v6841, 5
  %v6932 = vrot.slane %v6931, 4
  %v6933 = vrot.slane %v5810, 5
  %v6934 = vsel %vm1176, %v6932, %v6933
  %v6935 = vrot.slane %v6842, 5
  %v6936 = vrot.slane %v6935, 4
  %v6937 = vrot.slane %v5811, 5
  %v6938 = vsel %vm1176, %v6936, %v6937
  %v6939 = vrot.slane %v6843, 5
  %v6940 = vrot.slane %v6939, 4
  %v6941 = vrot.slane %v5812, 5
  %v6942 = vsel %vm1176, %v6940, %v6941
  %v6943 = vrot.slane %v6844, 5
  %v6944 = vrot.slane %v6943, 4
  %v6945 = vrot.slane %v5813, 5
  %v6946 = vsel %vm1176, %v6944, %v6945
  %v6947 = vrot.slane %v6845, 5
  %v6948 = vrot.slane %v6947, 4
  %v6949 = vrot.slane %v5814, 5
  %v6950 = vsel %vm1176, %v6948, %v6949
  %v6951 = vrot.slane %v6846, 5
  %v6952 = vrot.slane %v6951, 4
  %v6953 = vrot.slane %v5815, 5
  %v6954 = vsel %vm1176, %v6952, %v6953
  %s6955 = scalar_lea.vmem %s4, 512
  %v6956 = vld [vmem:[%s6955] sm:$0xff]
  %v6957 = vld [vmem:[%s6955 + $0x8] sm:$0xff]
  %v6958 = vld [vmem:[%s6955 + $0x10] sm:$0xff]
  %v6959 = vld [vmem:[%s6955 + $0x18] sm:$0xff]
  %v6960 = vld [vmem:[%s6955 + $0x20] sm:$0xff]
  %v6961 = vld [vmem:[%s6955 + $0x28] sm:$0xff]
  %v6962 = vld [vmem:[%s6955 + $0x30] sm:$0xff]
  %v6963 = vld [vmem:[%s6955 + $0x38] sm:$0xff]
  %v6964 = vld [vmem:[%s6955 + $0x40] sm:$0xff]
  %v6965 = vld [vmem:[%s6955 + $0x48] sm:$0xff]
  %v6966 = vld [vmem:[%s6955 + $0x50] sm:$0xff]
  %v6967 = vld [vmem:[%s6955 + $0x58] sm:$0xff]
  %v6968 = vld [vmem:[%s6955 + $0x60] sm:$0xff]
  %v6969 = vld [vmem:[%s6955 + $0x68] sm:$0xff]
  %v6970 = vld [vmem:[%s6955 + $0x70] sm:$0xff]
  %v6971 = vld [vmem:[%s6955 + $0x78] sm:$0xff]
  %v6972 = vld [vmem:[%s6955 + $0x80] sm:$0xff]
  %v6973 = vld [vmem:[%s6955 + $0x88] sm:$0xff]
  %v6974 = vld [vmem:[%s6955 + $0x90] sm:$0xff]
  %v6975 = vld [vmem:[%s6955 + $0x98] sm:$0xff]
  %v6976 = vld [vmem:[%s6955 + $0xa0] sm:$0xff]
  %v6977 = vld [vmem:[%s6955 + $0xa8] sm:$0xff]
  %v6978 = vld [vmem:[%s6955 + $0xb0] sm:$0xff]
  %v6979 = vld [vmem:[%s6955 + $0xb8] sm:$0xff]
  %v6980 = vld [vmem:[%s6955 + $0xc0] sm:$0xff]
  %v6981 = vld [vmem:[%s6955 + $0xc8] sm:$0xff]
  %v6982 = vld [vmem:[%s6955 + $0xd0] sm:$0xff]
  %v6983 = vld [vmem:[%s6955 + $0xd8] sm:$0xff]
  %v6984 = vld [vmem:[%s6955 + $0xe0] sm:$0xff]
  %v6985 = vld [vmem:[%s6955 + $0xe8] sm:$0xff]
  %v6986 = vld [vmem:[%s6955 + $0xf0] sm:$0xff]
  %v6987 = vld [vmem:[%s6955 + $0xf8] sm:$0xff]
  %v6988 = vunpack.c.l.b16 %v6886
  %v6989 = vunpack.c.h.b16 %v6886
  %v6990 = vunpack.c.l.b16 %v6890
  %v6991 = vunpack.c.h.b16 %v6890
  %v6992 = vunpack.c.l.b16 %v6894
  %v6993 = vunpack.c.h.b16 %v6894
  %v6994 = vunpack.c.l.b16 %v6898
  %v6995 = vunpack.c.h.b16 %v6898
  %v6996 = vunpack.c.l.b16 %v6902
  %v6997 = vunpack.c.h.b16 %v6902
  %v6998 = vunpack.c.l.b16 %v6906
  %v6999 = vunpack.c.h.b16 %v6906
  %v7000 = vunpack.c.l.b16 %v6910
  %v7001 = vunpack.c.h.b16 %v6910
  %v7002 = vunpack.c.l.b16 %v6914
  %v7003 = vunpack.c.h.b16 %v6914
  %v7004 = vunpack.c.l.b16 %v6918
  %v7005 = vunpack.c.h.b16 %v6918
  %v7006 = vunpack.c.l.b16 %v6922
  %v7007 = vunpack.c.h.b16 %v6922
  %v7008 = vunpack.c.l.b16 %v6926
  %v7009 = vunpack.c.h.b16 %v6926
  %v7010 = vunpack.c.l.b16 %v6930
  %v7011 = vunpack.c.h.b16 %v6930
  %v7012 = vunpack.c.l.b16 %v6934
  %v7013 = vunpack.c.h.b16 %v6934
  %v7014 = vunpack.c.l.b16 %v6938
  %v7015 = vunpack.c.h.b16 %v6938
  %v7016 = vunpack.c.l.b16 %v6942
  %v7017 = vunpack.c.h.b16 %v6942
  %v7018 = vunpack.c.l.b16 %v6946
  %v7019 = vunpack.c.h.b16 %v6946
  %v7020 = vunpack.c.l.b16 %v6950
  %v7021 = vunpack.c.h.b16 %v6950
  %v7022 = vunpack.c.l.b16 %v6954
  %v7023 = vunpack.c.h.b16 %v6954
  %v7024 = vpack.c.b16 %v6990, %v6988
  %v7025 = vpack.c.b16 %v6991, %v6989
  %v7026 = vpack.c.b16 %v6994, %v6992
  %v7027 = vpack.c.b16 %v6995, %v6993
  %v7028 = vpack.c.b16 %v6998, %v6996
  %v7029 = vpack.c.b16 %v6999, %v6997
  %v7030 = vpack.c.b16 %v7002, %v7000
  %v7031 = vpack.c.b16 %v7003, %v7001
  %v7032 = vpack.c.b16 %v7006, %v7004
  %v7033 = vpack.c.b16 %v7007, %v7005
  %v7034 = vpack.c.b16 %v7010, %v7008
  %v7035 = vpack.c.b16 %v7011, %v7009
  %v7036 = vpack.c.b16 %v7014, %v7012
  %v7037 = vpack.c.b16 %v7015, %v7013
  %v7038 = vpack.c.b16 %v7018, %v7016
  %v7039 = vpack.c.b16 %v7019, %v7017
  %v7040 = vpack.c.b16 %v7022, %v7020
  %v7041 = vpack.c.b16 %v7023, %v7021
  %v7092 = vunpack.c.l.b16 %v6956
  %v7093 = vunpack.c.h.b16 %v6956
  %v7094 = vunpack.c.l.b16 %v6957
  %v7095 = vunpack.c.h.b16 %v6957
  %v7096 = vunpack.c.l.b16 %v6958
  %v7097 = vunpack.c.h.b16 %v6958
  %v7098 = vunpack.c.l.b16 %v6959
  %v7099 = vunpack.c.h.b16 %v6959
  %v7100 = vunpack.c.l.b16 %v6960
  %v7101 = vunpack.c.h.b16 %v6960
  %v7102 = vunpack.c.l.b16 %v6961
  %v7103 = vunpack.c.h.b16 %v6961
  %v7104 = vunpack.c.l.b16 %v6962
  %v7105 = vunpack.c.h.b16 %v6962
  %v7106 = vunpack.c.l.b16 %v6963
  %v7107 = vunpack.c.h.b16 %v6963
  %v7108 = vunpack.c.l.b16 %v6964
  %v7109 = vunpack.c.h.b16 %v6964
  %v7110 = vunpack.c.l.b16 %v6965
  %v7111 = vunpack.c.h.b16 %v6965
  %v7112 = vunpack.c.l.b16 %v6966
  %v7113 = vunpack.c.h.b16 %v6966
  %v7114 = vunpack.c.l.b16 %v6967
  %v7115 = vunpack.c.h.b16 %v6967
  %v7116 = vunpack.c.l.b16 %v6968
  %v7117 = vunpack.c.h.b16 %v6968
  %v7118 = vunpack.c.l.b16 %v6969
  %v7119 = vunpack.c.h.b16 %v6969
  %v7120 = vunpack.c.l.b16 %v6970
  %v7121 = vunpack.c.h.b16 %v6970
  %v7122 = vunpack.c.l.b16 %v6971
  %v7123 = vunpack.c.h.b16 %v6971
  %v7124 = vunpack.c.l.b16 %v6972
  %v7125 = vunpack.c.h.b16 %v6972
  %v7126 = vunpack.c.l.b16 %v6973
  %v7127 = vunpack.c.h.b16 %v6973
  %v7128 = vunpack.c.l.b16 %v6974
  %v7129 = vunpack.c.h.b16 %v6974
  %v7130 = vunpack.c.l.b16 %v6975
  %v7131 = vunpack.c.h.b16 %v6975
  %v7132 = vunpack.c.l.b16 %v6976
  %v7133 = vunpack.c.h.b16 %v6976
  %v7134 = vunpack.c.l.b16 %v6977
  %v7135 = vunpack.c.h.b16 %v6977
  %v7136 = vunpack.c.l.b16 %v6978
  %v7137 = vunpack.c.h.b16 %v6978
  %v7138 = vunpack.c.l.b16 %v6979
  %v7139 = vunpack.c.h.b16 %v6979
  %v7140 = vunpack.c.l.b16 %v6980
  %v7141 = vunpack.c.h.b16 %v6980
  %v7142 = vunpack.c.l.b16 %v6981
  %v7143 = vunpack.c.h.b16 %v6981
  %v7144 = vunpack.c.l.b16 %v6982
  %v7145 = vunpack.c.h.b16 %v6982
  %v7146 = vunpack.c.l.b16 %v6983
  %v7147 = vunpack.c.h.b16 %v6983
  %v7148 = vunpack.c.l.b16 %v6984
  %v7149 = vunpack.c.h.b16 %v6984
  %v7150 = vunpack.c.l.b16 %v6985
  %v7151 = vunpack.c.h.b16 %v6985
  %v7152 = vunpack.c.l.b16 %v6986
  %v7153 = vunpack.c.h.b16 %v6986
  %v7154 = vunpack.c.l.b16 %v6987
  %v7155 = vunpack.c.h.b16 %v6987
  %v7156 = vpack.c.b16 %v7094, %v7092
  %v7157 = vpack.c.b16 %v7095, %v7093
  %v7158 = vpack.c.b16 %v7098, %v7096
  %v7159 = vpack.c.b16 %v7099, %v7097
  %v7160 = vpack.c.b16 %v7102, %v7100
  %v7161 = vpack.c.b16 %v7103, %v7101
  %v7162 = vpack.c.b16 %v7106, %v7104
  %v7163 = vpack.c.b16 %v7107, %v7105
  %v7164 = vpack.c.b16 %v7110, %v7108
  %v7165 = vpack.c.b16 %v7111, %v7109
  %v7166 = vpack.c.b16 %v7114, %v7112
  %v7167 = vpack.c.b16 %v7115, %v7113
  %v7168 = vpack.c.b16 %v7118, %v7116
  %v7169 = vpack.c.b16 %v7119, %v7117
  %v7170 = vpack.c.b16 %v7122, %v7120
  %v7171 = vpack.c.b16 %v7123, %v7121
  %v7172 = vpack.c.b16 %v7126, %v7124
  %v7173 = vpack.c.b16 %v7127, %v7125
  %v7174 = vpack.c.b16 %v7130, %v7128
  %v7175 = vpack.c.b16 %v7131, %v7129
  %v7176 = vpack.c.b16 %v7134, %v7132
  %v7177 = vpack.c.b16 %v7135, %v7133
  %v7178 = vpack.c.b16 %v7138, %v7136
  %v7179 = vpack.c.b16 %v7139, %v7137
  %v7180 = vpack.c.b16 %v7142, %v7140
  %v7181 = vpack.c.b16 %v7143, %v7141
  %v7182 = vpack.c.b16 %v7146, %v7144
  %v7183 = vpack.c.b16 %v7147, %v7145
  %v7184 = vpack.c.b16 %v7150, %v7148
  %v7185 = vpack.c.b16 %v7151, %v7149
  %v7186 = vpack.c.b16 %v7154, %v7152
  %v7187 = vpack.c.b16 %v7155, %v7153
  %7220 = vmatprep.subr.bf16.mxu0 %v7157
  %7221 = vmatpush1.bf16.msra.mxu0 %v7156
  %7222 = vmatprep.subr.bf16.mxu0 %v7159
  %7223 = vmatpush1.bf16.msra.mxu0 %v7158
  %7224 = vmatprep.subr.bf16.mxu0 %v7161
  %7225 = vmatpush1.bf16.msra.mxu0 %v7160
  %7226 = vmatprep.subr.bf16.mxu0 %v7163
  %7227 = vmatpush1.bf16.msra.mxu0 %v7162
  %7228 = vmatprep.subr.bf16.mxu0 %v7165
  %7229 = vmatpush1.bf16.msra.mxu0 %v7164
  %7230 = vmatprep.subr.bf16.mxu0 %v7167
  %7231 = vmatpush1.bf16.msra.mxu0 %v7166
  %7232 = vmatprep.subr.bf16.mxu0 %v7169
  %7233 = vmatpush1.bf16.msra.mxu0 %v7168
  %7234 = vmatprep.subr.bf16.mxu0 %v7171
  %7235 = vmatpush1.bf16.msra.mxu0 %v7170
  %7236 = vmatprep.subr.bf16.mxu0 %v7173
  %7237 = vmatpush1.bf16.msra.mxu0 %v7172
  %7238 = vmatprep.subr.bf16.mxu0 %v7175
  %7239 = vmatpush1.bf16.msra.mxu0 %v7174
  %7240 = vmatprep.subr.bf16.mxu0 %v7177
  %7241 = vmatpush1.bf16.msra.mxu0 %v7176
  %7242 = vmatprep.subr.bf16.mxu0 %v7179
  %7243 = vmatpush1.bf16.msra.mxu0 %v7178
  %7244 = vmatprep.subr.bf16.mxu0 %v7181
  %7245 = vmatpush1.bf16.msra.mxu0 %v7180
  %7246 = vmatprep.subr.bf16.mxu0 %v7183
  %7247 = vmatpush1.bf16.msra.mxu0 %v7182
  %7248 = vmatprep.subr.bf16.mxu0 %v7185
  %7249 = vmatpush1.bf16.msra.mxu0 %v7184
  %7250 = vmatprep.subr.bf16.mxu0 %v7187
  %7251 = vmatpush1.bf16.msra.mxu0 %v7186
  %7252 = vmatprep.mubr.bf16.mxu0 %v7025
  %7253 = vmatmul.mubr.bf16.gmra.mrb[0].mxu0 %v7024
  %v7254 = vpop.f32.mrb[0].mxu0
  %v7255 = vadd.f32 0.0, %v7254
  %v7256 = vpop.f32.mrb[0].mxu0
  %v7257 = vadd.f32 0.0, %v7256
  %v7258 = vpop.f32.mrb[0].mxu0
  %v7259 = vadd.f32 0.0, %v7258
  %v7260 = vpop.f32.mrb[0].mxu0
  %v7261 = vadd.f32 0.0, %v7260
  %7262 = vmatprep.mubr.bf16.mxu0 %v7027
  %7263 = vmatmul.mubr.bf16.gmra.mrb[0].mxu0 %v7026
  %v7264 = vpop.f32.mrb[0].mxu0
  %v7265 = vadd.f32 0.0, %v7264
  %v7266 = vpop.f32.mrb[0].mxu0
  %v7267 = vadd.f32 0.0, %v7266
  %v7268 = vpop.f32.mrb[0].mxu0
  %v7269 = vadd.f32 0.0, %v7268
  %v7270 = vpop.f32.mrb[0].mxu0
  %v7271 = vadd.f32 0.0, %v7270
  %7272 = vmatprep.mubr.bf16.mxu0 %v7029
  %7273 = vmatmul.mubr.bf16.gmra.mrb[0].mxu0 %v7028
  %v7274 = vpop.f32.mrb[0].mxu0
  %v7275 = vadd.f32 0.0, %v7274
  %v7276 = vpop.f32.mrb[0].mxu0
  %v7277 = vadd.f32 0.0, %v7276
  %v7278 = vpop.f32.mrb[0].mxu0
  %v7279 = vadd.f32 0.0, %v7278
  %v7280 = vpop.f32.mrb[0].mxu0
  %v7281 = vadd.f32 0.0, %v7280
  %7282 = vmatprep.mubr.bf16.mxu0 %v7031
  %7283 = vmatmul.mubr.bf16.gmra.mrb[0].mxu0 %v7030
  %v7284 = vpop.f32.mrb[0].mxu0
  %v7285 = vadd.f32 0.0, %v7284
  %v7286 = vpop.f32.mrb[0].mxu0
  %v7287 = vadd.f32 0.0, %v7286
  %v7288 = vpop.f32.mrb[0].mxu0
  %v7289 = vadd.f32 0.0, %v7288
  %v7290 = vpop.f32.mrb[0].mxu0
  %v7291 = vadd.f32 0.0, %v7290
  %7292 = vmatprep.mubr.bf16.mxu0 %v7033
  %7293 = vmatmul.mubr.bf16.gmra.mrb[0].mxu0 %v7032
  %v7294 = vpop.f32.mrb[0].mxu0
  %v7295 = vadd.f32 0.0, %v7294
  %v7296 = vpop.f32.mrb[0].mxu0
  %v7297 = vadd.f32 0.0, %v7296
  %v7298 = vpop.f32.mrb[0].mxu0
  %v7299 = vadd.f32 0.0, %v7298
  %v7300 = vpop.f32.mrb[0].mxu0
  %v7301 = vadd.f32 0.0, %v7300
  %7302 = vmatprep.mubr.bf16.mxu0 %v7035
  %7303 = vmatmul.mubr.bf16.gmra.mrb[0].mxu0 %v7034
  %v7304 = vpop.f32.mrb[0].mxu0
  %v7305 = vadd.f32 0.0, %v7304
  %v7306 = vpop.f32.mrb[0].mxu0
  %v7307 = vadd.f32 0.0, %v7306
  %v7308 = vpop.f32.mrb[0].mxu0
  %v7309 = vadd.f32 0.0, %v7308
  %v7310 = vpop.f32.mrb[0].mxu0
  %v7311 = vadd.f32 0.0, %v7310
  %7312 = vmatprep.mubr.bf16.mxu0 %v7037
  %7313 = vmatmul.mubr.bf16.gmra.mrb[0].mxu0 %v7036
  %v7314 = vpop.f32.mrb[0].mxu0
  %v7315 = vadd.f32 0.0, %v7314
  %v7316 = vpop.f32.mrb[0].mxu0
  %v7317 = vadd.f32 0.0, %v7316
  %v7318 = vpop.f32.mrb[0].mxu0
  %v7319 = vadd.f32 0.0, %v7318
  %v7320 = vpop.f32.mrb[0].mxu0
  %v7321 = vadd.f32 0.0, %v7320
  %7322 = vmatprep.mubr.bf16.mxu0 %v7039
  %7323 = vmatmul.mubr.bf16.gmra.mrb[0].mxu0 %v7038
  %v7324 = vpop.f32.mrb[0].mxu0
  %v7325 = vadd.f32 0.0, %v7324
  %v7326 = vpop.f32.mrb[0].mxu0
  %v7327 = vadd.f32 0.0, %v7326
  %v7328 = vpop.f32.mrb[0].mxu0
  %v7329 = vadd.f32 0.0, %v7328
  %v7330 = vpop.f32.mrb[0].mxu0
  %v7331 = vadd.f32 0.0, %v7330
  %7332 = vmatprep.mubr.bf16.mxu0 %v7041
  %7333 = vmatmul.mubr.bf16.gmra.mrb[0].mxu0 %v7040
  %v7334 = vpop.f32.mrb[0].mxu0
  %v7335 = vadd.f32 0.0, %v7334
  %v7336 = vpop.f32.mrb[0].mxu0
  %v7337 = vadd.f32 0.0, %v7336
  %v7338 = vpop.f32.mrb[0].mxu0
  %v7339 = vadd.f32 0.0, %v7338
  %v7340 = vpop.f32.mrb[0].mxu0
  %v7341 = vadd.f32 0.0, %v7340
  %7342 = vdwg.mxu0
  %v7343 = vadd.f32 %v6741, %v7255
  %v7344 = vadd.f32 %v6743, %v7257
  %v7345 = vadd.f32 %v6745, %v7259
  %v7346 = vadd.f32 %v6747, %v7261
  %v7347 = vadd.f32 %v6751, %v7265
  %v7348 = vadd.f32 %v6753, %v7267
  %v7349 = vadd.f32 %v6755, %v7269
  %v7350 = vadd.f32 %v6757, %v7271
  %v7351 = vadd.f32 %v6761, %v7275
  %v7352 = vadd.f32 %v6763, %v7277
  %v7353 = vadd.f32 %v6765, %v7279
  %v7354 = vadd.f32 %v6767, %v7281
  %v7355 = vadd.f32 %v6771, %v7285
  %v7356 = vadd.f32 %v6773, %v7287
  %v7357 = vadd.f32 %v6775, %v7289
  %v7358 = vadd.f32 %v6777, %v7291
  %v7359 = vadd.f32 %v6781, %v7295
  %v7360 = vadd.f32 %v6783, %v7297
  %v7361 = vadd.f32 %v6785, %v7299
  %v7362 = vadd.f32 %v6787, %v7301
  %v7363 = vadd.f32 %v6791, %v7305
  %v7364 = vadd.f32 %v6793, %v7307
  %v7365 = vadd.f32 %v6795, %v7309
  %v7366 = vadd.f32 %v6797, %v7311
  %v7367 = vadd.f32 %v6801, %v7315
  %v7368 = vadd.f32 %v6803, %v7317
  %v7369 = vadd.f32 %v6805, %v7319
  %v7370 = vadd.f32 %v6807, %v7321
  %v7371 = vadd.f32 %v6811, %v7325
  %v7372 = vadd.f32 %v6813, %v7327
  %v7373 = vadd.f32 %v6815, %v7329
  %v7374 = vadd.f32 %v6817, %v7331
  %v7375 = vadd.f32 %v6821, %v7335
  %v7376 = vadd.f32 %v6823, %v7337
  %v7377 = vadd.f32 %v6825, %v7339
  %v7378 = vadd.f32 %v6827, %v7341
  %v7379 = vld [vmem:[%s5625] sm:$0xff]
  %v7380 = vld [vmem:[%s5625 + $0x10] sm:$0xff]
  %v7381 = vld [vmem:[%s5625 + $0x20] sm:$0xff]
  %v7382 = vld [vmem:[%s5625 + $0x30] sm:$0xff]
  %v7383 = vld [vmem:[%s5625 + $0x40] sm:$0xff]
  %v7384 = vld [vmem:[%s5625 + $0x50] sm:$0xff]
  %v7385 = vld [vmem:[%s5625 + $0x60] sm:$0xff]
  %v7386 = vld [vmem:[%s5625 + $0x70] sm:$0xff]
  %v7387 = vld [vmem:[%s5625 + $0x80] sm:$0xff]
  %v7388 = vld [vmem:[%s5625 + $0xb0] sm:$0xff]
  %v7389 = vld [vmem:[%s5625 + $0xc0] sm:$0xff]
  %v7390 = vld [vmem:[%s5625 + $0xd0] sm:$0xff]
  %v7391 = vld [vmem:[%s5625 + $0xe0] sm:$0xff]
  %v7392 = vld [vmem:[%s5625 + $0xf0] sm:$0xff]
  %v7393 = vld [vmem:[%s5625 + $0x100] sm:$0xff]
  %v7394 = vld [vmem:[%s5625 + $0x110] sm:$0xff]
  %v7395 = vld [vmem:[%s5625 + $0x120] sm:$0xff]
  %v7396 = vld [vmem:[%s5625 + $0x130] sm:$0xff]
  %s7397 = scalar_lea.vmem %s4, 768
  %v7398 = vld [vmem:[%s7397] sm:$0xff]
  %v7399 = vld [vmem:[%s7397 + $0x8] sm:$0xff]
  %v7400 = vld [vmem:[%s7397 + $0x10] sm:$0xff]
  %v7401 = vld [vmem:[%s7397 + $0x18] sm:$0xff]
  %v7402 = vld [vmem:[%s7397 + $0x20] sm:$0xff]
  %v7403 = vld [vmem:[%s7397 + $0x28] sm:$0xff]
  %v7404 = vld [vmem:[%s7397 + $0x30] sm:$0xff]
  %v7405 = vld [vmem:[%s7397 + $0x38] sm:$0xff]
  %v7406 = vld [vmem:[%s7397 + $0x40] sm:$0xff]
  %v7407 = vld [vmem:[%s7397 + $0x48] sm:$0xff]
  %v7408 = vld [vmem:[%s7397 + $0x50] sm:$0xff]
  %v7409 = vld [vmem:[%s7397 + $0x58] sm:$0xff]
  %v7410 = vld [vmem:[%s7397 + $0x60] sm:$0xff]
  %v7411 = vld [vmem:[%s7397 + $0x68] sm:$0xff]
  %v7412 = vld [vmem:[%s7397 + $0x70] sm:$0xff]
  %v7413 = vld [vmem:[%s7397 + $0x78] sm:$0xff]
  %v7414 = vld [vmem:[%s7397 + $0x80] sm:$0xff]
  %v7415 = vld [vmem:[%s7397 + $0x88] sm:$0xff]
  %v7416 = vld [vmem:[%s7397 + $0x90] sm:$0xff]
  %v7417 = vld [vmem:[%s7397 + $0x98] sm:$0xff]
  %v7418 = vld [vmem:[%s7397 + $0xa0] sm:$0xff]
  %v7419 = vld [vmem:[%s7397 + $0xa8] sm:$0xff]
  %v7420 = vld [vmem:[%s7397 + $0xb0] sm:$0xff]
  %v7421 = vld [vmem:[%s7397 + $0xb8] sm:$0xff]
  %v7422 = vld [vmem:[%s7397 + $0xc0] sm:$0xff]
  %v7423 = vld [vmem:[%s7397 + $0xc8] sm:$0xff]
  %v7424 = vld [vmem:[%s7397 + $0xd0] sm:$0xff]
  %v7425 = vld [vmem:[%s7397 + $0xd8] sm:$0xff]
  %v7426 = vld [vmem:[%s7397 + $0xe0] sm:$0xff]
  %v7427 = vld [vmem:[%s7397 + $0xe8] sm:$0xff]
  %v7428 = vld [vmem:[%s7397 + $0xf0] sm:$0xff]
  %v7429 = vld [vmem:[%s7397 + $0xf8] sm:$0xff]
  %v7448 = vunpack.c.l.b16 %v7379
  %v7449 = vunpack.c.h.b16 %v7379
  %v7450 = vunpack.c.l.b16 %v7380
  %v7451 = vunpack.c.h.b16 %v7380
  %v7452 = vunpack.c.l.b16 %v7381
  %v7453 = vunpack.c.h.b16 %v7381
  %v7454 = vunpack.c.l.b16 %v7382
  %v7455 = vunpack.c.h.b16 %v7382
  %v7456 = vunpack.c.l.b16 %v7383
  %v7457 = vunpack.c.h.b16 %v7383
  %v7458 = vunpack.c.l.b16 %v7384
  %v7459 = vunpack.c.h.b16 %v7384
  %v7460 = vunpack.c.l.b16 %v7385
  %v7461 = vunpack.c.h.b16 %v7385
  %v7462 = vunpack.c.l.b16 %v7386
  %v7463 = vunpack.c.h.b16 %v7386
  %v7464 = vunpack.c.l.b16 %v7387
  %v7465 = vunpack.c.h.b16 %v7387
  %v7466 = vunpack.c.l.b16 %v7388
  %v7467 = vunpack.c.h.b16 %v7388
  %v7468 = vunpack.c.l.b16 %v7389
  %v7469 = vunpack.c.h.b16 %v7389
  %v7470 = vunpack.c.l.b16 %v7390
  %v7471 = vunpack.c.h.b16 %v7390
  %v7472 = vunpack.c.l.b16 %v7391
  %v7473 = vunpack.c.h.b16 %v7391
  %v7474 = vunpack.c.l.b16 %v7392
  %v7475 = vunpack.c.h.b16 %v7392
  %v7476 = vunpack.c.l.b16 %v7393
  %v7477 = vunpack.c.h.b16 %v7393
  %v7478 = vunpack.c.l.b16 %v7394
  %v7479 = vunpack.c.h.b16 %v7394
  %v7480 = vunpack.c.l.b16 %v7395
  %v7481 = vunpack.c.h.b16 %v7395
  %v7482 = vunpack.c.l.b16 %v7396
  %v7483 = vunpack.c.h.b16 %v7396
  %v7484 = vpack.c.b16 %v7450, %v7448
  %v7485 = vpack.c.b16 %v7451, %v7449
  %v7486 = vpack.c.b16 %v7454, %v7452
  %v7487 = vpack.c.b16 %v7455, %v7453
  %v7488 = vpack.c.b16 %v7458, %v7456
  %v7489 = vpack.c.b16 %v7459, %v7457
  %v7490 = vpack.c.b16 %v7462, %v7460
  %v7491 = vpack.c.b16 %v7463, %v7461
  %v7492 = vpack.c.b16 %v7466, %v7464
  %v7493 = vpack.c.b16 %v7467, %v7465
  %v7494 = vpack.c.b16 %v7470, %v7468
  %v7495 = vpack.c.b16 %v7471, %v7469
  %v7496 = vpack.c.b16 %v7474, %v7472
  %v7497 = vpack.c.b16 %v7475, %v7473
  %v7498 = vpack.c.b16 %v7478, %v7476
  %v7499 = vpack.c.b16 %v7479, %v7477
  %v7500 = vpack.c.b16 %v7482, %v7480
  %v7501 = vpack.c.b16 %v7483, %v7481
  %v7552 = vunpack.c.l.b16 %v7398
  %v7553 = vunpack.c.h.b16 %v7398
  %v7554 = vunpack.c.l.b16 %v7399
  %v7555 = vunpack.c.h.b16 %v7399
  %v7556 = vunpack.c.l.b16 %v7400
  %v7557 = vunpack.c.h.b16 %v7400
  %v7558 = vunpack.c.l.b16 %v7401
  %v7559 = vunpack.c.h.b16 %v7401
  %v7560 = vunpack.c.l.b16 %v7402
  %v7561 = vunpack.c.h.b16 %v7402
  %v7562 = vunpack.c.l.b16 %v7403
  %v7563 = vunpack.c.h.b16 %v7403
  %v7564 = vunpack.c.l.b16 %v7404
  %v7565 = vunpack.c.h.b16 %v7404
  %v7566 = vunpack.c.l.b16 %v7405
  %v7567 = vunpack.c.h.b16 %v7405
  %v7568 = vunpack.c.l.b16 %v7406
  %v7569 = vunpack.c.h.b16 %v7406
  %v7570 = vunpack.c.l.b16 %v7407
  %v7571 = vunpack.c.h.b16 %v7407
  %v7572 = vunpack.c.l.b16 %v7408
  %v7573 = vunpack.c.h.b16 %v7408
  %v7574 = vunpack.c.l.b16 %v7409
  %v7575 = vunpack.c.h.b16 %v7409
  %v7576 = vunpack.c.l.b16 %v7410
  %v7577 = vunpack.c.h.b16 %v7410
  %v7578 = vunpack.c.l.b16 %v7411
  %v7579 = vunpack.c.h.b16 %v7411
  %v7580 = vunpack.c.l.b16 %v7412
  %v7581 = vunpack.c.h.b16 %v7412
  %v7582 = vunpack.c.l.b16 %v7413
  %v7583 = vunpack.c.h.b16 %v7413
  %v7584 = vunpack.c.l.b16 %v7414
  %v7585 = vunpack.c.h.b16 %v7414
  %v7586 = vunpack.c.l.b16 %v7415
  %v7587 = vunpack.c.h.b16 %v7415
  %v7588 = vunpack.c.l.b16 %v7416
  %v7589 = vunpack.c.h.b16 %v7416
  %v7590 = vunpack.c.l.b16 %v7417
  %v7591 = vunpack.c.h.b16 %v7417
  %v7592 = vunpack.c.l.b16 %v7418
  %v7593 = vunpack.c.h.b16 %v7418
  %v7594 = vunpack.c.l.b16 %v7419
  %v7595 = vunpack.c.h.b16 %v7419
  %v7596 = vunpack.c.l.b16 %v7420
  %v7597 = vunpack.c.h.b16 %v7420
  %v7598 = vunpack.c.l.b16 %v7421
  %v7599 = vunpack.c.h.b16 %v7421
  %v7600 = vunpack.c.l.b16 %v7422
  %v7601 = vunpack.c.h.b16 %v7422
  %v7602 = vunpack.c.l.b16 %v7423
  %v7603 = vunpack.c.h.b16 %v7423
  %v7604 = vunpack.c.l.b16 %v7424
  %v7605 = vunpack.c.h.b16 %v7424
  %v7606 = vunpack.c.l.b16 %v7425
  %v7607 = vunpack.c.h.b16 %v7425
  %v7608 = vunpack.c.l.b16 %v7426
  %v7609 = vunpack.c.h.b16 %v7426
  %v7610 = vunpack.c.l.b16 %v7427
  %v7611 = vunpack.c.h.b16 %v7427
  %v7612 = vunpack.c.l.b16 %v7428
  %v7613 = vunpack.c.h.b16 %v7428
  %v7614 = vunpack.c.l.b16 %v7429
  %v7615 = vunpack.c.h.b16 %v7429
  %v7616 = vpack.c.b16 %v7554, %v7552
  %v7617 = vpack.c.b16 %v7555, %v7553
  %v7618 = vpack.c.b16 %v7558, %v7556
  %v7619 = vpack.c.b16 %v7559, %v7557
  %v7620 = vpack.c.b16 %v7562, %v7560
  %v7621 = vpack.c.b16 %v7563, %v7561
  %v7622 = vpack.c.b16 %v7566, %v7564
  %v7623 = vpack.c.b16 %v7567, %v7565
  %v7624 = vpack.c.b16 %v7570, %v7568
  %v7625 = vpack.c.b16 %v7571, %v7569
  %v7626 = vpack.c.b16 %v7574, %v7572
  %v7627 = vpack.c.b16 %v7575, %v7573
  %v7628 = vpack.c.b16 %v7578, %v7576
  %v7629 = vpack.c.b16 %v7579, %v7577
  %v7630 = vpack.c.b16 %v7582, %v7580
  %v7631 = vpack.c.b16 %v7583, %v7581
  %v7632 = vpack.c.b16 %v7586, %v7584
  %v7633 = vpack.c.b16 %v7587, %v7585
  %v7634 = vpack.c.b16 %v7590, %v7588
  %v7635 = vpack.c.b16 %v7591, %v7589
  %v7636 = vpack.c.b16 %v7594, %v7592
  %v7637 = vpack.c.b16 %v7595, %v7593
  %v7638 = vpack.c.b16 %v7598, %v7596
  %v7639 = vpack.c.b16 %v7599, %v7597
  %v7640 = vpack.c.b16 %v7602, %v7600
  %v7641 = vpack.c.b16 %v7603, %v7601
  %v7642 = vpack.c.b16 %v7606, %v7604
  %v7643 = vpack.c.b16 %v7607, %v7605
  %v7644 = vpack.c.b16 %v7610, %v7608
  %v7645 = vpack.c.b16 %v7611, %v7609
  %v7646 = vpack.c.b16 %v7614, %v7612
  %v7647 = vpack.c.b16 %v7615, %v7613
  %7680 = vmatprep.subr.bf16.mxu0 %v7617
  %7681 = vmatpush1.bf16.msra.mxu0 %v7616
  %7682 = vmatprep.subr.bf16.mxu0 %v7619
  %7683 = vmatpush1.bf16.msra.mxu0 %v7618
  %7684 = vmatprep.subr.bf16.mxu0 %v7621
  %7685 = vmatpush1.bf16.msra.mxu0 %v7620
  %7686 = vmatprep.subr.bf16.mxu0 %v7623
  %7687 = vmatpush1.bf16.msra.mxu0 %v7622
  %7688 = vmatprep.subr.bf16.mxu0 %v7625
  %7689 = vmatpush1.bf16.msra.mxu0 %v7624
  %7690 = vmatprep.subr.bf16.mxu0 %v7627
  %7691 = vmatpush1.bf16.msra.mxu0 %v7626
  %7692 = vmatprep.subr.bf16.mxu0 %v7629
  %7693 = vmatpush1.bf16.msra.mxu0 %v7628
  %7694 = vmatprep.subr.bf16.mxu0 %v7631
  %7695 = vmatpush1.bf16.msra.mxu0 %v7630
  %7696 = vmatprep.subr.bf16.mxu0 %v7633
  %7697 = vmatpush1.bf16.msra.mxu0 %v7632
  %7698 = vmatprep.subr.bf16.mxu0 %v7635
  %7699 = vmatpush1.bf16.msra.mxu0 %v7634
  %7700 = vmatprep.subr.bf16.mxu0 %v7637
  %7701 = vmatpush1.bf16.msra.mxu0 %v7636
  %7702 = vmatprep.subr.bf16.mxu0 %v7639
  %7703 = vmatpush1.bf16.msra.mxu0 %v7638
  %7704 = vmatprep.subr.bf16.mxu0 %v7641
  %7705 = vmatpush1.bf16.msra.mxu0 %v7640
  %7706 = vmatprep.subr.bf16.mxu0 %v7643
  %7707 = vmatpush1.bf16.msra.mxu0 %v7642
  %7708 = vmatprep.subr.bf16.mxu0 %v7645
  %7709 = vmatpush1.bf16.msra.mxu0 %v7644
  %7710 = vmatprep.subr.bf16.mxu0 %v7647
  %7711 = vmatpush1.bf16.msra.mxu0 %v7646
  %7712 = vmatprep.mubr.bf16.mxu0 %v7485
  %7713 = vmatmul.mubr.bf16.gmra.mrb[0].mxu0 %v7484
  %v7714 = vpop.f32.mrb[0].mxu0
  %v7715 = vadd.f32 0.0, %v7714
  %v7716 = vpop.f32.mrb[0].mxu0
  %v7717 = vadd.f32 0.0, %v7716
  %v7718 = vpop.f32.mrb[0].mxu0
  %v7719 = vadd.f32 0.0, %v7718
  %v7720 = vpop.f32.mrb[0].mxu0
  %v7721 = vadd.f32 0.0, %v7720
  %7722 = vmatprep.mubr.bf16.mxu0 %v7487
  %7723 = vmatmul.mubr.bf16.gmra.mrb[0].mxu0 %v7486
  %v7724 = vpop.f32.mrb[0].mxu0
  %v7725 = vadd.f32 0.0, %v7724
  %v7726 = vpop.f32.mrb[0].mxu0
  %v7727 = vadd.f32 0.0, %v7726
  %v7728 = vpop.f32.mrb[0].mxu0
  %v7729 = vadd.f32 0.0, %v7728
  %v7730 = vpop.f32.mrb[0].mxu0
  %v7731 = vadd.f32 0.0, %v7730
  %7732 = vmatprep.mubr.bf16.mxu0 %v7489
  %7733 = vmatmul.mubr.bf16.gmra.mrb[0].mxu0 %v7488
  %v7734 = vpop.f32.mrb[0].mxu0
  %v7735 = vadd.f32 0.0, %v7734
  %v7736 = vpop.f32.mrb[0].mxu0
  %v7737 = vadd.f32 0.0, %v7736
  %v7738 = vpop.f32.mrb[0].mxu0
  %v7739 = vadd.f32 0.0, %v7738
  %v7740 = vpop.f32.mrb[0].mxu0
  %v7741 = vadd.f32 0.0, %v7740
  %7742 = vmatprep.mubr.bf16.mxu0 %v7491
  %7743 = vmatmul.mubr.bf16.gmra.mrb[0].mxu0 %v7490
  %v7744 = vpop.f32.mrb[0].mxu0
  %v7745 = vadd.f32 0.0, %v7744
  %v7746 = vpop.f32.mrb[0].mxu0
  %v7747 = vadd.f32 0.0, %v7746
  %v7748 = vpop.f32.mrb[0].mxu0
  %v7749 = vadd.f32 0.0, %v7748
  %v7750 = vpop.f32.mrb[0].mxu0
  %v7751 = vadd.f32 0.0, %v7750
  %7752 = vmatprep.mubr.bf16.mxu0 %v7493
  %7753 = vmatmul.mubr.bf16.gmra.mrb[0].mxu0 %v7492
  %v7754 = vpop.f32.mrb[0].mxu0
  %v7755 = vadd.f32 0.0, %v7754
  %v7756 = vpop.f32.mrb[0].mxu0
  %v7757 = vadd.f32 0.0, %v7756
  %v7758 = vpop.f32.mrb[0].mxu0
  %v7759 = vadd.f32 0.0, %v7758
  %v7760 = vpop.f32.mrb[0].mxu0
  %v7761 = vadd.f32 0.0, %v7760
  %7762 = vmatprep.mubr.bf16.mxu0 %v7495
  %7763 = vmatmul.mubr.bf16.gmra.mrb[0].mxu0 %v7494
  %v7764 = vpop.f32.mrb[0].mxu0
  %v7765 = vadd.f32 0.0, %v7764
  %v7766 = vpop.f32.mrb[0].mxu0
  %v7767 = vadd.f32 0.0, %v7766
  %v7768 = vpop.f32.mrb[0].mxu0
  %v7769 = vadd.f32 0.0, %v7768
  %v7770 = vpop.f32.mrb[0].mxu0
  %v7771 = vadd.f32 0.0, %v7770
  %7772 = vmatprep.mubr.bf16.mxu0 %v7497
  %7773 = vmatmul.mubr.bf16.gmra.mrb[0].mxu0 %v7496
  %v7774 = vpop.f32.mrb[0].mxu0
  %v7775 = vadd.f32 0.0, %v7774
  %v7776 = vpop.f32.mrb[0].mxu0
  %v7777 = vadd.f32 0.0, %v7776
  %v7778 = vpop.f32.mrb[0].mxu0
  %v7779 = vadd.f32 0.0, %v7778
  %v7780 = vpop.f32.mrb[0].mxu0
  %v7781 = vadd.f32 0.0, %v7780
  %7782 = vmatprep.mubr.bf16.mxu0 %v7499
  %7783 = vmatmul.mubr.bf16.gmra.mrb[0].mxu0 %v7498
  %v7784 = vpop.f32.mrb[0].mxu0
  %v7785 = vadd.f32 0.0, %v7784
  %v7786 = vpop.f32.mrb[0].mxu0
  %v7787 = vadd.f32 0.0, %v7786
  %v7788 = vpop.f32.mrb[0].mxu0
  %v7789 = vadd.f32 0.0, %v7788
  %v7790 = vpop.f32.mrb[0].mxu0
  %v7791 = vadd.f32 0.0, %v7790
  %7792 = vmatprep.mubr.bf16.mxu0 %v7501
  %7793 = vmatmul.mubr.bf16.gmra.mrb[0].mxu0 %v7500
  %v7794 = vpop.f32.mrb[0].mxu0
  %v7795 = vadd.f32 0.0, %v7794
  %v7796 = vpop.f32.mrb[0].mxu0
  %v7797 = vadd.f32 0.0, %v7796
  %v7798 = vpop.f32.mrb[0].mxu0
  %v7799 = vadd.f32 0.0, %v7798
  %v7800 = vpop.f32.mrb[0].mxu0
  %v7801 = vadd.f32 0.0, %v7800
  %7802 = vdwg.mxu0
  %v7803 = vadd.f32 %v7343, %v7715
  %v7804 = vadd.f32 %v7344, %v7717
  %v7805 = vadd.f32 %v7345, %v7719
  %v7806 = vadd.f32 %v7346, %v7721
  %v7807 = vadd.f32 %v7347, %v7725
  %v7808 = vadd.f32 %v7348, %v7727
  %v7809 = vadd.f32 %v7349, %v7729
  %v7810 = vadd.f32 %v7350, %v7731
  %v7811 = vadd.f32 %v7351, %v7735
  %v7812 = vadd.f32 %v7352, %v7737
  %v7813 = vadd.f32 %v7353, %v7739
  %v7814 = vadd.f32 %v7354, %v7741
  %v7815 = vadd.f32 %v7355, %v7745
  %v7816 = vadd.f32 %v7356, %v7747
  %v7817 = vadd.f32 %v7357, %v7749
  %v7818 = vadd.f32 %v7358, %v7751
  %v7819 = vadd.f32 %v7359, %v7755
  %v7820 = vadd.f32 %v7360, %v7757
  %v7821 = vadd.f32 %v7361, %v7759
  %v7822 = vadd.f32 %v7362, %v7761
  %v7823 = vadd.f32 %v7363, %v7765
  %v7824 = vadd.f32 %v7364, %v7767
  %v7825 = vadd.f32 %v7365, %v7769
  %v7826 = vadd.f32 %v7366, %v7771
  %v7827 = vadd.f32 %v7367, %v7775
  %v7828 = vadd.f32 %v7368, %v7777
  %v7829 = vadd.f32 %v7369, %v7779
  %v7830 = vadd.f32 %v7370, %v7781
  %v7831 = vadd.f32 %v7371, %v7785
  %v7832 = vadd.f32 %v7372, %v7787
  %v7833 = vadd.f32 %v7373, %v7789
  %v7834 = vadd.f32 %v7374, %v7791
  %v7835 = vadd.f32 %v7375, %v7795
  %v7836 = vadd.f32 %v7376, %v7797
  %v7837 = vadd.f32 %v7377, %v7799
  %v7838 = vadd.f32 %v7378, %v7801
  %v7839 = vld [vmem:[%s5625] sm:$0xff]
  %v7840 = vld [vmem:[%s5625 + $0x8] sm:$0x11]
  %v7841 = vld [vmem:[%s5625 + $0x10] sm:$0xff]
  %v7842 = vld [vmem:[%s5625 + $0x18] sm:$0x11]
  %v7843 = vld [vmem:[%s5625 + $0x20] sm:$0xff]
  %v7844 = vld [vmem:[%s5625 + $0x28] sm:$0x11]
  %v7845 = vld [vmem:[%s5625 + $0x30] sm:$0xff]
  %v7846 = vld [vmem:[%s5625 + $0x38] sm:$0x11]
  %v7847 = vld [vmem:[%s5625 + $0x40] sm:$0xff]
  %v7848 = vld [vmem:[%s5625 + $0x48] sm:$0x11]
  %v7849 = vld [vmem:[%s5625 + $0x50] sm:$0xff]
  %v7850 = vld [vmem:[%s5625 + $0x58] sm:$0x11]
  %v7851 = vld [vmem:[%s5625 + $0x60] sm:$0xff]
  %v7852 = vld [vmem:[%s5625 + $0x68] sm:$0x11]
  %v7853 = vld [vmem:[%s5625 + $0x70] sm:$0xff]
  %v7854 = vld [vmem:[%s5625 + $0x78] sm:$0x11]
  %v7855 = vld [vmem:[%s5625 + $0x80] sm:$0xff]
  %v7856 = vld [vmem:[%s5625 + $0x88] sm:$0x11]
  %v7857 = vld [vmem:[%s5625 + $0xb0] sm:$0xff]
  %v7858 = vld [vmem:[%s5625 + $0xb8] sm:$0x11]
  %v7859 = vld [vmem:[%s5625 + $0xc0] sm:$0xff]
  %v7860 = vld [vmem:[%s5625 + $0xc8] sm:$0x11]
  %v7861 = vld [vmem:[%s5625 + $0xd0] sm:$0xff]
  %v7862 = vld [vmem:[%s5625 + $0xd8] sm:$0x11]
  %v7863 = vld [vmem:[%s5625 + $0xe0] sm:$0xff]
  %v7864 = vld [vmem:[%s5625 + $0xe8] sm:$0x11]
  %v7865 = vld [vmem:[%s5625 + $0xf0] sm:$0xff]
  %v7866 = vld [vmem:[%s5625 + $0xf8] sm:$0x11]
  %v7867 = vld [vmem:[%s5625 + $0x100] sm:$0xff]
  %v7868 = vld [vmem:[%s5625 + $0x108] sm:$0x11]
  %v7869 = vld [vmem:[%s5625 + $0x110] sm:$0xff]
  %v7870 = vld [vmem:[%s5625 + $0x118] sm:$0x11]
  %v7871 = vld [vmem:[%s5625 + $0x120] sm:$0xff]
  %v7872 = vld [vmem:[%s5625 + $0x128] sm:$0x11]
  %v7873 = vld [vmem:[%s5625 + $0x130] sm:$0xff]
  %v7874 = vld [vmem:[%s5625 + $0x138] sm:$0x11]
  %v7876 = vshrl.u32 %v7839, 16
  %v7878 = vrot.slane %v7876, 4
  %v7879 = vshll.u32 %v7839, 16
  %v7881 = vrot.slane %v7879, 5
  %v7882 = vor.u32 %v7878, %v7881
  %v7883 = vrot.slane %v7882, 4
  %v7885 = vshll.u32 %v7840, 16
  %v7887 = vrot.slane %v7885, 5
  %v7888 = vsel %vm106, %v7883, %v7887
  %v7890 = vshrl.u32 %v7841, 16
  %v7892 = vrot.slane %v7890, 4
  %v7893 = vshll.u32 %v7841, 16
  %v7895 = vrot.slane %v7893, 5
  %v7896 = vor.u32 %v7892, %v7895
  %v7897 = vrot.slane %v7896, 4
  %v7899 = vshll.u32 %v7842, 16
  %v7901 = vrot.slane %v7899, 5
  %v7902 = vsel %vm106, %v7897, %v7901
  %v7904 = vshrl.u32 %v7843, 16
  %v7906 = vrot.slane %v7904, 4
  %v7907 = vshll.u32 %v7843, 16
  %v7909 = vrot.slane %v7907, 5
  %v7910 = vor.u32 %v7906, %v7909
  %v7911 = vrot.slane %v7910, 4
  %v7913 = vshll.u32 %v7844, 16
  %v7915 = vrot.slane %v7913, 5
  %v7916 = vsel %vm106, %v7911, %v7915
  %v7918 = vshrl.u32 %v7845, 16
  %v7920 = vrot.slane %v7918, 4
  %v7921 = vshll.u32 %v7845, 16
  %v7923 = vrot.slane %v7921, 5
  %v7924 = vor.u32 %v7920, %v7923
  %v7925 = vrot.slane %v7924, 4
  %v7927 = vshll.u32 %v7846, 16
  %v7929 = vrot.slane %v7927, 5
  %v7930 = vsel %vm106, %v7925, %v7929
  %v7932 = vshrl.u32 %v7847, 16
  %v7934 = vrot.slane %v7932, 4
  %v7935 = vshll.u32 %v7847, 16
  %v7937 = vrot.slane %v7935, 5
  %v7938 = vor.u32 %v7934, %v7937
  %v7939 = vrot.slane %v7938, 4
  %v7941 = vshll.u32 %v7848, 16
  %v7943 = vrot.slane %v7941, 5
  %v7944 = vsel %vm106, %v7939, %v7943
  %v7946 = vshrl.u32 %v7849, 16
  %v7948 = vrot.slane %v7946, 4
  %v7949 = vshll.u32 %v7849, 16
  %v7951 = vrot.slane %v7949, 5
  %v7952 = vor.u32 %v7948, %v7951
  %v7953 = vrot.slane %v7952, 4
  %v7955 = vshll.u32 %v7850, 16
  %v7957 = vrot.slane %v7955, 5
  %v7958 = vsel %vm106, %v7953, %v7957
  %v7960 = vshrl.u32 %v7851, 16
  %v7962 = vrot.slane %v7960, 4
  %v7963 = vshll.u32 %v7851, 16
  %v7965 = vrot.slane %v7963, 5
  %v7966 = vor.u32 %v7962, %v7965
  %v7967 = vrot.slane %v7966, 4
  %v7969 = vshll.u32 %v7852, 16
  %v7971 = vrot.slane %v7969, 5
  %v7972 = vsel %vm106, %v7967, %v7971
  %v7974 = vshrl.u32 %v7853, 16
  %v7976 = vrot.slane %v7974, 4
  %v7977 = vshll.u32 %v7853, 16
  %v7979 = vrot.slane %v7977, 5
  %v7980 = vor.u32 %v7976, %v7979
  %v7981 = vrot.slane %v7980, 4
  %v7983 = vshll.u32 %v7854, 16
  %v7985 = vrot.slane %v7983, 5
  %v7986 = vsel %vm106, %v7981, %v7985
  %v7988 = vshrl.u32 %v7855, 16
  %v7990 = vrot.slane %v7988, 4
  %v7991 = vshll.u32 %v7855, 16
  %v7993 = vrot.slane %v7991, 5
  %v7994 = vor.u32 %v7990, %v7993
  %v7995 = vrot.slane %v7994, 4
  %v7997 = vshll.u32 %v7856, 16
  %v7999 = vrot.slane %v7997, 5
  %v8000 = vsel %vm106, %v7995, %v7999
  %v8002 = vshrl.u32 %v7857, 16
  %v8004 = vrot.slane %v8002, 4
  %v8005 = vshll.u32 %v7857, 16
  %v8007 = vrot.slane %v8005, 5
  %v8008 = vor.u32 %v8004, %v8007
  %v8009 = vrot.slane %v8008, 4
  %v8011 = vshll.u32 %v7858, 16
  %v8013 = vrot.slane %v8011, 5
  %v8014 = vsel %vm106, %v8009, %v8013
  %v8016 = vshrl.u32 %v7859, 16
  %v8018 = vrot.slane %v8016, 4
  %v8019 = vshll.u32 %v7859, 16
  %v8021 = vrot.slane %v8019, 5
  %v8022 = vor.u32 %v8018, %v8021
  %v8023 = vrot.slane %v8022, 4
  %v8025 = vshll.u32 %v7860, 16
  %v8027 = vrot.slane %v8025, 5
  %v8028 = vsel %vm106, %v8023, %v8027
  %v8030 = vshrl.u32 %v7861, 16
  %v8032 = vrot.slane %v8030, 4
  %v8033 = vshll.u32 %v7861, 16
  %v8035 = vrot.slane %v8033, 5
  %v8036 = vor.u32 %v8032, %v8035
  %v8037 = vrot.slane %v8036, 4
  %v8039 = vshll.u32 %v7862, 16
  %v8041 = vrot.slane %v8039, 5
  %v8042 = vsel %vm106, %v8037, %v8041
  %v8044 = vshrl.u32 %v7863, 16
  %v8046 = vrot.slane %v8044, 4
  %v8047 = vshll.u32 %v7863, 16
  %v8049 = vrot.slane %v8047, 5
  %v8050 = vor.u32 %v8046, %v8049
  %v8051 = vrot.slane %v8050, 4
  %v8053 = vshll.u32 %v7864, 16
  %v8055 = vrot.slane %v8053, 5
  %v8056 = vsel %vm106, %v8051, %v8055
  %v8058 = vshrl.u32 %v7865, 16
  %v8060 = vrot.slane %v8058, 4
  %v8061 = vshll.u32 %v7865, 16
  %v8063 = vrot.slane %v8061, 5
  %v8064 = vor.u32 %v8060, %v8063
  %v8065 = vrot.slane %v8064, 4
  %v8067 = vshll.u32 %v7866, 16
  %v8069 = vrot.slane %v8067, 5
  %v8070 = vsel %vm106, %v8065, %v8069
  %v8072 = vshrl.u32 %v7867, 16
  %v8074 = vrot.slane %v8072, 4
  %v8075 = vshll.u32 %v7867, 16
  %v8077 = vrot.slane %v8075, 5
  %v8078 = vor.u32 %v8074, %v8077
  %v8079 = vrot.slane %v8078, 4
  %v8081 = vshll.u32 %v7868, 16
  %v8083 = vrot.slane %v8081, 5
  %v8084 = vsel %vm106, %v8079, %v8083
  %v8086 = vshrl.u32 %v7869, 16
  %v8088 = vrot.slane %v8086, 4
  %v8089 = vshll.u32 %v7869, 16
  %v8091 = vrot.slane %v8089, 5
  %v8092 = vor.u32 %v8088, %v8091
  %v8093 = vrot.slane %v8092, 4
  %v8095 = vshll.u32 %v7870, 16
  %v8097 = vrot.slane %v8095, 5
  %v8098 = vsel %vm106, %v8093, %v8097
  %v8100 = vshrl.u32 %v7871, 16
  %v8102 = vrot.slane %v8100, 4
  %v8103 = vshll.u32 %v7871, 16
  %v8105 = vrot.slane %v8103, 5
  %v8106 = vor.u32 %v8102, %v8105
  %v8107 = vrot.slane %v8106, 4
  %v8109 = vshll.u32 %v7872, 16
  %v8111 = vrot.slane %v8109, 5
  %v8112 = vsel %vm106, %v8107, %v8111
  %v8114 = vshrl.u32 %v7873, 16
  %v8116 = vrot.slane %v8114, 4
  %v8117 = vshll.u32 %v7873, 16
  %v8119 = vrot.slane %v8117, 5
  %v8120 = vor.u32 %v8116, %v8119
  %v8121 = vrot.slane %v8120, 4
  %v8123 = vshll.u32 %v7874, 16
  %v8125 = vrot.slane %v8123, 5
  %v8126 = vsel %vm106, %v8121, %v8125
  %s8127 = scalar_lea.vmem %s4, 1024
  %v8128 = vld [vmem:[%s8127] sm:$0xff]
  %v8129 = vld [vmem:[%s8127 + $0x8] sm:$0xff]
  %v8130 = vld [vmem:[%s8127 + $0x10] sm:$0xff]
  %v8131 = vld [vmem:[%s8127 + $0x18] sm:$0xff]
  %v8132 = vld [vmem:[%s8127 + $0x20] sm:$0xff]
  %v8133 = vld [vmem:[%s8127 + $0x28] sm:$0xff]
  %v8134 = vld [vmem:[%s8127 + $0x30] sm:$0xff]
  %v8135 = vld [vmem:[%s8127 + $0x38] sm:$0xff]
  %v8136 = vld [vmem:[%s8127 + $0x40] sm:$0xff]
  %v8137 = vld [vmem:[%s8127 + $0x48] sm:$0xff]
  %v8138 = vld [vmem:[%s8127 + $0x50] sm:$0xff]
  %v8139 = vld [vmem:[%s8127 + $0x58] sm:$0xff]
  %v8140 = vld [vmem:[%s8127 + $0x60] sm:$0xff]
  %v8141 = vld [vmem:[%s8127 + $0x68] sm:$0xff]
  %v8142 = vld [vmem:[%s8127 + $0x70] sm:$0xff]
  %v8143 = vld [vmem:[%s8127 + $0x78] sm:$0xff]
  %v8144 = vld [vmem:[%s8127 + $0x80] sm:$0xff]
  %v8145 = vld [vmem:[%s8127 + $0x88] sm:$0xff]
  %v8146 = vld [vmem:[%s8127 + $0x90] sm:$0xff]
  %v8147 = vld [vmem:[%s8127 + $0x98] sm:$0xff]
  %v8148 = vld [vmem:[%s8127 + $0xa0] sm:$0xff]
  %v8149 = vld [vmem:[%s8127 + $0xa8] sm:$0xff]
  %v8150 = vld [vmem:[%s8127 + $0xb0] sm:$0xff]
  %v8151 = vld [vmem:[%s8127 + $0xb8] sm:$0xff]
  %v8152 = vld [vmem:[%s8127 + $0xc0] sm:$0xff]
  %v8153 = vld [vmem:[%s8127 + $0xc8] sm:$0xff]
  %v8154 = vld [vmem:[%s8127 + $0xd0] sm:$0xff]
  %v8155 = vld [vmem:[%s8127 + $0xd8] sm:$0xff]
  %v8156 = vld [vmem:[%s8127 + $0xe0] sm:$0xff]
  %v8157 = vld [vmem:[%s8127 + $0xe8] sm:$0xff]
  %v8158 = vld [vmem:[%s8127 + $0xf0] sm:$0xff]
  %v8159 = vld [vmem:[%s8127 + $0xf8] sm:$0xff]
  %v8160 = vunpack.c.l.b16 %v7888
  %v8161 = vunpack.c.h.b16 %v7888
  %v8162 = vunpack.c.l.b16 %v7902
  %v8163 = vunpack.c.h.b16 %v7902
  %v8164 = vunpack.c.l.b16 %v7916
  %v8165 = vunpack.c.h.b16 %v7916
  %v8166 = vunpack.c.l.b16 %v7930
  %v8167 = vunpack.c.h.b16 %v7930
  %v8168 = vunpack.c.l.b16 %v7944
  %v8169 = vunpack.c.h.b16 %v7944
  %v8170 = vunpack.c.l.b16 %v7958
  %v8171 = vunpack.c.h.b16 %v7958
  %v8172 = vunpack.c.l.b16 %v7972
  %v8173 = vunpack.c.h.b16 %v7972
  %v8174 = vunpack.c.l.b16 %v7986
  %v8175 = vunpack.c.h.b16 %v7986
  %v8176 = vunpack.c.l.b16 %v8000
  %v8177 = vunpack.c.h.b16 %v8000
  %v8178 = vunpack.c.l.b16 %v8014
  %v8179 = vunpack.c.h.b16 %v8014
  %v8180 = vunpack.c.l.b16 %v8028
  %v8181 = vunpack.c.h.b16 %v8028
  %v8182 = vunpack.c.l.b16 %v8042
  %v8183 = vunpack.c.h.b16 %v8042
  %v8184 = vunpack.c.l.b16 %v8056
  %v8185 = vunpack.c.h.b16 %v8056
  %v8186 = vunpack.c.l.b16 %v8070
  %v8187 = vunpack.c.h.b16 %v8070
  %v8188 = vunpack.c.l.b16 %v8084
  %v8189 = vunpack.c.h.b16 %v8084
  %v8190 = vunpack.c.l.b16 %v8098
  %v8191 = vunpack.c.h.b16 %v8098
  %v8192 = vunpack.c.l.b16 %v8112
  %v8193 = vunpack.c.h.b16 %v8112
  %v8194 = vunpack.c.l.b16 %v8126
  %v8195 = vunpack.c.h.b16 %v8126
  %v8196 = vpack.c.b16 %v8162, %v8160
  %v8197 = vpack.c.b16 %v8163, %v8161
  %v8198 = vpack.c.b16 %v8166, %v8164
  %v8199 = vpack.c.b16 %v8167, %v8165
  %v8200 = vpack.c.b16 %v8170, %v8168
  %v8201 = vpack.c.b16 %v8171, %v8169
  %v8202 = vpack.c.b16 %v8174, %v8172
  %v8203 = vpack.c.b16 %v8175, %v8173
  %v8204 = vpack.c.b16 %v8178, %v8176
  %v8205 = vpack.c.b16 %v8179, %v8177
  %v8206 = vpack.c.b16 %v8182, %v8180
  %v8207 = vpack.c.b16 %v8183, %v8181
  %v8208 = vpack.c.b16 %v8186, %v8184
  %v8209 = vpack.c.b16 %v8187, %v8185
  %v8210 = vpack.c.b16 %v8190, %v8188
  %v8211 = vpack.c.b16 %v8191, %v8189
  %v8212 = vpack.c.b16 %v8194, %v8192
  %v8213 = vpack.c.b16 %v8195, %v8193
  %v8264 = vunpack.c.l.b16 %v8128
  %v8265 = vunpack.c.h.b16 %v8128
  %v8266 = vunpack.c.l.b16 %v8129
  %v8267 = vunpack.c.h.b16 %v8129
  %v8268 = vunpack.c.l.b16 %v8130
  %v8269 = vunpack.c.h.b16 %v8130
  %v8270 = vunpack.c.l.b16 %v8131
  %v8271 = vunpack.c.h.b16 %v8131
  %v8272 = vunpack.c.l.b16 %v8132
  %v8273 = vunpack.c.h.b16 %v8132
  %v8274 = vunpack.c.l.b16 %v8133
  %v8275 = vunpack.c.h.b16 %v8133
  %v8276 = vunpack.c.l.b16 %v8134
  %v8277 = vunpack.c.h.b16 %v8134
  %v8278 = vunpack.c.l.b16 %v8135
  %v8279 = vunpack.c.h.b16 %v8135
  %v8280 = vunpack.c.l.b16 %v8136
  %v8281 = vunpack.c.h.b16 %v8136
  %v8282 = vunpack.c.l.b16 %v8137
  %v8283 = vunpack.c.h.b16 %v8137
  %v8284 = vunpack.c.l.b16 %v8138
  %v8285 = vunpack.c.h.b16 %v8138
  %v8286 = vunpack.c.l.b16 %v8139
  %v8287 = vunpack.c.h.b16 %v8139
  %v8288 = vunpack.c.l.b16 %v8140
  %v8289 = vunpack.c.h.b16 %v8140
  %v8290 = vunpack.c.l.b16 %v8141
  %v8291 = vunpack.c.h.b16 %v8141
  %v8292 = vunpack.c.l.b16 %v8142
  %v8293 = vunpack.c.h.b16 %v8142
  %v8294 = vunpack.c.l.b16 %v8143
  %v8295 = vunpack.c.h.b16 %v8143
  %v8296 = vunpack.c.l.b16 %v8144
  %v8297 = vunpack.c.h.b16 %v8144
  %v8298 = vunpack.c.l.b16 %v8145
  %v8299 = vunpack.c.h.b16 %v8145
  %v8300 = vunpack.c.l.b16 %v8146
  %v8301 = vunpack.c.h.b16 %v8146
  %v8302 = vunpack.c.l.b16 %v8147
  %v8303 = vunpack.c.h.b16 %v8147
  %v8304 = vunpack.c.l.b16 %v8148
  %v8305 = vunpack.c.h.b16 %v8148
  %v8306 = vunpack.c.l.b16 %v8149
  %v8307 = vunpack.c.h.b16 %v8149
  %v8308 = vunpack.c.l.b16 %v8150
  %v8309 = vunpack.c.h.b16 %v8150
  %v8310 = vunpack.c.l.b16 %v8151
  %v8311 = vunpack.c.h.b16 %v8151
  %v8312 = vunpack.c.l.b16 %v8152
  %v8313 = vunpack.c.h.b16 %v8152
  %v8314 = vunpack.c.l.b16 %v8153
  %v8315 = vunpack.c.h.b16 %v8153
  %v8316 = vunpack.c.l.b16 %v8154
  %v8317 = vunpack.c.h.b16 %v8154
  %v8318 = vunpack.c.l.b16 %v8155
  %v8319 = vunpack.c.h.b16 %v8155
  %v8320 = vunpack.c.l.b16 %v8156
  %v8321 = vunpack.c.h.b16 %v8156
  %v8322 = vunpack.c.l.b16 %v8157
  %v8323 = vunpack.c.h.b16 %v8157
  %v8324 = vunpack.c.l.b16 %v8158
  %v8325 = vunpack.c.h.b16 %v8158
  %v8326 = vunpack.c.l.b16 %v8159
  %v8327 = vunpack.c.h.b16 %v8159
  %v8328 = vpack.c.b16 %v8266, %v8264
  %v8329 = vpack.c.b16 %v8267, %v8265
  %v8330 = vpack.c.b16 %v8270, %v8268
  %v8331 = vpack.c.b16 %v8271, %v8269
  %v8332 = vpack.c.b16 %v8274, %v8272
  %v8333 = vpack.c.b16 %v8275, %v8273
  %v8334 = vpack.c.b16 %v8278, %v8276
  %v8335 = vpack.c.b16 %v8279, %v8277
  %v8336 = vpack.c.b16 %v8282, %v8280
  %v8337 = vpack.c.b16 %v8283, %v8281
  %v8338 = vpack.c.b16 %v8286, %v8284
  %v8339 = vpack.c.b16 %v8287, %v8285
  %v8340 = vpack.c.b16 %v8290, %v8288
  %v8341 = vpack.c.b16 %v8291, %v8289
  %v8342 = vpack.c.b16 %v8294, %v8292
  %v8343 = vpack.c.b16 %v8295, %v8293
  %v8344 = vpack.c.b16 %v8298, %v8296
  %v8345 = vpack.c.b16 %v8299, %v8297
  %v8346 = vpack.c.b16 %v8302, %v8300
  %v8347 = vpack.c.b16 %v8303, %v8301
  %v8348 = vpack.c.b16 %v8306, %v8304
  %v8349 = vpack.c.b16 %v8307, %v8305
  %v8350 = vpack.c.b16 %v8310, %v8308
  %v8351 = vpack.c.b16 %v8311, %v8309
  %v8352 = vpack.c.b16 %v8314, %v8312
  %v8353 = vpack.c.b16 %v8315, %v8313
  %v8354 = vpack.c.b16 %v8318, %v8316
  %v8355 = vpack.c.b16 %v8319, %v8317
  %v8356 = vpack.c.b16 %v8322, %v8320
  %v8357 = vpack.c.b16 %v8323, %v8321
  %v8358 = vpack.c.b16 %v8326, %v8324
  %v8359 = vpack.c.b16 %v8327, %v8325
  %8392 = vmatprep.subr.bf16.mxu0 %v8329
  %8393 = vmatpush1.bf16.msra.mxu0 %v8328
  %8394 = vmatprep.subr.bf16.mxu0 %v8331
  %8395 = vmatpush1.bf16.msra.mxu0 %v8330
  %8396 = vmatprep.subr.bf16.mxu0 %v8333
  %8397 = vmatpush1.bf16.msra.mxu0 %v8332
  %8398 = vmatprep.subr.bf16.mxu0 %v8335
  %8399 = vmatpush1.bf16.msra.mxu0 %v8334
  %8400 = vmatprep.subr.bf16.mxu0 %v8337
  %8401 = vmatpush1.bf16.msra.mxu0 %v8336
  %8402 = vmatprep.subr.bf16.mxu0 %v8339
  %8403 = vmatpush1.bf16.msra.mxu0 %v8338
  %8404 = vmatprep.subr.bf16.mxu0 %v8341
  %8405 = vmatpush1.bf16.msra.mxu0 %v8340
  %8406 = vmatprep.subr.bf16.mxu0 %v8343
  %8407 = vmatpush1.bf16.msra.mxu0 %v8342
  %8408 = vmatprep.subr.bf16.mxu0 %v8345
  %8409 = vmatpush1.bf16.msra.mxu0 %v8344
  %8410 = vmatprep.subr.bf16.mxu0 %v8347
  %8411 = vmatpush1.bf16.msra.mxu0 %v8346
  %8412 = vmatprep.subr.bf16.mxu0 %v8349
  %8413 = vmatpush1.bf16.msra.mxu0 %v8348
  %8414 = vmatprep.subr.bf16.mxu0 %v8351
  %8415 = vmatpush1.bf16.msra.mxu0 %v8350
  %8416 = vmatprep.subr.bf16.mxu0 %v8353
  %8417 = vmatpush1.bf16.msra.mxu0 %v8352
  %8418 = vmatprep.subr.bf16.mxu0 %v8355
  %8419 = vmatpush1.bf16.msra.mxu0 %v8354
  %8420 = vmatprep.subr.bf16.mxu0 %v8357
  %8421 = vmatpush1.bf16.msra.mxu0 %v8356
  %8422 = vmatprep.subr.bf16.mxu0 %v8359
  %8423 = vmatpush1.bf16.msra.mxu0 %v8358
  %8424 = vmatprep.mubr.bf16.mxu0 %v8197
  %8425 = vmatmul.mubr.bf16.gmra.mrb[0].mxu0 %v8196
  %v8426 = vpop.f32.mrb[0].mxu0
  %v8427 = vadd.f32 0.0, %v8426
  %v8428 = vpop.f32.mrb[0].mxu0
  %v8429 = vadd.f32 0.0, %v8428
  %v8430 = vpop.f32.mrb[0].mxu0
  %v8431 = vadd.f32 0.0, %v8430
  %v8432 = vpop.f32.mrb[0].mxu0
  %v8433 = vadd.f32 0.0, %v8432
  %8434 = vmatprep.mubr.bf16.mxu0 %v8199
  %8435 = vmatmul.mubr.bf16.gmra.mrb[0].mxu0 %v8198
  %v8436 = vpop.f32.mrb[0].mxu0
  %v8437 = vadd.f32 0.0, %v8436
  %v8438 = vpop.f32.mrb[0].mxu0
  %v8439 = vadd.f32 0.0, %v8438
  %v8440 = vpop.f32.mrb[0].mxu0
  %v8441 = vadd.f32 0.0, %v8440
  %v8442 = vpop.f32.mrb[0].mxu0
  %v8443 = vadd.f32 0.0, %v8442
  %8444 = vmatprep.mubr.bf16.mxu0 %v8201
  %8445 = vmatmul.mubr.bf16.gmra.mrb[0].mxu0 %v8200
  %v8446 = vpop.f32.mrb[0].mxu0
  %v8447 = vadd.f32 0.0, %v8446
  %v8448 = vpop.f32.mrb[0].mxu0
  %v8449 = vadd.f32 0.0, %v8448
  %v8450 = vpop.f32.mrb[0].mxu0
  %v8451 = vadd.f32 0.0, %v8450
  %v8452 = vpop.f32.mrb[0].mxu0
  %v8453 = vadd.f32 0.0, %v8452
  %8454 = vmatprep.mubr.bf16.mxu0 %v8203
  %8455 = vmatmul.mubr.bf16.gmra.mrb[0].mxu0 %v8202
  %v8456 = vpop.f32.mrb[0].mxu0
  %v8457 = vadd.f32 0.0, %v8456
  %v8458 = vpop.f32.mrb[0].mxu0
  %v8459 = vadd.f32 0.0, %v8458
  %v8460 = vpop.f32.mrb[0].mxu0
  %v8461 = vadd.f32 0.0, %v8460
  %v8462 = vpop.f32.mrb[0].mxu0
  %v8463 = vadd.f32 0.0, %v8462
  %8464 = vmatprep.mubr.bf16.mxu0 %v8205
  %8465 = vmatmul.mubr.bf16.gmra.mrb[0].mxu0 %v8204
  %v8466 = vpop.f32.mrb[0].mxu0
  %v8467 = vadd.f32 0.0, %v8466
  %v8468 = vpop.f32.mrb[0].mxu0
  %v8469 = vadd.f32 0.0, %v8468
  %v8470 = vpop.f32.mrb[0].mxu0
  %v8471 = vadd.f32 0.0, %v8470
  %v8472 = vpop.f32.mrb[0].mxu0
  %v8473 = vadd.f32 0.0, %v8472
  %8474 = vmatprep.mubr.bf16.mxu0 %v8207
  %8475 = vmatmul.mubr.bf16.gmra.mrb[0].mxu0 %v8206
  %v8476 = vpop.f32.mrb[0].mxu0
  %v8477 = vadd.f32 0.0, %v8476
  %v8478 = vpop.f32.mrb[0].mxu0
  %v8479 = vadd.f32 0.0, %v8478
  %v8480 = vpop.f32.mrb[0].mxu0
  %v8481 = vadd.f32 0.0, %v8480
  %v8482 = vpop.f32.mrb[0].mxu0
  %v8483 = vadd.f32 0.0, %v8482
  %8484 = vmatprep.mubr.bf16.mxu0 %v8209
  %8485 = vmatmul.mubr.bf16.gmra.mrb[0].mxu0 %v8208
  %v8486 = vpop.f32.mrb[0].mxu0
  %v8487 = vadd.f32 0.0, %v8486
  %v8488 = vpop.f32.mrb[0].mxu0
  %v8489 = vadd.f32 0.0, %v8488
  %v8490 = vpop.f32.mrb[0].mxu0
  %v8491 = vadd.f32 0.0, %v8490
  %v8492 = vpop.f32.mrb[0].mxu0
  %v8493 = vadd.f32 0.0, %v8492
  %8494 = vmatprep.mubr.bf16.mxu0 %v8211
  %8495 = vmatmul.mubr.bf16.gmra.mrb[0].mxu0 %v8210
  %v8496 = vpop.f32.mrb[0].mxu0
  %v8497 = vadd.f32 0.0, %v8496
  %v8498 = vpop.f32.mrb[0].mxu0
  %v8499 = vadd.f32 0.0, %v8498
  %v8500 = vpop.f32.mrb[0].mxu0
  %v8501 = vadd.f32 0.0, %v8500
  %v8502 = vpop.f32.mrb[0].mxu0
  %v8503 = vadd.f32 0.0, %v8502
  %8504 = vmatprep.mubr.bf16.mxu0 %v8213
  %8505 = vmatmul.mubr.bf16.gmra.mrb[0].mxu0 %v8212
  %v8506 = vpop.f32.mrb[0].mxu0
  %v8507 = vadd.f32 0.0, %v8506
  %v8508 = vpop.f32.mrb[0].mxu0
  %v8509 = vadd.f32 0.0, %v8508
  %v8510 = vpop.f32.mrb[0].mxu0
  %v8511 = vadd.f32 0.0, %v8510
  %v8512 = vpop.f32.mrb[0].mxu0
  %v8513 = vadd.f32 0.0, %v8512
  %8514 = vdwg.mxu0
  %v8515 = vadd.f32 %v7803, %v8427
  %v8516 = vadd.f32 %v7804, %v8429
  %v8517 = vadd.f32 %v7805, %v8431
  %v8518 = vadd.f32 %v7806, %v8433
  %v8519 = vadd.f32 %v7807, %v8437
  %v8520 = vadd.f32 %v7808, %v8439
  %v8521 = vadd.f32 %v7809, %v8441
  %v8522 = vadd.f32 %v7810, %v8443
  %v8523 = vadd.f32 %v7811, %v8447
  %v8524 = vadd.f32 %v7812, %v8449
  %v8525 = vadd.f32 %v7813, %v8451
  %v8526 = vadd.f32 %v7814, %v8453
  %v8527 = vadd.f32 %v7815, %v8457
  %v8528 = vadd.f32 %v7816, %v8459
  %v8529 = vadd.f32 %v7817, %v8461
  %v8530 = vadd.f32 %v7818, %v8463
  %v8531 = vadd.f32 %v7819, %v8467
  %v8532 = vadd.f32 %v7820, %v8469
  %v8533 = vadd.f32 %v7821, %v8471
  %v8534 = vadd.f32 %v7822, %v8473
  %v8535 = vadd.f32 %v7823, %v8477
  %v8536 = vadd.f32 %v7824, %v8479
  %v8537 = vadd.f32 %v7825, %v8481
  %v8538 = vadd.f32 %v7826, %v8483
  %v8539 = vadd.f32 %v7827, %v8487
  %v8540 = vadd.f32 %v7828, %v8489
  %v8541 = vadd.f32 %v7829, %v8491
  %v8542 = vadd.f32 %v7830, %v8493
  %v8543 = vadd.f32 %v7831, %v8497
  %v8544 = vadd.f32 %v7832, %v8499
  %v8545 = vadd.f32 %v7833, %v8501
  %v8546 = vadd.f32 %v7834, %v8503
  %v8547 = vadd.f32 %v7835, %v8507
  %v8548 = vadd.f32 %v7836, %v8509
  %v8549 = vadd.f32 %v7837, %v8511
  %v8550 = vadd.f32 %v7838, %v8513
  %v8551 = vld [vmem:[%s5625] sm:$0xee]
  %v8552 = vld [vmem:[%s5625 + $0x10] sm:$0xee]
  %v8553 = vld [vmem:[%s5625 + $0x20] sm:$0xee]
  %v8554 = vld [vmem:[%s5625 + $0x30] sm:$0xee]
  %v8555 = vld [vmem:[%s5625 + $0x40] sm:$0xee]
  %v8556 = vld [vmem:[%s5625 + $0x50] sm:$0xee]
  %v8557 = vld [vmem:[%s5625 + $0x60] sm:$0xee]
  %v8558 = vld [vmem:[%s5625 + $0x70] sm:$0xee]
  %v8559 = vld [vmem:[%s5625 + $0x80] sm:$0xee]
  %v8560 = vld [vmem:[%s5625 + $0xb0] sm:$0xee]
  %v8561 = vld [vmem:[%s5625 + $0xc0] sm:$0xee]
  %v8562 = vld [vmem:[%s5625 + $0xd0] sm:$0xee]
  %v8563 = vld [vmem:[%s5625 + $0xe0] sm:$0xee]
  %v8564 = vld [vmem:[%s5625 + $0xf0] sm:$0xee]
  %v8565 = vld [vmem:[%s5625 + $0x100] sm:$0xee]
  %v8566 = vld [vmem:[%s5625 + $0x110] sm:$0xee]
  %v8567 = vld [vmem:[%s5625 + $0x120] sm:$0xee]
  %v8568 = vld [vmem:[%s5625 + $0x130] sm:$0xee]
  %v8605 = vrot.slane %v8551, 5
  %v8606 = vrot.slane %v8605, 4
  %v8607 = vrot.slane %v7840, 5
  %v8608 = vsel %vm1176, %v8606, %v8607
  %v8609 = vrot.slane %v8552, 5
  %v8610 = vrot.slane %v8609, 4
  %v8611 = vrot.slane %v7842, 5
  %v8612 = vsel %vm1176, %v8610, %v8611
  %v8613 = vrot.slane %v8553, 5
  %v8614 = vrot.slane %v8613, 4
  %v8615 = vrot.slane %v7844, 5
  %v8616 = vsel %vm1176, %v8614, %v8615
  %v8617 = vrot.slane %v8554, 5
  %v8618 = vrot.slane %v8617, 4
  %v8619 = vrot.slane %v7846, 5
  %v8620 = vsel %vm1176, %v8618, %v8619
  %v8621 = vrot.slane %v8555, 5
  %v8622 = vrot.slane %v8621, 4
  %v8623 = vrot.slane %v7848, 5
  %v8624 = vsel %vm1176, %v8622, %v8623
  %v8625 = vrot.slane %v8556, 5
  %v8626 = vrot.slane %v8625, 4
  %v8627 = vrot.slane %v7850, 5
  %v8628 = vsel %vm1176, %v8626, %v8627
  %v8629 = vrot.slane %v8557, 5
  %v8630 = vrot.slane %v8629, 4
  %v8631 = vrot.slane %v7852, 5
  %v8632 = vsel %vm1176, %v8630, %v8631
  %v8633 = vrot.slane %v8558, 5
  %v8634 = vrot.slane %v8633, 4
  %v8635 = vrot.slane %v7854, 5
  %v8636 = vsel %vm1176, %v8634, %v8635
  %v8637 = vrot.slane %v8559, 5
  %v8638 = vrot.slane %v8637, 4
  %v8639 = vrot.slane %v7856, 5
  %v8640 = vsel %vm1176, %v8638, %v8639
  %v8641 = vrot.slane %v8560, 5
  %v8642 = vrot.slane %v8641, 4
  %v8643 = vrot.slane %v7858, 5
  %v8644 = vsel %vm1176, %v8642, %v8643
  %v8645 = vrot.slane %v8561, 5
  %v8646 = vrot.slane %v8645, 4
  %v8647 = vrot.slane %v7860, 5
  %v8648 = vsel %vm1176, %v8646, %v8647
  %v8649 = vrot.slane %v8562, 5
  %v8650 = vrot.slane %v8649, 4
  %v8651 = vrot.slane %v7862, 5
  %v8652 = vsel %vm1176, %v8650, %v8651
  %v8653 = vrot.slane %v8563, 5
  %v8654 = vrot.slane %v8653, 4
  %v8655 = vrot.slane %v7864, 5
  %v8656 = vsel %vm1176, %v8654, %v8655
  %v8657 = vrot.slane %v8564, 5
  %v8658 = vrot.slane %v8657, 4
  %v8659 = vrot.slane %v7866, 5
  %v8660 = vsel %vm1176, %v8658, %v8659
  %v8661 = vrot.slane %v8565, 5
  %v8662 = vrot.slane %v8661, 4
  %v8663 = vrot.slane %v7868, 5
  %v8664 = vsel %vm1176, %v8662, %v8663
  %v8665 = vrot.slane %v8566, 5
  %v8666 = vrot.slane %v8665, 4
  %v8667 = vrot.slane %v7870, 5
  %v8668 = vsel %vm1176, %v8666, %v8667
  %v8669 = vrot.slane %v8567, 5
  %v8670 = vrot.slane %v8669, 4
  %v8671 = vrot.slane %v7872, 5
  %v8672 = vsel %vm1176, %v8670, %v8671
  %v8673 = vrot.slane %v8568, 5
  %v8674 = vrot.slane %v8673, 4
  %v8675 = vrot.slane %v7874, 5
  %v8676 = vsel %vm1176, %v8674, %v8675
  %s8677 = scalar_lea.vmem %s4, 1280
  %v8678 = vld [vmem:[%s8677] sm:$0xff]
  %v8679 = vld [vmem:[%s8677 + $0x8] sm:$0xff]
  %v8680 = vld [vmem:[%s8677 + $0x10] sm:$0xff]
  %v8681 = vld [vmem:[%s8677 + $0x18] sm:$0xff]
  %v8682 = vld [vmem:[%s8677 + $0x20] sm:$0xff]
  %v8683 = vld [vmem:[%s8677 + $0x28] sm:$0xff]
  %v8684 = vld [vmem:[%s8677 + $0x30] sm:$0xff]
  %v8685 = vld [vmem:[%s8677 + $0x38] sm:$0xff]
  %v8686 = vld [vmem:[%s8677 + $0x40] sm:$0xff]
  %v8687 = vld [vmem:[%s8677 + $0x48] sm:$0xff]
  %v8688 = vld [vmem:[%s8677 + $0x50] sm:$0xff]
  %v8689 = vld [vmem:[%s8677 + $0x58] sm:$0xff]
  %v8690 = vld [vmem:[%s8677 + $0x60] sm:$0xff]
  %v8691 = vld [vmem:[%s8677 + $0x68] sm:$0xff]
  %v8692 = vld [vmem:[%s8677 + $0x70] sm:$0xff]
  %v8693 = vld [vmem:[%s8677 + $0x78] sm:$0xff]
  %v8694 = vld [vmem:[%s8677 + $0x80] sm:$0xff]
  %v8695 = vld [vmem:[%s8677 + $0x88] sm:$0xff]
  %v8696 = vld [vmem:[%s8677 + $0x90] sm:$0xff]
  %v8697 = vld [vmem:[%s8677 + $0x98] sm:$0xff]
  %v8698 = vld [vmem:[%s8677 + $0xa0] sm:$0xff]
  %v8699 = vld [vmem:[%s8677 + $0xa8] sm:$0xff]
  %v8700 = vld [vmem:[%s8677 + $0xb0] sm:$0xff]
  %v8701 = vld [vmem:[%s8677 + $0xb8] sm:$0xff]
  %v8702 = vld [vmem:[%s8677 + $0xc0] sm:$0xff]
  %v8703 = vld [vmem:[%s8677 + $0xc8] sm:$0xff]
  %v8704 = vld [vmem:[%s8677 + $0xd0] sm:$0xff]
  %v8705 = vld [vmem:[%s8677 + $0xd8] sm:$0xff]
  %v8706 = vld [vmem:[%s8677 + $0xe0] sm:$0xff]
  %v8707 = vld [vmem:[%s8677 + $0xe8] sm:$0xff]
  %v8708 = vld [vmem:[%s8677 + $0xf0] sm:$0xff]
  %v8709 = vld [vmem:[%s8677 + $0xf8] sm:$0xff]
  %v8710 = vunpack.c.l.b16 %v8608
  %v8711 = vunpack.c.h.b16 %v8608
  %v8712 = vunpack.c.l.b16 %v8612
  %v8713 = vunpack.c.h.b16 %v8612
  %v8714 = vunpack.c.l.b16 %v8616
  %v8715 = vunpack.c.h.b16 %v8616
  %v8716 = vunpack.c.l.b16 %v8620
  %v8717 = vunpack.c.h.b16 %v8620
  %v8718 = vunpack.c.l.b16 %v8624
  %v8719 = vunpack.c.h.b16 %v8624
  %v8720 = vunpack.c.l.b16 %v8628
  %v8721 = vunpack.c.h.b16 %v8628
  %v8722 = vunpack.c.l.b16 %v8632
  %v8723 = vunpack.c.h.b16 %v8632
  %v8724 = vunpack.c.l.b16 %v8636
  %v8725 = vunpack.c.h.b16 %v8636
  %v8726 = vunpack.c.l.b16 %v8640
  %v8727 = vunpack.c.h.b16 %v8640
  %v8728 = vunpack.c.l.b16 %v8644
  %v8729 = vunpack.c.h.b16 %v8644
  %v8730 = vunpack.c.l.b16 %v8648
  %v8731 = vunpack.c.h.b16 %v8648
  %v8732 = vunpack.c.l.b16 %v8652
  %v8733 = vunpack.c.h.b16 %v8652
  %v8734 = vunpack.c.l.b16 %v8656
  %v8735 = vunpack.c.h.b16 %v8656
  %v8736 = vunpack.c.l.b16 %v8660
  %v8737 = vunpack.c.h.b16 %v8660
  %v8738 = vunpack.c.l.b16 %v8664
  %v8739 = vunpack.c.h.b16 %v8664
  %v8740 = vunpack.c.l.b16 %v8668
  %v8741 = vunpack.c.h.b16 %v8668
  %v8742 = vunpack.c.l.b16 %v8672
  %v8743 = vunpack.c.h.b16 %v8672
  %v8744 = vunpack.c.l.b16 %v8676
  %v8745 = vunpack.c.h.b16 %v8676
  %v8746 = vpack.c.b16 %v8712, %v8710
  %v8747 = vpack.c.b16 %v8713, %v8711
  %v8748 = vpack.c.b16 %v8716, %v8714
  %v8749 = vpack.c.b16 %v8717, %v8715
  %v8750 = vpack.c.b16 %v8720, %v8718
  %v8751 = vpack.c.b16 %v8721, %v8719
  %v8752 = vpack.c.b16 %v8724, %v8722
  %v8753 = vpack.c.b16 %v8725, %v8723
  %v8754 = vpack.c.b16 %v8728, %v8726
  %v8755 = vpack.c.b16 %v8729, %v8727
  %v8756 = vpack.c.b16 %v8732, %v8730
  %v8757 = vpack.c.b16 %v8733, %v8731
  %v8758 = vpack.c.b16 %v8736, %v8734
  %v8759 = vpack.c.b16 %v8737, %v8735
  %v8760 = vpack.c.b16 %v8740, %v8738
  %v8761 = vpack.c.b16 %v8741, %v8739
  %v8762 = vpack.c.b16 %v8744, %v8742
  %v8763 = vpack.c.b16 %v8745, %v8743
  %v8814 = vunpack.c.l.b16 %v8678
  %v8815 = vunpack.c.h.b16 %v8678
  %v8816 = vunpack.c.l.b16 %v8679
  %v8817 = vunpack.c.h.b16 %v8679
  %v8818 = vunpack.c.l.b16 %v8680
  %v8819 = vunpack.c.h.b16 %v8680
  %v8820 = vunpack.c.l.b16 %v8681
  %v8821 = vunpack.c.h.b16 %v8681
  %v8822 = vunpack.c.l.b16 %v8682
  %v8823 = vunpack.c.h.b16 %v8682
  %v8824 = vunpack.c.l.b16 %v8683
  %v8825 = vunpack.c.h.b16 %v8683
  %v8826 = vunpack.c.l.b16 %v8684
  %v8827 = vunpack.c.h.b16 %v8684
  %v8828 = vunpack.c.l.b16 %v8685
  %v8829 = vunpack.c.h.b16 %v8685
  %v8830 = vunpack.c.l.b16 %v8686
  %v8831 = vunpack.c.h.b16 %v8686
  %v8832 = vunpack.c.l.b16 %v8687
  %v8833 = vunpack.c.h.b16 %v8687
  %v8834 = vunpack.c.l.b16 %v8688
  %v8835 = vunpack.c.h.b16 %v8688
  %v8836 = vunpack.c.l.b16 %v8689
  %v8837 = vunpack.c.h.b16 %v8689
  %v8838 = vunpack.c.l.b16 %v8690
  %v8839 = vunpack.c.h.b16 %v8690
  %v8840 = vunpack.c.l.b16 %v8691
  %v8841 = vunpack.c.h.b16 %v8691
  %v8842 = vunpack.c.l.b16 %v8692
  %v8843 = vunpack.c.h.b16 %v8692
  %v8844 = vunpack.c.l.b16 %v8693
  %v8845 = vunpack.c.h.b16 %v8693
  %v8846 = vunpack.c.l.b16 %v8694
  %v8847 = vunpack.c.h.b16 %v8694
  %v8848 = vunpack.c.l.b16 %v8695
  %v8849 = vunpack.c.h.b16 %v8695
  %v8850 = vunpack.c.l.b16 %v8696
  %v8851 = vunpack.c.h.b16 %v8696
  %v8852 = vunpack.c.l.b16 %v8697
  %v8853 = vunpack.c.h.b16 %v8697
  %v8854 = vunpack.c.l.b16 %v8698
  %v8855 = vunpack.c.h.b16 %v8698
  %v8856 = vunpack.c.l.b16 %v8699
  %v8857 = vunpack.c.h.b16 %v8699
  %v8858 = vunpack.c.l.b16 %v8700
  %v8859 = vunpack.c.h.b16 %v8700
  %v8860 = vunpack.c.l.b16 %v8701
  %v8861 = vunpack.c.h.b16 %v8701
  %v8862 = vunpack.c.l.b16 %v8702
  %v8863 = vunpack.c.h.b16 %v8702
  %v8864 = vunpack.c.l.b16 %v8703
  %v8865 = vunpack.c.h.b16 %v8703
  %v8866 = vunpack.c.l.b16 %v8704
  %v8867 = vunpack.c.h.b16 %v8704
  %v8868 = vunpack.c.l.b16 %v8705
  %v8869 = vunpack.c.h.b16 %v8705
  %v8870 = vunpack.c.l.b16 %v8706
  %v8871 = vunpack.c.h.b16 %v8706
  %v8872 = vunpack.c.l.b16 %v8707
  %v8873 = vunpack.c.h.b16 %v8707
  %v8874 = vunpack.c.l.b16 %v8708
  %v8875 = vunpack.c.h.b16 %v8708
  %v8876 = vunpack.c.l.b16 %v8709
  %v8877 = vunpack.c.h.b16 %v8709
  %v8878 = vpack.c.b16 %v8816, %v8814
  %v8879 = vpack.c.b16 %v8817, %v8815
  %v8880 = vpack.c.b16 %v8820, %v8818
  %v8881 = vpack.c.b16 %v8821, %v8819
  %v8882 = vpack.c.b16 %v8824, %v8822
  %v8883 = vpack.c.b16 %v8825, %v8823
  %v8884 = vpack.c.b16 %v8828, %v8826
  %v8885 = vpack.c.b16 %v8829, %v8827
  %v8886 = vpack.c.b16 %v8832, %v8830
  %v8887 = vpack.c.b16 %v8833, %v8831
  %v8888 = vpack.c.b16 %v8836, %v8834
  %v8889 = vpack.c.b16 %v8837, %v8835
  %v8890 = vpack.c.b16 %v8840, %v8838
  %v8891 = vpack.c.b16 %v8841, %v8839
  %v8892 = vpack.c.b16 %v8844, %v8842
  %v8893 = vpack.c.b16 %v8845, %v8843
  %v8894 = vpack.c.b16 %v8848, %v8846
  %v8895 = vpack.c.b16 %v8849, %v8847
  %v8896 = vpack.c.b16 %v8852, %v8850
  %v8897 = vpack.c.b16 %v8853, %v8851
  %v8898 = vpack.c.b16 %v8856, %v8854
  %v8899 = vpack.c.b16 %v8857, %v8855
  %v8900 = vpack.c.b16 %v8860, %v8858
  %v8901 = vpack.c.b16 %v8861, %v8859
  %v8902 = vpack.c.b16 %v8864, %v8862
  %v8903 = vpack.c.b16 %v8865, %v8863
  %v8904 = vpack.c.b16 %v8868, %v8866
  %v8905 = vpack.c.b16 %v8869, %v8867
  %v8906 = vpack.c.b16 %v8872, %v8870
  %v8907 = vpack.c.b16 %v8873, %v8871
  %v8908 = vpack.c.b16 %v8876, %v8874
  %v8909 = vpack.c.b16 %v8877, %v8875
  %8942 = vmatprep.subr.bf16.mxu0 %v8879
  %8943 = vmatpush1.bf16.msra.mxu0 %v8878
  %8944 = vmatprep.subr.bf16.mxu0 %v8881
  %8945 = vmatpush1.bf16.msra.mxu0 %v8880
  %8946 = vmatprep.subr.bf16.mxu0 %v8883
  %8947 = vmatpush1.bf16.msra.mxu0 %v8882
  %8948 = vmatprep.subr.bf16.mxu0 %v8885
  %8949 = vmatpush1.bf16.msra.mxu0 %v8884
  %8950 = vmatprep.subr.bf16.mxu0 %v8887
  %8951 = vmatpush1.bf16.msra.mxu0 %v8886
  %8952 = vmatprep.subr.bf16.mxu0 %v8889
  %8953 = vmatpush1.bf16.msra.mxu0 %v8888
  %8954 = vmatprep.subr.bf16.mxu0 %v8891
  %8955 = vmatpush1.bf16.msra.mxu0 %v8890
  %8956 = vmatprep.subr.bf16.mxu0 %v8893
  %8957 = vmatpush1.bf16.msra.mxu0 %v8892
  %8958 = vmatprep.subr.bf16.mxu0 %v8895
  %8959 = vmatpush1.bf16.msra.mxu0 %v8894
  %8960 = vmatprep.subr.bf16.mxu0 %v8897
  %8961 = vmatpush1.bf16.msra.mxu0 %v8896
  %8962 = vmatprep.subr.bf16.mxu0 %v8899
  %8963 = vmatpush1.bf16.msra.mxu0 %v8898
  %8964 = vmatprep.subr.bf16.mxu0 %v8901
  %8965 = vmatpush1.bf16.msra.mxu0 %v8900
  %8966 = vmatprep.subr.bf16.mxu0 %v8903
  %8967 = vmatpush1.bf16.msra.mxu0 %v8902
  %8968 = vmatprep.subr.bf16.mxu0 %v8905
  %8969 = vmatpush1.bf16.msra.mxu0 %v8904
  %8970 = vmatprep.subr.bf16.mxu0 %v8907
  %8971 = vmatpush1.bf16.msra.mxu0 %v8906
  %8972 = vmatprep.subr.bf16.mxu0 %v8909
  %8973 = vmatpush1.bf16.msra.mxu0 %v8908
  %8974 = vmatprep.mubr.bf16.mxu0 %v8747
  %8975 = vmatmul.mubr.bf16.gmra.mrb[0].mxu0 %v8746
  %v8976 = vpop.f32.mrb[0].mxu0
  %v8977 = vadd.f32 0.0, %v8976
  %v8978 = vpop.f32.mrb[0].mxu0
  %v8979 = vadd.f32 0.0, %v8978
  %v8980 = vpop.f32.mrb[0].mxu0
  %v8981 = vadd.f32 0.0, %v8980
  %v8982 = vpop.f32.mrb[0].mxu0
  %v8983 = vadd.f32 0.0, %v8982
  %8984 = vmatprep.mubr.bf16.mxu0 %v8749
  %8985 = vmatmul.mubr.bf16.gmra.mrb[0].mxu0 %v8748
  %v8986 = vpop.f32.mrb[0].mxu0
  %v8987 = vadd.f32 0.0, %v8986
  %v8988 = vpop.f32.mrb[0].mxu0
  %v8989 = vadd.f32 0.0, %v8988
  %v8990 = vpop.f32.mrb[0].mxu0
  %v8991 = vadd.f32 0.0, %v8990
  %v8992 = vpop.f32.mrb[0].mxu0
  %v8993 = vadd.f32 0.0, %v8992
  %8994 = vmatprep.mubr.bf16.mxu0 %v8751
  %8995 = vmatmul.mubr.bf16.gmra.mrb[0].mxu0 %v8750
  %v8996 = vpop.f32.mrb[0].mxu0
  %v8997 = vadd.f32 0.0, %v8996
  %v8998 = vpop.f32.mrb[0].mxu0
  %v8999 = vadd.f32 0.0, %v8998
  %v9000 = vpop.f32.mrb[0].mxu0
  %v9001 = vadd.f32 0.0, %v9000
  %v9002 = vpop.f32.mrb[0].mxu0
  %v9003 = vadd.f32 0.0, %v9002
  %9004 = vmatprep.mubr.bf16.mxu0 %v8753
  %9005 = vmatmul.mubr.bf16.gmra.mrb[0].mxu0 %v8752
  %v9006 = vpop.f32.mrb[0].mxu0
  %v9007 = vadd.f32 0.0, %v9006
  %v9008 = vpop.f32.mrb[0].mxu0
  %v9009 = vadd.f32 0.0, %v9008
  %v9010 = vpop.f32.mrb[0].mxu0
  %v9011 = vadd.f32 0.0, %v9010
  %v9012 = vpop.f32.mrb[0].mxu0
  %v9013 = vadd.f32 0.0, %v9012
  %9014 = vmatprep.mubr.bf16.mxu0 %v8755
  %9015 = vmatmul.mubr.bf16.gmra.mrb[0].mxu0 %v8754
  %v9016 = vpop.f32.mrb[0].mxu0
  %v9017 = vadd.f32 0.0, %v9016
  %v9018 = vpop.f32.mrb[0].mxu0
  %v9019 = vadd.f32 0.0, %v9018
  %v9020 = vpop.f32.mrb[0].mxu0
  %v9021 = vadd.f32 0.0, %v9020
  %v9022 = vpop.f32.mrb[0].mxu0
  %v9023 = vadd.f32 0.0, %v9022
  %9024 = vmatprep.mubr.bf16.mxu0 %v8757
  %9025 = vmatmul.mubr.bf16.gmra.mrb[0].mxu0 %v8756
  %v9026 = vpop.f32.mrb[0].mxu0
  %v9027 = vadd.f32 0.0, %v9026
  %v9028 = vpop.f32.mrb[0].mxu0
  %v9029 = vadd.f32 0.0, %v9028
  %v9030 = vpop.f32.mrb[0].mxu0
  %v9031 = vadd.f32 0.0, %v9030
  %v9032 = vpop.f32.mrb[0].mxu0
  %v9033 = vadd.f32 0.0, %v9032
  %9034 = vmatprep.mubr.bf16.mxu0 %v8759
  %9035 = vmatmul.mubr.bf16.gmra.mrb[0].mxu0 %v8758
  %v9036 = vpop.f32.mrb[0].mxu0
  %v9037 = vadd.f32 0.0, %v9036
  %v9038 = vpop.f32.mrb[0].mxu0
  %v9039 = vadd.f32 0.0, %v9038
  %v9040 = vpop.f32.mrb[0].mxu0
  %v9041 = vadd.f32 0.0, %v9040
  %v9042 = vpop.f32.mrb[0].mxu0
  %v9043 = vadd.f32 0.0, %v9042
  %9044 = vmatprep.mubr.bf16.mxu0 %v8761
  %9045 = vmatmul.mubr.bf16.gmra.mrb[0].mxu0 %v8760
  %v9046 = vpop.f32.mrb[0].mxu0
  %v9047 = vadd.f32 0.0, %v9046
  %v9048 = vpop.f32.mrb[0].mxu0
  %v9049 = vadd.f32 0.0, %v9048
  %v9050 = vpop.f32.mrb[0].mxu0
  %v9051 = vadd.f32 0.0, %v9050
  %v9052 = vpop.f32.mrb[0].mxu0
  %v9053 = vadd.f32 0.0, %v9052
  %9054 = vmatprep.mubr.bf16.mxu0 %v8763
  %9055 = vmatmul.mubr.bf16.gmra.mrb[0].mxu0 %v8762
  %v9056 = vpop.f32.mrb[0].mxu0
  %v9057 = vadd.f32 0.0, %v9056
  %v9058 = vpop.f32.mrb[0].mxu0
  %v9059 = vadd.f32 0.0, %v9058
  %v9060 = vpop.f32.mrb[0].mxu0
  %v9061 = vadd.f32 0.0, %v9060
  %v9062 = vpop.f32.mrb[0].mxu0
  %v9063 = vadd.f32 0.0, %v9062
  %9064 = vdwg.mxu0
  %v9065 = vadd.f32 %v8515, %v8977
  %v9066 = vadd.f32 %v8516, %v8979
  %v9067 = vadd.f32 %v8517, %v8981
  %v9068 = vadd.f32 %v8518, %v8983
  %v9069 = vadd.f32 %v8519, %v8987
  %v9070 = vadd.f32 %v8520, %v8989
  %v9071 = vadd.f32 %v8521, %v8991
  %v9072 = vadd.f32 %v8522, %v8993
  %v9073 = vadd.f32 %v8523, %v8997
  %v9074 = vadd.f32 %v8524, %v8999
  %v9075 = vadd.f32 %v8525, %v9001
  %v9076 = vadd.f32 %v8526, %v9003
  %v9077 = vadd.f32 %v8527, %v9007
  %v9078 = vadd.f32 %v8528, %v9009
  %v9079 = vadd.f32 %v8529, %v9011
  %v9080 = vadd.f32 %v8530, %v9013
  %v9081 = vadd.f32 %v8531, %v9017
  %v9082 = vadd.f32 %v8532, %v9019
  %v9083 = vadd.f32 %v8533, %v9021
  %v9084 = vadd.f32 %v8534, %v9023
  %v9085 = vadd.f32 %v8535, %v9027
  %v9086 = vadd.f32 %v8536, %v9029
  %v9087 = vadd.f32 %v8537, %v9031
  %v9088 = vadd.f32 %v8538, %v9033
  %v9089 = vadd.f32 %v8539, %v9037
  %v9090 = vadd.f32 %v8540, %v9039
  %v9091 = vadd.f32 %v8541, %v9041
  %v9092 = vadd.f32 %v8542, %v9043
  %v9093 = vadd.f32 %v8543, %v9047
  %v9094 = vadd.f32 %v8544, %v9049
  %v9095 = vadd.f32 %v8545, %v9051
  %v9096 = vadd.f32 %v8546, %v9053
  %v9097 = vadd.f32 %v8547, %v9057
  %v9098 = vadd.f32 %v8548, %v9059
  %v9099 = vadd.f32 %v8549, %v9061
  %v9100 = vadd.f32 %v8550, %v9063
  %s9101 = scalar_lea.vmem [#allocation2], 32
  %v9102 = vld [vmem:[%s9101] sm:$0xff]
  %v9103 = vld [vmem:[%s9101 + $0x10] sm:$0xff]
  %v9104 = vld [vmem:[%s9101 + $0x20] sm:$0xff]
  %v9105 = vld [vmem:[%s9101 + $0x30] sm:$0xff]
  %v9106 = vld [vmem:[%s9101 + $0x40] sm:$0xff]
  %v9107 = vld [vmem:[%s9101 + $0x50] sm:$0xff]
  %v9108 = vld [vmem:[%s9101 + $0x60] sm:$0xff]
  %v9109 = vld [vmem:[%s9101 + $0x70] sm:$0xff]
  %v9110 = vld [vmem:[%s9101 + $0x80] sm:$0xff]
  %v9111 = vld [vmem:[%s9101 + $0xb0] sm:$0xff]
  %v9112 = vld [vmem:[%s9101 + $0xc0] sm:$0xff]
  %v9113 = vld [vmem:[%s9101 + $0xd0] sm:$0xff]
  %v9114 = vld [vmem:[%s9101 + $0xe0] sm:$0xff]
  %v9115 = vld [vmem:[%s9101 + $0xf0] sm:$0xff]
  %v9116 = vld [vmem:[%s9101 + $0x100] sm:$0xff]
  %v9117 = vld [vmem:[%s9101 + $0x110] sm:$0xff]
  %v9118 = vld [vmem:[%s9101 + $0x120] sm:$0xff]
  %v9119 = vld [vmem:[%s9101 + $0x130] sm:$0xff]
  %s9120 = scalar_lea.vmem %s4, 1536
  %v9121 = vld [vmem:[%s9120] sm:$0xff]
  %v9122 = vld [vmem:[%s9120 + $0x8] sm:$0xff]
  %v9123 = vld [vmem:[%s9120 + $0x10] sm:$0xff]
  %v9124 = vld [vmem:[%s9120 + $0x18] sm:$0xff]
  %v9125 = vld [vmem:[%s9120 + $0x20] sm:$0xff]
  %v9126 = vld [vmem:[%s9120 + $0x28] sm:$0xff]
  %v9127 = vld [vmem:[%s9120 + $0x30] sm:$0xff]
  %v9128 = vld [vmem:[%s9120 + $0x38] sm:$0xff]
  %v9129 = vld [vmem:[%s9120 + $0x40] sm:$0xff]
  %v9130 = vld [vmem:[%s9120 + $0x48] sm:$0xff]
  %v9131 = vld [vmem:[%s9120 + $0x50] sm:$0xff]
  %v9132 = vld [vmem:[%s9120 + $0x58] sm:$0xff]
  %v9133 = vld [vmem:[%s9120 + $0x60] sm:$0xff]
  %v9134 = vld [vmem:[%s9120 + $0x68] sm:$0xff]
  %v9135 = vld [vmem:[%s9120 + $0x70] sm:$0xff]
  %v9136 = vld [vmem:[%s9120 + $0x78] sm:$0xff]
  %v9137 = vld [vmem:[%s9120 + $0x80] sm:$0xff]
  %v9138 = vld [vmem:[%s9120 + $0x88] sm:$0xff]
  %v9139 = vld [vmem:[%s9120 + $0x90] sm:$0xff]
  %v9140 = vld [vmem:[%s9120 + $0x98] sm:$0xff]
  %v9141 = vld [vmem:[%s9120 + $0xa0] sm:$0xff]
  %v9142 = vld [vmem:[%s9120 + $0xa8] sm:$0xff]
  %v9143 = vld [vmem:[%s9120 + $0xb0] sm:$0xff]
  %v9144 = vld [vmem:[%s9120 + $0xb8] sm:$0xff]
  %v9145 = vld [vmem:[%s9120 + $0xc0] sm:$0xff]
  %v9146 = vld [vmem:[%s9120 + $0xc8] sm:$0xff]
  %v9147 = vld [vmem:[%s9120 + $0xd0] sm:$0xff]
  %v9148 = vld [vmem:[%s9120 + $0xd8] sm:$0xff]
  %v9149 = vld [vmem:[%s9120 + $0xe0] sm:$0xff]
  %v9150 = vld [vmem:[%s9120 + $0xe8] sm:$0xff]
  %v9151 = vld [vmem:[%s9120 + $0xf0] sm:$0xff]
  %v9152 = vld [vmem:[%s9120 + $0xf8] sm:$0xff]
  %v9171 = vunpack.c.l.b16 %v9102
  %v9172 = vunpack.c.h.b16 %v9102
  %v9173 = vunpack.c.l.b16 %v9103
  %v9174 = vunpack.c.h.b16 %v9103
  %v9175 = vunpack.c.l.b16 %v9104
  %v9176 = vunpack.c.h.b16 %v9104
  %v9177 = vunpack.c.l.b16 %v9105
  %v9178 = vunpack.c.h.b16 %v9105
  %v9179 = vunpack.c.l.b16 %v9106
  %v9180 = vunpack.c.h.b16 %v9106
  %v9181 = vunpack.c.l.b16 %v9107
  %v9182 = vunpack.c.h.b16 %v9107
  %v9183 = vunpack.c.l.b16 %v9108
  %v9184 = vunpack.c.h.b16 %v9108
  %v9185 = vunpack.c.l.b16 %v9109
  %v9186 = vunpack.c.h.b16 %v9109
  %v9187 = vunpack.c.l.b16 %v9110
  %v9188 = vunpack.c.h.b16 %v9110
  %v9189 = vunpack.c.l.b16 %v9111
  %v9190 = vunpack.c.h.b16 %v9111
  %v9191 = vunpack.c.l.b16 %v9112
  %v9192 = vunpack.c.h.b16 %v9112
  %v9193 = vunpack.c.l.b16 %v9113
  %v9194 = vunpack.c.h.b16 %v9113
  %v9195 = vunpack.c.l.b16 %v9114
  %v9196 = vunpack.c.h.b16 %v9114
  %v9197 = vunpack.c.l.b16 %v9115
  %v9198 = vunpack.c.h.b16 %v9115
  %v9199 = vunpack.c.l.b16 %v9116
  %v9200 = vunpack.c.h.b16 %v9116
  %v9201 = vunpack.c.l.b16 %v9117
  %v9202 = vunpack.c.h.b16 %v9117
  %v9203 = vunpack.c.l.b16 %v9118
  %v9204 = vunpack.c.h.b16 %v9118
  %v9205 = vunpack.c.l.b16 %v9119
  %v9206 = vunpack.c.h.b16 %v9119
  %v9207 = vpack.c.b16 %v9173, %v9171
  %v9208 = vpack.c.b16 %v9174, %v9172
  %v9209 = vpack.c.b16 %v9177, %v9175
  %v9210 = vpack.c.b16 %v9178, %v9176
  %v9211 = vpack.c.b16 %v9181, %v9179
  %v9212 = vpack.c.b16 %v9182, %v9180
  %v9213 = vpack.c.b16 %v9185, %v9183
  %v9214 = vpack.c.b16 %v9186, %v9184
  %v9215 = vpack.c.b16 %v9189, %v9187
  %v9216 = vpack.c.b16 %v9190, %v9188
  %v9217 = vpack.c.b16 %v9193, %v9191
  %v9218 = vpack.c.b16 %v9194, %v9192
  %v9219 = vpack.c.b16 %v9197, %v9195
  %v9220 = vpack.c.b16 %v9198, %v9196
  %v9221 = vpack.c.b16 %v9201, %v9199
  %v9222 = vpack.c.b16 %v9202, %v9200
  %v9223 = vpack.c.b16 %v9205, %v9203
  %v9224 = vpack.c.b16 %v9206, %v9204
  %v9275 = vunpack.c.l.b16 %v9121
  %v9276 = vunpack.c.h.b16 %v9121
  %v9277 = vunpack.c.l.b16 %v9122
  %v9278 = vunpack.c.h.b16 %v9122
  %v9279 = vunpack.c.l.b16 %v9123
  %v9280 = vunpack.c.h.b16 %v9123
  %v9281 = vunpack.c.l.b16 %v9124
  %v9282 = vunpack.c.h.b16 %v9124
  %v9283 = vunpack.c.l.b16 %v9125
  %v9284 = vunpack.c.h.b16 %v9125
  %v9285 = vunpack.c.l.b16 %v9126
  %v9286 = vunpack.c.h.b16 %v9126
  %v9287 = vunpack.c.l.b16 %v9127
  %v9288 = vunpack.c.h.b16 %v9127
  %v9289 = vunpack.c.l.b16 %v9128
  %v9290 = vunpack.c.h.b16 %v9128
  %v9291 = vunpack.c.l.b16 %v9129
  %v9292 = vunpack.c.h.b16 %v9129
  %v9293 = vunpack.c.l.b16 %v9130
  %v9294 = vunpack.c.h.b16 %v9130
  %v9295 = vunpack.c.l.b16 %v9131
  %v9296 = vunpack.c.h.b16 %v9131
  %v9297 = vunpack.c.l.b16 %v9132
  %v9298 = vunpack.c.h.b16 %v9132
  %v9299 = vunpack.c.l.b16 %v9133
  %v9300 = vunpack.c.h.b16 %v9133
  %v9301 = vunpack.c.l.b16 %v9134
  %v9302 = vunpack.c.h.b16 %v9134
  %v9303 = vunpack.c.l.b16 %v9135
  %v9304 = vunpack.c.h.b16 %v9135
  %v9305 = vunpack.c.l.b16 %v9136
  %v9306 = vunpack.c.h.b16 %v9136
  %v9307 = vunpack.c.l.b16 %v9137
  %v9308 = vunpack.c.h.b16 %v9137
  %v9309 = vunpack.c.l.b16 %v9138
  %v9310 = vunpack.c.h.b16 %v9138
  %v9311 = vunpack.c.l.b16 %v9139
  %v9312 = vunpack.c.h.b16 %v9139
  %v9313 = vunpack.c.l.b16 %v9140
  %v9314 = vunpack.c.h.b16 %v9140
  %v9315 = vunpack.c.l.b16 %v9141
  %v9316 = vunpack.c.h.b16 %v9141
  %v9317 = vunpack.c.l.b16 %v9142
  %v9318 = vunpack.c.h.b16 %v9142
  %v9319 = vunpack.c.l.b16 %v9143
  %v9320 = vunpack.c.h.b16 %v9143
  %v9321 = vunpack.c.l.b16 %v9144
  %v9322 = vunpack.c.h.b16 %v9144
  %v9323 = vunpack.c.l.b16 %v9145
  %v9324 = vunpack.c.h.b16 %v9145
  %v9325 = vunpack.c.l.b16 %v9146
  %v9326 = vunpack.c.h.b16 %v9146
  %v9327 = vunpack.c.l.b16 %v9147
  %v9328 = vunpack.c.h.b16 %v9147
  %v9329 = vunpack.c.l.b16 %v9148
  %v9330 = vunpack.c.h.b16 %v9148
  %v9331 = vunpack.c.l.b16 %v9149
  %v9332 = vunpack.c.h.b16 %v9149
  %v9333 = vunpack.c.l.b16 %v9150
  %v9334 = vunpack.c.h.b16 %v9150
  %v9335 = vunpack.c.l.b16 %v9151
  %v9336 = vunpack.c.h.b16 %v9151
  %v9337 = vunpack.c.l.b16 %v9152
  %v9338 = vunpack.c.h.b16 %v9152
  %v9339 = vpack.c.b16 %v9277, %v9275
  %v9340 = vpack.c.b16 %v9278, %v9276
  %v9341 = vpack.c.b16 %v9281, %v9279
  %v9342 = vpack.c.b16 %v9282, %v9280
  %v9343 = vpack.c.b16 %v9285, %v9283
  %v9344 = vpack.c.b16 %v9286, %v9284
  %v9345 = vpack.c.b16 %v9289, %v9287
  %v9346 = vpack.c.b16 %v9290, %v9288
  %v9347 = vpack.c.b16 %v9293, %v9291
  %v9348 = vpack.c.b16 %v9294, %v9292
  %v9349 = vpack.c.b16 %v9297, %v9295
  %v9350 = vpack.c.b16 %v9298, %v9296
  %v9351 = vpack.c.b16 %v9301, %v9299
  %v9352 = vpack.c.b16 %v9302, %v9300
  %v9353 = vpack.c.b16 %v9305, %v9303
  %v9354 = vpack.c.b16 %v9306, %v9304
  %v9355 = vpack.c.b16 %v9309, %v9307
  %v9356 = vpack.c.b16 %v9310, %v9308
  %v9357 = vpack.c.b16 %v9313, %v9311
  %v9358 = vpack.c.b16 %v9314, %v9312
  %v9359 = vpack.c.b16 %v9317, %v9315
  %v9360 = vpack.c.b16 %v9318, %v9316
  %v9361 = vpack.c.b16 %v9321, %v9319
  %v9362 = vpack.c.b16 %v9322, %v9320
  %v9363 = vpack.c.b16 %v9325, %v9323
  %v9364 = vpack.c.b16 %v9326, %v9324
  %v9365 = vpack.c.b16 %v9329, %v9327
  %v9366 = vpack.c.b16 %v9330, %v9328
  %v9367 = vpack.c.b16 %v9333, %v9331
  %v9368 = vpack.c.b16 %v9334, %v9332
  %v9369 = vpack.c.b16 %v9337, %v9335
  %v9370 = vpack.c.b16 %v9338, %v9336
  %9403 = vmatprep.subr.bf16.mxu0 %v9340
  %9404 = vmatpush1.bf16.msra.mxu0 %v9339
  %9405 = vmatprep.subr.bf16.mxu0 %v9342
  %9406 = vmatpush1.bf16.msra.mxu0 %v9341
  %9407 = vmatprep.subr.bf16.mxu0 %v9344
  %9408 = vmatpush1.bf16.msra.mxu0 %v9343
  %9409 = vmatprep.subr.bf16.mxu0 %v9346
  %9410 = vmatpush1.bf16.msra.mxu0 %v9345
  %9411 = vmatprep.subr.bf16.mxu0 %v9348
  %9412 = vmatpush1.bf16.msra.mxu0 %v9347
  %9413 = vmatprep.subr.bf16.mxu0 %v9350
  %9414 = vmatpush1.bf16.msra.mxu0 %v9349
  %9415 = vmatprep.subr.bf16.mxu0 %v9352
  %9416 = vmatpush1.bf16.msra.mxu0 %v9351
  %9417 = vmatprep.subr.bf16.mxu0 %v9354
  %9418 = vmatpush1.bf16.msra.mxu0 %v9353
  %9419 = vmatprep.subr.bf16.mxu0 %v9356
  %9420 = vmatpush1.bf16.msra.mxu0 %v9355
  %9421 = vmatprep.subr.bf16.mxu0 %v9358
  %9422 = vmatpush1.bf16.msra.mxu0 %v9357
  %9423 = vmatprep.subr.bf16.mxu0 %v9360
  %9424 = vmatpush1.bf16.msra.mxu0 %v9359
  %9425 = vmatprep.subr.bf16.mxu0 %v9362
  %9426 = vmatpush1.bf16.msra.mxu0 %v9361
  %9427 = vmatprep.subr.bf16.mxu0 %v9364
  %9428 = vmatpush1.bf16.msra.mxu0 %v9363
  %9429 = vmatprep.subr.bf16.mxu0 %v9366
  %9430 = vmatpush1.bf16.msra.mxu0 %v9365
  %9431 = vmatprep.subr.bf16.mxu0 %v9368
  %9432 = vmatpush1.bf16.msra.mxu0 %v9367
  %9433 = vmatprep.subr.bf16.mxu0 %v9370
  %9434 = vmatpush1.bf16.msra.mxu0 %v9369
  %9435 = vmatprep.mubr.bf16.mxu0 %v9208
  %9436 = vmatmul.mubr.bf16.gmra.mrb[0].mxu0 %v9207
  %v9437 = vpop.f32.mrb[0].mxu0
  %v9438 = vadd.f32 0.0, %v9437
  %v9439 = vpop.f32.mrb[0].mxu0
  %v9440 = vadd.f32 0.0, %v9439
  %v9441 = vpop.f32.mrb[0].mxu0
  %v9442 = vadd.f32 0.0, %v9441
  %v9443 = vpop.f32.mrb[0].mxu0
  %v9444 = vadd.f32 0.0, %v9443
  %9445 = vmatprep.mubr.bf16.mxu0 %v9210
  %9446 = vmatmul.mubr.bf16.gmra.mrb[0].mxu0 %v9209
  %v9447 = vpop.f32.mrb[0].mxu0
  %v9448 = vadd.f32 0.0, %v9447
  %v9449 = vpop.f32.mrb[0].mxu0
  %v9450 = vadd.f32 0.0, %v9449
  %v9451 = vpop.f32.mrb[0].mxu0
  %v9452 = vadd.f32 0.0, %v9451
  %v9453 = vpop.f32.mrb[0].mxu0
  %v9454 = vadd.f32 0.0, %v9453
  %9455 = vmatprep.mubr.bf16.mxu0 %v9212
  %9456 = vmatmul.mubr.bf16.gmra.mrb[0].mxu0 %v9211
  %v9457 = vpop.f32.mrb[0].mxu0
  %v9458 = vadd.f32 0.0, %v9457
  %v9459 = vpop.f32.mrb[0].mxu0
  %v9460 = vadd.f32 0.0, %v9459
  %v9461 = vpop.f32.mrb[0].mxu0
  %v9462 = vadd.f32 0.0, %v9461
  %v9463 = vpop.f32.mrb[0].mxu0
  %v9464 = vadd.f32 0.0, %v9463
  %9465 = vmatprep.mubr.bf16.mxu0 %v9214
  %9466 = vmatmul.mubr.bf16.gmra.mrb[0].mxu0 %v9213
  %v9467 = vpop.f32.mrb[0].mxu0
  %v9468 = vadd.f32 0.0, %v9467
  %v9469 = vpop.f32.mrb[0].mxu0
  %v9470 = vadd.f32 0.0, %v9469
  %v9471 = vpop.f32.mrb[0].mxu0
  %v9472 = vadd.f32 0.0, %v9471
  %v9473 = vpop.f32.mrb[0].mxu0
  %v9474 = vadd.f32 0.0, %v9473
  %9475 = vmatprep.mubr.bf16.mxu0 %v9216
  %9476 = vmatmul.mubr.bf16.gmra.mrb[0].mxu0 %v9215
  %v9477 = vpop.f32.mrb[0].mxu0
  %v9478 = vadd.f32 0.0, %v9477
  %v9479 = vpop.f32.mrb[0].mxu0
  %v9480 = vadd.f32 0.0, %v9479
  %v9481 = vpop.f32.mrb[0].mxu0
  %v9482 = vadd.f32 0.0, %v9481
  %v9483 = vpop.f32.mrb[0].mxu0
  %v9484 = vadd.f32 0.0, %v9483
  %9485 = vmatprep.mubr.bf16.mxu0 %v9218
  %9486 = vmatmul.mubr.bf16.gmra.mrb[0].mxu0 %v9217
  %v9487 = vpop.f32.mrb[0].mxu0
  %v9488 = vadd.f32 0.0, %v9487
  %v9489 = vpop.f32.mrb[0].mxu0
  %v9490 = vadd.f32 0.0, %v9489
  %v9491 = vpop.f32.mrb[0].mxu0
  %v9492 = vadd.f32 0.0, %v9491
  %v9493 = vpop.f32.mrb[0].mxu0
  %v9494 = vadd.f32 0.0, %v9493
  %9495 = vmatprep.mubr.bf16.mxu0 %v9220
  %9496 = vmatmul.mubr.bf16.gmra.mrb[0].mxu0 %v9219
  %v9497 = vpop.f32.mrb[0].mxu0
  %v9498 = vadd.f32 0.0, %v9497
  %v9499 = vpop.f32.mrb[0].mxu0
  %v9500 = vadd.f32 0.0, %v9499
  %v9501 = vpop.f32.mrb[0].mxu0
  %v9502 = vadd.f32 0.0, %v9501
  %v9503 = vpop.f32.mrb[0].mxu0
  %v9504 = vadd.f32 0.0, %v9503
  %9505 = vmatprep.mubr.bf16.mxu0 %v9222
  %9506 = vmatmul.mubr.bf16.gmra.mrb[0].mxu0 %v9221
  %v9507 = vpop.f32.mrb[0].mxu0
  %v9508 = vadd.f32 0.0, %v9507
  %v9509 = vpop.f32.mrb[0].mxu0
  %v9510 = vadd.f32 0.0, %v9509
  %v9511 = vpop.f32.mrb[0].mxu0
  %v9512 = vadd.f32 0.0, %v9511
  %v9513 = vpop.f32.mrb[0].mxu0
  %v9514 = vadd.f32 0.0, %v9513
  %9515 = vmatprep.mubr.bf16.mxu0 %v9224
  %9516 = vmatmul.mubr.bf16.gmra.mrb[0].mxu0 %v9223
  %v9517 = vpop.f32.mrb[0].mxu0
  %v9518 = vadd.f32 0.0, %v9517
  %v9519 = vpop.f32.mrb[0].mxu0
  %v9520 = vadd.f32 0.0, %v9519
  %v9521 = vpop.f32.mrb[0].mxu0
  %v9522 = vadd.f32 0.0, %v9521
  %v9523 = vpop.f32.mrb[0].mxu0
  %v9524 = vadd.f32 0.0, %v9523
  %9525 = vdwg.mxu0
  %v9526 = vadd.f32 %v9065, %v9438
  %v9527 = vadd.f32 %v9066, %v9440
  %v9528 = vadd.f32 %v9067, %v9442
  %v9529 = vadd.f32 %v9068, %v9444
  %v9530 = vadd.f32 %v9069, %v9448
  %v9531 = vadd.f32 %v9070, %v9450
  %v9532 = vadd.f32 %v9071, %v9452
  %v9533 = vadd.f32 %v9072, %v9454
  %v9534 = vadd.f32 %v9073, %v9458
  %v9535 = vadd.f32 %v9074, %v9460
  %v9536 = vadd.f32 %v9075, %v9462
  %v9537 = vadd.f32 %v9076, %v9464
  %v9538 = vadd.f32 %v9077, %v9468
  %v9539 = vadd.f32 %v9078, %v9470
  %v9540 = vadd.f32 %v9079, %v9472
  %v9541 = vadd.f32 %v9080, %v9474
  %v9542 = vadd.f32 %v9081, %v9478
  %v9543 = vadd.f32 %v9082, %v9480
  %v9544 = vadd.f32 %v9083, %v9482
  %v9545 = vadd.f32 %v9084, %v9484
  %v9546 = vadd.f32 %v9085, %v9488
  %v9547 = vadd.f32 %v9086, %v9490
  %v9548 = vadd.f32 %v9087, %v9492
  %v9549 = vadd.f32 %v9088, %v9494
  %v9550 = vadd.f32 %v9089, %v9498
  %v9551 = vadd.f32 %v9090, %v9500
  %v9552 = vadd.f32 %v9091, %v9502
  %v9553 = vadd.f32 %v9092, %v9504
  %v9554 = vadd.f32 %v9093, %v9508
  %v9555 = vadd.f32 %v9094, %v9510
  %v9556 = vadd.f32 %v9095, %v9512
  %v9557 = vadd.f32 %v9096, %v9514
  %v9558 = vadd.f32 %v9097, %v9518
  %v9559 = vadd.f32 %v9098, %v9520
  %v9560 = vadd.f32 %v9099, %v9522
  %v9561 = vadd.f32 %v9100, %v9524
  %v9562 = vld [vmem:[%s9101] sm:$0xff]
  %v9563 = vld [vmem:[%s9101 + $0x8] sm:$0x11]
  %v9564 = vld [vmem:[%s9101 + $0x10] sm:$0xff]
  %v9565 = vld [vmem:[%s9101 + $0x18] sm:$0x11]
  %v9566 = vld [vmem:[%s9101 + $0x20] sm:$0xff]
  %v9567 = vld [vmem:[%s9101 + $0x28] sm:$0x11]
  %v9568 = vld [vmem:[%s9101 + $0x30] sm:$0xff]
  %v9569 = vld [vmem:[%s9101 + $0x38] sm:$0x11]
  %v9570 = vld [vmem:[%s9101 + $0x40] sm:$0xff]
  %v9571 = vld [vmem:[%s9101 + $0x48] sm:$0x11]
  %v9572 = vld [vmem:[%s9101 + $0x50] sm:$0xff]
  %v9573 = vld [vmem:[%s9101 + $0x58] sm:$0x11]
  %v9574 = vld [vmem:[%s9101 + $0x60] sm:$0xff]
  %v9575 = vld [vmem:[%s9101 + $0x68] sm:$0x11]
  %v9576 = vld [vmem:[%s9101 + $0x70] sm:$0xff]
  %v9577 = vld [vmem:[%s9101 + $0x78] sm:$0x11]
  %v9578 = vld [vmem:[%s9101 + $0x80] sm:$0xff]
  %v9579 = vld [vmem:[%s9101 + $0x88] sm:$0x11]
  %v9580 = vld [vmem:[%s9101 + $0xb0] sm:$0xff]
  %v9581 = vld [vmem:[%s9101 + $0xb8] sm:$0x11]
  %v9582 = vld [vmem:[%s9101 + $0xc0] sm:$0xff]
  %v9583 = vld [vmem:[%s9101 + $0xc8] sm:$0x11]
  %v9584 = vld [vmem:[%s9101 + $0xd0] sm:$0xff]
  %v9585 = vld [vmem:[%s9101 + $0xd8] sm:$0x11]
  %v9586 = vld [vmem:[%s9101 + $0xe0] sm:$0xff]
  %v9587 = vld [vmem:[%s9101 + $0xe8] sm:$0x11]
  %v9588 = vld [vmem:[%s9101 + $0xf0] sm:$0xff]
  %v9589 = vld [vmem:[%s9101 + $0xf8] sm:$0x11]
  %v9590 = vld [vmem:[%s9101 + $0x100] sm:$0xff]
  %v9591 = vld [vmem:[%s9101 + $0x108] sm:$0x11]
  %v9592 = vld [vmem:[%s9101 + $0x110] sm:$0xff]
  %v9593 = vld [vmem:[%s9101 + $0x118] sm:$0x11]
  %v9594 = vld [vmem:[%s9101 + $0x120] sm:$0xff]
  %v9595 = vld [vmem:[%s9101 + $0x128] sm:$0x11]
  %v9596 = vld [vmem:[%s9101 + $0x130] sm:$0xff]
  %v9597 = vld [vmem:[%s9101 + $0x138] sm:$0x11]
  %v9599 = vshrl.u32 %v9562, 16
  %v9601 = vrot.slane %v9599, 4
  %v9602 = vshll.u32 %v9562, 16
  %v9604 = vrot.slane %v9602, 5
  %v9605 = vor.u32 %v9601, %v9604
  %v9606 = vrot.slane %v9605, 4
  %v9608 = vshll.u32 %v9563, 16
  %v9610 = vrot.slane %v9608, 5
  %v9611 = vsel %vm106, %v9606, %v9610
  %v9613 = vshrl.u32 %v9564, 16
  %v9615 = vrot.slane %v9613, 4
  %v9616 = vshll.u32 %v9564, 16
  %v9618 = vrot.slane %v9616, 5
  %v9619 = vor.u32 %v9615, %v9618
  %v9620 = vrot.slane %v9619, 4
  %v9622 = vshll.u32 %v9565, 16
  %v9624 = vrot.slane %v9622, 5
  %v9625 = vsel %vm106, %v9620, %v9624
  %v9627 = vshrl.u32 %v9566, 16
  %v9629 = vrot.slane %v9627, 4
  %v9630 = vshll.u32 %v9566, 16
  %v9632 = vrot.slane %v9630, 5
  %v9633 = vor.u32 %v9629, %v9632
  %v9634 = vrot.slane %v9633, 4
  %v9636 = vshll.u32 %v9567, 16
  %v9638 = vrot.slane %v9636, 5
  %v9639 = vsel %vm106, %v9634, %v9638
  %v9641 = vshrl.u32 %v9568, 16
  %v9643 = vrot.slane %v9641, 4
  %v9644 = vshll.u32 %v9568, 16
  %v9646 = vrot.slane %v9644, 5
  %v9647 = vor.u32 %v9643, %v9646
  %v9648 = vrot.slane %v9647, 4
  %v9650 = vshll.u32 %v9569, 16
  %v9652 = vrot.slane %v9650, 5
  %v9653 = vsel %vm106, %v9648, %v9652
  %v9655 = vshrl.u32 %v9570, 16
  %v9657 = vrot.slane %v9655, 4
  %v9658 = vshll.u32 %v9570, 16
  %v9660 = vrot.slane %v9658, 5
  %v9661 = vor.u32 %v9657, %v9660
  %v9662 = vrot.slane %v9661, 4
  %v9664 = vshll.u32 %v9571, 16
  %v9666 = vrot.slane %v9664, 5
  %v9667 = vsel %vm106, %v9662, %v9666
  %v9669 = vshrl.u32 %v9572, 16
  %v9671 = vrot.slane %v9669, 4
  %v9672 = vshll.u32 %v9572, 16
  %v9674 = vrot.slane %v9672, 5
  %v9675 = vor.u32 %v9671, %v9674
  %v9676 = vrot.slane %v9675, 4
  %v9678 = vshll.u32 %v9573, 16
  %v9680 = vrot.slane %v9678, 5
  %v9681 = vsel %vm106, %v9676, %v9680
  %v9683 = vshrl.u32 %v9574, 16
  %v9685 = vrot.slane %v9683, 4
  %v9686 = vshll.u32 %v9574, 16
  %v9688 = vrot.slane %v9686, 5
  %v9689 = vor.u32 %v9685, %v9688
  %v9690 = vrot.slane %v9689, 4
  %v9692 = vshll.u32 %v9575, 16
  %v9694 = vrot.slane %v9692, 5
  %v9695 = vsel %vm106, %v9690, %v9694
  %v9697 = vshrl.u32 %v9576, 16
  %v9699 = vrot.slane %v9697, 4
  %v9700 = vshll.u32 %v9576, 16
  %v9702 = vrot.slane %v9700, 5
  %v9703 = vor.u32 %v9699, %v9702
  %v9704 = vrot.slane %v9703, 4
  %v9706 = vshll.u32 %v9577, 16
  %v9708 = vrot.slane %v9706, 5
  %v9709 = vsel %vm106, %v9704, %v9708
  %v9711 = vshrl.u32 %v9578, 16
  %v9713 = vrot.slane %v9711, 4
  %v9714 = vshll.u32 %v9578, 16
  %v9716 = vrot.slane %v9714, 5
  %v9717 = vor.u32 %v9713, %v9716
  %v9718 = vrot.slane %v9717, 4
  %v9720 = vshll.u32 %v9579, 16
  %v9722 = vrot.slane %v9720, 5
  %v9723 = vsel %vm106, %v9718, %v9722
  %v9725 = vshrl.u32 %v9580, 16
  %v9727 = vrot.slane %v9725, 4
  %v9728 = vshll.u32 %v9580, 16
  %v9730 = vrot.slane %v9728, 5
  %v9731 = vor.u32 %v9727, %v9730
  %v9732 = vrot.slane %v9731, 4
  %v9734 = vshll.u32 %v9581, 16
  %v9736 = vrot.slane %v9734, 5
  %v9737 = vsel %vm106, %v9732, %v9736
  %v9739 = vshrl.u32 %v9582, 16
  %v9741 = vrot.slane %v9739, 4
  %v9742 = vshll.u32 %v9582, 16
  %v9744 = vrot.slane %v9742, 5
  %v9745 = vor.u32 %v9741, %v9744
  %v9746 = vrot.slane %v9745, 4
  %v9748 = vshll.u32 %v9583, 16
  %v9750 = vrot.slane %v9748, 5
  %v9751 = vsel %vm106, %v9746, %v9750
  %v9753 = vshrl.u32 %v9584, 16
  %v9755 = vrot.slane %v9753, 4
  %v9756 = vshll.u32 %v9584, 16
  %v9758 = vrot.slane %v9756, 5
  %v9759 = vor.u32 %v9755, %v9758
  %v9760 = vrot.slane %v9759, 4
  %v9762 = vshll.u32 %v9585, 16
  %v9764 = vrot.slane %v9762, 5
  %v9765 = vsel %vm106, %v9760, %v9764
  %v9767 = vshrl.u32 %v9586, 16
  %v9769 = vrot.slane %v9767, 4
  %v9770 = vshll.u32 %v9586, 16
  %v9772 = vrot.slane %v9770, 5
  %v9773 = vor.u32 %v9769, %v9772
  %v9774 = vrot.slane %v9773, 4
  %v9776 = vshll.u32 %v9587, 16
  %v9778 = vrot.slane %v9776, 5
  %v9779 = vsel %vm106, %v9774, %v9778
  %v9781 = vshrl.u32 %v9588, 16
  %v9783 = vrot.slane %v9781, 4
  %v9784 = vshll.u32 %v9588, 16
  %v9786 = vrot.slane %v9784, 5
  %v9787 = vor.u32 %v9783, %v9786
  %v9788 = vrot.slane %v9787, 4
  %v9790 = vshll.u32 %v9589, 16
  %v9792 = vrot.slane %v9790, 5
  %v9793 = vsel %vm106, %v9788, %v9792
  %v9795 = vshrl.u32 %v9590, 16
  %v9797 = vrot.slane %v9795, 4
  %v9798 = vshll.u32 %v9590, 16
  %v9800 = vrot.slane %v9798, 5
  %v9801 = vor.u32 %v9797, %v9800
  %v9802 = vrot.slane %v9801, 4
  %v9804 = vshll.u32 %v9591, 16
  %v9806 = vrot.slane %v9804, 5
  %v9807 = vsel %vm106, %v9802, %v9806
  %v9809 = vshrl.u32 %v9592, 16
  %v9811 = vrot.slane %v9809, 4
  %v9812 = vshll.u32 %v9592, 16
  %v9814 = vrot.slane %v9812, 5
  %v9815 = vor.u32 %v9811, %v9814
  %v9816 = vrot.slane %v9815, 4
  %v9818 = vshll.u32 %v9593, 16
  %v9820 = vrot.slane %v9818, 5
  %v9821 = vsel %vm106, %v9816, %v9820
  %v9823 = vshrl.u32 %v9594, 16
  %v9825 = vrot.slane %v9823, 4
  %v9826 = vshll.u32 %v9594, 16
  %v9828 = vrot.slane %v9826, 5
  %v9829 = vor.u32 %v9825, %v9828
  %v9830 = vrot.slane %v9829, 4
  %v9832 = vshll.u32 %v9595, 16
  %v9834 = vrot.slane %v9832, 5
  %v9835 = vsel %vm106, %v9830, %v9834
  %v9837 = vshrl.u32 %v9596, 16
  %v9839 = vrot.slane %v9837, 4
  %v9840 = vshll.u32 %v9596, 16
  %v9842 = vrot.slane %v9840, 5
  %v9843 = vor.u32 %v9839, %v9842
  %v9844 = vrot.slane %v9843, 4
  %v9846 = vshll.u32 %v9597, 16
  %v9848 = vrot.slane %v9846, 5
  %v9849 = vsel %vm106, %v9844, %v9848
  %s9850 = scalar_lea.vmem %s4, 1792
  %v9851 = vld [vmem:[%s9850] sm:$0xff]
  %v9852 = vld [vmem:[%s9850 + $0x8] sm:$0xff]
  %v9853 = vld [vmem:[%s9850 + $0x10] sm:$0xff]
  %v9854 = vld [vmem:[%s9850 + $0x18] sm:$0xff]
  %v9855 = vld [vmem:[%s9850 + $0x20] sm:$0xff]
  %v9856 = vld [vmem:[%s9850 + $0x28] sm:$0xff]
  %v9857 = vld [vmem:[%s9850 + $0x30] sm:$0xff]
  %v9858 = vld [vmem:[%s9850 + $0x38] sm:$0xff]
  %v9859 = vld [vmem:[%s9850 + $0x40] sm:$0xff]
  %v9860 = vld [vmem:[%s9850 + $0x48] sm:$0xff]
  %v9861 = vld [vmem:[%s9850 + $0x50] sm:$0xff]
  %v9862 = vld [vmem:[%s9850 + $0x58] sm:$0xff]
  %v9863 = vld [vmem:[%s9850 + $0x60] sm:$0xff]
  %v9864 = vld [vmem:[%s9850 + $0x68] sm:$0xff]
  %v9865 = vld [vmem:[%s9850 + $0x70] sm:$0xff]
  %v9866 = vld [vmem:[%s9850 + $0x78] sm:$0xff]
  %v9867 = vld [vmem:[%s9850 + $0x80] sm:$0xff]
  %v9868 = vld [vmem:[%s9850 + $0x88] sm:$0xff]
  %v9869 = vld [vmem:[%s9850 + $0x90] sm:$0xff]
  %v9870 = vld [vmem:[%s9850 + $0x98] sm:$0xff]
  %v9871 = vld [vmem:[%s9850 + $0xa0] sm:$0xff]
  %v9872 = vld [vmem:[%s9850 + $0xa8] sm:$0xff]
  %v9873 = vld [vmem:[%s9850 + $0xb0] sm:$0xff]
  %v9874 = vld [vmem:[%s9850 + $0xb8] sm:$0xff]
  %v9875 = vld [vmem:[%s9850 + $0xc0] sm:$0xff]
  %v9876 = vld [vmem:[%s9850 + $0xc8] sm:$0xff]
  %v9877 = vld [vmem:[%s9850 + $0xd0] sm:$0xff]
  %v9878 = vld [vmem:[%s9850 + $0xd8] sm:$0xff]
  %v9879 = vld [vmem:[%s9850 + $0xe0] sm:$0xff]
  %v9880 = vld [vmem:[%s9850 + $0xe8] sm:$0xff]
  %v9881 = vld [vmem:[%s9850 + $0xf0] sm:$0xff]
  %v9882 = vld [vmem:[%s9850 + $0xf8] sm:$0xff]
  %v9883 = vunpack.c.l.b16 %v9611
  %v9884 = vunpack.c.h.b16 %v9611
  %v9885 = vunpack.c.l.b16 %v9625
  %v9886 = vunpack.c.h.b16 %v9625
  %v9887 = vunpack.c.l.b16 %v9639
  %v9888 = vunpack.c.h.b16 %v9639
  %v9889 = vunpack.c.l.b16 %v9653
  %v9890 = vunpack.c.h.b16 %v9653
  %v9891 = vunpack.c.l.b16 %v9667
  %v9892 = vunpack.c.h.b16 %v9667
  %v9893 = vunpack.c.l.b16 %v9681
  %v9894 = vunpack.c.h.b16 %v9681
  %v9895 = vunpack.c.l.b16 %v9695
  %v9896 = vunpack.c.h.b16 %v9695
  %v9897 = vunpack.c.l.b16 %v9709
  %v9898 = vunpack.c.h.b16 %v9709
  %v9899 = vunpack.c.l.b16 %v9723
  %v9900 = vunpack.c.h.b16 %v9723
  %v9901 = vunpack.c.l.b16 %v9737
  %v9902 = vunpack.c.h.b16 %v9737
  %v9903 = vunpack.c.l.b16 %v9751
  %v9904 = vunpack.c.h.b16 %v9751
  %v9905 = vunpack.c.l.b16 %v9765
  %v9906 = vunpack.c.h.b16 %v9765
  %v9907 = vunpack.c.l.b16 %v9779
  %v9908 = vunpack.c.h.b16 %v9779
  %v9909 = vunpack.c.l.b16 %v9793
  %v9910 = vunpack.c.h.b16 %v9793
  %v9911 = vunpack.c.l.b16 %v9807
  %v9912 = vunpack.c.h.b16 %v9807
  %v9913 = vunpack.c.l.b16 %v9821
  %v9914 = vunpack.c.h.b16 %v9821
  %v9915 = vunpack.c.l.b16 %v9835
  %v9916 = vunpack.c.h.b16 %v9835
  %v9917 = vunpack.c.l.b16 %v9849
  %v9918 = vunpack.c.h.b16 %v9849
  %v9919 = vpack.c.b16 %v9885, %v9883
  %v9920 = vpack.c.b16 %v9886, %v9884
  %v9921 = vpack.c.b16 %v9889, %v9887
  %v9922 = vpack.c.b16 %v9890, %v9888
  %v9923 = vpack.c.b16 %v9893, %v9891
  %v9924 = vpack.c.b16 %v9894, %v9892
  %v9925 = vpack.c.b16 %v9897, %v9895
  %v9926 = vpack.c.b16 %v9898, %v9896
  %v9927 = vpack.c.b16 %v9901, %v9899
  %v9928 = vpack.c.b16 %v9902, %v9900
  %v9929 = vpack.c.b16 %v9905, %v9903
  %v9930 = vpack.c.b16 %v9906, %v9904
  %v9931 = vpack.c.b16 %v9909, %v9907
  %v9932 = vpack.c.b16 %v9910, %v9908
  %v9933 = vpack.c.b16 %v9913, %v9911
  %v9934 = vpack.c.b16 %v9914, %v9912
  %v9935 = vpack.c.b16 %v9917, %v9915
  %v9936 = vpack.c.b16 %v9918, %v9916
  %v9987 = vunpack.c.l.b16 %v9851
  %v9988 = vunpack.c.h.b16 %v9851
  %v9989 = vunpack.c.l.b16 %v9852
  %v9990 = vunpack.c.h.b16 %v9852
  %v9991 = vunpack.c.l.b16 %v9853
  %v9992 = vunpack.c.h.b16 %v9853
  %v9993 = vunpack.c.l.b16 %v9854
  %v9994 = vunpack.c.h.b16 %v9854
  %v9995 = vunpack.c.l.b16 %v9855
  %v9996 = vunpack.c.h.b16 %v9855
  %v9997 = vunpack.c.l.b16 %v9856
  %v9998 = vunpack.c.h.b16 %v9856
  %v9999 = vunpack.c.l.b16 %v9857
  %v10000 = vunpack.c.h.b16 %v9857
  %v10001 = vunpack.c.l.b16 %v9858
  %v10002 = vunpack.c.h.b16 %v9858
  %v10003 = vunpack.c.l.b16 %v9859
  %v10004 = vunpack.c.h.b16 %v9859
  %v10005 = vunpack.c.l.b16 %v9860
  %v10006 = vunpack.c.h.b16 %v9860
  %v10007 = vunpack.c.l.b16 %v9861
  %v10008 = vunpack.c.h.b16 %v9861
  %v10009 = vunpack.c.l.b16 %v9862
  %v10010 = vunpack.c.h.b16 %v9862
  %v10011 = vunpack.c.l.b16 %v9863
  %v10012 = vunpack.c.h.b16 %v9863
  %v10013 = vunpack.c.l.b16 %v9864
  %v10014 = vunpack.c.h.b16 %v9864
  %v10015 = vunpack.c.l.b16 %v9865
  %v10016 = vunpack.c.h.b16 %v9865
  %v10017 = vunpack.c.l.b16 %v9866
  %v10018 = vunpack.c.h.b16 %v9866
  %v10019 = vunpack.c.l.b16 %v9867
  %v10020 = vunpack.c.h.b16 %v9867
  %v10021 = vunpack.c.l.b16 %v9868
  %v10022 = vunpack.c.h.b16 %v9868
  %v10023 = vunpack.c.l.b16 %v9869
  %v10024 = vunpack.c.h.b16 %v9869
  %v10025 = vunpack.c.l.b16 %v9870
  %v10026 = vunpack.c.h.b16 %v9870
  %v10027 = vunpack.c.l.b16 %v9871
  %v10028 = vunpack.c.h.b16 %v9871
  %v10029 = vunpack.c.l.b16 %v9872
  %v10030 = vunpack.c.h.b16 %v9872
  %v10031 = vunpack.c.l.b16 %v9873
  %v10032 = vunpack.c.h.b16 %v9873
  %v10033 = vunpack.c.l.b16 %v9874
  %v10034 = vunpack.c.h.b16 %v9874
  %v10035 = vunpack.c.l.b16 %v9875
  %v10036 = vunpack.c.h.b16 %v9875
  %v10037 = vunpack.c.l.b16 %v9876
  %v10038 = vunpack.c.h.b16 %v9876
  %v10039 = vunpack.c.l.b16 %v9877
  %v10040 = vunpack.c.h.b16 %v9877
  %v10041 = vunpack.c.l.b16 %v9878
  %v10042 = vunpack.c.h.b16 %v9878
  %v10043 = vunpack.c.l.b16 %v9879
  %v10044 = vunpack.c.h.b16 %v9879
  %v10045 = vunpack.c.l.b16 %v9880
  %v10046 = vunpack.c.h.b16 %v9880
  %v10047 = vunpack.c.l.b16 %v9881
  %v10048 = vunpack.c.h.b16 %v9881
  %v10049 = vunpack.c.l.b16 %v9882
  %v10050 = vunpack.c.h.b16 %v9882
  %v10051 = vpack.c.b16 %v9989, %v9987
  %v10052 = vpack.c.b16 %v9990, %v9988
  %v10053 = vpack.c.b16 %v9993, %v9991
  %v10054 = vpack.c.b16 %v9994, %v9992
  %v10055 = vpack.c.b16 %v9997, %v9995
  %v10056 = vpack.c.b16 %v9998, %v9996
  %v10057 = vpack.c.b16 %v10001, %v9999
  %v10058 = vpack.c.b16 %v10002, %v10000
  %v10059 = vpack.c.b16 %v10005, %v10003
  %v10060 = vpack.c.b16 %v10006, %v10004
  %v10061 = vpack.c.b16 %v10009, %v10007
  %v10062 = vpack.c.b16 %v10010, %v10008
  %v10063 = vpack.c.b16 %v10013, %v10011
  %v10064 = vpack.c.b16 %v10014, %v10012
  %v10065 = vpack.c.b16 %v10017, %v10015
  %v10066 = vpack.c.b16 %v10018, %v10016
  %v10067 = vpack.c.b16 %v10021, %v10019
  %v10068 = vpack.c.b16 %v10022, %v10020
  %v10069 = vpack.c.b16 %v10025, %v10023
  %v10070 = vpack.c.b16 %v10026, %v10024
  %v10071 = vpack.c.b16 %v10029, %v10027
  %v10072 = vpack.c.b16 %v10030, %v10028
  %v10073 = vpack.c.b16 %v10033, %v10031
  %v10074 = vpack.c.b16 %v10034, %v10032
  %v10075 = vpack.c.b16 %v10037, %v10035
  %v10076 = vpack.c.b16 %v10038, %v10036
  %v10077 = vpack.c.b16 %v10041, %v10039
  %v10078 = vpack.c.b16 %v10042, %v10040
  %v10079 = vpack.c.b16 %v10045, %v10043
  %v10080 = vpack.c.b16 %v10046, %v10044
  %v10081 = vpack.c.b16 %v10049, %v10047
  %v10082 = vpack.c.b16 %v10050, %v10048
  %10115 = vmatprep.subr.bf16.mxu0 %v10052
  %10116 = vmatpush1.bf16.msra.mxu0 %v10051
  %10117 = vmatprep.subr.bf16.mxu0 %v10054
  %10118 = vmatpush1.bf16.msra.mxu0 %v10053
  %10119 = vmatprep.subr.bf16.mxu0 %v10056
  %10120 = vmatpush1.bf16.msra.mxu0 %v10055
  %10121 = vmatprep.subr.bf16.mxu0 %v10058
  %10122 = vmatpush1.bf16.msra.mxu0 %v10057
  %10123 = vmatprep.subr.bf16.mxu0 %v10060
  %10124 = vmatpush1.bf16.msra.mxu0 %v10059
  %10125 = vmatprep.subr.bf16.mxu0 %v10062
  %10126 = vmatpush1.bf16.msra.mxu0 %v10061
  %10127 = vmatprep.subr.bf16.mxu0 %v10064
  %10128 = vmatpush1.bf16.msra.mxu0 %v10063
  %10129 = vmatprep.subr.bf16.mxu0 %v10066
  %10130 = vmatpush1.bf16.msra.mxu0 %v10065
  %10131 = vmatprep.subr.bf16.mxu0 %v10068
  %10132 = vmatpush1.bf16.msra.mxu0 %v10067
  %10133 = vmatprep.subr.bf16.mxu0 %v10070
  %10134 = vmatpush1.bf16.msra.mxu0 %v10069
  %10135 = vmatprep.subr.bf16.mxu0 %v10072
  %10136 = vmatpush1.bf16.msra.mxu0 %v10071
  %10137 = vmatprep.subr.bf16.mxu0 %v10074
  %10138 = vmatpush1.bf16.msra.mxu0 %v10073
  %10139 = vmatprep.subr.bf16.mxu0 %v10076
  %10140 = vmatpush1.bf16.msra.mxu0 %v10075
  %10141 = vmatprep.subr.bf16.mxu0 %v10078
  %10142 = vmatpush1.bf16.msra.mxu0 %v10077
  %10143 = vmatprep.subr.bf16.mxu0 %v10080
  %10144 = vmatpush1.bf16.msra.mxu0 %v10079
  %10145 = vmatprep.subr.bf16.mxu0 %v10082
  %10146 = vmatpush1.bf16.msra.mxu0 %v10081
  %10147 = vmatprep.mubr.bf16.mxu0 %v9920
  %10148 = vmatmul.mubr.bf16.gmra.mrb[0].mxu0 %v9919
  %v10149 = vpop.f32.mrb[0].mxu0
  %v10150 = vadd.f32 0.0, %v10149
  %v10151 = vpop.f32.mrb[0].mxu0
  %v10152 = vadd.f32 0.0, %v10151
  %v10153 = vpop.f32.mrb[0].mxu0
  %v10154 = vadd.f32 0.0, %v10153
  %v10155 = vpop.f32.mrb[0].mxu0
  %v10156 = vadd.f32 0.0, %v10155
  %10157 = vmatprep.mubr.bf16.mxu0 %v9922
  %10158 = vmatmul.mubr.bf16.gmra.mrb[0].mxu0 %v9921
  %v10159 = vpop.f32.mrb[0].mxu0
  %v10160 = vadd.f32 0.0, %v10159
  %v10161 = vpop.f32.mrb[0].mxu0
  %v10162 = vadd.f32 0.0, %v10161
  %v10163 = vpop.f32.mrb[0].mxu0
  %v10164 = vadd.f32 0.0, %v10163
  %v10165 = vpop.f32.mrb[0].mxu0
  %v10166 = vadd.f32 0.0, %v10165
  %10167 = vmatprep.mubr.bf16.mxu0 %v9924
  %10168 = vmatmul.mubr.bf16.gmra.mrb[0].mxu0 %v9923
  %v10169 = vpop.f32.mrb[0].mxu0
  %v10170 = vadd.f32 0.0, %v10169
  %v10171 = vpop.f32.mrb[0].mxu0
  %v10172 = vadd.f32 0.0, %v10171
  %v10173 = vpop.f32.mrb[0].mxu0
  %v10174 = vadd.f32 0.0, %v10173
  %v10175 = vpop.f32.mrb[0].mxu0
  %v10176 = vadd.f32 0.0, %v10175
  %10177 = vmatprep.mubr.bf16.mxu0 %v9926
  %10178 = vmatmul.mubr.bf16.gmra.mrb[0].mxu0 %v9925
  %v10179 = vpop.f32.mrb[0].mxu0
  %v10180 = vadd.f32 0.0, %v10179
  %v10181 = vpop.f32.mrb[0].mxu0
  %v10182 = vadd.f32 0.0, %v10181
  %v10183 = vpop.f32.mrb[0].mxu0
  %v10184 = vadd.f32 0.0, %v10183
  %v10185 = vpop.f32.mrb[0].mxu0
  %v10186 = vadd.f32 0.0, %v10185
  %10187 = vmatprep.mubr.bf16.mxu0 %v9928
  %10188 = vmatmul.mubr.bf16.gmra.mrb[0].mxu0 %v9927
  %v10189 = vpop.f32.mrb[0].mxu0
  %v10190 = vadd.f32 0.0, %v10189
  %v10191 = vpop.f32.mrb[0].mxu0
  %v10192 = vadd.f32 0.0, %v10191
  %v10193 = vpop.f32.mrb[0].mxu0
  %v10194 = vadd.f32 0.0, %v10193
  %v10195 = vpop.f32.mrb[0].mxu0
  %v10196 = vadd.f32 0.0, %v10195
  %10197 = vmatprep.mubr.bf16.mxu0 %v9930
  %10198 = vmatmul.mubr.bf16.gmra.mrb[0].mxu0 %v9929
  %v10199 = vpop.f32.mrb[0].mxu0
  %v10200 = vadd.f32 0.0, %v10199
  %v10201 = vpop.f32.mrb[0].mxu0
  %v10202 = vadd.f32 0.0, %v10201
  %v10203 = vpop.f32.mrb[0].mxu0
  %v10204 = vadd.f32 0.0, %v10203
  %v10205 = vpop.f32.mrb[0].mxu0
  %v10206 = vadd.f32 0.0, %v10205
  %10207 = vmatprep.mubr.bf16.mxu0 %v9932
  %10208 = vmatmul.mubr.bf16.gmra.mrb[0].mxu0 %v9931
  %v10209 = vpop.f32.mrb[0].mxu0
  %v10210 = vadd.f32 0.0, %v10209
  %v10211 = vpop.f32.mrb[0].mxu0
  %v10212 = vadd.f32 0.0, %v10211
  %v10213 = vpop.f32.mrb[0].mxu0
  %v10214 = vadd.f32 0.0, %v10213
  %v10215 = vpop.f32.mrb[0].mxu0
  %v10216 = vadd.f32 0.0, %v10215
  %10217 = vmatprep.mubr.bf16.mxu0 %v9934
  %10218 = vmatmul.mubr.bf16.gmra.mrb[0].mxu0 %v9933
  %v10219 = vpop.f32.mrb[0].mxu0
  %v10220 = vadd.f32 0.0, %v10219
  %v10221 = vpop.f32.mrb[0].mxu0
  %v10222 = vadd.f32 0.0, %v10221
  %v10223 = vpop.f32.mrb[0].mxu0
  %v10224 = vadd.f32 0.0, %v10223
  %v10225 = vpop.f32.mrb[0].mxu0
  %v10226 = vadd.f32 0.0, %v10225
  %10227 = vmatprep.mubr.bf16.mxu0 %v9936
  %10228 = vmatmul.mubr.bf16.gmra.mrb[0].mxu0 %v9935
  %v10229 = vpop.f32.mrb[0].mxu0
  %v10230 = vadd.f32 0.0, %v10229
  %v10231 = vpop.f32.mrb[0].mxu0
  %v10232 = vadd.f32 0.0, %v10231
  %v10233 = vpop.f32.mrb[0].mxu0
  %v10234 = vadd.f32 0.0, %v10233
  %v10235 = vpop.f32.mrb[0].mxu0
  %v10236 = vadd.f32 0.0, %v10235
  %10237 = vdwg.mxu0
  %v10238 = vadd.f32 %v9526, %v10150
  %v10239 = vadd.f32 %v9527, %v10152
  %v10240 = vadd.f32 %v9528, %v10154
  %v10241 = vadd.f32 %v9529, %v10156
  %v10242 = vadd.f32 %v9530, %v10160
  %v10243 = vadd.f32 %v9531, %v10162
  %v10244 = vadd.f32 %v9532, %v10164
  %v10245 = vadd.f32 %v9533, %v10166
  %v10246 = vadd.f32 %v9534, %v10170
  %v10247 = vadd.f32 %v9535, %v10172
  %v10248 = vadd.f32 %v9536, %v10174
  %v10249 = vadd.f32 %v9537, %v10176
  %v10250 = vadd.f32 %v9538, %v10180
  %v10251 = vadd.f32 %v9539, %v10182
  %v10252 = vadd.f32 %v9540, %v10184
  %v10253 = vadd.f32 %v9541, %v10186
  %v10254 = vadd.f32 %v9542, %v10190
  %v10255 = vadd.f32 %v9543, %v10192
  %v10256 = vadd.f32 %v9544, %v10194
  %v10257 = vadd.f32 %v9545, %v10196
  %v10258 = vadd.f32 %v9546, %v10200
  %v10259 = vadd.f32 %v9547, %v10202
  %v10260 = vadd.f32 %v9548, %v10204
  %v10261 = vadd.f32 %v9549, %v10206
  %v10262 = vadd.f32 %v9550, %v10210
  %v10263 = vadd.f32 %v9551, %v10212
  %v10264 = vadd.f32 %v9552, %v10214
  %v10265 = vadd.f32 %v9553, %v10216
  %v10266 = vadd.f32 %v9554, %v10220
  %v10267 = vadd.f32 %v9555, %v10222
  %v10268 = vadd.f32 %v9556, %v10224
  %v10269 = vadd.f32 %v9557, %v10226
  %v10270 = vadd.f32 %v9558, %v10230
  %v10271 = vadd.f32 %v9559, %v10232
  %v10272 = vadd.f32 %v9560, %v10234
  %v10273 = vadd.f32 %v9561, %v10236
  %v10274 = vld [vmem:[%s9101] sm:$0xee]
  %v10275 = vld [vmem:[%s9101 + $0x10] sm:$0xee]
  %v10276 = vld [vmem:[%s9101 + $0x20] sm:$0xee]
  %v10277 = vld [vmem:[%s9101 + $0x30] sm:$0xee]
  %v10278 = vld [vmem:[%s9101 + $0x40] sm:$0xee]
  %v10279 = vld [vmem:[%s9101 + $0x50] sm:$0xee]
  %v10280 = vld [vmem:[%s9101 + $0x60] sm:$0xee]
  %v10281 = vld [vmem:[%s9101 + $0x70] sm:$0xee]
  %v10282 = vld [vmem:[%s9101 + $0x80] sm:$0xee]
  %v10283 = vld [vmem:[%s9101 + $0xb0] sm:$0xee]
  %v10284 = vld [vmem:[%s9101 + $0xc0] sm:$0xee]
  %v10285 = vld [vmem:[%s9101 + $0xd0] sm:$0xee]
  %v10286 = vld [vmem:[%s9101 + $0xe0] sm:$0xee]
  %v10287 = vld [vmem:[%s9101 + $0xf0] sm:$0xee]
  %v10288 = vld [vmem:[%s9101 + $0x100] sm:$0xee]
  %v10289 = vld [vmem:[%s9101 + $0x110] sm:$0xee]
  %v10290 = vld [vmem:[%s9101 + $0x120] sm:$0xee]
  %v10291 = vld [vmem:[%s9101 + $0x130] sm:$0xee]
  %v10328 = vrot.slane %v10274, 5
  %v10329 = vrot.slane %v10328, 4
  %v10330 = vrot.slane %v9563, 5
  %v10331 = vsel %vm1176, %v10329, %v10330
  %v10332 = vrot.slane %v10275, 5
  %v10333 = vrot.slane %v10332, 4
  %v10334 = vrot.slane %v9565, 5
  %v10335 = vsel %vm1176, %v10333, %v10334
  %v10336 = vrot.slane %v10276, 5
  %v10337 = vrot.slane %v10336, 4
  %v10338 = vrot.slane %v9567, 5
  %v10339 = vsel %vm1176, %v10337, %v10338
  %v10340 = vrot.slane %v10277, 5
  %v10341 = vrot.slane %v10340, 4
  %v10342 = vrot.slane %v9569, 5
  %v10343 = vsel %vm1176, %v10341, %v10342
  %v10344 = vrot.slane %v10278, 5
  %v10345 = vrot.slane %v10344, 4
  %v10346 = vrot.slane %v9571, 5
  %v10347 = vsel %vm1176, %v10345, %v10346
  %v10348 = vrot.slane %v10279, 5
  %v10349 = vrot.slane %v10348, 4
  %v10350 = vrot.slane %v9573, 5
  %v10351 = vsel %vm1176, %v10349, %v10350
  %v10352 = vrot.slane %v10280, 5
  %v10353 = vrot.slane %v10352, 4
  %v10354 = vrot.slane %v9575, 5
  %v10355 = vsel %vm1176, %v10353, %v10354
  %v10356 = vrot.slane %v10281, 5
  %v10357 = vrot.slane %v10356, 4
  %v10358 = vrot.slane %v9577, 5
  %v10359 = vsel %vm1176, %v10357, %v10358
  %v10360 = vrot.slane %v10282, 5
  %v10361 = vrot.slane %v10360, 4
  %v10362 = vrot.slane %v9579, 5
  %v10363 = vsel %vm1176, %v10361, %v10362
  %v10364 = vrot.slane %v10283, 5
  %v10365 = vrot.slane %v10364, 4
  %v10366 = vrot.slane %v9581, 5
  %v10367 = vsel %vm1176, %v10365, %v10366
  %v10368 = vrot.slane %v10284, 5
  %v10369 = vrot.slane %v10368, 4
  %v10370 = vrot.slane %v9583, 5
  %v10371 = vsel %vm1176, %v10369, %v10370
  %v10372 = vrot.slane %v10285, 5
  %v10373 = vrot.slane %v10372, 4
  %v10374 = vrot.slane %v9585, 5
  %v10375 = vsel %vm1176, %v10373, %v10374
  %v10376 = vrot.slane %v10286, 5
  %v10377 = vrot.slane %v10376, 4
  %v10378 = vrot.slane %v9587, 5
  %v10379 = vsel %vm1176, %v10377, %v10378
  %v10380 = vrot.slane %v10287, 5
  %v10381 = vrot.slane %v10380, 4
  %v10382 = vrot.slane %v9589, 5
  %v10383 = vsel %vm1176, %v10381, %v10382
  %v10384 = vrot.slane %v10288, 5
  %v10385 = vrot.slane %v10384, 4
  %v10386 = vrot.slane %v9591, 5
  %v10387 = vsel %vm1176, %v10385, %v10386
  %v10388 = vrot.slane %v10289, 5
  %v10389 = vrot.slane %v10388, 4
  %v10390 = vrot.slane %v9593, 5
  %v10391 = vsel %vm1176, %v10389, %v10390
  %v10392 = vrot.slane %v10290, 5
  %v10393 = vrot.slane %v10392, 4
  %v10394 = vrot.slane %v9595, 5
  %v10395 = vsel %vm1176, %v10393, %v10394
  %v10396 = vrot.slane %v10291, 5
  %v10397 = vrot.slane %v10396, 4
  %v10398 = vrot.slane %v9597, 5
  %v10399 = vsel %vm1176, %v10397, %v10398
  %s10400 = scalar_lea.vmem %s4, 2048
  %v10401 = vld [vmem:[%s10400] sm:$0xff]
  %v10402 = vld [vmem:[%s10400 + $0x8] sm:$0xff]
  %v10403 = vld [vmem:[%s10400 + $0x10] sm:$0xff]
  %v10404 = vld [vmem:[%s10400 + $0x18] sm:$0xff]
  %v10405 = vld [vmem:[%s10400 + $0x20] sm:$0xff]
  %v10406 = vld [vmem:[%s10400 + $0x28] sm:$0xff]
  %v10407 = vld [vmem:[%s10400 + $0x30] sm:$0xff]
  %v10408 = vld [vmem:[%s10400 + $0x38] sm:$0xff]
  %v10409 = vld [vmem:[%s10400 + $0x40] sm:$0xff]
  %v10410 = vld [vmem:[%s10400 + $0x48] sm:$0xff]
  %v10411 = vld [vmem:[%s10400 + $0x50] sm:$0xff]
  %v10412 = vld [vmem:[%s10400 + $0x58] sm:$0xff]
  %v10413 = vld [vmem:[%s10400 + $0x60] sm:$0xff]
  %v10414 = vld [vmem:[%s10400 + $0x68] sm:$0xff]
  %v10415 = vld [vmem:[%s10400 + $0x70] sm:$0xff]
  %v10416 = vld [vmem:[%s10400 + $0x78] sm:$0xff]
  %v10417 = vld [vmem:[%s10400 + $0x80] sm:$0xff]
  %v10418 = vld [vmem:[%s10400 + $0x88] sm:$0xff]
  %v10419 = vld [vmem:[%s10400 + $0x90] sm:$0xff]
  %v10420 = vld [vmem:[%s10400 + $0x98] sm:$0xff]
  %v10421 = vld [vmem:[%s10400 + $0xa0] sm:$0xff]
  %v10422 = vld [vmem:[%s10400 + $0xa8] sm:$0xff]
  %v10423 = vld [vmem:[%s10400 + $0xb0] sm:$0xff]
  %v10424 = vld [vmem:[%s10400 + $0xb8] sm:$0xff]
  %v10425 = vld [vmem:[%s10400 + $0xc0] sm:$0xff]
  %v10426 = vld [vmem:[%s10400 + $0xc8] sm:$0xff]
  %v10427 = vld [vmem:[%s10400 + $0xd0] sm:$0xff]
  %v10428 = vld [vmem:[%s10400 + $0xd8] sm:$0xff]
  %v10429 = vld [vmem:[%s10400 + $0xe0] sm:$0xff]
  %v10430 = vld [vmem:[%s10400 + $0xe8] sm:$0xff]
  %v10431 = vld [vmem:[%s10400 + $0xf0] sm:$0xff]
  %v10432 = vld [vmem:[%s10400 + $0xf8] sm:$0xff]
  %v10433 = vunpack.c.l.b16 %v10331
  %v10434 = vunpack.c.h.b16 %v10331
  %v10435 = vunpack.c.l.b16 %v10335
  %v10436 = vunpack.c.h.b16 %v10335
  %v10437 = vunpack.c.l.b16 %v10339
  %v10438 = vunpack.c.h.b16 %v10339
  %v10439 = vunpack.c.l.b16 %v10343
  %v10440 = vunpack.c.h.b16 %v10343
  %v10441 = vunpack.c.l.b16 %v10347
  %v10442 = vunpack.c.h.b16 %v10347
  %v10443 = vunpack.c.l.b16 %v10351
  %v10444 = vunpack.c.h.b16 %v10351
  %v10445 = vunpack.c.l.b16 %v10355
  %v10446 = vunpack.c.h.b16 %v10355
  %v10447 = vunpack.c.l.b16 %v10359
  %v10448 = vunpack.c.h.b16 %v10359
  %v10449 = vunpack.c.l.b16 %v10363
  %v10450 = vunpack.c.h.b16 %v10363
  %v10451 = vunpack.c.l.b16 %v10367
  %v10452 = vunpack.c.h.b16 %v10367
  %v10453 = vunpack.c.l.b16 %v10371
  %v10454 = vunpack.c.h.b16 %v10371
  %v10455 = vunpack.c.l.b16 %v10375
  %v10456 = vunpack.c.h.b16 %v10375
  %v10457 = vunpack.c.l.b16 %v10379
  %v10458 = vunpack.c.h.b16 %v10379
  %v10459 = vunpack.c.l.b16 %v10383
  %v10460 = vunpack.c.h.b16 %v10383
  %v10461 = vunpack.c.l.b16 %v10387
  %v10462 = vunpack.c.h.b16 %v10387
  %v10463 = vunpack.c.l.b16 %v10391
  %v10464 = vunpack.c.h.b16 %v10391
  %v10465 = vunpack.c.l.b16 %v10395
  %v10466 = vunpack.c.h.b16 %v10395
  %v10467 = vunpack.c.l.b16 %v10399
  %v10468 = vunpack.c.h.b16 %v10399
  %v10469 = vpack.c.b16 %v10435, %v10433
  %v10470 = vpack.c.b16 %v10436, %v10434
  %v10471 = vpack.c.b16 %v10439, %v10437
  %v10472 = vpack.c.b16 %v10440, %v10438
  %v10473 = vpack.c.b16 %v10443, %v10441
  %v10474 = vpack.c.b16 %v10444, %v10442
  %v10475 = vpack.c.b16 %v10447, %v10445
  %v10476 = vpack.c.b16 %v10448, %v10446
  %v10477 = vpack.c.b16 %v10451, %v10449
  %v10478 = vpack.c.b16 %v10452, %v10450
  %v10479 = vpack.c.b16 %v10455, %v10453
  %v10480 = vpack.c.b16 %v10456, %v10454
  %v10481 = vpack.c.b16 %v10459, %v10457
  %v10482 = vpack.c.b16 %v10460, %v10458
  %v10483 = vpack.c.b16 %v10463, %v10461
  %v10484 = vpack.c.b16 %v10464, %v10462
  %v10485 = vpack.c.b16 %v10467, %v10465
  %v10486 = vpack.c.b16 %v10468, %v10466
  %v10537 = vunpack.c.l.b16 %v10401
  %v10538 = vunpack.c.h.b16 %v10401
  %v10539 = vunpack.c.l.b16 %v10402
  %v10540 = vunpack.c.h.b16 %v10402
  %v10541 = vunpack.c.l.b16 %v10403
  %v10542 = vunpack.c.h.b16 %v10403
  %v10543 = vunpack.c.l.b16 %v10404
  %v10544 = vunpack.c.h.b16 %v10404
  %v10545 = vunpack.c.l.b16 %v10405
  %v10546 = vunpack.c.h.b16 %v10405
  %v10547 = vunpack.c.l.b16 %v10406
  %v10548 = vunpack.c.h.b16 %v10406
  %v10549 = vunpack.c.l.b16 %v10407
  %v10550 = vunpack.c.h.b16 %v10407
  %v10551 = vunpack.c.l.b16 %v10408
  %v10552 = vunpack.c.h.b16 %v10408
  %v10553 = vunpack.c.l.b16 %v10409
  %v10554 = vunpack.c.h.b16 %v10409
  %v10555 = vunpack.c.l.b16 %v10410
  %v10556 = vunpack.c.h.b16 %v10410
  %v10557 = vunpack.c.l.b16 %v10411
  %v10558 = vunpack.c.h.b16 %v10411
  %v10559 = vunpack.c.l.b16 %v10412
  %v10560 = vunpack.c.h.b16 %v10412
  %v10561 = vunpack.c.l.b16 %v10413
  %v10562 = vunpack.c.h.b16 %v10413
  %v10563 = vunpack.c.l.b16 %v10414
  %v10564 = vunpack.c.h.b16 %v10414
  %v10565 = vunpack.c.l.b16 %v10415
  %v10566 = vunpack.c.h.b16 %v10415
  %v10567 = vunpack.c.l.b16 %v10416
  %v10568 = vunpack.c.h.b16 %v10416
  %v10569 = vunpack.c.l.b16 %v10417
  %v10570 = vunpack.c.h.b16 %v10417
  %v10571 = vunpack.c.l.b16 %v10418
  %v10572 = vunpack.c.h.b16 %v10418
  %v10573 = vunpack.c.l.b16 %v10419
  %v10574 = vunpack.c.h.b16 %v10419
  %v10575 = vunpack.c.l.b16 %v10420
  %v10576 = vunpack.c.h.b16 %v10420
  %v10577 = vunpack.c.l.b16 %v10421
  %v10578 = vunpack.c.h.b16 %v10421
  %v10579 = vunpack.c.l.b16 %v10422
  %v10580 = vunpack.c.h.b16 %v10422
  %v10581 = vunpack.c.l.b16 %v10423
  %v10582 = vunpack.c.h.b16 %v10423
  %v10583 = vunpack.c.l.b16 %v10424
  %v10584 = vunpack.c.h.b16 %v10424
  %v10585 = vunpack.c.l.b16 %v10425
  %v10586 = vunpack.c.h.b16 %v10425
  %v10587 = vunpack.c.l.b16 %v10426
  %v10588 = vunpack.c.h.b16 %v10426
  %v10589 = vunpack.c.l.b16 %v10427
  %v10590 = vunpack.c.h.b16 %v10427
  %v10591 = vunpack.c.l.b16 %v10428
  %v10592 = vunpack.c.h.b16 %v10428
  %v10593 = vunpack.c.l.b16 %v10429
  %v10594 = vunpack.c.h.b16 %v10429
  %v10595 = vunpack.c.l.b16 %v10430
  %v10596 = vunpack.c.h.b16 %v10430
  %v10597 = vunpack.c.l.b16 %v10431
  %v10598 = vunpack.c.h.b16 %v10431
  %v10599 = vunpack.c.l.b16 %v10432
  %v10600 = vunpack.c.h.b16 %v10432
  %v10601 = vpack.c.b16 %v10539, %v10537
  %v10602 = vpack.c.b16 %v10540, %v10538
  %v10603 = vpack.c.b16 %v10543, %v10541
  %v10604 = vpack.c.b16 %v10544, %v10542
  %v10605 = vpack.c.b16 %v10547, %v10545
  %v10606 = vpack.c.b16 %v10548, %v10546
  %v10607 = vpack.c.b16 %v10551, %v10549
  %v10608 = vpack.c.b16 %v10552, %v10550
  %v10609 = vpack.c.b16 %v10555, %v10553
  %v10610 = vpack.c.b16 %v10556, %v10554
  %v10611 = vpack.c.b16 %v10559, %v10557
  %v10612 = vpack.c.b16 %v10560, %v10558
  %v10613 = vpack.c.b16 %v10563, %v10561
  %v10614 = vpack.c.b16 %v10564, %v10562
  %v10615 = vpack.c.b16 %v10567, %v10565
  %v10616 = vpack.c.b16 %v10568, %v10566
  %v10617 = vpack.c.b16 %v10571, %v10569
  %v10618 = vpack.c.b16 %v10572, %v10570
  %v10619 = vpack.c.b16 %v10575, %v10573
  %v10620 = vpack.c.b16 %v10576, %v10574
  %v10621 = vpack.c.b16 %v10579, %v10577
  %v10622 = vpack.c.b16 %v10580, %v10578
  %v10623 = vpack.c.b16 %v10583, %v10581
  %v10624 = vpack.c.b16 %v10584, %v10582
  %v10625 = vpack.c.b16 %v10587, %v10585
  %v10626 = vpack.c.b16 %v10588, %v10586
  %v10627 = vpack.c.b16 %v10591, %v10589
  %v10628 = vpack.c.b16 %v10592, %v10590
  %v10629 = vpack.c.b16 %v10595, %v10593
  %v10630 = vpack.c.b16 %v10596, %v10594
  %v10631 = vpack.c.b16 %v10599, %v10597
  %v10632 = vpack.c.b16 %v10600, %v10598
  %10665 = vmatprep.subr.bf16.mxu0 %v10602
  %10666 = vmatpush1.bf16.msra.mxu0 %v10601
  %10667 = vmatprep.subr.bf16.mxu0 %v10604
  %10668 = vmatpush1.bf16.msra.mxu0 %v10603
  %10669 = vmatprep.subr.bf16.mxu0 %v10606
  %10670 = vmatpush1.bf16.msra.mxu0 %v10605
  %10671 = vmatprep.subr.bf16.mxu0 %v10608
  %10672 = vmatpush1.bf16.msra.mxu0 %v10607
  %10673 = vmatprep.subr.bf16.mxu0 %v10610
  %10674 = vmatpush1.bf16.msra.mxu0 %v10609
  %10675 = vmatprep.subr.bf16.mxu0 %v10612
  %10676 = vmatpush1.bf16.msra.mxu0 %v10611
  %10677 = vmatprep.subr.bf16.mxu0 %v10614
  %10678 = vmatpush1.bf16.msra.mxu0 %v10613
  %10679 = vmatprep.subr.bf16.mxu0 %v10616
  %10680 = vmatpush1.bf16.msra.mxu0 %v10615
  %10681 = vmatprep.subr.bf16.mxu0 %v10618
  %10682 = vmatpush1.bf16.msra.mxu0 %v10617
  %10683 = vmatprep.subr.bf16.mxu0 %v10620
  %10684 = vmatpush1.bf16.msra.mxu0 %v10619
  %10685 = vmatprep.subr.bf16.mxu0 %v10622
  %10686 = vmatpush1.bf16.msra.mxu0 %v10621
  %10687 = vmatprep.subr.bf16.mxu0 %v10624
  %10688 = vmatpush1.bf16.msra.mxu0 %v10623
  %10689 = vmatprep.subr.bf16.mxu0 %v10626
  %10690 = vmatpush1.bf16.msra.mxu0 %v10625
  %10691 = vmatprep.subr.bf16.mxu0 %v10628
  %10692 = vmatpush1.bf16.msra.mxu0 %v10627
  %10693 = vmatprep.subr.bf16.mxu0 %v10630
  %10694 = vmatpush1.bf16.msra.mxu0 %v10629
  %10695 = vmatprep.subr.bf16.mxu0 %v10632
  %10696 = vmatpush1.bf16.msra.mxu0 %v10631
  %10697 = vmatprep.mubr.bf16.mxu0 %v10470
  %10698 = vmatmul.mubr.bf16.gmra.mrb[0].mxu0 %v10469
  %v10699 = vpop.f32.mrb[0].mxu0
  %v10700 = vadd.f32 0.0, %v10699
  %v10701 = vpop.f32.mrb[0].mxu0
  %v10702 = vadd.f32 0.0, %v10701
  %v10703 = vpop.f32.mrb[0].mxu0
  %v10704 = vadd.f32 0.0, %v10703
  %v10705 = vpop.f32.mrb[0].mxu0
  %v10706 = vadd.f32 0.0, %v10705
  %10707 = vmatprep.mubr.bf16.mxu0 %v10472
  %10708 = vmatmul.mubr.bf16.gmra.mrb[0].mxu0 %v10471
  %v10709 = vpop.f32.mrb[0].mxu0
  %v10710 = vadd.f32 0.0, %v10709
  %v10711 = vpop.f32.mrb[0].mxu0
  %v10712 = vadd.f32 0.0, %v10711
  %v10713 = vpop.f32.mrb[0].mxu0
  %v10714 = vadd.f32 0.0, %v10713
  %v10715 = vpop.f32.mrb[0].mxu0
  %v10716 = vadd.f32 0.0, %v10715
  %10717 = vmatprep.mubr.bf16.mxu0 %v10474
  %10718 = vmatmul.mubr.bf16.gmra.mrb[0].mxu0 %v10473
  %v10719 = vpop.f32.mrb[0].mxu0
  %v10720 = vadd.f32 0.0, %v10719
  %v10721 = vpop.f32.mrb[0].mxu0
  %v10722 = vadd.f32 0.0, %v10721
  %v10723 = vpop.f32.mrb[0].mxu0
  %v10724 = vadd.f32 0.0, %v10723
  %v10725 = vpop.f32.mrb[0].mxu0
  %v10726 = vadd.f32 0.0, %v10725
  %10727 = vmatprep.mubr.bf16.mxu0 %v10476
  %10728 = vmatmul.mubr.bf16.gmra.mrb[0].mxu0 %v10475
  %v10729 = vpop.f32.mrb[0].mxu0
  %v10730 = vadd.f32 0.0, %v10729
  %v10731 = vpop.f32.mrb[0].mxu0
  %v10732 = vadd.f32 0.0, %v10731
  %v10733 = vpop.f32.mrb[0].mxu0
  %v10734 = vadd.f32 0.0, %v10733
  %v10735 = vpop.f32.mrb[0].mxu0
  %v10736 = vadd.f32 0.0, %v10735
  %10737 = vmatprep.mubr.bf16.mxu0 %v10478
  %10738 = vmatmul.mubr.bf16.gmra.mrb[0].mxu0 %v10477
  %v10739 = vpop.f32.mrb[0].mxu0
  %v10740 = vadd.f32 0.0, %v10739
  %v10741 = vpop.f32.mrb[0].mxu0
  %v10742 = vadd.f32 0.0, %v10741
  %v10743 = vpop.f32.mrb[0].mxu0
  %v10744 = vadd.f32 0.0, %v10743
  %v10745 = vpop.f32.mrb[0].mxu0
  %v10746 = vadd.f32 0.0, %v10745
  %10747 = vmatprep.mubr.bf16.mxu0 %v10480
  %10748 = vmatmul.mubr.bf16.gmra.mrb[0].mxu0 %v10479
  %v10749 = vpop.f32.mrb[0].mxu0
  %v10750 = vadd.f32 0.0, %v10749
  %v10751 = vpop.f32.mrb[0].mxu0
  %v10752 = vadd.f32 0.0, %v10751
  %v10753 = vpop.f32.mrb[0].mxu0
  %v10754 = vadd.f32 0.0, %v10753
  %v10755 = vpop.f32.mrb[0].mxu0
  %v10756 = vadd.f32 0.0, %v10755
  %10757 = vmatprep.mubr.bf16.mxu0 %v10482
  %10758 = vmatmul.mubr.bf16.gmra.mrb[0].mxu0 %v10481
  %v10759 = vpop.f32.mrb[0].mxu0
  %v10760 = vadd.f32 0.0, %v10759
  %v10761 = vpop.f32.mrb[0].mxu0
  %v10762 = vadd.f32 0.0, %v10761
  %v10763 = vpop.f32.mrb[0].mxu0
  %v10764 = vadd.f32 0.0, %v10763
  %v10765 = vpop.f32.mrb[0].mxu0
  %v10766 = vadd.f32 0.0, %v10765
  %10767 = vmatprep.mubr.bf16.mxu0 %v10484
  %10768 = vmatmul.mubr.bf16.gmra.mrb[0].mxu0 %v10483
  %v10769 = vpop.f32.mrb[0].mxu0
  %v10770 = vadd.f32 0.0, %v10769
  %v10771 = vpop.f32.mrb[0].mxu0
  %v10772 = vadd.f32 0.0, %v10771
  %v10773 = vpop.f32.mrb[0].mxu0
  %v10774 = vadd.f32 0.0, %v10773
  %v10775 = vpop.f32.mrb[0].mxu0
  %v10776 = vadd.f32 0.0, %v10775
  %10777 = vmatprep.mubr.bf16.mxu0 %v10486
  %10778 = vmatmul.mubr.bf16.gmra.mrb[0].mxu0 %v10485
  %v10779 = vpop.f32.mrb[0].mxu0
  %v10780 = vadd.f32 0.0, %v10779
  %v10781 = vpop.f32.mrb[0].mxu0
  %v10782 = vadd.f32 0.0, %v10781
  %v10783 = vpop.f32.mrb[0].mxu0
  %v10784 = vadd.f32 0.0, %v10783
  %v10785 = vpop.f32.mrb[0].mxu0
  %v10786 = vadd.f32 0.0, %v10785
  %10787 = vdwg.mxu0
  %v10788 = vadd.f32 %v10238, %v10700
  %v10789 = vadd.f32 %v10239, %v10702
  %v10790 = vadd.f32 %v10240, %v10704
  %v10791 = vadd.f32 %v10241, %v10706
  %v10792 = vadd.f32 %v10242, %v10710
  %v10793 = vadd.f32 %v10243, %v10712
  %v10794 = vadd.f32 %v10244, %v10714
  %v10795 = vadd.f32 %v10245, %v10716
  %v10796 = vadd.f32 %v10246, %v10720
  %v10797 = vadd.f32 %v10247, %v10722
  %v10798 = vadd.f32 %v10248, %v10724
  %v10799 = vadd.f32 %v10249, %v10726
  %v10800 = vadd.f32 %v10250, %v10730
  %v10801 = vadd.f32 %v10251, %v10732
  %v10802 = vadd.f32 %v10252, %v10734
  %v10803 = vadd.f32 %v10253, %v10736
  %v10804 = vadd.f32 %v10254, %v10740
  %v10805 = vadd.f32 %v10255, %v10742
  %v10806 = vadd.f32 %v10256, %v10744
  %v10807 = vadd.f32 %v10257, %v10746
  %v10808 = vadd.f32 %v10258, %v10750
  %v10809 = vadd.f32 %v10259, %v10752
  %v10810 = vadd.f32 %v10260, %v10754
  %v10811 = vadd.f32 %v10261, %v10756
  %v10812 = vadd.f32 %v10262, %v10760
  %v10813 = vadd.f32 %v10263, %v10762
  %v10814 = vadd.f32 %v10264, %v10764
  %v10815 = vadd.f32 %v10265, %v10766
  %v10816 = vadd.f32 %v10266, %v10770
  %v10817 = vadd.f32 %v10267, %v10772
  %v10818 = vadd.f32 %v10268, %v10774
  %v10819 = vadd.f32 %v10269, %v10776
  %v10820 = vadd.f32 %v10270, %v10780
  %v10821 = vadd.f32 %v10271, %v10782
  %v10822 = vadd.f32 %v10272, %v10784
  %v10823 = vadd.f32 %v10273, %v10786
  %v10824 = vrot.slane %v10788, 4
  %v10825 = vadd.f32 %v10788, %v10824
  %v10826 = vrot.slane %v10825, 2
  %v10827 = vadd.f32 %v10825, %v10826
  %v10828 = vrot.slane %v10827, 1
  %v10829 = vadd.f32 %v10827, %v10828
  %v10830 = vrot.slane %v10789, 4
  %v10831 = vadd.f32 %v10789, %v10830
  %v10832 = vrot.slane %v10831, 2
  %v10833 = vadd.f32 %v10831, %v10832
  %v10834 = vrot.slane %v10833, 1
  %v10835 = vadd.f32 %v10833, %v10834
  %v10836 = vrot.slane %v10790, 4
  %v10837 = vadd.f32 %v10790, %v10836
  %v10838 = vrot.slane %v10837, 2
  %v10839 = vadd.f32 %v10837, %v10838
  %v10840 = vrot.slane %v10839, 1
  %v10841 = vadd.f32 %v10839, %v10840
  %v10842 = vrot.slane %v10791, 4
  %v10843 = vadd.f32 %v10791, %v10842
  %v10844 = vrot.slane %v10843, 2
  %v10845 = vadd.f32 %v10843, %v10844
  %v10846 = vrot.slane %v10845, 1
  %v10847 = vadd.f32 %v10845, %v10846
  %v10848 = vrot.slane %v10792, 4
  %v10849 = vadd.f32 %v10792, %v10848
  %v10850 = vrot.slane %v10849, 2
  %v10851 = vadd.f32 %v10849, %v10850
  %v10852 = vrot.slane %v10851, 1
  %v10853 = vadd.f32 %v10851, %v10852
  %v10854 = vrot.slane %v10793, 4
  %v10855 = vadd.f32 %v10793, %v10854
  %v10856 = vrot.slane %v10855, 2
  %v10857 = vadd.f32 %v10855, %v10856
  %v10858 = vrot.slane %v10857, 1
  %v10859 = vadd.f32 %v10857, %v10858
  %v10860 = vrot.slane %v10794, 4
  %v10861 = vadd.f32 %v10794, %v10860
  %v10862 = vrot.slane %v10861, 2
  %v10863 = vadd.f32 %v10861, %v10862
  %v10864 = vrot.slane %v10863, 1
  %v10865 = vadd.f32 %v10863, %v10864
  %v10866 = vrot.slane %v10795, 4
  %v10867 = vadd.f32 %v10795, %v10866
  %v10868 = vrot.slane %v10867, 2
  %v10869 = vadd.f32 %v10867, %v10868
  %v10870 = vrot.slane %v10869, 1
  %v10871 = vadd.f32 %v10869, %v10870
  %v10872 = vrot.slane %v10796, 4
  %v10873 = vadd.f32 %v10796, %v10872
  %v10874 = vrot.slane %v10873, 2
  %v10875 = vadd.f32 %v10873, %v10874
  %v10876 = vrot.slane %v10875, 1
  %v10877 = vadd.f32 %v10875, %v10876
  %v10878 = vrot.slane %v10797, 4
  %v10879 = vadd.f32 %v10797, %v10878
  %v10880 = vrot.slane %v10879, 2
  %v10881 = vadd.f32 %v10879, %v10880
  %v10882 = vrot.slane %v10881, 1
  %v10883 = vadd.f32 %v10881, %v10882
  %v10884 = vrot.slane %v10798, 4
  %v10885 = vadd.f32 %v10798, %v10884
  %v10886 = vrot.slane %v10885, 2
  %v10887 = vadd.f32 %v10885, %v10886
  %v10888 = vrot.slane %v10887, 1
  %v10889 = vadd.f32 %v10887, %v10888
  %v10890 = vrot.slane %v10799, 4
  %v10891 = vadd.f32 %v10799, %v10890
  %v10892 = vrot.slane %v10891, 2
  %v10893 = vadd.f32 %v10891, %v10892
  %v10894 = vrot.slane %v10893, 1
  %v10895 = vadd.f32 %v10893, %v10894
  %v10896 = vrot.slane %v10800, 4
  %v10897 = vadd.f32 %v10800, %v10896
  %v10898 = vrot.slane %v10897, 2
  %v10899 = vadd.f32 %v10897, %v10898
  %v10900 = vrot.slane %v10899, 1
  %v10901 = vadd.f32 %v10899, %v10900
  %v10902 = vrot.slane %v10801, 4
  %v10903 = vadd.f32 %v10801, %v10902
  %v10904 = vrot.slane %v10903, 2
  %v10905 = vadd.f32 %v10903, %v10904
  %v10906 = vrot.slane %v10905, 1
  %v10907 = vadd.f32 %v10905, %v10906
  %v10908 = vrot.slane %v10802, 4
  %v10909 = vadd.f32 %v10802, %v10908
  %v10910 = vrot.slane %v10909, 2
  %v10911 = vadd.f32 %v10909, %v10910
  %v10912 = vrot.slane %v10911, 1
  %v10913 = vadd.f32 %v10911, %v10912
  %v10914 = vrot.slane %v10803, 4
  %v10915 = vadd.f32 %v10803, %v10914
  %v10916 = vrot.slane %v10915, 2
  %v10917 = vadd.f32 %v10915, %v10916
  %v10918 = vrot.slane %v10917, 1
  %v10919 = vadd.f32 %v10917, %v10918
  %v10920 = vrot.slane %v10804, 4
  %v10921 = vadd.f32 %v10804, %v10920
  %v10922 = vrot.slane %v10921, 2
  %v10923 = vadd.f32 %v10921, %v10922
  %v10924 = vrot.slane %v10923, 1
  %v10925 = vadd.f32 %v10923, %v10924
  %v10926 = vrot.slane %v10805, 4
  %v10927 = vadd.f32 %v10805, %v10926
  %v10928 = vrot.slane %v10927, 2
  %v10929 = vadd.f32 %v10927, %v10928
  %v10930 = vrot.slane %v10929, 1
  %v10931 = vadd.f32 %v10929, %v10930
  %v10932 = vrot.slane %v10806, 4
  %v10933 = vadd.f32 %v10806, %v10932
  %v10934 = vrot.slane %v10933, 2
  %v10935 = vadd.f32 %v10933, %v10934
  %v10936 = vrot.slane %v10935, 1
  %v10937 = vadd.f32 %v10935, %v10936
  %v10938 = vrot.slane %v10807, 4
  %v10939 = vadd.f32 %v10807, %v10938
  %v10940 = vrot.slane %v10939, 2
  %v10941 = vadd.f32 %v10939, %v10940
  %v10942 = vrot.slane %v10941, 1
  %v10943 = vadd.f32 %v10941, %v10942
  %v10944 = vrot.slane %v10808, 4
  %v10945 = vadd.f32 %v10808, %v10944
  %v10946 = vrot.slane %v10945, 2
  %v10947 = vadd.f32 %v10945, %v10946
  %v10948 = vrot.slane %v10947, 1
  %v10949 = vadd.f32 %v10947, %v10948
  %v10950 = vrot.slane %v10809, 4
  %v10951 = vadd.f32 %v10809, %v10950
  %v10952 = vrot.slane %v10951, 2
  %v10953 = vadd.f32 %v10951, %v10952
  %v10954 = vrot.slane %v10953, 1
  %v10955 = vadd.f32 %v10953, %v10954
  %v10956 = vrot.slane %v10810, 4
  %v10957 = vadd.f32 %v10810, %v10956
  %v10958 = vrot.slane %v10957, 2
  %v10959 = vadd.f32 %v10957, %v10958
  %v10960 = vrot.slane %v10959, 1
  %v10961 = vadd.f32 %v10959, %v10960
  %v10962 = vrot.slane %v10811, 4
  %v10963 = vadd.f32 %v10811, %v10962
  %v10964 = vrot.slane %v10963, 2
  %v10965 = vadd.f32 %v10963, %v10964
  %v10966 = vrot.slane %v10965, 1
  %v10967 = vadd.f32 %v10965, %v10966
  %v10968 = vrot.slane %v10812, 4
  %v10969 = vadd.f32 %v10812, %v10968
  %v10970 = vrot.slane %v10969, 2
  %v10971 = vadd.f32 %v10969, %v10970
  %v10972 = vrot.slane %v10971, 1
  %v10973 = vadd.f32 %v10971, %v10972
  %v10974 = vrot.slane %v10813, 4
  %v10975 = vadd.f32 %v10813, %v10974
  %v10976 = vrot.slane %v10975, 2
  %v10977 = vadd.f32 %v10975, %v10976
  %v10978 = vrot.slane %v10977, 1
  %v10979 = vadd.f32 %v10977, %v10978
  %v10980 = vrot.slane %v10814, 4
  %v10981 = vadd.f32 %v10814, %v10980
  %v10982 = vrot.slane %v10981, 2
  %v10983 = vadd.f32 %v10981, %v10982
  %v10984 = vrot.slane %v10983, 1
  %v10985 = vadd.f32 %v10983, %v10984
  %v10986 = vrot.slane %v10815, 4
  %v10987 = vadd.f32 %v10815, %v10986
  %v10988 = vrot.slane %v10987, 2
  %v10989 = vadd.f32 %v10987, %v10988
  %v10990 = vrot.slane %v10989, 1
  %v10991 = vadd.f32 %v10989, %v10990
  %v10992 = vrot.slane %v10816, 4
  %v10993 = vadd.f32 %v10816, %v10992
  %v10994 = vrot.slane %v10993, 2
  %v10995 = vadd.f32 %v10993, %v10994
  %v10996 = vrot.slane %v10995, 1
  %v10997 = vadd.f32 %v10995, %v10996
  %v10998 = vrot.slane %v10817, 4
  %v10999 = vadd.f32 %v10817, %v10998
  %v11000 = vrot.slane %v10999, 2
  %v11001 = vadd.f32 %v10999, %v11000
  %v11002 = vrot.slane %v11001, 1
  %v11003 = vadd.f32 %v11001, %v11002
  %v11004 = vrot.slane %v10818, 4
  %v11005 = vadd.f32 %v10818, %v11004
  %v11006 = vrot.slane %v11005, 2
  %v11007 = vadd.f32 %v11005, %v11006
  %v11008 = vrot.slane %v11007, 1
  %v11009 = vadd.f32 %v11007, %v11008
  %v11010 = vrot.slane %v10819, 4
  %v11011 = vadd.f32 %v10819, %v11010
  %v11012 = vrot.slane %v11011, 2
  %v11013 = vadd.f32 %v11011, %v11012
  %v11014 = vrot.slane %v11013, 1
  %v11015 = vadd.f32 %v11013, %v11014
  %v11016 = vrot.slane %v10820, 4
  %v11017 = vadd.f32 %v10820, %v11016
  %v11018 = vrot.slane %v11017, 2
  %v11019 = vadd.f32 %v11017, %v11018
  %v11020 = vrot.slane %v11019, 1
  %v11021 = vadd.f32 %v11019, %v11020
  %v11022 = vrot.slane %v10821, 4
  %v11023 = vadd.f32 %v10821, %v11022
  %v11024 = vrot.slane %v11023, 2
  %v11025 = vadd.f32 %v11023, %v11024
  %v11026 = vrot.slane %v11025, 1
  %v11027 = vadd.f32 %v11025, %v11026
  %v11028 = vrot.slane %v10822, 4
  %v11029 = vadd.f32 %v10822, %v11028
  %v11030 = vrot.slane %v11029, 2
  %v11031 = vadd.f32 %v11029, %v11030
  %v11032 = vrot.slane %v11031, 1
  %v11033 = vadd.f32 %v11031, %v11032
  %v11034 = vrot.slane %v10823, 4
  %v11035 = vadd.f32 %v10823, %v11034
  %v11036 = vrot.slane %v11035, 2
  %v11037 = vadd.f32 %v11035, %v11036
  %v11038 = vrot.slane %v11037, 1
  %v11039 = vadd.f32 %v11037, %v11038
  %11058 = vrot.lane.b32.xlu0 %v10829, 96
  %v11059 = vpop.permute.xlu0 %11058
  %11060 = vrot.lane.b32.xlu0 %v10841, 96
  %v11061 = vpop.permute.xlu0 %11060
  %11062 = vrot.lane.b32.xlu0 %v10853, 96
  %v11063 = vpop.permute.xlu0 %11062
  %11064 = vrot.lane.b32.xlu0 %v10865, 96
  %v11065 = vpop.permute.xlu0 %11064
  %11066 = vrot.lane.b32.xlu0 %v10877, 96
  %v11067 = vpop.permute.xlu0 %11066
  %11068 = vrot.lane.b32.xlu0 %v10889, 96
  %v11069 = vpop.permute.xlu0 %11068
  %11070 = vrot.lane.b32.xlu0 %v10901, 96
  %v11071 = vpop.permute.xlu0 %11070
  %11072 = vrot.lane.b32.xlu0 %v10913, 96
  %v11073 = vpop.permute.xlu0 %11072
  %11074 = vrot.lane.b32.xlu0 %v10925, 96
  %v11075 = vpop.permute.xlu0 %11074
  %11076 = vrot.lane.b32.xlu0 %v10937, 96
  %v11077 = vpop.permute.xlu0 %11076
  %11078 = vrot.lane.b32.xlu0 %v10949, 96
  %v11079 = vpop.permute.xlu0 %11078
  %11080 = vrot.lane.b32.xlu0 %v10961, 96
  %v11081 = vpop.permute.xlu0 %11080
  %11082 = vrot.lane.b32.xlu0 %v10973, 96
  %v11083 = vpop.permute.xlu0 %11082
  %11084 = vrot.lane.b32.xlu0 %v10985, 96
  %v11085 = vpop.permute.xlu0 %11084
  %11086 = vrot.lane.b32.xlu0 %v10997, 96
  %v11087 = vpop.permute.xlu0 %11086
  %11088 = vrot.lane.b32.xlu0 %v11009, 96
  %v11089 = vpop.permute.xlu0 %11088
  %11090 = vrot.lane.b32.xlu0 %v11021, 96
  %v11091 = vpop.permute.xlu0 %11090
  %11092 = vrot.lane.b32.xlu0 %v11033, 96
  %v11093 = vpop.permute.xlu0 %11092
  %v11112 = vadd.f32 %v10829, %v11059
  %v11113 = vadd.f32 %v10841, %v11061
  %v11114 = vadd.f32 %v10853, %v11063
  %v11115 = vadd.f32 %v10865, %v11065
  %v11116 = vadd.f32 %v10877, %v11067
  %v11117 = vadd.f32 %v10889, %v11069
  %v11118 = vadd.f32 %v10901, %v11071
  %v11119 = vadd.f32 %v10913, %v11073
  %v11120 = vadd.f32 %v10925, %v11075
  %v11121 = vadd.f32 %v10937, %v11077
  %v11122 = vadd.f32 %v10949, %v11079
  %v11123 = vadd.f32 %v10961, %v11081
  %v11124 = vadd.f32 %v10973, %v11083
  %v11125 = vadd.f32 %v10985, %v11085
  %v11126 = vadd.f32 %v10997, %v11087
  %v11127 = vadd.f32 %v11009, %v11089
  %v11128 = vadd.f32 %v11021, %v11091
  %v11129 = vadd.f32 %v11033, %v11093
  %11130 = vrot.lane.b32.xlu0 %v10829, 64
  %v11131 = vpop.permute.xlu0 %11130
  %11132 = vrot.lane.b32.xlu0 %v10841, 64
  %v11133 = vpop.permute.xlu0 %11132
  %11134 = vrot.lane.b32.xlu0 %v10853, 64
  %v11135 = vpop.permute.xlu0 %11134
  %11136 = vrot.lane.b32.xlu0 %v10865, 64
  %v11137 = vpop.permute.xlu0 %11136
  %11138 = vrot.lane.b32.xlu0 %v10877, 64
  %v11139 = vpop.permute.xlu0 %11138
  %11140 = vrot.lane.b32.xlu0 %v10889, 64
  %v11141 = vpop.permute.xlu0 %11140
  %11142 = vrot.lane.b32.xlu0 %v10901, 64
  %v11143 = vpop.permute.xlu0 %11142
  %11144 = vrot.lane.b32.xlu0 %v10913, 64
  %v11145 = vpop.permute.xlu0 %11144
  %11146 = vrot.lane.b32.xlu0 %v10925, 64
  %v11147 = vpop.permute.xlu0 %11146
  %11148 = vrot.lane.b32.xlu0 %v10937, 64
  %v11149 = vpop.permute.xlu0 %11148
  %11150 = vrot.lane.b32.xlu0 %v10949, 64
  %v11151 = vpop.permute.xlu0 %11150
  %11152 = vrot.lane.b32.xlu0 %v10961, 64
  %v11153 = vpop.permute.xlu0 %11152
  %11154 = vrot.lane.b32.xlu0 %v10973, 64
  %v11155 = vpop.permute.xlu0 %11154
  %11156 = vrot.lane.b32.xlu0 %v10985, 64
  %v11157 = vpop.permute.xlu0 %11156
  %11158 = vrot.lane.b32.xlu0 %v10997, 64
  %v11159 = vpop.permute.xlu0 %11158
  %11160 = vrot.lane.b32.xlu0 %v11009, 64
  %v11161 = vpop.permute.xlu0 %11160
  %11162 = vrot.lane.b32.xlu0 %v11021, 64
  %v11163 = vpop.permute.xlu0 %11162
  %11164 = vrot.lane.b32.xlu0 %v11033, 64
  %v11165 = vpop.permute.xlu0 %11164
  %v11184 = vadd.f32 %v11112, %v11131
  %v11185 = vadd.f32 %v11113, %v11133
  %v11186 = vadd.f32 %v11114, %v11135
  %v11187 = vadd.f32 %v11115, %v11137
  %v11188 = vadd.f32 %v11116, %v11139
  %v11189 = vadd.f32 %v11117, %v11141
  %v11190 = vadd.f32 %v11118, %v11143
  %v11191 = vadd.f32 %v11119, %v11145
  %v11192 = vadd.f32 %v11120, %v11147
  %v11193 = vadd.f32 %v11121, %v11149
  %v11194 = vadd.f32 %v11122, %v11151
  %v11195 = vadd.f32 %v11123, %v11153
  %v11196 = vadd.f32 %v11124, %v11155
  %v11197 = vadd.f32 %v11125, %v11157
  %v11198 = vadd.f32 %v11126, %v11159
  %v11199 = vadd.f32 %v11127, %v11161
  %v11200 = vadd.f32 %v11128, %v11163
  %v11201 = vadd.f32 %v11129, %v11165
  %11202 = vrot.lane.b32.xlu0 %v10829, 32
  %v11203 = vpop.permute.xlu0 %11202
  %11204 = vrot.lane.b32.xlu0 %v10841, 32
  %v11205 = vpop.permute.xlu0 %11204
  %11206 = vrot.lane.b32.xlu0 %v10853, 32
  %v11207 = vpop.permute.xlu0 %11206
  %11208 = vrot.lane.b32.xlu0 %v10865, 32
  %v11209 = vpop.permute.xlu0 %11208
  %11210 = vrot.lane.b32.xlu0 %v10877, 32
  %v11211 = vpop.permute.xlu0 %11210
  %11212 = vrot.lane.b32.xlu0 %v10889, 32
  %v11213 = vpop.permute.xlu0 %11212
  %11214 = vrot.lane.b32.xlu0 %v10901, 32
  %v11215 = vpop.permute.xlu0 %11214
  %11216 = vrot.lane.b32.xlu0 %v10913, 32
  %v11217 = vpop.permute.xlu0 %11216
  %11218 = vrot.lane.b32.xlu0 %v10925, 32
  %v11219 = vpop.permute.xlu0 %11218
  %11220 = vrot.lane.b32.xlu0 %v10937, 32
  %v11221 = vpop.permute.xlu0 %11220
  %11222 = vrot.lane.b32.xlu0 %v10949, 32
  %v11223 = vpop.permute.xlu0 %11222
  %11224 = vrot.lane.b32.xlu0 %v10961, 32
  %v11225 = vpop.permute.xlu0 %11224
  %11226 = vrot.lane.b32.xlu0 %v10973, 32
  %v11227 = vpop.permute.xlu0 %11226
  %11228 = vrot.lane.b32.xlu0 %v10985, 32
  %v11229 = vpop.permute.xlu0 %11228
  %11230 = vrot.lane.b32.xlu0 %v10997, 32
  %v11231 = vpop.permute.xlu0 %11230
  %11232 = vrot.lane.b32.xlu0 %v11009, 32
  %v11233 = vpop.permute.xlu0 %11232
  %11234 = vrot.lane.b32.xlu0 %v11021, 32
  %v11235 = vpop.permute.xlu0 %11234
  %11236 = vrot.lane.b32.xlu0 %v11033, 32
  %v11237 = vpop.permute.xlu0 %11236
  %v11256 = vadd.f32 %v11184, %v11203
  %v11257 = vadd.f32 %v11185, %v11205
  %v11258 = vadd.f32 %v11186, %v11207
  %v11259 = vadd.f32 %v11187, %v11209
  %v11260 = vadd.f32 %v11188, %v11211
  %v11261 = vadd.f32 %v11189, %v11213
  %v11262 = vadd.f32 %v11190, %v11215
  %v11263 = vadd.f32 %v11191, %v11217
  %v11264 = vadd.f32 %v11192, %v11219
  %v11265 = vadd.f32 %v11193, %v11221
  %v11266 = vadd.f32 %v11194, %v11223
  %v11267 = vadd.f32 %v11195, %v11225
  %v11268 = vadd.f32 %v11196, %v11227
  %v11269 = vadd.f32 %v11197, %v11229
  %v11270 = vadd.f32 %v11198, %v11231
  %v11271 = vadd.f32 %v11199, %v11233
  %v11272 = vadd.f32 %v11200, %v11235
  %v11273 = vadd.f32 %v11201, %v11237
  %v11274 = vadd.f32 %v11256, %v10835
  %v11275 = vadd.f32 %v11257, %v10847
  %v11276 = vadd.f32 %v11258, %v10859
  %v11277 = vadd.f32 %v11259, %v10871
  %v11278 = vadd.f32 %v11260, %v10883
  %v11279 = vadd.f32 %v11261, %v10895
  %v11280 = vadd.f32 %v11262, %v10907
  %v11281 = vadd.f32 %v11263, %v10919
  %v11282 = vadd.f32 %v11264, %v10931
  %v11283 = vadd.f32 %v11265, %v10943
  %v11284 = vadd.f32 %v11266, %v10955
  %v11285 = vadd.f32 %v11267, %v10967
  %v11286 = vadd.f32 %v11268, %v10979
  %v11287 = vadd.f32 %v11269, %v10991
  %v11288 = vadd.f32 %v11270, %v11003
  %v11289 = vadd.f32 %v11271, %v11015
  %v11290 = vadd.f32 %v11272, %v11027
  %v11291 = vadd.f32 %v11273, %v11039
  %11310 = vrot.lane.b32.xlu0 %v10835, 96
  %v11311 = vpop.permute.xlu0 %11310
  %11312 = vrot.lane.b32.xlu0 %v10847, 96
  %v11313 = vpop.permute.xlu0 %11312
  %11314 = vrot.lane.b32.xlu0 %v10859, 96
  %v11315 = vpop.permute.xlu0 %11314
  %11316 = vrot.lane.b32.xlu0 %v10871, 96
  %v11317 = vpop.permute.xlu0 %11316
  %11318 = vrot.lane.b32.xlu0 %v10883, 96
  %v11319 = vpop.permute.xlu0 %11318
  %11320 = vrot.lane.b32.xlu0 %v10895, 96
  %v11321 = vpop.permute.xlu0 %11320
  %11322 = vrot.lane.b32.xlu0 %v10907, 96
  %v11323 = vpop.permute.xlu0 %11322
  %11324 = vrot.lane.b32.xlu0 %v10919, 96
  %v11325 = vpop.permute.xlu0 %11324
  %11326 = vrot.lane.b32.xlu0 %v10931, 96
  %v11327 = vpop.permute.xlu0 %11326
  %11328 = vrot.lane.b32.xlu0 %v10943, 96
  %v11329 = vpop.permute.xlu0 %11328
  %11330 = vrot.lane.b32.xlu0 %v10955, 96
  %v11331 = vpop.permute.xlu0 %11330
  %11332 = vrot.lane.b32.xlu0 %v10967, 96
  %v11333 = vpop.permute.xlu0 %11332
  %11334 = vrot.lane.b32.xlu0 %v10979, 96
  %v11335 = vpop.permute.xlu0 %11334
  %11336 = vrot.lane.b32.xlu0 %v10991, 96
  %v11337 = vpop.permute.xlu0 %11336
  %11338 = vrot.lane.b32.xlu0 %v11003, 96
  %v11339 = vpop.permute.xlu0 %11338
  %11340 = vrot.lane.b32.xlu0 %v11015, 96
  %v11341 = vpop.permute.xlu0 %11340
  %11342 = vrot.lane.b32.xlu0 %v11027, 96
  %v11343 = vpop.permute.xlu0 %11342
  %11344 = vrot.lane.b32.xlu0 %v11039, 96
  %v11345 = vpop.permute.xlu0 %11344
  %v11364 = vadd.f32 %v11274, %v11311
  %v11365 = vadd.f32 %v11275, %v11313
  %v11366 = vadd.f32 %v11276, %v11315
  %v11367 = vadd.f32 %v11277, %v11317
  %v11368 = vadd.f32 %v11278, %v11319
  %v11369 = vadd.f32 %v11279, %v11321
  %v11370 = vadd.f32 %v11280, %v11323
  %v11371 = vadd.f32 %v11281, %v11325
  %v11372 = vadd.f32 %v11282, %v11327
  %v11373 = vadd.f32 %v11283, %v11329
  %v11374 = vadd.f32 %v11284, %v11331
  %v11375 = vadd.f32 %v11285, %v11333
  %v11376 = vadd.f32 %v11286, %v11335
  %v11377 = vadd.f32 %v11287, %v11337
  %v11378 = vadd.f32 %v11288, %v11339
  %v11379 = vadd.f32 %v11289, %v11341
  %v11380 = vadd.f32 %v11290, %v11343
  %v11381 = vadd.f32 %v11291, %v11345
  %11382 = vrot.lane.b32.xlu0 %v10835, 64
  %v11383 = vpop.permute.xlu0 %11382
  %11384 = vrot.lane.b32.xlu0 %v10847, 64
  %v11385 = vpop.permute.xlu0 %11384
  %11386 = vrot.lane.b32.xlu0 %v10859, 64
  %v11387 = vpop.permute.xlu0 %11386
  %11388 = vrot.lane.b32.xlu0 %v10871, 64
  %v11389 = vpop.permute.xlu0 %11388
  %11390 = vrot.lane.b32.xlu0 %v10883, 64
  %v11391 = vpop.permute.xlu0 %11390
  %11392 = vrot.lane.b32.xlu0 %v10895, 64
  %v11393 = vpop.permute.xlu0 %11392
  %11394 = vrot.lane.b32.xlu0 %v10907, 64
  %v11395 = vpop.permute.xlu0 %11394
  %11396 = vrot.lane.b32.xlu0 %v10919, 64
  %v11397 = vpop.permute.xlu0 %11396
  %11398 = vrot.lane.b32.xlu0 %v10931, 64
  %v11399 = vpop.permute.xlu0 %11398
  %11400 = vrot.lane.b32.xlu0 %v10943, 64
  %v11401 = vpop.permute.xlu0 %11400
  %11402 = vrot.lane.b32.xlu0 %v10955, 64
  %v11403 = vpop.permute.xlu0 %11402
  %11404 = vrot.lane.b32.xlu0 %v10967, 64
  %v11405 = vpop.permute.xlu0 %11404
  %11406 = vrot.lane.b32.xlu0 %v10979, 64
  %v11407 = vpop.permute.xlu0 %11406
  %11408 = vrot.lane.b32.xlu0 %v10991, 64
  %v11409 = vpop.permute.xlu0 %11408
  %11410 = vrot.lane.b32.xlu0 %v11003, 64
  %v11411 = vpop.permute.xlu0 %11410
  %11412 = vrot.lane.b32.xlu0 %v11015, 64
  %v11413 = vpop.permute.xlu0 %11412
  %11414 = vrot.lane.b32.xlu0 %v11027, 64
  %v11415 = vpop.permute.xlu0 %11414
  %11416 = vrot.lane.b32.xlu0 %v11039, 64
  %v11417 = vpop.permute.xlu0 %11416
  %v11436 = vadd.f32 %v11364, %v11383
  %v11437 = vadd.f32 %v11365, %v11385
  %v11438 = vadd.f32 %v11366, %v11387
  %v11439 = vadd.f32 %v11367, %v11389
  %v11440 = vadd.f32 %v11368, %v11391
  %v11441 = vadd.f32 %v11369, %v11393
  %v11442 = vadd.f32 %v11370, %v11395
  %v11443 = vadd.f32 %v11371, %v11397
  %v11444 = vadd.f32 %v11372, %v11399
  %v11445 = vadd.f32 %v11373, %v11401
  %v11446 = vadd.f32 %v11374, %v11403
  %v11447 = vadd.f32 %v11375, %v11405
  %v11448 = vadd.f32 %v11376, %v11407
  %v11449 = vadd.f32 %v11377, %v11409
  %v11450 = vadd.f32 %v11378, %v11411
  %v11451 = vadd.f32 %v11379, %v11413
  %v11452 = vadd.f32 %v11380, %v11415
  %v11453 = vadd.f32 %v11381, %v11417
  %11454 = vrot.lane.b32.xlu0 %v10835, 32
  %v11455 = vpop.permute.xlu0 %11454
  %11456 = vrot.lane.b32.xlu0 %v10847, 32
  %v11457 = vpop.permute.xlu0 %11456
  %11458 = vrot.lane.b32.xlu0 %v10859, 32
  %v11459 = vpop.permute.xlu0 %11458
  %11460 = vrot.lane.b32.xlu0 %v10871, 32
  %v11461 = vpop.permute.xlu0 %11460
  %11462 = vrot.lane.b32.xlu0 %v10883, 32
  %v11463 = vpop.permute.xlu0 %11462
  %11464 = vrot.lane.b32.xlu0 %v10895, 32
  %v11465 = vpop.permute.xlu0 %11464
  %11466 = vrot.lane.b32.xlu0 %v10907, 32
  %v11467 = vpop.permute.xlu0 %11466
  %11468 = vrot.lane.b32.xlu0 %v10919, 32
  %v11469 = vpop.permute.xlu0 %11468
  %11470 = vrot.lane.b32.xlu0 %v10931, 32
  %v11471 = vpop.permute.xlu0 %11470
  %11472 = vrot.lane.b32.xlu0 %v10943, 32
  %v11473 = vpop.permute.xlu0 %11472
  %11474 = vrot.lane.b32.xlu0 %v10955, 32
  %v11475 = vpop.permute.xlu0 %11474
  %11476 = vrot.lane.b32.xlu0 %v10967, 32
  %v11477 = vpop.permute.xlu0 %11476
  %11478 = vrot.lane.b32.xlu0 %v10979, 32
  %v11479 = vpop.permute.xlu0 %11478
  %11480 = vrot.lane.b32.xlu0 %v10991, 32
  %v11481 = vpop.permute.xlu0 %11480
  %11482 = vrot.lane.b32.xlu0 %v11003, 32
  %v11483 = vpop.permute.xlu0 %11482
  %11484 = vrot.lane.b32.xlu0 %v11015, 32
  %v11485 = vpop.permute.xlu0 %11484
  %11486 = vrot.lane.b32.xlu0 %v11027, 32
  %v11487 = vpop.permute.xlu0 %11486
  %11488 = vrot.lane.b32.xlu0 %v11039, 32
  %v11489 = vpop.permute.xlu0 %11488
  %v11508 = vadd.f32 %v11436, %v11455
  %v11509 = vadd.f32 %v11437, %v11457
  %v11510 = vadd.f32 %v11438, %v11459
  %v11511 = vadd.f32 %v11439, %v11461
  %v11512 = vadd.f32 %v11440, %v11463
  %v11513 = vadd.f32 %v11441, %v11465
  %v11514 = vadd.f32 %v11442, %v11467
  %v11515 = vadd.f32 %v11443, %v11469
  %v11516 = vadd.f32 %v11444, %v11471
  %v11517 = vadd.f32 %v11445, %v11473
  %v11518 = vadd.f32 %v11446, %v11475
  %v11519 = vadd.f32 %v11447, %v11477
  %v11520 = vadd.f32 %v11448, %v11479
  %v11521 = vadd.f32 %v11449, %v11481
  %v11522 = vadd.f32 %v11450, %v11483
  %v11523 = vadd.f32 %v11451, %v11485
  %v11524 = vadd.f32 %v11452, %v11487
  %v11525 = vadd.f32 %v11453, %v11489
  %v11526 = vmul.f32 %v11508, 0.015625
  %v11527 = vmul.f32 %v11509, 0.015625
  %v11528 = vmul.f32 %v11510, 0.015625
  %v11529 = vmul.f32 %v11511, 0.015625
  %v11530 = vmul.f32 %v11512, 0.015625
  %v11531 = vmul.f32 %v11513, 0.015625
  %v11532 = vmul.f32 %v11514, 0.015625
  %v11533 = vmul.f32 %v11515, 0.015625
  %v11534 = vmul.f32 %v11516, 0.015625
  %v11535 = vmul.f32 %v11517, 0.015625
  %v11536 = vmul.f32 %v11518, 0.015625
  %v11537 = vmul.f32 %v11519, 0.015625
  %v11538 = vmul.f32 %v11520, 0.015625
  %v11539 = vmul.f32 %v11521, 0.015625
  %v11540 = vmul.f32 %v11522, 0.015625
  %v11541 = vmul.f32 %v11523, 0.015625
  %v11542 = vmul.f32 %v11524, 0.015625
  %v11543 = vmul.f32 %v11525, 0.015625
  %v11544 = vld [vmem:[%s5] sm:$0x1]
  %v11546 = vlaneseq
  %v11547 = vshrl.u32 %v11546, 7
  %v11548 = vsub.s32 0, %v11547
  %v11549 = vrot.slane %v11544, %v11548
  %v11551 = vadd.f32 %v11526, %v11549
  %v11552 = vadd.f32 %v11527, %v11549
  %v11553 = vadd.f32 %v11528, %v11549
  %v11554 = vadd.f32 %v11529, %v11549
  %v11555 = vadd.f32 %v11530, %v11549
  %v11556 = vadd.f32 %v11531, %v11549
  %v11557 = vadd.f32 %v11532, %v11549
  %v11558 = vadd.f32 %v11533, %v11549
  %v11559 = vadd.f32 %v11534, %v11549
  %v11560 = vadd.f32 %v11535, %v11549
  %v11561 = vadd.f32 %v11536, %v11549
  %v11562 = vadd.f32 %v11537, %v11549
  %v11563 = vadd.f32 %v11538, %v11549
  %v11564 = vadd.f32 %v11539, %v11549
  %v11565 = vadd.f32 %v11540, %v11549
  %v11566 = vadd.f32 %v11541, %v11549
  %v11567 = vadd.f32 %v11542, %v11549
  %v11568 = vadd.f32 %v11543, %v11549
  %v11569 = vld [vmem:[%s6] sm:$0x3]
  %v11570 = vlaneseq
  %v11571 = vshrl.u32 %v11570, 7
  %v11572 = vsub.s32 0, %v11571
  %v11573 = vrot.slane %v11569, %v11572
  %v11574 = vmul.f32 %v11551, %v11573
  %v11575 = vmul.f32 %v11552, %v11573
  %v11576 = vmul.f32 %v11553, %v11573
  %v11577 = vmul.f32 %v11554, %v11573
  %v11578 = vmul.f32 %v11555, %v11573
  %v11579 = vmul.f32 %v11556, %v11573
  %v11580 = vmul.f32 %v11557, %v11573
  %v11581 = vmul.f32 %v11558, %v11573
  %v11582 = vmul.f32 %v11559, %v11573
  %v11583 = vmul.f32 %v11560, %v11573
  %v11584 = vmul.f32 %v11561, %v11573
  %v11585 = vmul.f32 %v11562, %v11573
  %v11586 = vmul.f32 %v11563, %v11573
  %v11587 = vmul.f32 %v11564, %v11573
  %v11588 = vmul.f32 %v11565, %v11573
  %v11589 = vmul.f32 %v11566, %v11573
  %v11590 = vmul.f32 %v11567, %v11573
  %v11591 = vmul.f32 %v11568, %v11573
  %v11610 = vrot.slane %v11575, 7
  %vm11611 = vcmask 1041409
  %v11612 = vsel %vm11611, %v11610, %v11574
  %v11613 = vrot.slane %v11576, 6
  %vm11614 = vcmask 1042434
  %v11615 = vsel %vm11614, %v11613, %v11612
  %v11616 = vrot.slane %v11577, 5
  %vm11617 = vcmask 1043459
  %v11618 = vsel %vm11617, %v11616, %v11615
  %v11619 = vrot.slane %v11578, 4
  %vm11620 = vcmask 1044484
  %v11621 = vsel %vm11620, %v11619, %v11618
  %v11622 = vrot.slane %v11579, 3
  %vm11623 = vcmask 1045509
  %v11624 = vsel %vm11623, %v11622, %v11621
  %v11625 = vrot.slane %v11580, 2
  %vm11626 = vcmask 1046534
  %v11627 = vsel %vm11626, %v11625, %v11624
  %v11628 = vrot.slane %v11581, 1
  %vm11629 = vcmask 1047559
  %v11630 = vsel %vm11629, %v11628, %v11627
  %v11631 = vrot.slane %v11583, 7
  %v11632 = vsel %vm11611, %v11631, %v11582
  %v11633 = vrot.slane %v11584, 6
  %v11634 = vsel %vm11614, %v11633, %v11632
  %v11635 = vrot.slane %v11585, 5
  %v11636 = vsel %vm11617, %v11635, %v11634
  %v11637 = vrot.slane %v11586, 4
  %v11638 = vsel %vm11620, %v11637, %v11636
  %v11639 = vrot.slane %v11587, 3
  %v11640 = vsel %vm11623, %v11639, %v11638
  %v11641 = vrot.slane %v11588, 2
  %v11642 = vsel %vm11626, %v11641, %v11640
  %v11643 = vrot.slane %v11589, 1
  %v11644 = vsel %vm11629, %v11643, %v11642
  %v11645 = vrot.slane %v11591, 7
  %v11646 = vsel %vm11611, %v11645, %v11590
  %vm11650 = vcmask 261120
  %v11651 = vsel %vm11650, %v11630, 0.0
  %11652 = vadd.xlane.f32.xlu0 %v11651
  %v11653 = vpop.xlane.xlu0 %11652
  %v11654 = vsel %vm11650, %v11644, 0.0
  %11655 = vadd.xlane.f32.xlu0 %v11654
  %v11656 = vpop.xlane.xlu0 %11655
  %vm11657 = vcmask 254976
  %v11658 = vsel %vm11657, %v11646, 0.0
  %11659 = vadd.xlane.f32.xlu0 %v11658
  %v11660 = vpop.xlane.xlu0 %11659
  %v11661 = vlaneseq
  %v11662 = vshrl.u32 %v11661, 7
  %v11663 = vsub.s32 1, %v11662
  %v11664 = vrot.slane %v11569, %v11663
  %v11665 = vmul.f32 %v11551, %v11664
  %v11666 = vmul.f32 %v11552, %v11664
  %v11667 = vmul.f32 %v11553, %v11664
  %v11668 = vmul.f32 %v11554, %v11664
  %v11669 = vmul.f32 %v11555, %v11664
  %v11670 = vmul.f32 %v11556, %v11664
  %v11671 = vmul.f32 %v11557, %v11664
  %v11672 = vmul.f32 %v11558, %v11664
  %v11673 = vmul.f32 %v11559, %v11664
  %v11674 = vmul.f32 %v11560, %v11664
  %v11675 = vmul.f32 %v11561, %v11664
  %v11676 = vmul.f32 %v11562, %v11664
  %v11677 = vmul.f32 %v11563, %v11664
  %v11678 = vmul.f32 %v11564, %v11664
  %v11679 = vmul.f32 %v11565, %v11664
  %v11680 = vmul.f32 %v11566, %v11664
  %v11681 = vmul.f32 %v11567, %v11664
  %v11682 = vmul.f32 %v11568, %v11664
  %v11701 = vrot.slane %v11666, 7
  %v11702 = vsel %vm11611, %v11701, %v11665
  %v11703 = vrot.slane %v11667, 6
  %v11704 = vsel %vm11614, %v11703, %v11702
  %v11705 = vrot.slane %v11668, 5
  %v11706 = vsel %vm11617, %v11705, %v11704
  %v11707 = vrot.slane %v11669, 4
  %v11708 = vsel %vm11620, %v11707, %v11706
  %v11709 = vrot.slane %v11670, 3
  %v11710 = vsel %vm11623, %v11709, %v11708
  %v11711 = vrot.slane %v11671, 2
  %v11712 = vsel %vm11626, %v11711, %v11710
  %v11713 = vrot.slane %v11672, 1
  %v11714 = vsel %vm11629, %v11713, %v11712
  %v11715 = vrot.slane %v11674, 7
  %v11716 = vsel %vm11611, %v11715, %v11673
  %v11717 = vrot.slane %v11675, 6
  %v11718 = vsel %vm11614, %v11717, %v11716
  %v11719 = vrot.slane %v11676, 5
  %v11720 = vsel %vm11617, %v11719, %v11718
  %v11721 = vrot.slane %v11677, 4
  %v11722 = vsel %vm11620, %v11721, %v11720
  %v11723 = vrot.slane %v11678, 3
  %v11724 = vsel %vm11623, %v11723, %v11722
  %v11725 = vrot.slane %v11679, 2
  %v11726 = vsel %vm11626, %v11725, %v11724
  %v11727 = vrot.slane %v11680, 1
  %v11728 = vsel %vm11629, %v11727, %v11726
  %v11729 = vrot.slane %v11682, 7
  %v11730 = vsel %vm11611, %v11729, %v11681
  %v11734 = vsel %vm11650, %v11714, 0.0
  %11735 = vadd.xlane.f32.xlu0 %v11734
  %v11736 = vpop.xlane.xlu0 %11735
  %v11737 = vsel %vm11650, %v11728, 0.0
  %11738 = vadd.xlane.f32.xlu0 %v11737
  %v11739 = vpop.xlane.xlu0 %11738
  %v11740 = vsel %vm11657, %v11730, 0.0
  %11741 = vadd.xlane.f32.xlu0 %v11740
  %v11742 = vpop.xlane.xlu0 %11741
  %vm11743 = vcmask 7168
  %v11744 = vsel %vm11743, %v11653, %v11736
  %v11745 = vsel %vm11743, %v11656, %v11739
  %v11746 = vsel %vm11743, %v11660, %v11742
  %v11747 = vld [vmem:[%s7] sm:$0x1]
  %v11749 = vlaneseq
  %v11750 = vshrl.u32 %v11749, 7
  %v11751 = vsub.s32 0, %v11750
  %v11752 = vrot.slane %v11747, %v11751
  %v11754 = vadd.f32 %v11744, %v11752
  %v11755 = vadd.f32 %v11745, %v11752
  %v11756 = vadd.f32 %v11746, %v11752
  %vm11757 = vcmp.ge.f32.partialorder %v11754, 0.0
  %vm11758 = vcmp.ge.f32.partialorder %v11755, 0.0
  %vm11759 = vcmp.ge.f32.partialorder %v11756, 0.0
  %v11760 = vmul.f32 %v11754, 0.1
  %v11761 = vmul.f32 %v11755, 0.1
  %v11762 = vmul.f32 %v11756, 0.1
  %v11763 = vsel %vm11757, %v11754, %v11760
  %v11764 = vsel %vm11758, %v11755, %v11761
  %v11765 = vsel %vm11759, %v11756, %v11762
  %v11766 = vld [vmem:[%s8] sm:$0x3]
  %11768 = vset.pattern.permute.xlu0 0
  %11769 = vperm.xlu0 %11768, %v11763
  %v11770 = vpop.permute.xlu0 %11769
  %11773 = vset.pattern.permute.xlu0 0
  %11774 = vperm.xlu0 %11773, %v11764
  %v11775 = vpop.permute.xlu0 %11774
  %11778 = vset.pattern.permute.xlu0 0
  %11779 = vperm.xlu0 %11778, %v11765
  %v11780 = vpop.permute.xlu0 %11779
  %v11782 = vlaneseq
  %v11783 = vshrl.u32 %v11782, 7
  %v11784 = vsub.s32 0, %v11783
  %v11785 = vrot.slane %v11766, %v11784
  %v11786 = vmul.f32 %v11770, %v11785
  %v11787 = vmul.f32 %v11775, %v11785
  %v11788 = vmul.f32 %v11780, %v11785
  %11789 = vset.pattern.permute.xlu0 1
  %11790 = vperm.xlu0 %11789, %v11763
  %v11791 = vpop.permute.xlu0 %11790
  %11793 = vset.pattern.permute.xlu0 1
  %11794 = vperm.xlu0 %11793, %v11764
  %v11795 = vpop.permute.xlu0 %11794
  %11797 = vset.pattern.permute.xlu0 1
  %11798 = vperm.xlu0 %11797, %v11765
  %v11799 = vpop.permute.xlu0 %11798
  %v11801 = vlaneseq
  %v11802 = vshrl.u32 %v11801, 7
  %v11803 = vsub.s32 1, %v11802
  %v11804 = vrot.slane %v11766, %v11803
  %v11805 = vmul.f32 %v11791, %v11804
  %v11806 = vmul.f32 %v11795, %v11804
  %v11807 = vmul.f32 %v11799, %v11804
  %v11808 = vadd.f32 %v11786, %v11805
  %v11809 = vadd.f32 %v11787, %v11806
  %v11810 = vadd.f32 %v11788, %v11807
  %v11811 = vld [vmem:[%s9] sm:$0x1]
  %v11813 = vlaneseq
  %v11814 = vshrl.u32 %v11813, 7
  %v11815 = vsub.s32 0, %v11814
  %v11816 = vrot.slane %v11811, %v11815
  %v11818 = vadd.f32 %v11808, %v11816
  %v11819 = vadd.f32 %v11809, %v11816
  %v11820 = vadd.f32 %v11810, %v11816
  %v11821 = vxor.u32 %v11818, 2147483648
  %v11822 = vxor.u32 %v11819, 2147483648
  %v11823 = vxor.u32 %v11820, 2147483648
  %v11824 = vmul.f32 %v11821, 1.442695
  %v11825 = vpow.pop %v11824
  %v11826 = vmul.f32 %v11822, 1.442695
  %v11827 = vpow.pop %v11826
  %v11828 = vmul.f32 %v11823, 1.442695
  %v11829 = vpow.pop %v11828
  %v11830 = vadd.f32 %v11825, 1.0
  %v11831 = vadd.f32 %v11827, 1.0
  %v11832 = vadd.f32 %v11829, 1.0
  %v11833 = vrcp.pop %v11830
  %v11834 = vmul.f32 1.0, %v11833
  %v11835 = vrcp.pop %v11831
  %v11836 = vmul.f32 1.0, %v11835
  %v11837 = vrcp.pop %v11832
  %v11838 = vmul.f32 1.0, %v11837
  %11842 = vrot.lane.b32.xlu0 %v11834, 32
  %v11843 = vpop.permute.xlu0 %11842
  %11844 = vrot.lane.b32.xlu0 %v11836, 32
  %v11845 = vpop.permute.xlu0 %11844
  %11846 = vrot.lane.b32.xlu0 %v11838, 32
  %v11847 = vpop.permute.xlu0 %11846
  %11851 = vrot.lane.b32.xlu0 %v11834, 64
  %v11852 = vpop.permute.xlu0 %11851
  %11853 = vrot.lane.b32.xlu0 %v11836, 64
  %v11854 = vpop.permute.xlu0 %11853
  %11855 = vrot.lane.b32.xlu0 %v11838, 64
  %v11856 = vpop.permute.xlu0 %11855
  %11860 = vrot.lane.b32.xlu0 %v11834, 96
  %v11861 = vpop.permute.xlu0 %11860
  %11862 = vrot.lane.b32.xlu0 %v11836, 96
  %v11863 = vpop.permute.xlu0 %11862
  %11864 = vrot.lane.b32.xlu0 %v11838, 96
  %v11865 = vpop.permute.xlu0 %11864
  %v11869 = vsel %vm11650, %v11834, %v11843
  %v11870 = vsel %vm11650, %v11836, %v11845
  %v11871 = vsel %vm11650, %v11838, %v11847
  %vm11872 = vcmask 523264
  %v11873 = vsel %vm11872, %v11869, %v11852
  %v11874 = vsel %vm11872, %v11870, %v11854
  %v11875 = vsel %vm11872, %v11871, %v11856
  %vm11876 = vcmask 785408
  %v11877 = vsel %vm11876, %v11873, %v11861
  %v11878 = vsel %vm11876, %v11874, %v11863
  %v11879 = vsel %vm11876, %v11875, %v11865
  %v11883 = vcombine.low %v11877, %v11877
  %v11884 = vcombine.high %v11877, %v11877
  %v11886 = vunpack.c.l.s4 1966171168
  %v11887 = vunpack.c.0.s8 %v11886
  %v11888 = vlaneseq
  %v11889 = vshrl.u32 %v11888, 7
  %v11890 = vsub.s32 %v11887, %v11889
  %v11891 = vrot.slane %v11883, %v11890
  %v11893 = vunpack.c.l.s4 1966171168
  %v11894 = vunpack.c.0.s8 %v11893
  %v11895 = vlaneseq
  %v11896 = vshrl.u32 %v11895, 7
  %v11897 = vsub.s32 %v11894, %v11896
  %v11898 = vrot.slane %v11884, %v11897
  %v11899 = vcombine.high %v11891, %v11891
  %v11900 = vcombine.high %v11898, %v11898
  %v11902 = vunpack.c.l.s4 1966171168
  %v11903 = vunpack.c.0.s8 %v11902
  %v11904 = vlaneseq
  %v11905 = vshrl.u32 %v11904, 7
  %v11906 = vsub.s32 %v11903, %v11905
  %v11907 = vrot.slane %v11891, %v11906
  %v11909 = vunpack.c.l.s4 1966171168
  %v11910 = vunpack.c.0.s8 %v11909
  %v11911 = vlaneseq
  %v11912 = vshrl.u32 %v11911, 7
  %v11913 = vsub.s32 %v11910, %v11912
  %v11914 = vrot.slane %v11898, %v11913
  %v11916 = vunpack.c.l.s4 1966171168
  %v11917 = vunpack.c.0.s8 %v11916
  %v11918 = vlaneseq
  %v11919 = vshrl.u32 %v11918, 7
  %v11920 = vsub.s32 %v11917, %v11919
  %v11921 = vrot.slane %v11899, %v11920
  %v11923 = vunpack.c.l.s4 1966171168
  %v11924 = vunpack.c.0.s8 %v11923
  %v11925 = vlaneseq
  %v11926 = vshrl.u32 %v11925, 7
  %v11927 = vsub.s32 %v11924, %v11926
  %v11928 = vrot.slane %v11900, %v11927
  %v11929 = vcombine.high %v11907, %v11907
  %v11930 = vcombine.high %v11914, %v11914
  %v11931 = vcombine.high %v11921, %v11921
  %v11932 = vcombine.high %v11928, %v11928
  %v11933 = vcombine.low %v11878, %v11878
  %v11934 = vcombine.high %v11878, %v11878
  %v11936 = vunpack.c.l.s4 1966171168
  %v11937 = vunpack.c.0.s8 %v11936
  %v11938 = vlaneseq
  %v11939 = vshrl.u32 %v11938, 7
  %v11940 = vsub.s32 %v11937, %v11939
  %v11941 = vrot.slane %v11933, %v11940
  %v11943 = vunpack.c.l.s4 1966171168
  %v11944 = vunpack.c.0.s8 %v11943
  %v11945 = vlaneseq
  %v11946 = vshrl.u32 %v11945, 7
  %v11947 = vsub.s32 %v11944, %v11946
  %v11948 = vrot.slane %v11934, %v11947
  %v11949 = vcombine.high %v11941, %v11941
  %v11950 = vcombine.high %v11948, %v11948
  %v11952 = vunpack.c.l.s4 1966171168
  %v11953 = vunpack.c.0.s8 %v11952
  %v11954 = vlaneseq
  %v11955 = vshrl.u32 %v11954, 7
  %v11956 = vsub.s32 %v11953, %v11955
  %v11957 = vrot.slane %v11941, %v11956
  %v11959 = vunpack.c.l.s4 1966171168
  %v11960 = vunpack.c.0.s8 %v11959
  %v11961 = vlaneseq
  %v11962 = vshrl.u32 %v11961, 7
  %v11963 = vsub.s32 %v11960, %v11962
  %v11964 = vrot.slane %v11948, %v11963
  %v11966 = vunpack.c.l.s4 1966171168
  %v11967 = vunpack.c.0.s8 %v11966
  %v11968 = vlaneseq
  %v11969 = vshrl.u32 %v11968, 7
  %v11970 = vsub.s32 %v11967, %v11969
  %v11971 = vrot.slane %v11949, %v11970
  %v11973 = vunpack.c.l.s4 1966171168
  %v11974 = vunpack.c.0.s8 %v11973
  %v11975 = vlaneseq
  %v11976 = vshrl.u32 %v11975, 7
  %v11977 = vsub.s32 %v11974, %v11976
  %v11978 = vrot.slane %v11950, %v11977
  %v11979 = vcombine.high %v11957, %v11957
  %v11980 = vcombine.high %v11964, %v11964
  %v11981 = vcombine.high %v11971, %v11971
  %v11982 = vcombine.high %v11978, %v11978
  %v11983 = vcombine.low %v11879, %v11879
  %v11985 = vunpack.c.l.s4 1966171168
  %v11986 = vunpack.c.0.s8 %v11985
  %v11987 = vlaneseq
  %v11988 = vshrl.u32 %v11987, 7
  %v11989 = vsub.s32 %v11986, %v11988
  %v11990 = vrot.slane %v11983, %v11989
  %v11991 = vcombine.high %v11990, %v11990
  %v11993 = vunpack.c.l.s4 1966171168
  %v11994 = vunpack.c.0.s8 %v11993
  %v11995 = vlaneseq
  %v11996 = vshrl.u32 %v11995, 7
  %v11997 = vsub.s32 %v11994, %v11996
  %v11998 = vrot.slane %v11990, %v11997
  %v12000 = vunpack.c.l.s4 1966171168
  %v12001 = vunpack.c.0.s8 %v12000
  %v12002 = vlaneseq
  %v12003 = vshrl.u32 %v12002, 7
  %v12004 = vsub.s32 %v12001, %v12003
  %v12005 = vrot.slane %v11991, %v12004
  %v12006 = vlaneseq
  %v12007 = vshrl.u32 %v12006, 7
  %v12008 = vsub.s32 0, %v12007
  %v12009 = vrot.slane %v11907, %v12008
  %v12010 = vlaneseq
  %v12011 = vshrl.u32 %v12010, 7
  %v12012 = vsub.s32 1, %v12011
  %v12013 = vrot.slane %v11907, %v12012
  %v12014 = vlaneseq
  %v12015 = vshrl.u32 %v12014, 7
  %v12016 = vsub.s32 0, %v12015
  %v12017 = vrot.slane %v11921, %v12016
  %v12018 = vlaneseq
  %v12019 = vshrl.u32 %v12018, 7
  %v12020 = vsub.s32 1, %v12019
  %v12021 = vrot.slane %v11921, %v12020
  %v12022 = vlaneseq
  %v12023 = vshrl.u32 %v12022, 7
  %v12024 = vsub.s32 0, %v12023
  %v12025 = vrot.slane %v11929, %v12024
  %v12026 = vlaneseq
  %v12027 = vshrl.u32 %v12026, 7
  %v12028 = vsub.s32 1, %v12027
  %v12029 = vrot.slane %v11929, %v12028
  %v12030 = vlaneseq
  %v12031 = vshrl.u32 %v12030, 7
  %v12032 = vsub.s32 0, %v12031
  %v12033 = vrot.slane %v11931, %v12032
  %v12034 = vlaneseq
  %v12035 = vshrl.u32 %v12034, 7
  %v12036 = vsub.s32 1, %v12035
  %v12037 = vrot.slane %v11931, %v12036
  %v12038 = vlaneseq
  %v12039 = vshrl.u32 %v12038, 7
  %v12040 = vsub.s32 0, %v12039
  %v12041 = vrot.slane %v11914, %v12040
  %v12042 = vlaneseq
  %v12043 = vshrl.u32 %v12042, 7
  %v12044 = vsub.s32 1, %v12043
  %v12045 = vrot.slane %v11914, %v12044
  %v12046 = vlaneseq
  %v12047 = vshrl.u32 %v12046, 7
  %v12048 = vsub.s32 0, %v12047
  %v12049 = vrot.slane %v11928, %v12048
  %v12050 = vlaneseq
  %v12051 = vshrl.u32 %v12050, 7
  %v12052 = vsub.s32 1, %v12051
  %v12053 = vrot.slane %v11928, %v12052
  %v12054 = vlaneseq
  %v12055 = vshrl.u32 %v12054, 7
  %v12056 = vsub.s32 0, %v12055
  %v12057 = vrot.slane %v11930, %v12056
  %v12058 = vlaneseq
  %v12059 = vshrl.u32 %v12058, 7
  %v12060 = vsub.s32 1, %v12059
  %v12061 = vrot.slane %v11930, %v12060
  %v12062 = vlaneseq
  %v12063 = vshrl.u32 %v12062, 7
  %v12064 = vsub.s32 0, %v12063
  %v12065 = vrot.slane %v11932, %v12064
  %v12066 = vlaneseq
  %v12067 = vshrl.u32 %v12066, 7
  %v12068 = vsub.s32 1, %v12067
  %v12069 = vrot.slane %v11932, %v12068
  %v12070 = vlaneseq
  %v12071 = vshrl.u32 %v12070, 7
  %v12072 = vsub.s32 0, %v12071
  %v12073 = vrot.slane %v11957, %v12072
  %v12074 = vlaneseq
  %v12075 = vshrl.u32 %v12074, 7
  %v12076 = vsub.s32 1, %v12075
  %v12077 = vrot.slane %v11957, %v12076
  %v12078 = vlaneseq
  %v12079 = vshrl.u32 %v12078, 7
  %v12080 = vsub.s32 0, %v12079
  %v12081 = vrot.slane %v11971, %v12080
  %v12082 = vlaneseq
  %v12083 = vshrl.u32 %v12082, 7
  %v12084 = vsub.s32 1, %v12083
  %v12085 = vrot.slane %v11971, %v12084
  %v12086 = vlaneseq
  %v12087 = vshrl.u32 %v12086, 7
  %v12088 = vsub.s32 0, %v12087
  %v12089 = vrot.slane %v11979, %v12088
  %v12090 = vlaneseq
  %v12091 = vshrl.u32 %v12090, 7
  %v12092 = vsub.s32 1, %v12091
  %v12093 = vrot.slane %v11979, %v12092
  %v12094 = vlaneseq
  %v12095 = vshrl.u32 %v12094, 7
  %v12096 = vsub.s32 0, %v12095
  %v12097 = vrot.slane %v11981, %v12096
  %v12098 = vlaneseq
  %v12099 = vshrl.u32 %v12098, 7
  %v12100 = vsub.s32 1, %v12099
  %v12101 = vrot.slane %v11981, %v12100
  %v12102 = vlaneseq
  %v12103 = vshrl.u32 %v12102, 7
  %v12104 = vsub.s32 0, %v12103
  %v12105 = vrot.slane %v11964, %v12104
  %v12106 = vlaneseq
  %v12107 = vshrl.u32 %v12106, 7
  %v12108 = vsub.s32 1, %v12107
  %v12109 = vrot.slane %v11964, %v12108
  %v12110 = vlaneseq
  %v12111 = vshrl.u32 %v12110, 7
  %v12112 = vsub.s32 0, %v12111
  %v12113 = vrot.slane %v11978, %v12112
  %v12114 = vlaneseq
  %v12115 = vshrl.u32 %v12114, 7
  %v12116 = vsub.s32 1, %v12115
  %v12117 = vrot.slane %v11978, %v12116
  %v12118 = vlaneseq
  %v12119 = vshrl.u32 %v12118, 7
  %v12120 = vsub.s32 0, %v12119
  %v12121 = vrot.slane %v11980, %v12120
  %v12122 = vlaneseq
  %v12123 = vshrl.u32 %v12122, 7
  %v12124 = vsub.s32 1, %v12123
  %v12125 = vrot.slane %v11980, %v12124
  %v12126 = vlaneseq
  %v12127 = vshrl.u32 %v12126, 7
  %v12128 = vsub.s32 0, %v12127
  %v12129 = vrot.slane %v11982, %v12128
  %v12130 = vlaneseq
  %v12131 = vshrl.u32 %v12130, 7
  %v12132 = vsub.s32 1, %v12131
  %v12133 = vrot.slane %v11982, %v12132
  %v12134 = vlaneseq
  %v12135 = vshrl.u32 %v12134, 7
  %v12136 = vsub.s32 0, %v12135
  %v12137 = vrot.slane %v11998, %v12136
  %v12138 = vlaneseq
  %v12139 = vshrl.u32 %v12138, 7
  %v12140 = vsub.s32 1, %v12139
  %v12141 = vrot.slane %v11998, %v12140
  %v12142 = vlaneseq
  %v12143 = vshrl.u32 %v12142, 7
  %v12144 = vsub.s32 0, %v12143
  %v12145 = vrot.slane %v12005, %v12144
  %v12146 = vlaneseq
  %v12147 = vshrl.u32 %v12146, 7
  %v12148 = vsub.s32 1, %v12147
  %v12149 = vrot.slane %v12005, %v12148
  %v12186 = vld [vmem:[%s5] sm:$0x3]
  %v12188 = vlaneseq
  %v12189 = vshrl.u32 %v12188, 7
  %v12190 = vsub.s32 0, %v12189
  %v12191 = vrot.slane %v12186, %v12190
  %v12192 = vlaneseq
  %v12193 = vshrl.u32 %v12192, 7
  %v12194 = vsub.s32 1, %v12193
  %v12195 = vrot.slane %v12186, %v12194
  %v12198 = vadd.f32 %v10788, %v12191
  %v12199 = vadd.f32 %v10789, %v12195
  %v12200 = vadd.f32 %v10790, %v12191
  %v12201 = vadd.f32 %v10791, %v12195
  %v12202 = vadd.f32 %v10792, %v12191
  %v12203 = vadd.f32 %v10793, %v12195
  %v12204 = vadd.f32 %v10794, %v12191
  %v12205 = vadd.f32 %v10795, %v12195
  %v12206 = vadd.f32 %v10796, %v12191
  %v12207 = vadd.f32 %v10797, %v12195
  %v12208 = vadd.f32 %v10798, %v12191
  %v12209 = vadd.f32 %v10799, %v12195
  %v12210 = vadd.f32 %v10800, %v12191
  %v12211 = vadd.f32 %v10801, %v12195
  %v12212 = vadd.f32 %v10802, %v12191
  %v12213 = vadd.f32 %v10803, %v12195
  %v12214 = vadd.f32 %v10804, %v12191
  %v12215 = vadd.f32 %v10805, %v12195
  %v12216 = vadd.f32 %v10806, %v12191
  %v12217 = vadd.f32 %v10807, %v12195
  %v12218 = vadd.f32 %v10808, %v12191
  %v12219 = vadd.f32 %v10809, %v12195
  %v12220 = vadd.f32 %v10810, %v12191
  %v12221 = vadd.f32 %v10811, %v12195
  %v12222 = vadd.f32 %v10812, %v12191
  %v12223 = vadd.f32 %v10813, %v12195
  %v12224 = vadd.f32 %v10814, %v12191
  %v12225 = vadd.f32 %v10815, %v12195
  %v12226 = vadd.f32 %v10816, %v12191
  %v12227 = vadd.f32 %v10817, %v12195
  %v12228 = vadd.f32 %v10818, %v12191
  %v12229 = vadd.f32 %v10819, %v12195
  %v12230 = vadd.f32 %v10820, %v12191
  %v12231 = vadd.f32 %v10821, %v12195
  %v12232 = vadd.f32 %v10822, %v12191
  %v12233 = vadd.f32 %v10823, %v12195
  %v12234 = vmul.f32 %v12198, %v12009
  %v12235 = vmul.f32 %v12199, %v12013
  %v12236 = vmul.f32 %v12200, %v12017
  %v12237 = vmul.f32 %v12201, %v12021
  %v12238 = vmul.f32 %v12202, %v12025
  %v12239 = vmul.f32 %v12203, %v12029
  %v12240 = vmul.f32 %v12204, %v12033
  %v12241 = vmul.f32 %v12205, %v12037
  %v12242 = vmul.f32 %v12206, %v12041
  %v12243 = vmul.f32 %v12207, %v12045
  %v12244 = vmul.f32 %v12208, %v12049
  %v12245 = vmul.f32 %v12209, %v12053
  %v12246 = vmul.f32 %v12210, %v12057
  %v12247 = vmul.f32 %v12211, %v12061
  %v12248 = vmul.f32 %v12212, %v12065
  %v12249 = vmul.f32 %v12213, %v12069
  %v12250 = vmul.f32 %v12214, %v12073
  %v12251 = vmul.f32 %v12215, %v12077
  %v12252 = vmul.f32 %v12216, %v12081
  %v12253 = vmul.f32 %v12217, %v12085
  %v12254 = vmul.f32 %v12218, %v12089
  %v12255 = vmul.f32 %v12219, %v12093
  %v12256 = vmul.f32 %v12220, %v12097
  %v12257 = vmul.f32 %v12221, %v12101
  %v12258 = vmul.f32 %v12222, %v12105
  %v12259 = vmul.f32 %v12223, %v12109
  %v12260 = vmul.f32 %v12224, %v12113
  %v12261 = vmul.f32 %v12225, %v12117
  %v12262 = vmul.f32 %v12226, %v12121
  %v12263 = vmul.f32 %v12227, %v12125
  %v12264 = vmul.f32 %v12228, %v12129
  %v12265 = vmul.f32 %v12229, %v12133
  %v12266 = vmul.f32 %v12230, %v12137
  %v12267 = vmul.f32 %v12231, %v12141
  %v12268 = vmul.f32 %v12232, %v12145
  %v12269 = vmul.f32 %v12233, %v12149
  %v12270 = vld [vmem:[%s1] sm:$0xff]
  %v12271 = vld [vmem:[%s1 + $0x8] sm:$0xff]
  %v12272 = vld [vmem:[%s1 + $0x10] sm:$0xff]
  %v12273 = vld [vmem:[%s1 + $0x18] sm:$0xff]
  %v12274 = vld [vmem:[%s1 + $0x20] sm:$0xff]
  %v12275 = vld [vmem:[%s1 + $0x28] sm:$0xff]
  %v12276 = vld [vmem:[%s1 + $0x30] sm:$0xff]
  %v12277 = vld [vmem:[%s1 + $0x38] sm:$0xff]
  %v12278 = vld [vmem:[%s1 + $0x40] sm:$0xff]
  %v12279 = vld [vmem:[%s1 + $0x48] sm:$0xff]
  %v12280 = vld [vmem:[%s1 + $0x50] sm:$0xff]
  %v12281 = vld [vmem:[%s1 + $0x58] sm:$0xff]
  %v12282 = vld [vmem:[%s1 + $0x60] sm:$0xff]
  %v12283 = vld [vmem:[%s1 + $0x68] sm:$0xff]
  %v12284 = vld [vmem:[%s1 + $0x70] sm:$0xff]
  %v12285 = vld [vmem:[%s1 + $0x78] sm:$0xff]
  %v12286 = vld [vmem:[%s1 + $0x80] sm:$0xff]
  %v12287 = vld [vmem:[%s1 + $0x88] sm:$0xff]
  %v12288 = vld [vmem:[%s1 + $0x90] sm:$0xff]
  %v12289 = vld [vmem:[%s1 + $0x98] sm:$0xff]
  %v12290 = vld [vmem:[%s1 + $0xa0] sm:$0xff]
  %v12291 = vld [vmem:[%s1 + $0xa8] sm:$0xff]
  %v12292 = vld [vmem:[%s1 + $0xb0] sm:$0xff]
  %v12293 = vld [vmem:[%s1 + $0xb8] sm:$0xff]
  %v12294 = vld [vmem:[%s1 + $0xc0] sm:$0xff]
  %v12295 = vld [vmem:[%s1 + $0xc8] sm:$0xff]
  %v12296 = vld [vmem:[%s1 + $0xd0] sm:$0xff]
  %v12297 = vld [vmem:[%s1 + $0xd8] sm:$0xff]
  %v12298 = vld [vmem:[%s1 + $0xe0] sm:$0xff]
  %v12299 = vld [vmem:[%s1 + $0xe8] sm:$0xff]
  %v12300 = vld [vmem:[%s1 + $0xf0] sm:$0xff]
  %v12301 = vld [vmem:[%s1 + $0xf8] sm:$0xff]
  %v12302 = vld [vmem:[%s1 + $0x100] sm:$0xff]
  %v12303 = vld [vmem:[%s1 + $0x108] sm:$0xff]
  %v12304 = vld [vmem:[%s1 + $0x110] sm:$0xff]
  %v12305 = vld [vmem:[%s1 + $0x118] sm:$0xff]
  %v12306 = vadd.f32 %v12234, %v12270
  %v12307 = vadd.f32 %v12235, %v12271
  %v12308 = vadd.f32 %v12236, %v12272
  %v12309 = vadd.f32 %v12237, %v12273
  %v12310 = vadd.f32 %v12238, %v12274
  %v12311 = vadd.f32 %v12239, %v12275
  %v12312 = vadd.f32 %v12240, %v12276
  %v12313 = vadd.f32 %v12241, %v12277
  %v12314 = vadd.f32 %v12242, %v12278
  %v12315 = vadd.f32 %v12243, %v12279
  %v12316 = vadd.f32 %v12244, %v12280
  %v12317 = vadd.f32 %v12245, %v12281
  %v12318 = vadd.f32 %v12246, %v12282
  %v12319 = vadd.f32 %v12247, %v12283
  %v12320 = vadd.f32 %v12248, %v12284
  %v12321 = vadd.f32 %v12249, %v12285
  %v12322 = vadd.f32 %v12250, %v12286
  %v12323 = vadd.f32 %v12251, %v12287
  %v12324 = vadd.f32 %v12252, %v12288
  %v12325 = vadd.f32 %v12253, %v12289
  %v12326 = vadd.f32 %v12254, %v12290
  %v12327 = vadd.f32 %v12255, %v12291
  %v12328 = vadd.f32 %v12256, %v12292
  %v12329 = vadd.f32 %v12257, %v12293
  %v12330 = vadd.f32 %v12258, %v12294
  %v12331 = vadd.f32 %v12259, %v12295
  %v12332 = vadd.f32 %v12260, %v12296
  %v12333 = vadd.f32 %v12261, %v12297
  %v12334 = vadd.f32 %v12262, %v12298
  %v12335 = vadd.f32 %v12263, %v12299
  %v12336 = vadd.f32 %v12264, %v12300
  %v12337 = vadd.f32 %v12265, %v12301
  %v12338 = vadd.f32 %v12266, %v12302
  %v12339 = vadd.f32 %v12267, %v12303
  %v12340 = vadd.f32 %v12268, %v12304
  %v12341 = vadd.f32 %v12269, %v12305
  %12342 = vst [vmem:[%s10] sm:$0xff] %v12306
  %12343 = vst [vmem:[%s10 + $0x8] sm:$0xff] %v12307
  %12344 = vst [vmem:[%s10 + $0x10] sm:$0xff] %v12308
  %12345 = vst [vmem:[%s10 + $0x18] sm:$0xff] %v12309
  %12346 = vst [vmem:[%s10 + $0x20] sm:$0xff] %v12310
  %12347 = vst [vmem:[%s10 + $0x28] sm:$0xff] %v12311
  %12348 = vst [vmem:[%s10 + $0x30] sm:$0xff] %v12312
  %12349 = vst [vmem:[%s10 + $0x38] sm:$0xff] %v12313
  %12350 = vst [vmem:[%s10 + $0x40] sm:$0xff] %v12314
  %12351 = vst [vmem:[%s10 + $0x48] sm:$0xff] %v12315
  %12352 = vst [vmem:[%s10 + $0x50] sm:$0xff] %v12316
  %12353 = vst [vmem:[%s10 + $0x58] sm:$0xff] %v12317
  %12354 = vst [vmem:[%s10 + $0x60] sm:$0xff] %v12318
  %12355 = vst [vmem:[%s10 + $0x68] sm:$0xff] %v12319
  %12356 = vst [vmem:[%s10 + $0x70] sm:$0xff] %v12320
  %12357 = vst [vmem:[%s10 + $0x78] sm:$0xff] %v12321
  %12358 = vst [vmem:[%s10 + $0x80] sm:$0xff] %v12322
  %12359 = vst [vmem:[%s10 + $0x88] sm:$0xff] %v12323
  %12360 = vst [vmem:[%s10 + $0x90] sm:$0xff] %v12324
  %12361 = vst [vmem:[%s10 + $0x98] sm:$0xff] %v12325
  %12362 = vst [vmem:[%s10 + $0xa0] sm:$0xff] %v12326
  %12363 = vst [vmem:[%s10 + $0xa8] sm:$0xff] %v12327
  %12364 = vst [vmem:[%s10 + $0xb0] sm:$0xff] %v12328
  %12365 = vst [vmem:[%s10 + $0xb8] sm:$0xff] %v12329
  %12366 = vst [vmem:[%s10 + $0xc0] sm:$0xff] %v12330
  %12367 = vst [vmem:[%s10 + $0xc8] sm:$0xff] %v12331
  %12368 = vst [vmem:[%s10 + $0xd0] sm:$0xff] %v12332
  %12369 = vst [vmem:[%s10 + $0xd8] sm:$0xff] %v12333
  %12370 = vst [vmem:[%s10 + $0xe0] sm:$0xff] %v12334
  %12371 = vst [vmem:[%s10 + $0xe8] sm:$0xff] %v12335
  %12372 = vst [vmem:[%s10 + $0xf0] sm:$0xff] %v12336
  %12373 = vst [vmem:[%s10 + $0xf8] sm:$0xff] %v12337
  %12374 = vst [vmem:[%s10 + $0x100] sm:$0xff] %v12338
  %12375 = vst [vmem:[%s10 + $0x108] sm:$0xff] %v12339
  %12376 = vst [vmem:[%s10 + $0x110] sm:$0xff] %v12340
  %12377 = vst [vmem:[%s10 + $0x118] sm:$0xff] %v12341
  // Predicated region
  $region42: #{resb3d_forward.1} parent=0 // pred_check
    _
  $region43: #{resb3d_forward.1} parent=0 // pred_check_branch
    %12379 = sbr.rel (0) target = $region45
  $region44: #{resb3d_forward.1} parent=0 // pred_region
    _
  $region45: #{resb3d_forward.1} parent=0 // pred_fallthru
    _
  // Predicated region
  $region46: #{resb3d_forward.1} parent=0 // pred_check
    _
  $region47: #{resb3d_forward.1} parent=0 // pred_check_branch
    %12381 = sbr.rel (0) target = $region49
  $region48: #{resb3d_forward.1} parent=0 // pred_region
    _
  $region49: #{resb3d_forward.1} parent=0 // pred_fallthru
    _

</llo_original>
